<compile_context>
chip_gen: v5e
topology: v5e:2x2
jax: 0.10.0
libtpu: 0.0.40
codegen_flags: <defaults>
</compile_context>

<pallas_src>
import functools

import jax
import jax.numpy as jnp
from jax.experimental import pallas as pl
from jax.experimental.pallas import tpu as pltpu


def _tryon_kernel(real_ref, clothes_ref, edge_ref,
                  w_warp_ref, b_warp_ref, w_gen_ref, b_gen_ref,
                  out_ref):
    """One (batch, row-tile) block per grid step.

    real_ref    : (1, 3, TH, W) f32   person image tile (planar NCHW)
    clothes_ref : (1, 3, TH, W) f32   clothes image tile
    edge_ref    : (1, 1, H,  W) bf16  pre-binarized edge plane, resident per batch
    w_warp_ref  : (6, 5) f32  SMEM    warp stand-in ([real|clothes] -> [cloth3|flow2])
    b_warp_ref  : (5,)   f32  SMEM
    w_gen_ref   : (7, 4) f32  SMEM    gen stand-in ([real|warped_cloth|warped_edge] -> 4)
    b_gen_ref   : (4,)   f32  SMEM
    out_ref     : (1, 3, TH, W) f32   p_tryon tile
    """
    TH = real_ref.shape[2]
    W = real_ref.shape[3]
    H = edge_ref.shape[2]
    THW = TH * W

    t = pl.program_id(1)
    row0 = pl.multiple_of(t * TH, 16 if TH % 16 == 0 else 8)

    edge_plane = edge_ref[0, 0]                                        # (H, W) bf16, 0/1
    edge_tile = edge_ref[0, 0, pl.ds(row0, TH), :].astype(jnp.float32)  # (TH, W)

    # ---- warp_model stand-in: 1x1 conv via SMEM-scalar FMAs, plane at a time
    def warp_in(c):
        if c < 3:
            return real_ref[0, c]
        return clothes_ref[0, c - 3] * edge_tile          # clothes * (edge > 0.5)

    def warp_out(j):
        acc = warp_in(0) * w_warp_ref[0, j]
        for c in range(1, 6):
            acc = acc + warp_in(c) * w_warp_ref[c, j]
        return acc + b_warp_ref[j]

    warped_cloth = [warp_out(j) for j in range(3)]         # 3 x (TH, W)

    # ---- F.grid_sample(edge, grid, 'bilinear', padding_mode='zeros',
    #                    align_corners=False):  pixel = (g + 1) * size/2 - 0.5
    px = (jnp.tanh(warp_out(3)) + 1.0) * (W * 0.5) - 0.5   # (TH, W), x (width) coord
    py = (jnp.tanh(warp_out(4)) + 1.0) * (H * 0.5) - 0.5   # (TH, W), y (height) coord

    # Flatten output pixels p = r*W + w onto the lane axis (free when W%128==0).
    px_flat = px.reshape(1, THW)
    py_flat = py.reshape(1, THW)

    # Horizontal tent weights wx[c, p] = max(0, 1 - |px[p] - c|)  (bf16 MXU operand).
    c_idx = jax.lax.broadcasted_iota(jnp.int32, (W, THW), 0).astype(jnp.float32)
    dx = px_flat - c_idx                                    # (W, THW) f32 (implicit bcast)
    wx = jnp.maximum(0.0, 1.0 - jnp.abs(dx)).astype(jnp.bfloat16)

    # col_mix[h, p] = sum_c edge[h, c] * wx[c, p]  — ONE de-batched matmul with the
    # 0/1 edge plane as the stationary operand (bf16 is exact for 0/1).
    col_mix = jnp.dot(edge_plane, wx, preferred_element_type=jnp.float32)  # (H, THW)

    # Vertical tent weights wy[h, p] = max(0, 1 - |py[p] - h|)  (f32 for accuracy).
    # TODO(synk): on v6e/v7x the abs/1-x/max chain could run in bf16 for ~2x VPU
    #             throughput; kept f32 so the same kernel is optimal on v5e too.
    h_idx = c_idx if H == W else (
        jax.lax.broadcasted_iota(jnp.int32, (H, THW), 0).astype(jnp.float32))
    dy = py_flat - h_idx                                    # (H, THW) f32
    wy = jnp.maximum(0.0, 1.0 - jnp.abs(dy))

    # warped_edge[p] = sum_h col_mix[h, p] * wy[h, p]  — sublane reduce, result
    # comes back lane-dense (W on lanes) after the trailing-dim reshape.
    warped_edge = jnp.sum(col_mix * wy, axis=0, keepdims=True).reshape(TH, W)

    # ---- gen_model stand-in folded into the final composite (low plane liveness)
    def gen_in(c):
        if c < 3:
            return real_ref[0, c]
        if c < 6:
            return warped_cloth[c - 3]
        return warped_edge

    def gen_out(j):
        acc = gen_in(0) * w_gen_ref[0, j]
        for c in range(1, 7):
            acc = acc + gen_in(c) * w_gen_ref[c, j]
        return acc + b_gen_ref[j]

    # split [3, 1]; tanh / sigmoid; composite
    m_comp = jax.nn.sigmoid(gen_out(3)) * warped_edge
    one_minus_m = 1.0 - m_comp
    for c in range(3):
        p_rend = jnp.tanh(gen_out(c))
        out_ref[0, c] = (warped_cloth[c] * m_comp
                         + p_rend * one_minus_m).astype(out_ref.dtype)


def _vmem_capacity_bytes():
    try:
        return int(pltpu.get_tpu_info().vmem_capacity_bytes)
    except Exception:
        return 64 * 1024 * 1024        # conservative fallback (v7x-class)


def _pick_config(H, W, vmem_cap):
    """Row-tile height + scoped-VMEM limit, gated on physical VMEM.

    Per tile row, the sampling slabs ((K, TH*W) tent weights, col_mix and the
    product) cost roughly 4*W*(6H + 3W) bytes with modest buffer reuse."""
    if vmem_cap >= 96 * 1024 * 1024:        # v5e / v6e: 128 MiB physical VMEM
        budget, cap, vmem_limit = 40 << 20, 128, 100 << 20
    else:                                    # v7x: 64 MiB per TensorCore
        budget, cap, vmem_limit = 18 << 20, 64, 48 << 20

    per_row = 4 * W * (6 * H + 3 * W)
    th_max = min(H, cap, max(8, budget // max(per_row, 1)))
    for step in (16, 8):                     # prefer 16 (bf16 sublane packing)
        th = (th_max // step) * step
        while th >= step:
            if H % th == 0:
                return int(th), int(vmem_limit)
            th -= step
    return int(H), int(vmem_limit)           # full-extent rows (always legal)


@functools.partial(jax.jit, static_argnames=("tile_rows", "vmem_limit"))
def _forward_impl(real_image, clothes, edge, w_warp, b_warp, w_gen, b_gen,
                  *, tile_rows, vmem_limit):
    N, _, H, W = real_image.shape
    TH = tile_rows
    grid = (N, H // TH)

    real_f = real_image.astype(jnp.float32)
    clothes_f = clothes.astype(jnp.float32)
    # edge = float(edge > 0.5): binarize once in the wrapper; 0/1 is exact in bf16.
    edge_bin = (edge > 0.5).astype(jnp.bfloat16)              # (N, 1, H, W)

    grid_spec = pltpu.PrefetchScalarGridSpec(
        num_scalar_prefetch=0,
        grid=grid,
        in_specs=[
            pl.BlockSpec((1, 3, TH, W), lambda n, t: (n, 0, t, 0)),   # real tile
            pl.BlockSpec((1, 3, TH, W), lambda n, t: (n, 0, t, 0)),   # clothes tile
            pl.BlockSpec((1, 1, H, W),  lambda n, t: (n, 0, 0, 0)),   # edge plane / batch
            pl.BlockSpec(memory_space=pltpu.MemorySpace.SMEM),        # w_warp
            pl.BlockSpec(memory_space=pltpu.MemorySpace.SMEM),        # b_warp
            pl.BlockSpec(memory_space=pltpu.MemorySpace.SMEM),        # w_gen
            pl.BlockSpec(memory_space=pltpu.MemorySpace.SMEM),        # b_gen
        ],
        out_specs=pl.BlockSpec((1, 3, TH, W), lambda n, t: (n, 0, t, 0)),
    )

    return pl.pallas_call(
        _tryon_kernel,
        out_shape=jax.ShapeDtypeStruct((N, 3, H, W), jnp.float32),
        grid_spec=grid_spec,
        compiler_params=pltpu.CompilerParams(
            dimension_semantics=("parallel", "parallel"),
            vmem_limit_bytes=vmem_limit),
    )(real_f, clothes_f, edge_bin,
      w_warp.astype(jnp.float32), b_warp.astype(jnp.float32),
      w_gen.astype(jnp.float32), b_gen.astype(jnp.float32))


def helper_model_forward(real_image, clothes, edge, w_warp, b_warp, w_gen, b_gen):
    """real_image, clothes: (N, 3, H, W); edge: (N, 1, H, W) — NCHW like PyTorch.

    Returns p_tryon as (N, 3, H, W) float32.
    """
    _, _, H, W = real_image.shape
    TH, vmem_limit = _pick_config(H, W, _vmem_capacity_bytes())
    return _forward_impl(real_image, clothes, edge, w_warp, b_warp, w_gen, b_gen,
                         tile_rows=TH, vmem_limit=vmem_limit)


if __name__ == "__main__":
    key = jax.random.PRNGKey(0)
    k_real, k_cloth, k_edge, k_ww, k_wb, k_gw, k_gb = jax.random.split(key, 7)

    N, H, W = 2, 128, 128
    real_image = jax.random.normal(k_real, (N, 3, H, W), jnp.float32)
    clothes = jax.random.normal(k_cloth, (N, 3, H, W), jnp.float32)
    edge = jax.random.uniform(k_edge, (N, 1, H, W), jnp.float32)  # in [0, 1]

    # Deterministic stand-in parameters (checkpoints are unavailable).
    w_warp = 0.3 * jax.random.normal(k_ww, (6, 5), jnp.float32)
    b_warp = 0.1 * jax.random.normal(k_wb, (5,), jnp.float32)
    w_gen = 0.3 * jax.random.normal(k_gw, (7, 4), jnp.float32)
    b_gen = 0.1 * jax.random.normal(k_gb, (4,), jnp.float32)

    p_tryon = helper_model_forward(real_image, clothes, edge,
                                   w_warp, b_warp, w_gen, b_gen)
    jax.block_until_ready(p_tryon)
    assert p_tryon.shape == (N, 3, H, W)
    assert bool(jnp.all(jnp.isfinite(p_tryon)))
    print("KERNEL_OK")
</pallas_src>

<mosaic_0001>
module attributes {stable_mosaic.version = 11 : i64} {
  func.func @_tryon_kernel(%arg0: i32, %arg1: i32, %arg2: memref<1x3x32x128xf32, #tpu.memory_space<vmem>>, %arg3: memref<1x3x32x128xf32, #tpu.memory_space<vmem>>, %arg4: memref<1x1x128x128xbf16, #tpu.memory_space<vmem>>, %arg5: memref<6x5xf32, #tpu.memory_space<smem>>, %arg6: memref<5xf32, #tpu.memory_space<smem>>, %arg7: memref<7x4xf32, #tpu.memory_space<smem>>, %arg8: memref<4xf32, #tpu.memory_space<smem>>, %arg9: memref<1x3x32x128xf32, #tpu.memory_space<vmem>>) attributes {dimension_semantics = [#tpu.dimension_semantics<parallel>, #tpu.dimension_semantics<parallel>], iteration_bounds = array<i64: 2, 4>, scalar_prefetch = 0 : i64, scratch_operands = 0 : i64, tpu.core_type = #tpu.core_type<tc>, window_params = [{transform_indices = @transform_0, window_bounds = array<i64: 1, 3, 32, 128>}, {transform_indices = @transform_1, window_bounds = array<i64: 1, 3, 32, 128>}, {transform_indices = @transform_2, window_bounds = array<i64: 1, 1, 128, 128>}, {transform_indices = @transform_3, window_bounds = array<i64: 6, 5>}, {transform_indices = @transform_4, window_bounds = array<i64: 5>}, {transform_indices = @transform_5, window_bounds = array<i64: 7, 4>}, {transform_indices = @transform_6, window_bounds = array<i64: 4>}, {transform_indices = @transform_7, window_bounds = array<i64: 1, 3, 32, 128>}]} {
    %c32_i32 = arith.constant 32 : i32
    %0 = arith.muli %arg1, %c32_i32 : i32
    %1 = tpu.assume_multiple %0, 16 : i32
    %c0 = arith.constant 0 : index
    %c0_0 = arith.constant 0 : index
    %c0_1 = arith.constant 0 : index
    %c0_2 = arith.constant 0 : index
    %2 = vector.load %arg4[%c0, %c0_0, %c0_1, %c0_2] : memref<1x1x128x128xbf16, #tpu.memory_space<vmem>>, vector<1x1x128x128xbf16>
    %3 = vector.shape_cast %2 : vector<1x1x128x128xbf16> to vector<128x128xbf16>
    %c0_3 = arith.constant 0 : index
    %c0_4 = arith.constant 0 : index
    %4 = arith.index_cast %1 : i32 to index
    %c0_5 = arith.constant 0 : index
    %5 = vector.load %arg4[%c0_3, %c0_4, %4, %c0_5] : memref<1x1x128x128xbf16, #tpu.memory_space<vmem>>, vector<1x1x32x128xbf16>
    %6 = vector.shape_cast %5 : vector<1x1x32x128xbf16> to vector<32x128xbf16>
    %7 = arith.extf %6 : vector<32x128xbf16> to vector<32x128xf32>
    %c0_6 = arith.constant 0 : index
    %c0_7 = arith.constant 0 : index
    %c0_8 = arith.constant 0 : index
    %c0_9 = arith.constant 0 : index
    %8 = vector.load %arg2[%c0_6, %c0_7, %c0_8, %c0_9] : memref<1x3x32x128xf32, #tpu.memory_space<vmem>>, vector<1x1x32x128xf32>
    %9 = vector.shape_cast %8 : vector<1x1x32x128xf32> to vector<32x128xf32>
    %c0_10 = arith.constant 0 : index
    %c0_11 = arith.constant 0 : index
    %10 = memref.load %arg5[%c0_10, %c0_11] : memref<6x5xf32, #tpu.memory_space<smem>>
    %11 = vector.broadcast %10 : f32 to vector<32x128xf32>
    %12 = arith.mulf %9, %11 : vector<32x128xf32>
    %c0_12 = arith.constant 0 : index
    %c1 = arith.constant 1 : index
    %c0_13 = arith.constant 0 : index
    %c0_14 = arith.constant 0 : index
    %13 = vector.load %arg2[%c0_12, %c1, %c0_13, %c0_14] : memref<1x3x32x128xf32, #tpu.memory_space<vmem>>, vector<1x1x32x128xf32>
    %14 = vector.shape_cast %13 : vector<1x1x32x128xf32> to vector<32x128xf32>
    %c1_15 = arith.constant 1 : index
    %c0_16 = arith.constant 0 : index
    %15 = memref.load %arg5[%c1_15, %c0_16] : memref<6x5xf32, #tpu.memory_space<smem>>
    %16 = vector.broadcast %15 : f32 to vector<32x128xf32>
    %17 = arith.mulf %14, %16 : vector<32x128xf32>
    %18 = arith.addf %12, %17 : vector<32x128xf32>
    %c0_17 = arith.constant 0 : index
    %c2 = arith.constant 2 : index
    %c0_18 = arith.constant 0 : index
    %c0_19 = arith.constant 0 : index
    %19 = vector.load %arg2[%c0_17, %c2, %c0_18, %c0_19] : memref<1x3x32x128xf32, #tpu.memory_space<vmem>>, vector<1x1x32x128xf32>
    %20 = vector.shape_cast %19 : vector<1x1x32x128xf32> to vector<32x128xf32>
    %c2_20 = arith.constant 2 : index
    %c0_21 = arith.constant 0 : index
    %21 = memref.load %arg5[%c2_20, %c0_21] : memref<6x5xf32, #tpu.memory_space<smem>>
    %22 = vector.broadcast %21 : f32 to vector<32x128xf32>
    %23 = arith.mulf %20, %22 : vector<32x128xf32>
    %24 = arith.addf %18, %23 : vector<32x128xf32>
    %c0_22 = arith.constant 0 : index
    %c0_23 = arith.constant 0 : index
    %c0_24 = arith.constant 0 : index
    %c0_25 = arith.constant 0 : index
    %25 = vector.load %arg3[%c0_22, %c0_23, %c0_24, %c0_25] : memref<1x3x32x128xf32, #tpu.memory_space<vmem>>, vector<1x1x32x128xf32>
    %26 = vector.shape_cast %25 : vector<1x1x32x128xf32> to vector<32x128xf32>
    %27 = arith.mulf %26, %7 : vector<32x128xf32>
    %c3 = arith.constant 3 : index
    %c0_26 = arith.constant 0 : index
    %28 = memref.load %arg5[%c3, %c0_26] : memref<6x5xf32, #tpu.memory_space<smem>>
    %29 = vector.broadcast %28 : f32 to vector<32x128xf32>
    %30 = arith.mulf %27, %29 : vector<32x128xf32>
    %31 = arith.addf %24, %30 : vector<32x128xf32>
    %c0_27 = arith.constant 0 : index
    %c1_28 = arith.constant 1 : index
    %c0_29 = arith.constant 0 : index
    %c0_30 = arith.constant 0 : index
    %32 = vector.load %arg3[%c0_27, %c1_28, %c0_29, %c0_30] : memref<1x3x32x128xf32, #tpu.memory_space<vmem>>, vector<1x1x32x128xf32>
    %33 = vector.shape_cast %32 : vector<1x1x32x128xf32> to vector<32x128xf32>
    %34 = arith.mulf %33, %7 : vector<32x128xf32>
    %c4 = arith.constant 4 : index
    %c0_31 = arith.constant 0 : index
    %35 = memref.load %arg5[%c4, %c0_31] : memref<6x5xf32, #tpu.memory_space<smem>>
    %36 = vector.broadcast %35 : f32 to vector<32x128xf32>
    %37 = arith.mulf %34, %36 : vector<32x128xf32>
    %38 = arith.addf %31, %37 : vector<32x128xf32>
    %c0_32 = arith.constant 0 : index
    %c2_33 = arith.constant 2 : index
    %c0_34 = arith.constant 0 : index
    %c0_35 = arith.constant 0 : index
    %39 = vector.load %arg3[%c0_32, %c2_33, %c0_34, %c0_35] : memref<1x3x32x128xf32, #tpu.memory_space<vmem>>, vector<1x1x32x128xf32>
    %40 = vector.shape_cast %39 : vector<1x1x32x128xf32> to vector<32x128xf32>
    %41 = arith.mulf %40, %7 : vector<32x128xf32>
    %c5 = arith.constant 5 : index
    %c0_36 = arith.constant 0 : index
    %42 = memref.load %arg5[%c5, %c0_36] : memref<6x5xf32, #tpu.memory_space<smem>>
    %43 = vector.broadcast %42 : f32 to vector<32x128xf32>
    %44 = arith.mulf %41, %43 : vector<32x128xf32>
    %45 = arith.addf %38, %44 : vector<32x128xf32>
    %c0_37 = arith.constant 0 : index
    %46 = memref.load %arg6[%c0_37] : memref<5xf32, #tpu.memory_space<smem>>
    %47 = vector.broadcast %46 : f32 to vector<32x128xf32>
    %48 = arith.addf %45, %47 : vector<32x128xf32>
    %c0_38 = arith.constant 0 : index
    %c0_39 = arith.constant 0 : index
    %c0_40 = arith.constant 0 : index
    %c0_41 = arith.constant 0 : index
    %49 = vector.load %arg2[%c0_38, %c0_39, %c0_40, %c0_41] : memref<1x3x32x128xf32, #tpu.memory_space<vmem>>, vector<1x1x32x128xf32>
    %50 = vector.shape_cast %49 : vector<1x1x32x128xf32> to vector<32x128xf32>
    %c0_42 = arith.constant 0 : index
    %c1_43 = arith.constant 1 : index
    %51 = memref.load %arg5[%c0_42, %c1_43] : memref<6x5xf32, #tpu.memory_space<smem>>
    %52 = vector.broadcast %51 : f32 to vector<32x128xf32>
    %53 = arith.mulf %50, %52 : vector<32x128xf32>
    %c0_44 = arith.constant 0 : index
    %c1_45 = arith.constant 1 : index
    %c0_46 = arith.constant 0 : index
    %c0_47 = arith.constant 0 : index
    %54 = vector.load %arg2[%c0_44, %c1_45, %c0_46, %c0_47] : memref<1x3x32x128xf32, #tpu.memory_space<vmem>>, vector<1x1x32x128xf32>
    %55 = vector.shape_cast %54 : vector<1x1x32x128xf32> to vector<32x128xf32>
    %c1_48 = arith.constant 1 : index
    %c1_49 = arith.constant 1 : index
    %56 = memref.load %arg5[%c1_48, %c1_49] : memref<6x5xf32, #tpu.memory_space<smem>>
    %57 = vector.broadcast %56 : f32 to vector<32x128xf32>
    %58 = arith.mulf %55, %57 : vector<32x128xf32>
    %59 = arith.addf %53, %58 : vector<32x128xf32>
    %c0_50 = arith.constant 0 : index
    %c2_51 = arith.constant 2 : index
    %c0_52 = arith.constant 0 : index
    %c0_53 = arith.constant 0 : index
    %60 = vector.load %arg2[%c0_50, %c2_51, %c0_52, %c0_53] : memref<1x3x32x128xf32, #tpu.memory_space<vmem>>, vector<1x1x32x128xf32>
    %61 = vector.shape_cast %60 : vector<1x1x32x128xf32> to vector<32x128xf32>
    %c2_54 = arith.constant 2 : index
    %c1_55 = arith.constant 1 : index
    %62 = memref.load %arg5[%c2_54, %c1_55] : memref<6x5xf32, #tpu.memory_space<smem>>
    %63 = vector.broadcast %62 : f32 to vector<32x128xf32>
    %64 = arith.mulf %61, %63 : vector<32x128xf32>
    %65 = arith.addf %59, %64 : vector<32x128xf32>
    %c0_56 = arith.constant 0 : index
    %c0_57 = arith.constant 0 : index
    %c0_58 = arith.constant 0 : index
    %c0_59 = arith.constant 0 : index
    %66 = vector.load %arg3[%c0_56, %c0_57, %c0_58, %c0_59] : memref<1x3x32x128xf32, #tpu.memory_space<vmem>>, vector<1x1x32x128xf32>
    %67 = vector.shape_cast %66 : vector<1x1x32x128xf32> to vector<32x128xf32>
    %68 = arith.mulf %67, %7 : vector<32x128xf32>
    %c3_60 = arith.constant 3 : index
    %c1_61 = arith.constant 1 : index
    %69 = memref.load %arg5[%c3_60, %c1_61] : memref<6x5xf32, #tpu.memory_space<smem>>
    %70 = vector.broadcast %69 : f32 to vector<32x128xf32>
    %71 = arith.mulf %68, %70 : vector<32x128xf32>
    %72 = arith.addf %65, %71 : vector<32x128xf32>
    %c0_62 = arith.constant 0 : index
    %c1_63 = arith.constant 1 : index
    %c0_64 = arith.constant 0 : index
    %c0_65 = arith.constant 0 : index
    %73 = vector.load %arg3[%c0_62, %c1_63, %c0_64, %c0_65] : memref<1x3x32x128xf32, #tpu.memory_space<vmem>>, vector<1x1x32x128xf32>
    %74 = vector.shape_cast %73 : vector<1x1x32x128xf32> to vector<32x128xf32>
    %75 = arith.mulf %74, %7 : vector<32x128xf32>
    %c4_66 = arith.constant 4 : index
    %c1_67 = arith.constant 1 : index
    %76 = memref.load %arg5[%c4_66, %c1_67] : memref<6x5xf32, #tpu.memory_space<smem>>
    %77 = vector.broadcast %76 : f32 to vector<32x128xf32>
    %78 = arith.mulf %75, %77 : vector<32x128xf32>
    %79 = arith.addf %72, %78 : vector<32x128xf32>
    %c0_68 = arith.constant 0 : index
    %c2_69 = arith.constant 2 : index
    %c0_70 = arith.constant 0 : index
    %c0_71 = arith.constant 0 : index
    %80 = vector.load %arg3[%c0_68, %c2_69, %c0_70, %c0_71] : memref<1x3x32x128xf32, #tpu.memory_space<vmem>>, vector<1x1x32x128xf32>
    %81 = vector.shape_cast %80 : vector<1x1x32x128xf32> to vector<32x128xf32>
    %82 = arith.mulf %81, %7 : vector<32x128xf32>
    %c5_72 = arith.constant 5 : index
    %c1_73 = arith.constant 1 : index
    %83 = memref.load %arg5[%c5_72, %c1_73] : memref<6x5xf32, #tpu.memory_space<smem>>
    %84 = vector.broadcast %83 : f32 to vector<32x128xf32>
    %85 = arith.mulf %82, %84 : vector<32x128xf32>
    %86 = arith.addf %79, %85 : vector<32x128xf32>
    %c1_74 = arith.constant 1 : index
    %87 = memref.load %arg6[%c1_74] : memref<5xf32, #tpu.memory_space<smem>>
    %88 = vector.broadcast %87 : f32 to vector<32x128xf32>
    %89 = arith.addf %86, %88 : vector<32x128xf32>
    %c0_75 = arith.constant 0 : index
    %c0_76 = arith.constant 0 : index
    %c0_77 = arith.constant 0 : index
    %c0_78 = arith.constant 0 : index
    %90 = vector.load %arg2[%c0_75, %c0_76, %c0_77, %c0_78] : memref<1x3x32x128xf32, #tpu.memory_space<vmem>>, vector<1x1x32x128xf32>
    %91 = vector.shape_cast %90 : vector<1x1x32x128xf32> to vector<32x128xf32>
    %c0_79 = arith.constant 0 : index
    %c2_80 = arith.constant 2 : index
    %92 = memref.load %arg5[%c0_79, %c2_80] : memref<6x5xf32, #tpu.memory_space<smem>>
    %93 = vector.broadcast %92 : f32 to vector<32x128xf32>
    %94 = arith.mulf %91, %93 : vector<32x128xf32>
    %c0_81 = arith.constant 0 : index
    %c1_82 = arith.constant 1 : index
    %c0_83 = arith.constant 0 : index
    %c0_84 = arith.constant 0 : index
    %95 = vector.load %arg2[%c0_81, %c1_82, %c0_83, %c0_84] : memref<1x3x32x128xf32, #tpu.memory_space<vmem>>, vector<1x1x32x128xf32>
    %96 = vector.shape_cast %95 : vector<1x1x32x128xf32> to vector<32x128xf32>
    %c1_85 = arith.constant 1 : index
    %c2_86 = arith.constant 2 : index
    %97 = memref.load %arg5[%c1_85, %c2_86] : memref<6x5xf32, #tpu.memory_space<smem>>
    %98 = vector.broadcast %97 : f32 to vector<32x128xf32>
    %99 = arith.mulf %96, %98 : vector<32x128xf32>
    %100 = arith.addf %94, %99 : vector<32x128xf32>
    %c0_87 = arith.constant 0 : index
    %c2_88 = arith.constant 2 : index
    %c0_89 = arith.constant 0 : index
    %c0_90 = arith.constant 0 : index
    %101 = vector.load %arg2[%c0_87, %c2_88, %c0_89, %c0_90] : memref<1x3x32x128xf32, #tpu.memory_space<vmem>>, vector<1x1x32x128xf32>
    %102 = vector.shape_cast %101 : vector<1x1x32x128xf32> to vector<32x128xf32>
    %c2_91 = arith.constant 2 : index
    %c2_92 = arith.constant 2 : index
    %103 = memref.load %arg5[%c2_91, %c2_92] : memref<6x5xf32, #tpu.memory_space<smem>>
    %104 = vector.broadcast %103 : f32 to vector<32x128xf32>
    %105 = arith.mulf %102, %104 : vector<32x128xf32>
    %106 = arith.addf %100, %105 : vector<32x128xf32>
    %c0_93 = arith.constant 0 : index
    %c0_94 = arith.constant 0 : index
    %c0_95 = arith.constant 0 : index
    %c0_96 = arith.constant 0 : index
    %107 = vector.load %arg3[%c0_93, %c0_94, %c0_95, %c0_96] : memref<1x3x32x128xf32, #tpu.memory_space<vmem>>, vector<1x1x32x128xf32>
    %108 = vector.shape_cast %107 : vector<1x1x32x128xf32> to vector<32x128xf32>
    %109 = arith.mulf %108, %7 : vector<32x128xf32>
    %c3_97 = arith.constant 3 : index
    %c2_98 = arith.constant 2 : index
    %110 = memref.load %arg5[%c3_97, %c2_98] : memref<6x5xf32, #tpu.memory_space<smem>>
    %111 = vector.broadcast %110 : f32 to vector<32x128xf32>
    %112 = arith.mulf %109, %111 : vector<32x128xf32>
    %113 = arith.addf %106, %112 : vector<32x128xf32>
    %c0_99 = arith.constant 0 : index
    %c1_100 = arith.constant 1 : index
    %c0_101 = arith.constant 0 : index
    %c0_102 = arith.constant 0 : index
    %114 = vector.load %arg3[%c0_99, %c1_100, %c0_101, %c0_102] : memref<1x3x32x128xf32, #tpu.memory_space<vmem>>, vector<1x1x32x128xf32>
    %115 = vector.shape_cast %114 : vector<1x1x32x128xf32> to vector<32x128xf32>
    %116 = arith.mulf %115, %7 : vector<32x128xf32>
    %c4_103 = arith.constant 4 : index
    %c2_104 = arith.constant 2 : index
    %117 = memref.load %arg5[%c4_103, %c2_104] : memref<6x5xf32, #tpu.memory_space<smem>>
    %118 = vector.broadcast %117 : f32 to vector<32x128xf32>
    %119 = arith.mulf %116, %118 : vector<32x128xf32>
    %120 = arith.addf %113, %119 : vector<32x128xf32>
    %c0_105 = arith.constant 0 : index
    %c2_106 = arith.constant 2 : index
    %c0_107 = arith.constant 0 : index
    %c0_108 = arith.constant 0 : index
    %121 = vector.load %arg3[%c0_105, %c2_106, %c0_107, %c0_108] : memref<1x3x32x128xf32, #tpu.memory_space<vmem>>, vector<1x1x32x128xf32>
    %122 = vector.shape_cast %121 : vector<1x1x32x128xf32> to vector<32x128xf32>
    %123 = arith.mulf %122, %7 : vector<32x128xf32>
    %c5_109 = arith.constant 5 : index
    %c2_110 = arith.constant 2 : index
    %124 = memref.load %arg5[%c5_109, %c2_110] : memref<6x5xf32, #tpu.memory_space<smem>>
    %125 = vector.broadcast %124 : f32 to vector<32x128xf32>
    %126 = arith.mulf %123, %125 : vector<32x128xf32>
    %127 = arith.addf %120, %126 : vector<32x128xf32>
    %c2_111 = arith.constant 2 : index
    %128 = memref.load %arg6[%c2_111] : memref<5xf32, #tpu.memory_space<smem>>
    %129 = vector.broadcast %128 : f32 to vector<32x128xf32>
    %130 = arith.addf %127, %129 : vector<32x128xf32>
    %c0_112 = arith.constant 0 : index
    %c0_113 = arith.constant 0 : index
    %c0_114 = arith.constant 0 : index
    %c0_115 = arith.constant 0 : index
    %131 = vector.load %arg2[%c0_112, %c0_113, %c0_114, %c0_115] : memref<1x3x32x128xf32, #tpu.memory_space<vmem>>, vector<1x1x32x128xf32>
    %132 = vector.shape_cast %131 : vector<1x1x32x128xf32> to vector<32x128xf32>
    %c0_116 = arith.constant 0 : index
    %c3_117 = arith.constant 3 : index
    %133 = memref.load %arg5[%c0_116, %c3_117] : memref<6x5xf32, #tpu.memory_space<smem>>
    %134 = vector.broadcast %133 : f32 to vector<32x128xf32>
    %135 = arith.mulf %132, %134 : vector<32x128xf32>
    %c0_118 = arith.constant 0 : index
    %c1_119 = arith.constant 1 : index
    %c0_120 = arith.constant 0 : index
    %c0_121 = arith.constant 0 : index
    %136 = vector.load %arg2[%c0_118, %c1_119, %c0_120, %c0_121] : memref<1x3x32x128xf32, #tpu.memory_space<vmem>>, vector<1x1x32x128xf32>
    %137 = vector.shape_cast %136 : vector<1x1x32x128xf32> to vector<32x128xf32>
    %c1_122 = arith.constant 1 : index
    %c3_123 = arith.constant 3 : index
    %138 = memref.load %arg5[%c1_122, %c3_123] : memref<6x5xf32, #tpu.memory_space<smem>>
    %139 = vector.broadcast %138 : f32 to vector<32x128xf32>
    %140 = arith.mulf %137, %139 : vector<32x128xf32>
    %141 = arith.addf %135, %140 : vector<32x128xf32>
    %c0_124 = arith.constant 0 : index
    %c2_125 = arith.constant 2 : index
    %c0_126 = arith.constant 0 : index
    %c0_127 = arith.constant 0 : index
    %142 = vector.load %arg2[%c0_124, %c2_125, %c0_126, %c0_127] : memref<1x3x32x128xf32, #tpu.memory_space<vmem>>, vector<1x1x32x128xf32>
    %143 = vector.shape_cast %142 : vector<1x1x32x128xf32> to vector<32x128xf32>
    %c2_128 = arith.constant 2 : index
    %c3_129 = arith.constant 3 : index
    %144 = memref.load %arg5[%c2_128, %c3_129] : memref<6x5xf32, #tpu.memory_space<smem>>
    %145 = vector.broadcast %144 : f32 to vector<32x128xf32>
    %146 = arith.mulf %143, %145 : vector<32x128xf32>
    %147 = arith.addf %141, %146 : vector<32x128xf32>
    %c0_130 = arith.constant 0 : index
    %c0_131 = arith.constant 0 : index
    %c0_132 = arith.constant 0 : index
    %c0_133 = arith.constant 0 : index
    %148 = vector.load %arg3[%c0_130, %c0_131, %c0_132, %c0_133] : memref<1x3x32x128xf32, #tpu.memory_space<vmem>>, vector<1x1x32x128xf32>
    %149 = vector.shape_cast %148 : vector<1x1x32x128xf32> to vector<32x128xf32>
    %150 = arith.mulf %149, %7 : vector<32x128xf32>
    %c3_134 = arith.constant 3 : index
    %c3_135 = arith.constant 3 : index
    %151 = memref.load %arg5[%c3_134, %c3_135] : memref<6x5xf32, #tpu.memory_space<smem>>
    %152 = vector.broadcast %151 : f32 to vector<32x128xf32>
    %153 = arith.mulf %150, %152 : vector<32x128xf32>
    %154 = arith.addf %147, %153 : vector<32x128xf32>
    %c0_136 = arith.constant 0 : index
    %c1_137 = arith.constant 1 : index
    %c0_138 = arith.constant 0 : index
    %c0_139 = arith.constant 0 : index
    %155 = vector.load %arg3[%c0_136, %c1_137, %c0_138, %c0_139] : memref<1x3x32x128xf32, #tpu.memory_space<vmem>>, vector<1x1x32x128xf32>
    %156 = vector.shape_cast %155 : vector<1x1x32x128xf32> to vector<32x128xf32>
    %157 = arith.mulf %156, %7 : vector<32x128xf32>
    %c4_140 = arith.constant 4 : index
    %c3_141 = arith.constant 3 : index
    %158 = memref.load %arg5[%c4_140, %c3_141] : memref<6x5xf32, #tpu.memory_space<smem>>
    %159 = vector.broadcast %158 : f32 to vector<32x128xf32>
    %160 = arith.mulf %157, %159 : vector<32x128xf32>
    %161 = arith.addf %154, %160 : vector<32x128xf32>
    %c0_142 = arith.constant 0 : index
    %c2_143 = arith.constant 2 : index
    %c0_144 = arith.constant 0 : index
    %c0_145 = arith.constant 0 : index
    %162 = vector.load %arg3[%c0_142, %c2_143, %c0_144, %c0_145] : memref<1x3x32x128xf32, #tpu.memory_space<vmem>>, vector<1x1x32x128xf32>
    %163 = vector.shape_cast %162 : vector<1x1x32x128xf32> to vector<32x128xf32>
    %164 = arith.mulf %163, %7 : vector<32x128xf32>
    %c5_146 = arith.constant 5 : index
    %c3_147 = arith.constant 3 : index
    %165 = memref.load %arg5[%c5_146, %c3_147] : memref<6x5xf32, #tpu.memory_space<smem>>
    %166 = vector.broadcast %165 : f32 to vector<32x128xf32>
    %167 = arith.mulf %164, %166 : vector<32x128xf32>
    %168 = arith.addf %161, %167 : vector<32x128xf32>
    %c3_148 = arith.constant 3 : index
    %169 = memref.load %arg6[%c3_148] : memref<5xf32, #tpu.memory_space<smem>>
    %170 = vector.broadcast %169 : f32 to vector<32x128xf32>
    %171 = arith.addf %168, %170 : vector<32x128xf32>
    %172 = math.tanh %171 : vector<32x128xf32>
    %cst = arith.constant 1.000000e+00 : f32
    %173 = vector.broadcast %cst : f32 to vector<32x128xf32>
    %174 = arith.addf %172, %173 : vector<32x128xf32>
    %cst_149 = arith.constant 6.400000e+01 : f32
    %175 = vector.broadcast %cst_149 : f32 to vector<32x128xf32>
    %176 = arith.mulf %174, %175 : vector<32x128xf32>
    %cst_150 = arith.constant 5.000000e-01 : f32
    %177 = vector.broadcast %cst_150 : f32 to vector<32x128xf32>
    %178 = arith.subf %176, %177 : vector<32x128xf32>
    %c0_151 = arith.constant 0 : index
    %c0_152 = arith.constant 0 : index
    %c0_153 = arith.constant 0 : index
    %c0_154 = arith.constant 0 : index
    %179 = vector.load %arg2[%c0_151, %c0_152, %c0_153, %c0_154] : memref<1x3x32x128xf32, #tpu.memory_space<vmem>>, vector<1x1x32x128xf32>
    %180 = vector.shape_cast %179 : vector<1x1x32x128xf32> to vector<32x128xf32>
    %c0_155 = arith.constant 0 : index
    %c4_156 = arith.constant 4 : index
    %181 = memref.load %arg5[%c0_155, %c4_156] : memref<6x5xf32, #tpu.memory_space<smem>>
    %182 = vector.broadcast %181 : f32 to vector<32x128xf32>
    %183 = arith.mulf %180, %182 : vector<32x128xf32>
    %c0_157 = arith.constant 0 : index
    %c1_158 = arith.constant 1 : index
    %c0_159 = arith.constant 0 : index
    %c0_160 = arith.constant 0 : index
    %184 = vector.load %arg2[%c0_157, %c1_158, %c0_159, %c0_160] : memref<1x3x32x128xf32, #tpu.memory_space<vmem>>, vector<1x1x32x128xf32>
    %185 = vector.shape_cast %184 : vector<1x1x32x128xf32> to vector<32x128xf32>
    %c1_161 = arith.constant 1 : index
    %c4_162 = arith.constant 4 : index
    %186 = memref.load %arg5[%c1_161, %c4_162] : memref<6x5xf32, #tpu.memory_space<smem>>
    %187 = vector.broadcast %186 : f32 to vector<32x128xf32>
    %188 = arith.mulf %185, %187 : vector<32x128xf32>
    %189 = arith.addf %183, %188 : vector<32x128xf32>
    %c0_163 = arith.constant 0 : index
    %c2_164 = arith.constant 2 : index
    %c0_165 = arith.constant 0 : index
    %c0_166 = arith.constant 0 : index
    %190 = vector.load %arg2[%c0_163, %c2_164, %c0_165, %c0_166] : memref<1x3x32x128xf32, #tpu.memory_space<vmem>>, vector<1x1x32x128xf32>
    %191 = vector.shape_cast %190 : vector<1x1x32x128xf32> to vector<32x128xf32>
    %c2_167 = arith.constant 2 : index
    %c4_168 = arith.constant 4 : index
    %192 = memref.load %arg5[%c2_167, %c4_168] : memref<6x5xf32, #tpu.memory_space<smem>>
    %193 = vector.broadcast %192 : f32 to vector<32x128xf32>
    %194 = arith.mulf %191, %193 : vector<32x128xf32>
    %195 = arith.addf %189, %194 : vector<32x128xf32>
    %c0_169 = arith.constant 0 : index
    %c0_170 = arith.constant 0 : index
    %c0_171 = arith.constant 0 : index
    %c0_172 = arith.constant 0 : index
    %196 = vector.load %arg3[%c0_169, %c0_170, %c0_171, %c0_172] : memref<1x3x32x128xf32, #tpu.memory_space<vmem>>, vector<1x1x32x128xf32>
    %197 = vector.shape_cast %196 : vector<1x1x32x128xf32> to vector<32x128xf32>
    %198 = arith.mulf %197, %7 : vector<32x128xf32>
    %c3_173 = arith.constant 3 : index
    %c4_174 = arith.constant 4 : index
    %199 = memref.load %arg5[%c3_173, %c4_174] : memref<6x5xf32, #tpu.memory_space<smem>>
    %200 = vector.broadcast %199 : f32 to vector<32x128xf32>
    %201 = arith.mulf %198, %200 : vector<32x128xf32>
    %202 = arith.addf %195, %201 : vector<32x128xf32>
    %c0_175 = arith.constant 0 : index
    %c1_176 = arith.constant 1 : index
    %c0_177 = arith.constant 0 : index
    %c0_178 = arith.constant 0 : index
    %203 = vector.load %arg3[%c0_175, %c1_176, %c0_177, %c0_178] : memref<1x3x32x128xf32, #tpu.memory_space<vmem>>, vector<1x1x32x128xf32>
    %204 = vector.shape_cast %203 : vector<1x1x32x128xf32> to vector<32x128xf32>
    %205 = arith.mulf %204, %7 : vector<32x128xf32>
    %c4_179 = arith.constant 4 : index
    %c4_180 = arith.constant 4 : index
    %206 = memref.load %arg5[%c4_179, %c4_180] : memref<6x5xf32, #tpu.memory_space<smem>>
    %207 = vector.broadcast %206 : f32 to vector<32x128xf32>
    %208 = arith.mulf %205, %207 : vector<32x128xf32>
    %209 = arith.addf %202, %208 : vector<32x128xf32>
    %c0_181 = arith.constant 0 : index
    %c2_182 = arith.constant 2 : index
    %c0_183 = arith.constant 0 : index
    %c0_184 = arith.constant 0 : index
    %210 = vector.load %arg3[%c0_181, %c2_182, %c0_183, %c0_184] : memref<1x3x32x128xf32, #tpu.memory_space<vmem>>, vector<1x1x32x128xf32>
    %211 = vector.shape_cast %210 : vector<1x1x32x128xf32> to vector<32x128xf32>
    %212 = arith.mulf %211, %7 : vector<32x128xf32>
    %c5_185 = arith.constant 5 : index
    %c4_186 = arith.constant 4 : index
    %213 = memref.load %arg5[%c5_185, %c4_186] : memref<6x5xf32, #tpu.memory_space<smem>>
    %214 = vector.broadcast %213 : f32 to vector<32x128xf32>
    %215 = arith.mulf %212, %214 : vector<32x128xf32>
    %216 = arith.addf %209, %215 : vector<32x128xf32>
    %c4_187 = arith.constant 4 : index
    %217 = memref.load %arg6[%c4_187] : memref<5xf32, #tpu.memory_space<smem>>
    %218 = vector.broadcast %217 : f32 to vector<32x128xf32>
    %219 = arith.addf %216, %218 : vector<32x128xf32>
    %220 = math.tanh %219 : vector<32x128xf32>
    %cst_188 = arith.constant 1.000000e+00 : f32
    %221 = vector.broadcast %cst_188 : f32 to vector<32x128xf32>
    %222 = arith.addf %220, %221 : vector<32x128xf32>
    %cst_189 = arith.constant 6.400000e+01 : f32
    %223 = vector.broadcast %cst_189 : f32 to vector<32x128xf32>
    %224 = arith.mulf %222, %223 : vector<32x128xf32>
    %cst_190 = arith.constant 5.000000e-01 : f32
    %225 = vector.broadcast %cst_190 : f32 to vector<32x128xf32>
    %226 = arith.subf %224, %225 : vector<32x128xf32>
    %227 = vector.shape_cast %178 : vector<32x128xf32> to vector<1x4096xf32>
    %228 = vector.shape_cast %226 : vector<32x128xf32> to vector<1x4096xf32>
    %229 = tpu.iota {dimensions = array<i32: 0>} : vector<128x4096xi32>
    %230 = arith.sitofp %229 : vector<128x4096xi32> to vector<128x4096xf32>
    %231 = vector.broadcast %227 : vector<1x4096xf32> to vector<128x4096xf32>
    %232 = arith.subf %231, %230 : vector<128x4096xf32>
    %233 = math.absf %232 : vector<128x4096xf32>
    %cst_191 = arith.constant 1.000000e+00 : f32
    %234 = vector.broadcast %cst_191 : f32 to vector<128x4096xf32>
    %235 = arith.subf %234, %233 : vector<128x4096xf32>
    %cst_192 = arith.constant 0.000000e+00 : f32
    %236 = vector.broadcast %cst_192 : f32 to vector<128x4096xf32>
    %237 = arith.maximumf %236, %235 : vector<128x4096xf32>
    %238 = arith.truncf %237 : vector<128x4096xf32> to vector<128x4096xbf16>
    %cst_193 = arith.constant dense<0.000000e+00> : vector<128x4096xf32>
    %239 = tpu.matmul %3, %238, %cst_193 {dimension_numbers = #tpu.dot_dimension_numbers<[1], [0], [0], [1], [0, 0, 1, 1], [], []>} : vector<128x128xbf16>, vector<128x4096xbf16>, vector<128x4096xf32> -> vector<128x4096xf32>
    %240 = vector.broadcast %228 : vector<1x4096xf32> to vector<128x4096xf32>
    %241 = arith.subf %240, %230 : vector<128x4096xf32>
    %242 = math.absf %241 : vector<128x4096xf32>
    %cst_194 = arith.constant 1.000000e+00 : f32
    %243 = vector.broadcast %cst_194 : f32 to vector<128x4096xf32>
    %244 = arith.subf %243, %242 : vector<128x4096xf32>
    %cst_195 = arith.constant 0.000000e+00 : f32
    %245 = vector.broadcast %cst_195 : f32 to vector<128x4096xf32>
    %246 = arith.maximumf %245, %244 : vector<128x4096xf32>
    %247 = arith.mulf %239, %246 : vector<128x4096xf32>
    %cst_196 = arith.constant dense<0.000000e+00> : vector<4096xf32>
    %248 = vector.multi_reduction <add>, %247, %cst_196 [0] : vector<128x4096xf32> to vector<4096xf32>
    %249 = vector.shape_cast %248 : vector<4096xf32> to vector<1x4096xf32>
    %250 = vector.shape_cast %249 : vector<1x4096xf32> to vector<32x128xf32>
    %c0_197 = arith.constant 0 : index
    %c0_198 = arith.constant 0 : index
    %c0_199 = arith.constant 0 : index
    %c0_200 = arith.constant 0 : index
    %251 = vector.load %arg2[%c0_197, %c0_198, %c0_199, %c0_200] : memref<1x3x32x128xf32, #tpu.memory_space<vmem>>, vector<1x1x32x128xf32>
    %252 = vector.shape_cast %251 : vector<1x1x32x128xf32> to vector<32x128xf32>
    %c0_201 = arith.constant 0 : index
    %c3_202 = arith.constant 3 : index
    %253 = memref.load %arg7[%c0_201, %c3_202] : memref<7x4xf32, #tpu.memory_space<smem>>
    %254 = vector.broadcast %253 : f32 to vector<32x128xf32>
    %255 = arith.mulf %252, %254 : vector<32x128xf32>
    %c0_203 = arith.constant 0 : index
    %c1_204 = arith.constant 1 : index
    %c0_205 = arith.constant 0 : index
    %c0_206 = arith.constant 0 : index
    %256 = vector.load %arg2[%c0_203, %c1_204, %c0_205, %c0_206] : memref<1x3x32x128xf32, #tpu.memory_space<vmem>>, vector<1x1x32x128xf32>
    %257 = vector.shape_cast %256 : vector<1x1x32x128xf32> to vector<32x128xf32>
    %c1_207 = arith.constant 1 : index
    %c3_208 = arith.constant 3 : index
    %258 = memref.load %arg7[%c1_207, %c3_208] : memref<7x4xf32, #tpu.memory_space<smem>>
    %259 = vector.broadcast %258 : f32 to vector<32x128xf32>
    %260 = arith.mulf %257, %259 : vector<32x128xf32>
    %261 = arith.addf %255, %260 : vector<32x128xf32>
    %c0_209 = arith.constant 0 : index
    %c2_210 = arith.constant 2 : index
    %c0_211 = arith.constant 0 : index
    %c0_212 = arith.constant 0 : index
    %262 = vector.load %arg2[%c0_209, %c2_210, %c0_211, %c0_212] : memref<1x3x32x128xf32, #tpu.memory_space<vmem>>, vector<1x1x32x128xf32>
    %263 = vector.shape_cast %262 : vector<1x1x32x128xf32> to vector<32x128xf32>
    %c2_213 = arith.constant 2 : index
    %c3_214 = arith.constant 3 : index
    %264 = memref.load %arg7[%c2_213, %c3_214] : memref<7x4xf32, #tpu.memory_space<smem>>
    %265 = vector.broadcast %264 : f32 to vector<32x128xf32>
    %266 = arith.mulf %263, %265 : vector<32x128xf32>
    %267 = arith.addf %261, %266 : vector<32x128xf32>
    %c3_215 = arith.constant 3 : index
    %c3_216 = arith.constant 3 : index
    %268 = memref.load %arg7[%c3_215, %c3_216] : memref<7x4xf32, #tpu.memory_space<smem>>
    %269 = vector.broadcast %268 : f32 to vector<32x128xf32>
    %270 = arith.mulf %48, %269 : vector<32x128xf32>
    %271 = arith.addf %267, %270 : vector<32x128xf32>
    %c4_217 = arith.constant 4 : index
    %c3_218 = arith.constant 3 : index
    %272 = memref.load %arg7[%c4_217, %c3_218] : memref<7x4xf32, #tpu.memory_space<smem>>
    %273 = vector.broadcast %272 : f32 to vector<32x128xf32>
    %274 = arith.mulf %89, %273 : vector<32x128xf32>
    %275 = arith.addf %271, %274 : vector<32x128xf32>
    %c5_219 = arith.constant 5 : index
    %c3_220 = arith.constant 3 : index
    %276 = memref.load %arg7[%c5_219, %c3_220] : memref<7x4xf32, #tpu.memory_space<smem>>
    %277 = vector.broadcast %276 : f32 to vector<32x128xf32>
    %278 = arith.mulf %130, %277 : vector<32x128xf32>
    %279 = arith.addf %275, %278 : vector<32x128xf32>
    %c6 = arith.constant 6 : index
    %c3_221 = arith.constant 3 : index
    %280 = memref.load %arg7[%c6, %c3_221] : memref<7x4xf32, #tpu.memory_space<smem>>
    %281 = vector.broadcast %280 : f32 to vector<32x128xf32>
    %282 = arith.mulf %250, %281 : vector<32x128xf32>
    %283 = arith.addf %279, %282 : vector<32x128xf32>
    %c3_222 = arith.constant 3 : index
    %284 = memref.load %arg8[%c3_222] : memref<4xf32, #tpu.memory_space<smem>>
    %285 = vector.broadcast %284 : f32 to vector<32x128xf32>
    %286 = arith.addf %283, %285 : vector<32x128xf32>
    %287 = arith.negf %286 : vector<32x128xf32>
    %288 = math.exp %287 : vector<32x128xf32>
    %cst_223 = arith.constant 1.000000e+00 : f32
    %289 = vector.broadcast %cst_223 : f32 to vector<32x128xf32>
    %290 = arith.addf %289, %288 : vector<32x128xf32>
    %291 = arith.divf %289, %290 : vector<32x128xf32>
    %292 = arith.mulf %291, %250 : vector<32x128xf32>
    %cst_224 = arith.constant 1.000000e+00 : f32
    %293 = vector.broadcast %cst_224 : f32 to vector<32x128xf32>
    %294 = arith.subf %293, %292 : vector<32x128xf32>
    %c0_225 = arith.constant 0 : index
    %c0_226 = arith.constant 0 : index
    %c0_227 = arith.constant 0 : index
    %c0_228 = arith.constant 0 : index
    %295 = vector.load %arg2[%c0_225, %c0_226, %c0_227, %c0_228] : memref<1x3x32x128xf32, #tpu.memory_space<vmem>>, vector<1x1x32x128xf32>
    %296 = vector.shape_cast %295 : vector<1x1x32x128xf32> to vector<32x128xf32>
    %c0_229 = arith.constant 0 : index
    %c0_230 = arith.constant 0 : index
    %297 = memref.load %arg7[%c0_229, %c0_230] : memref<7x4xf32, #tpu.memory_space<smem>>
    %298 = vector.broadcast %297 : f32 to vector<32x128xf32>
    %299 = arith.mulf %296, %298 : vector<32x128xf32>
    %c0_231 = arith.constant 0 : index
    %c1_232 = arith.constant 1 : index
    %c0_233 = arith.constant 0 : index
    %c0_234 = arith.constant 0 : index
    %300 = vector.load %arg2[%c0_231, %c1_232, %c0_233, %c0_234] : memref<1x3x32x128xf32, #tpu.memory_space<vmem>>, vector<1x1x32x128xf32>
    %301 = vector.shape_cast %300 : vector<1x1x32x128xf32> to vector<32x128xf32>
    %c1_235 = arith.constant 1 : index
    %c0_236 = arith.constant 0 : index
    %302 = memref.load %arg7[%c1_235, %c0_236] : memref<7x4xf32, #tpu.memory_space<smem>>
    %303 = vector.broadcast %302 : f32 to vector<32x128xf32>
    %304 = arith.mulf %301, %303 : vector<32x128xf32>
    %305 = arith.addf %299, %304 : vector<32x128xf32>
    %c0_237 = arith.constant 0 : index
    %c2_238 = arith.constant 2 : index
    %c0_239 = arith.constant 0 : index
    %c0_240 = arith.constant 0 : index
    %306 = vector.load %arg2[%c0_237, %c2_238, %c0_239, %c0_240] : memref<1x3x32x128xf32, #tpu.memory_space<vmem>>, vector<1x1x32x128xf32>
    %307 = vector.shape_cast %306 : vector<1x1x32x128xf32> to vector<32x128xf32>
    %c2_241 = arith.constant 2 : index
    %c0_242 = arith.constant 0 : index
    %308 = memref.load %arg7[%c2_241, %c0_242] : memref<7x4xf32, #tpu.memory_space<smem>>
    %309 = vector.broadcast %308 : f32 to vector<32x128xf32>
    %310 = arith.mulf %307, %309 : vector<32x128xf32>
    %311 = arith.addf %305, %310 : vector<32x128xf32>
    %c3_243 = arith.constant 3 : index
    %c0_244 = arith.constant 0 : index
    %312 = memref.load %arg7[%c3_243, %c0_244] : memref<7x4xf32, #tpu.memory_space<smem>>
    %313 = vector.broadcast %312 : f32 to vector<32x128xf32>
    %314 = arith.mulf %48, %313 : vector<32x128xf32>
    %315 = arith.addf %311, %314 : vector<32x128xf32>
    %c4_245 = arith.constant 4 : index
    %c0_246 = arith.constant 0 : index
    %316 = memref.load %arg7[%c4_245, %c0_246] : memref<7x4xf32, #tpu.memory_space<smem>>
    %317 = vector.broadcast %316 : f32 to vector<32x128xf32>
    %318 = arith.mulf %89, %317 : vector<32x128xf32>
    %319 = arith.addf %315, %318 : vector<32x128xf32>
    %c5_247 = arith.constant 5 : index
    %c0_248 = arith.constant 0 : index
    %320 = memref.load %arg7[%c5_247, %c0_248] : memref<7x4xf32, #tpu.memory_space<smem>>
    %321 = vector.broadcast %320 : f32 to vector<32x128xf32>
    %322 = arith.mulf %130, %321 : vector<32x128xf32>
    %323 = arith.addf %319, %322 : vector<32x128xf32>
    %c6_249 = arith.constant 6 : index
    %c0_250 = arith.constant 0 : index
    %324 = memref.load %arg7[%c6_249, %c0_250] : memref<7x4xf32, #tpu.memory_space<smem>>
    %325 = vector.broadcast %324 : f32 to vector<32x128xf32>
    %326 = arith.mulf %250, %325 : vector<32x128xf32>
    %327 = arith.addf %323, %326 : vector<32x128xf32>
    %c0_251 = arith.constant 0 : index
    %328 = memref.load %arg8[%c0_251] : memref<4xf32, #tpu.memory_space<smem>>
    %329 = vector.broadcast %328 : f32 to vector<32x128xf32>
    %330 = arith.addf %327, %329 : vector<32x128xf32>
    %331 = math.tanh %330 : vector<32x128xf32>
    %332 = arith.mulf %48, %292 : vector<32x128xf32>
    %333 = arith.mulf %331, %294 : vector<32x128xf32>
    %334 = arith.addf %332, %333 : vector<32x128xf32>
    %c0_252 = arith.constant 0 : index
    %c0_253 = arith.constant 0 : index
    %c0_254 = arith.constant 0 : index
    %c0_255 = arith.constant 0 : index
    %335 = vector.load %arg9[%c0_252, %c0_253, %c0_254, %c0_255] : memref<1x3x32x128xf32, #tpu.memory_space<vmem>>, vector<1x1x32x128xf32>
    %336 = vector.shape_cast %335 : vector<1x1x32x128xf32> to vector<32x128xf32>
    %337 = vector.shape_cast %334 : vector<32x128xf32> to vector<1x1x32x128xf32>
    tpu.vector_store %arg9[%c0_252, %c0_253, %c0_254, %c0_255], %337 {strides = array<i32>} : memref<1x3x32x128xf32, #tpu.memory_space<vmem>>, vector<1x1x32x128xf32>,
    %c0_256 = arith.constant 0 : index
    %c0_257 = arith.constant 0 : index
    %c0_258 = arith.constant 0 : index
    %c0_259 = arith.constant 0 : index
    %338 = vector.load %arg2[%c0_256, %c0_257, %c0_258, %c0_259] : memref<1x3x32x128xf32, #tpu.memory_space<vmem>>, vector<1x1x32x128xf32>
    %339 = vector.shape_cast %338 : vector<1x1x32x128xf32> to vector<32x128xf32>
    %c0_260 = arith.constant 0 : index
    %c1_261 = arith.constant 1 : index
    %340 = memref.load %arg7[%c0_260, %c1_261] : memref<7x4xf32, #tpu.memory_space<smem>>
    %341 = vector.broadcast %340 : f32 to vector<32x128xf32>
    %342 = arith.mulf %339, %341 : vector<32x128xf32>
    %c0_262 = arith.constant 0 : index
    %c1_263 = arith.constant 1 : index
    %c0_264 = arith.constant 0 : index
    %c0_265 = arith.constant 0 : index
    %343 = vector.load %arg2[%c0_262, %c1_263, %c0_264, %c0_265] : memref<1x3x32x128xf32, #tpu.memory_space<vmem>>, vector<1x1x32x128xf32>
    %344 = vector.shape_cast %343 : vector<1x1x32x128xf32> to vector<32x128xf32>
    %c1_266 = arith.constant 1 : index
    %c1_267 = arith.constant 1 : index
    %345 = memref.load %arg7[%c1_266, %c1_267] : memref<7x4xf32, #tpu.memory_space<smem>>
    %346 = vector.broadcast %345 : f32 to vector<32x128xf32>
    %347 = arith.mulf %344, %346 : vector<32x128xf32>
    %348 = arith.addf %342, %347 : vector<32x128xf32>
    %c0_268 = arith.constant 0 : index
    %c2_269 = arith.constant 2 : index
    %c0_270 = arith.constant 0 : index
    %c0_271 = arith.constant 0 : index
    %349 = vector.load %arg2[%c0_268, %c2_269, %c0_270, %c0_271] : memref<1x3x32x128xf32, #tpu.memory_space<vmem>>, vector<1x1x32x128xf32>
    %350 = vector.shape_cast %349 : vector<1x1x32x128xf32> to vector<32x128xf32>
    %c2_272 = arith.constant 2 : index
    %c1_273 = arith.constant 1 : index
    %351 = memref.load %arg7[%c2_272, %c1_273] : memref<7x4xf32, #tpu.memory_space<smem>>
    %352 = vector.broadcast %351 : f32 to vector<32x128xf32>
    %353 = arith.mulf %350, %352 : vector<32x128xf32>
    %354 = arith.addf %348, %353 : vector<32x128xf32>
    %c3_274 = arith.constant 3 : index
    %c1_275 = arith.constant 1 : index
    %355 = memref.load %arg7[%c3_274, %c1_275] : memref<7x4xf32, #tpu.memory_space<smem>>
    %356 = vector.broadcast %355 : f32 to vector<32x128xf32>
    %357 = arith.mulf %48, %356 : vector<32x128xf32>
    %358 = arith.addf %354, %357 : vector<32x128xf32>
    %c4_276 = arith.constant 4 : index
    %c1_277 = arith.constant 1 : index
    %359 = memref.load %arg7[%c4_276, %c1_277] : memref<7x4xf32, #tpu.memory_space<smem>>
    %360 = vector.broadcast %359 : f32 to vector<32x128xf32>
    %361 = arith.mulf %89, %360 : vector<32x128xf32>
    %362 = arith.addf %358, %361 : vector<32x128xf32>
    %c5_278 = arith.constant 5 : index
    %c1_279 = arith.constant 1 : index
    %363 = memref.load %arg7[%c5_278, %c1_279] : memref<7x4xf32, #tpu.memory_space<smem>>
    %364 = vector.broadcast %363 : f32 to vector<32x128xf32>
    %365 = arith.mulf %130, %364 : vector<32x128xf32>
    %366 = arith.addf %362, %365 : vector<32x128xf32>
    %c6_280 = arith.constant 6 : index
    %c1_281 = arith.constant 1 : index
    %367 = memref.load %arg7[%c6_280, %c1_281] : memref<7x4xf32, #tpu.memory_space<smem>>
    %368 = vector.broadcast %367 : f32 to vector<32x128xf32>
    %369 = arith.mulf %250, %368 : vector<32x128xf32>
    %370 = arith.addf %366, %369 : vector<32x128xf32>
    %c1_282 = arith.constant 1 : index
    %371 = memref.load %arg8[%c1_282] : memref<4xf32, #tpu.memory_space<smem>>
    %372 = vector.broadcast %371 : f32 to vector<32x128xf32>
    %373 = arith.addf %370, %372 : vector<32x128xf32>
    %374 = math.tanh %373 : vector<32x128xf32>
    %375 = arith.mulf %89, %292 : vector<32x128xf32>
    %376 = arith.mulf %374, %294 : vector<32x128xf32>
    %377 = arith.addf %375, %376 : vector<32x128xf32>
    %c0_283 = arith.constant 0 : index
    %c1_284 = arith.constant 1 : index
    %c0_285 = arith.constant 0 : index
    %c0_286 = arith.constant 0 : index
    %378 = vector.load %arg9[%c0_283, %c1_284, %c0_285, %c0_286] : memref<1x3x32x128xf32, #tpu.memory_space<vmem>>, vector<1x1x32x128xf32>
    %379 = vector.shape_cast %378 : vector<1x1x32x128xf32> to vector<32x128xf32>
    %380 = vector.shape_cast %377 : vector<32x128xf32> to vector<1x1x32x128xf32>
    tpu.vector_store %arg9[%c0_283, %c1_284, %c0_285, %c0_286], %380 {strides = array<i32>} : memref<1x3x32x128xf32, #tpu.memory_space<vmem>>, vector<1x1x32x128xf32>,
    %c0_287 = arith.constant 0 : index
    %c0_288 = arith.constant 0 : index
    %c0_289 = arith.constant 0 : index
    %c0_290 = arith.constant 0 : index
    %381 = vector.load %arg2[%c0_287, %c0_288, %c0_289, %c0_290] : memref<1x3x32x128xf32, #tpu.memory_space<vmem>>, vector<1x1x32x128xf32>
    %382 = vector.shape_cast %381 : vector<1x1x32x128xf32> to vector<32x128xf32>
    %c0_291 = arith.constant 0 : index
    %c2_292 = arith.constant 2 : index
    %383 = memref.load %arg7[%c0_291, %c2_292] : memref<7x4xf32, #tpu.memory_space<smem>>
    %384 = vector.broadcast %383 : f32 to vector<32x128xf32>
    %385 = arith.mulf %382, %384 : vector<32x128xf32>
    %c0_293 = arith.constant 0 : index
    %c1_294 = arith.constant 1 : index
    %c0_295 = arith.constant 0 : index
    %c0_296 = arith.constant 0 : index
    %386 = vector.load %arg2[%c0_293, %c1_294, %c0_295, %c0_296] : memref<1x3x32x128xf32, #tpu.memory_space<vmem>>, vector<1x1x32x128xf32>
    %387 = vector.shape_cast %386 : vector<1x1x32x128xf32> to vector<32x128xf32>
    %c1_297 = arith.constant 1 : index
    %c2_298 = arith.constant 2 : index
    %388 = memref.load %arg7[%c1_297, %c2_298] : memref<7x4xf32, #tpu.memory_space<smem>>
    %389 = vector.broadcast %388 : f32 to vector<32x128xf32>
    %390 = arith.mulf %387, %389 : vector<32x128xf32>
    %391 = arith.addf %385, %390 : vector<32x128xf32>
    %c0_299 = arith.constant 0 : index
    %c2_300 = arith.constant 2 : index
    %c0_301 = arith.constant 0 : index
    %c0_302 = arith.constant 0 : index
    %392 = vector.load %arg2[%c0_299, %c2_300, %c0_301, %c0_302] : memref<1x3x32x128xf32, #tpu.memory_space<vmem>>, vector<1x1x32x128xf32>
    %393 = vector.shape_cast %392 : vector<1x1x32x128xf32> to vector<32x128xf32>
    %c2_303 = arith.constant 2 : index
    %c2_304 = arith.constant 2 : index
    %394 = memref.load %arg7[%c2_303, %c2_304] : memref<7x4xf32, #tpu.memory_space<smem>>
    %395 = vector.broadcast %394 : f32 to vector<32x128xf32>
    %396 = arith.mulf %393, %395 : vector<32x128xf32>
    %397 = arith.addf %391, %396 : vector<32x128xf32>
    %c3_305 = arith.constant 3 : index
    %c2_306 = arith.constant 2 : index
    %398 = memref.load %arg7[%c3_305, %c2_306] : memref<7x4xf32, #tpu.memory_space<smem>>
    %399 = vector.broadcast %398 : f32 to vector<32x128xf32>
    %400 = arith.mulf %48, %399 : vector<32x128xf32>
    %401 = arith.addf %397, %400 : vector<32x128xf32>
    %c4_307 = arith.constant 4 : index
    %c2_308 = arith.constant 2 : index
    %402 = memref.load %arg7[%c4_307, %c2_308] : memref<7x4xf32, #tpu.memory_space<smem>>
    %403 = vector.broadcast %402 : f32 to vector<32x128xf32>
    %404 = arith.mulf %89, %403 : vector<32x128xf32>
    %405 = arith.addf %401, %404 : vector<32x128xf32>
    %c5_309 = arith.constant 5 : index
    %c2_310 = arith.constant 2 : index
    %406 = memref.load %arg7[%c5_309, %c2_310] : memref<7x4xf32, #tpu.memory_space<smem>>
    %407 = vector.broadcast %406 : f32 to vector<32x128xf32>
    %408 = arith.mulf %130, %407 : vector<32x128xf32>
    %409 = arith.addf %405, %408 : vector<32x128xf32>
    %c6_311 = arith.constant 6 : index
    %c2_312 = arith.constant 2 : index
    %410 = memref.load %arg7[%c6_311, %c2_312] : memref<7x4xf32, #tpu.memory_space<smem>>
    %411 = vector.broadcast %410 : f32 to vector<32x128xf32>
    %412 = arith.mulf %250, %411 : vector<32x128xf32>
    %413 = arith.addf %409, %412 : vector<32x128xf32>
    %c2_313 = arith.constant 2 : index
    %414 = memref.load %arg8[%c2_313] : memref<4xf32, #tpu.memory_space<smem>>
    %415 = vector.broadcast %414 : f32 to vector<32x128xf32>
    %416 = arith.addf %413, %415 : vector<32x128xf32>
    %417 = math.tanh %416 : vector<32x128xf32>
    %418 = arith.mulf %130, %292 : vector<32x128xf32>
    %419 = arith.mulf %417, %294 : vector<32x128xf32>
    %420 = arith.addf %418, %419 : vector<32x128xf32>
    %c0_314 = arith.constant 0 : index
    %c2_315 = arith.constant 2 : index
    %c0_316 = arith.constant 0 : index
    %c0_317 = arith.constant 0 : index
    %421 = vector.load %arg9[%c0_314, %c2_315, %c0_316, %c0_317] : memref<1x3x32x128xf32, #tpu.memory_space<vmem>>, vector<1x1x32x128xf32>
    %422 = vector.shape_cast %421 : vector<1x1x32x128xf32> to vector<32x128xf32>
    %423 = vector.shape_cast %420 : vector<32x128xf32> to vector<1x1x32x128xf32>
    tpu.vector_store %arg9[%c0_314, %c2_315, %c0_316, %c0_317], %423 {strides = array<i32>} : memref<1x3x32x128xf32, #tpu.memory_space<vmem>>, vector<1x1x32x128xf32>,
    return
  }
  func.func @transform_0(%arg0: i32, %arg1: i32) -> (i32, i32, i32, i32) {
    %c0_i32 = arith.constant 0 : i32
    %c0_i32_0 = arith.constant 0 : i32
    %c0_i32_1 = arith.constant 0 : i32
    return %arg0, %c0_i32, %arg1, %c0_i32_0 : i32, i32, i32, i32
  }
  func.func @transform_1(%arg0: i32, %arg1: i32) -> (i32, i32, i32, i32) {
    %c0_i32 = arith.constant 0 : i32
    %c0_i32_0 = arith.constant 0 : i32
    %c0_i32_1 = arith.constant 0 : i32
    return %arg0, %c0_i32, %arg1, %c0_i32_0 : i32, i32, i32, i32
  }
  func.func @transform_2(%arg0: i32, %arg1: i32) -> (i32, i32, i32, i32) {
    %c0_i32 = arith.constant 0 : i32
    %c0_i32_0 = arith.constant 0 : i32
    %c0_i32_1 = arith.constant 0 : i32
    %c0_i32_2 = arith.constant 0 : i32
    return %arg0, %c0_i32, %c0_i32_0, %c0_i32_1 : i32, i32, i32, i32
  }
  func.func @transform_3(%arg0: i32, %arg1: i32) -> (i32, i32) {
    %c0_i32 = arith.constant 0 : i32
    %c0_i32_0 = arith.constant 0 : i32
    %c0_i32_1 = arith.constant 0 : i32
    return %c0_i32, %c0_i32_0 : i32, i32
  }
  func.func @transform_4(%arg0: i32, %arg1: i32) -> i32 {
    %c0_i32 = arith.constant 0 : i32
    %c0_i32_0 = arith.constant 0 : i32
    return %c0_i32 : i32
  }
  func.func @transform_5(%arg0: i32, %arg1: i32) -> (i32, i32) {
    %c0_i32 = arith.constant 0 : i32
    %c0_i32_0 = arith.constant 0 : i32
    %c0_i32_1 = arith.constant 0 : i32
    return %c0_i32, %c0_i32_0 : i32, i32
  }
  func.func @transform_6(%arg0: i32, %arg1: i32) -> i32 {
    %c0_i32 = arith.constant 0 : i32
    %c0_i32_0 = arith.constant 0 : i32
    return %c0_i32 : i32
  }
  func.func @transform_7(%arg0: i32, %arg1: i32) -> (i32, i32, i32, i32) {
    %c0_i32 = arith.constant 0 : i32
    %c0_i32_0 = arith.constant 0 : i32
    %c0_i32_1 = arith.constant 0 : i32
    return %arg0, %c0_i32, %arg1, %c0_i32_0 : i32, i32, i32, i32
  }
}

</mosaic_0001>

<llo_original>
// kernel: _forward_impl.1
$region0: #{_forward_impl.1}
  #allocation0 [shape = 'u32[]', space=smem, size = 0x4, offset = 0x4, fixed_abs, tag = 'smem constant byte address 0x4 - core index']
  #allocation1 [shape = 'u32[72,128]{1,0:T(1,128)}', space=vmem, size = 0x9000, scoped, tag = 'internal scratch']
  #allocation15 [shape = 's32[]', space=sflag, size = 0x4, offset = 0, fixed_abs, tag = 'sflag constant byte address 0x0 - dummy sync flag']
  #allocation17 [shape = 's32[]', space=sflag, size = 0x4, offset = 0, fixed_abs, tag = 'sflag constant byte address 0x0 - dummy sync flag']
  #allocation19 [shape = 's32[]', space=sflag, size = 0x4, offset = 0, fixed_abs, tag = 'sflag constant byte address 0x0 - dummy sync flag']
  %s0 = inlined_call_operand.hbm [shape: f32[2,3,128,128], index: 0, kind: input, shape index: {}]
  %s1 = inlined_call_operand.hbm [shape: f32[2,3,128,128], index: 1, kind: input, shape index: {}]
  %s2 = inlined_call_operand.vmem [shape: bf16[2,1,128,128], index: 2, kind: input, shape index: {}]
  %s3 = inlined_call_operand.vmem [shape: f32[6,5], index: 3, kind: input, shape index: {}]
  %s4 = inlined_call_operand.vmem [shape: f32[5], index: 4, kind: input, shape index: {}]
  %s5 = inlined_call_operand.vmem [shape: f32[7,4], index: 5, kind: input, shape index: {}]
  %s6 = inlined_call_operand.vmem [shape: f32[4], index: 6, kind: input, shape index: {}]
  %s7 = inlined_call_operand.hbm [shape: f32[2,3,128,128], index: 7, kind: output, shape index: {}]
  %s8 = sld [smem:[#allocation0]]
  $region85: #{_forward_impl.1} parent=0
    _
  %s10 = ssub.s32 1, %s8
  %s11 = scalar_select 0, %s10, %s8
  $region1: #{_forward_impl.1} parent=0
    #allocation2 [shape = 'u8[98304]{0}', space=vmem, size = 0x18000, scoped, tag = 'input window, operand 0']
    #allocation3 [shape = 's32[2]{0}', space=sflag, size = 0x8, scoped, tag = 'scoped memory for _forward_impl.1']
    #allocation4 [shape = 's32[2]{0}', space=sflag, size = 0x8, scoped, tag = 'scoped memory for _forward_impl.1']
    #allocation5 [shape = 's32[2]{0}', space=sflag, size = 0x8, scoped, tag = 'scoped memory for _forward_impl.1']
    #allocation6 [shape = 'u8[98304]{0}', space=vmem, size = 0x18000, scoped, tag = 'input window, operand 1']
    #allocation7 [shape = 's32[2]{0}', space=sflag, size = 0x8, scoped, tag = 'scoped memory for _forward_impl.1']
    #allocation8 [shape = 'u8[4096]{0}', space=smem, size = 0x1000, scoped, tag = 'input window, operand 3, single buffered']
    #allocation9 [shape = 'u8[512]{0}', space=smem, size = 0x200, scoped, tag = 'input window, operand 4, single buffered']
    #allocation10 [shape = 's32[1]{0}', space=sflag, size = 0x4, scoped, tag = 'scoped memory for _forward_impl.1']
    #allocation11 [shape = 'u8[4096]{0}', space=smem, size = 0x1000, scoped, tag = 'input window, operand 5, single buffered']
    #allocation12 [shape = 'u8[512]{0}', space=smem, size = 0x200, scoped, tag = 'input window, operand 6, single buffered']
    #allocation13 [shape = 's32[1]{0}', space=sflag, size = 0x4, scoped, tag = 'scoped memory for _forward_impl.1']
    #allocation14 [shape = 'u8[98304]{0}', space=vmem, size = 0x18000, scoped, tag = 'output window, operand 0']
    %12 = vsyncpa [#allocation3], 0
    %s13 = scalar_lea.sflag [#allocation3], 1
    %14 = vsyncpa %s13, 0
    %15 = vsyncpa [#allocation7], 0
    %s16 = scalar_lea.sflag [#allocation7], 1
    %17 = vsyncpa %s16, 0
    %18 = vsyncpa [#allocation5], 0
    %19 = vsyncpa [#allocation10], 0
    %20 = vsyncpa [#allocation13], 0
    %21 = vsyncpa [#allocation4], 0
    %s22 = scalar_lea.sflag [#allocation4], 1
    %23 = vsyncpa %s22, 0
    loop: start=0, step=1, limit=10
    $region2: #{_forward_impl.1} parent=1 // loop_pre_header
      _
    $region3: #{_forward_impl.1} parent=1 // loop_header
      %s25 = sphi 0, %s29
      %p26 = scmp.ge.s32.totalorder %s25, 10
      %s32 = sphi 0, %s44
      %s33 = sphi 0, %s40
      %s34 = sphi 0, %s32
      %s35 = sphi 0, %s33
      %s36 = sphi 0, %s34
      %s37 = sphi 0, %s35
      %s49 = sphi 0, %s51
      %s52 = sphi 0, %s49
      %s53 = sphi 0, %s52
      %s69 = sphi 0, %s53
      %s77 = sphi 0, %s79
      %s80 = sphi 0, %s77
      %s81 = sphi 0, %s80
      %s97 = sphi 0, %s81
      %s103 = sphi 0, %s105
      %s106 = sphi 0, %s103
      %s107 = sphi 0, %s106
      %s123 = sphi 0, %s107
      %s127 = sphi 0, %s127
      %s129 = sphi 0, %s127
      %s130 = sphi 0, %s129
      %s144 = sphi 0, %s130
      %s148 = sphi 0, %s148
      %s150 = sphi 0, %s148
      %s151 = sphi 0, %s150
      %s165 = sphi 0, %s151
      %s169 = sphi 0, %s169
      %s171 = sphi 0, %s169
      %s172 = sphi 0, %s171
      %s186 = sphi 0, %s172
      %s190 = sphi 0, %s190
      %s192 = sphi 0, %s190
      %s193 = sphi 0, %s192
      %s207 = sphi 0, %s193
      %s215 = sphi 0, %s217
      %s218 = sphi 0, %s215
      %s219 = sphi 0, %s218
      %s235 = sphi 0, %s219
    $region4: #{_forward_impl.1} parent=1 // loop_header_branch
      %28 = sbr.rel (%p26) target = $region8
    $region5: #{_forward_impl.1} parent=1 // loop_body
      %s30 = ssub.s32 %s25, 1
      %s31 = ssub.s32 %s25, 2
      %s38 = sadd.s32 1, %s33
      %p39 = scmp.ge.s32.totalorder %s38, 4
      %s40 = scalar_select %p39, 0, %s38
      %s41 = sadd.s32 1, %s32
      %s42 = scalar_select %p39, %s41, %s32
      %p43 = scmp.ge.s32.totalorder %s42, 2
      %s44 = scalar_select %p43, 0, %s42
      %s45 = ssub.s32 %s32, %s44
      %s46 = ssub.s32 %s33, %s40
      %s47 = sor.u32 %s45, %s46
      %p48 = scmp.eq.s32.totalorder %s47, 0
      %s50 = sadd.s32 %s49, 1
      %s51 = scalar_select %p48, %s49, %s50
      %p54 = pneg %p48
      %p55 = scmp.eq.s32.totalorder %s25, 7
      %p56 = por %p54, %p55
      %p57 = scmp.ne.s32.totalorder %s49, %s52
      %p58 = scmp.eq.s32.totalorder %s25, 0
      %p59 = por %p57, %p58
      %p60 = scmp.ne.s32.totalorder %s49, %s52
      %p61 = scmp.eq.s32.totalorder %s30, 7
      %p62 = por %p60, %p61
      %p63 = scmp.ne.s32.totalorder %s52, %s53
      %p64 = scmp.eq.s32.totalorder %s30, 0
      %p65 = por %p63, %p64
      %p66 = scmp.ne.s32.totalorder %s52, %s53
      %p67 = scmp.eq.s32.totalorder %s31, 7
      %p68 = por %p66, %p67
      %p70 = scmp.ne.s32.totalorder %s53, %s69
      %p71 = scmp.eq.s32.totalorder %s31, 0
      %p72 = por %p70, %p71
      %s73 = ssub.s32 %s32, %s44
      %s74 = ssub.s32 %s33, %s40
      %s75 = sor.u32 %s73, %s74
      %p76 = scmp.eq.s32.totalorder %s75, 0
      %s78 = sadd.s32 %s77, 1
      %s79 = scalar_select %p76, %s77, %s78
      %p82 = pneg %p76
      %p83 = scmp.eq.s32.totalorder %s25, 7
      %p84 = por %p82, %p83
      %p85 = scmp.ne.s32.totalorder %s77, %s80
      %p86 = scmp.eq.s32.totalorder %s25, 0
      %p87 = por %p85, %p86
      %p88 = scmp.ne.s32.totalorder %s77, %s80
      %p89 = scmp.eq.s32.totalorder %s30, 7
      %p90 = por %p88, %p89
      %p91 = scmp.ne.s32.totalorder %s80, %s81
      %p92 = scmp.eq.s32.totalorder %s30, 0
      %p93 = por %p91, %p92
      %p94 = scmp.ne.s32.totalorder %s80, %s81
      %p95 = scmp.eq.s32.totalorder %s31, 7
      %p96 = por %p94, %p95
      %p98 = scmp.ne.s32.totalorder %s81, %s97
      %p99 = scmp.eq.s32.totalorder %s31, 0
      %p100 = por %p98, %p99
      %s101 = ssub.s32 %s32, %s44
      %p102 = scmp.eq.s32.totalorder %s101, 0
      %s104 = sadd.s32 %s103, 1
      %s105 = scalar_select %p102, %s103, %s104
      %p108 = pneg %p102
      %p109 = scmp.eq.s32.totalorder %s25, 7
      %p110 = por %p108, %p109
      %p111 = scmp.ne.s32.totalorder %s103, %s106
      %p112 = scmp.eq.s32.totalorder %s25, 0
      %p113 = por %p111, %p112
      %p114 = scmp.ne.s32.totalorder %s103, %s106
      %p115 = scmp.eq.s32.totalorder %s30, 7
      %p116 = por %p114, %p115
      %p117 = scmp.ne.s32.totalorder %s106, %s107
      %p118 = scmp.eq.s32.totalorder %s30, 0
      %p119 = por %p117, %p118
      %p120 = scmp.ne.s32.totalorder %s106, %s107
      %p121 = scmp.eq.s32.totalorder %s31, 7
      %p122 = por %p120, %p121
      %p124 = scmp.ne.s32.totalorder %s107, %s123
      %p125 = scmp.eq.s32.totalorder %s31, 0
      %p126 = por %p124, %p125
      %s128 = sadd.s32 %s127, 1
      %p131 = scmp.eq.s32.totalorder %s25, 7
      %p132 = scmp.ne.s32.totalorder %s127, %s129
      %p133 = scmp.eq.s32.totalorder %s25, 0
      %p134 = por %p132, %p133
      %p135 = scmp.ne.s32.totalorder %s127, %s129
      %p136 = scmp.eq.s32.totalorder %s30, 7
      %p137 = por %p135, %p136
      %p138 = scmp.ne.s32.totalorder %s129, %s130
      %p139 = scmp.eq.s32.totalorder %s30, 0
      %p140 = por %p138, %p139
      %p141 = scmp.ne.s32.totalorder %s129, %s130
      %p142 = scmp.eq.s32.totalorder %s31, 7
      %p143 = por %p141, %p142
      %p145 = scmp.ne.s32.totalorder %s130, %s144
      %p146 = scmp.eq.s32.totalorder %s31, 0
      %p147 = por %p145, %p146
      %s149 = sadd.s32 %s148, 1
      %p152 = scmp.eq.s32.totalorder %s25, 7
      %p153 = scmp.ne.s32.totalorder %s148, %s150
      %p154 = scmp.eq.s32.totalorder %s25, 0
      %p155 = por %p153, %p154
      %p156 = scmp.ne.s32.totalorder %s148, %s150
      %p157 = scmp.eq.s32.totalorder %s30, 7
      %p158 = por %p156, %p157
      %p159 = scmp.ne.s32.totalorder %s150, %s151
      %p160 = scmp.eq.s32.totalorder %s30, 0
      %p161 = por %p159, %p160
      %p162 = scmp.ne.s32.totalorder %s150, %s151
      %p163 = scmp.eq.s32.totalorder %s31, 7
      %p164 = por %p162, %p163
      %p166 = scmp.ne.s32.totalorder %s151, %s165
      %p167 = scmp.eq.s32.totalorder %s31, 0
      %p168 = por %p166, %p167
      %s170 = sadd.s32 %s169, 1
      %p173 = scmp.eq.s32.totalorder %s25, 7
      %p174 = scmp.ne.s32.totalorder %s169, %s171
      %p175 = scmp.eq.s32.totalorder %s25, 0
      %p176 = por %p174, %p175
      %p177 = scmp.ne.s32.totalorder %s169, %s171
      %p178 = scmp.eq.s32.totalorder %s30, 7
      %p179 = por %p177, %p178
      %p180 = scmp.ne.s32.totalorder %s171, %s172
      %p181 = scmp.eq.s32.totalorder %s30, 0
      %p182 = por %p180, %p181
      %p183 = scmp.ne.s32.totalorder %s171, %s172
      %p184 = scmp.eq.s32.totalorder %s31, 7
      %p185 = por %p183, %p184
      %p187 = scmp.ne.s32.totalorder %s172, %s186
      %p188 = scmp.eq.s32.totalorder %s31, 0
      %p189 = por %p187, %p188
      %s191 = sadd.s32 %s190, 1
      %p194 = scmp.eq.s32.totalorder %s25, 7
      %p195 = scmp.ne.s32.totalorder %s190, %s192
      %p196 = scmp.eq.s32.totalorder %s25, 0
      %p197 = por %p195, %p196
      %p198 = scmp.ne.s32.totalorder %s190, %s192
      %p199 = scmp.eq.s32.totalorder %s30, 7
      %p200 = por %p198, %p199
      %p201 = scmp.ne.s32.totalorder %s192, %s193
      %p202 = scmp.eq.s32.totalorder %s30, 0
      %p203 = por %p201, %p202
      %p204 = scmp.ne.s32.totalorder %s192, %s193
      %p205 = scmp.eq.s32.totalorder %s31, 7
      %p206 = por %p204, %p205
      %p208 = scmp.ne.s32.totalorder %s193, %s207
      %p209 = scmp.eq.s32.totalorder %s31, 0
      %p210 = por %p208, %p209
      %s211 = ssub.s32 %s32, %s44
      %s212 = ssub.s32 %s33, %s40
      %s213 = sor.u32 %s211, %s212
      %p214 = scmp.eq.s32.totalorder %s213, 0
      %s216 = sadd.s32 %s215, 1
      %s217 = scalar_select %p214, %s215, %s216
      %p220 = pneg %p214
      %p221 = scmp.eq.s32.totalorder %s25, 7
      %p222 = por %p220, %p221
      %p223 = scmp.ne.s32.totalorder %s215, %s218
      %p224 = scmp.eq.s32.totalorder %s25, 0
      %p225 = por %p223, %p224
      %p226 = scmp.ne.s32.totalorder %s215, %s218
      %p227 = scmp.eq.s32.totalorder %s30, 7
      %p228 = por %p226, %p227
      %p229 = scmp.ne.s32.totalorder %s218, %s219
      %p230 = scmp.eq.s32.totalorder %s30, 0
      %p231 = por %p229, %p230
      %p232 = scmp.ne.s32.totalorder %s218, %s219
      %p233 = scmp.eq.s32.totalorder %s31, 7
      %p234 = por %p232, %p233
      %p236 = scmp.ne.s32.totalorder %s219, %s235
      %p237 = scmp.eq.s32.totalorder %s31, 0
      %p238 = por %p236, %p237
      %p239 = scmp.le.s32.totalorder 1, %s25
      %p240 = scmp.lt.s32.totalorder %s25, 9
      %p241 = pnand %p239, %p240
      %p242 = pneg %p241
      // Predicated region
      $region9: #{_forward_impl.1} parent=5 // pred_check
        _
      $region10: #{_forward_impl.1} parent=5 // pred_check_branch
        %244 = sbr.rel (%p241) target = $region12
      $region11: #{_forward_impl.1} parent=5 // pred_region
        %s245 = ssub.s32 %s25, 1
        // Predicated region
        $region13: #{_forward_impl.1} parent=11 // pred_check
          %p246 = pneg %p140
        $region14: #{_forward_impl.1} parent=11 // pred_check_branch
          %248 = sbr.rel (%p246) target = $region16
        $region15: #{_forward_impl.1} parent=11 // pred_region
          %250 = vsyncadd [#allocation5], 0
          %s252 = sshll.u32 %s3, 4
          %s253 = int_to_ptr.vmem [resolvable:$true] %s252
          %255 = dma.vmem_to_smem %s253, 128, [#allocation8], [#allocation5]
        $region16: #{_forward_impl.1} parent=11 // pred_fallthru
          _
        // Predicated region
        $region17: #{_forward_impl.1} parent=11 // pred_check
          %p256 = pneg %p161
        $region18: #{_forward_impl.1} parent=11 // pred_check_branch
          %258 = sbr.rel (%p256) target = $region20
        $region19: #{_forward_impl.1} parent=11 // pred_region
          %260 = vsyncadd [#allocation10], 0
          %s262 = sshll.u32 %s4, 4
          %s263 = int_to_ptr.vmem [resolvable:$true] %s262
          %265 = dma.vmem_to_smem %s263, 16, [#allocation9], [#allocation10]
        $region20: #{_forward_impl.1} parent=11 // pred_fallthru
          _
        // Predicated region
        $region21: #{_forward_impl.1} parent=11 // pred_check
          %p266 = pneg %p182
        $region22: #{_forward_impl.1} parent=11 // pred_check_branch
          %268 = sbr.rel (%p266) target = $region24
        $region23: #{_forward_impl.1} parent=11 // pred_region
          %270 = vsyncadd [#allocation10], 0
          %s272 = sshll.u32 %s5, 4
          %s273 = int_to_ptr.vmem [resolvable:$true] %s272
          %275 = dma.vmem_to_smem %s273, 128, [#allocation11], [#allocation10]
        $region24: #{_forward_impl.1} parent=11 // pred_fallthru
          _
        // Predicated region
        $region25: #{_forward_impl.1} parent=11 // pred_check
          %p276 = pneg %p203
        $region26: #{_forward_impl.1} parent=11 // pred_check_branch
          %278 = sbr.rel (%p276) target = $region28
        $region27: #{_forward_impl.1} parent=11 // pred_region
          %280 = vsyncadd [#allocation13], 0
          %s282 = sshll.u32 %s6, 4
          %s283 = int_to_ptr.vmem [resolvable:$true] %s282
          %285 = dma.vmem_to_smem %s283, 16, [#allocation12], [#allocation13]
        $region28: #{_forward_impl.1} parent=11 // pred_fallthru
          _
      $region12: #{_forward_impl.1} parent=5 // pred_fallthru
        _
      %p286 = scmp.lt.s32.totalorder %s25, 8
      // Predicated region
      $region29: #{_forward_impl.1} parent=5 // pred_check
        %p287 = pneg %p286
      $region30: #{_forward_impl.1} parent=5 // pred_check_branch
        %289 = sbr.rel (%p287) target = $region32
      $region31: #{_forward_impl.1} parent=5 // pred_region
        // Predicated region
        $region33: #{_forward_impl.1} parent=31 // pred_check
          %p290 = pneg %p59
        $region34: #{_forward_impl.1} parent=31 // pred_check_branch
          %292 = sbr.rel (%p290) target = $region36
        $region35: #{_forward_impl.1} parent=31 // pred_region
          #allocation16 [shape = 'u32[6]{0}', space=smem, size = 0x18, scoped, tag = 'DMA stride descriptor']
          %s293 = sand.u32 %s49, 1
          %s294 = scalar_lea.sflag [#allocation3], %s293
          %s295 = sand.u32 %s49, 1
          %s296 = smul.addr %s295, 96
          %s297 = scalar_lea.vmem [#allocation2], %s296
          %s298 = smul.u32 4, %s33
          %300 = vsyncadd %s294, 0
          %s301 = smul.addr %s32, 48
          %s302 = sadd.s32 %s298, %s301
          %s303 = smul.addr %s302, 8
          %s304 = scalar_lea.hbm %s0, %s303
          %s306 = sshll.u32 1, 14
          %s307 = sxor.u32 4294967295, %s306
          %s309 = sld [smem:[#allocation0]]
          %s310 = sadd.s32 2, %s309
          %s312 = sshll.u32 7, 26
          %s313 = sxor.u32 4294967295, %s312
          %s314 = sand.u32 0, %s313
          %s315 = sshll.u32 %s310, 26
          %s316 = sor.u32 %s314, %s315
          %s317 = sshll.u32 %s304, 4
          %s318 = int_to_ptr.hbm [resolvable:$true] %s317
          %s319 = sshll.u32 %s297, 4
          %s320 = int_to_ptr.vmem [resolvable:$true] %s319
          %326 = sst [smem:[#allocation16]] 2048
          %s327 = scalar_lea.smem [#allocation16], 1
          %328 = sst [smem:[%s327]] 512
          %s329 = scalar_lea.smem [#allocation16], 2
          %330 = sst [smem:[%s329]] 4
          %s331 = scalar_lea.smem [#allocation16], 3
          %332 = sst [smem:[%s331]] 128
          %s333 = scalar_lea.smem [#allocation16], 4
          %334 = sst [smem:[%s333]] 128
          %s335 = scalar_lea.smem [#allocation16], 5
          %336 = sst [smem:[%s335]] 8
          %338 = dma.general %s318, 1536, %s320, %s294, [#allocation15], [#allocation16], %s316, 0
        $region36: #{_forward_impl.1} parent=31 // pred_fallthru
          _
        // Predicated region
        $region37: #{_forward_impl.1} parent=31 // pred_check
          %p339 = pneg %p87
        $region38: #{_forward_impl.1} parent=31 // pred_check_branch
          %341 = sbr.rel (%p339) target = $region40
        $region39: #{_forward_impl.1} parent=31 // pred_region
          #allocation18 [shape = 'u32[6]{0}', space=smem, size = 0x18, scoped, tag = 'DMA stride descriptor']
          %s342 = sand.u32 %s77, 1
          %s343 = scalar_lea.sflag [#allocation7], %s342
          %s344 = sand.u32 %s77, 1
          %s345 = smul.addr %s344, 96
          %s346 = scalar_lea.vmem [#allocation6], %s345
          %s347 = smul.u32 4, %s33
          %349 = vsyncadd %s343, 0
          %s350 = smul.addr %s32, 48
          %s351 = sadd.s32 %s347, %s350
          %s352 = smul.addr %s351, 8
          %s353 = scalar_lea.hbm %s1, %s352
          %s355 = sshll.u32 1, 14
          %s356 = sxor.u32 4294967295, %s355
          %s358 = sld [smem:[#allocation0]]
          %s359 = sadd.s32 2, %s358
          %s361 = sshll.u32 7, 26
          %s362 = sxor.u32 4294967295, %s361
          %s363 = sand.u32 0, %s362
          %s364 = sshll.u32 %s359, 26
          %s365 = sor.u32 %s363, %s364
          %s366 = sshll.u32 %s353, 4
          %s367 = int_to_ptr.hbm [resolvable:$true] %s366
          %s368 = sshll.u32 %s346, 4
          %s369 = int_to_ptr.vmem [resolvable:$true] %s368
          %375 = sst [smem:[#allocation18]] 2048
          %s376 = scalar_lea.smem [#allocation18], 1
          %377 = sst [smem:[%s376]] 512
          %s378 = scalar_lea.smem [#allocation18], 2
          %379 = sst [smem:[%s378]] 4
          %s380 = scalar_lea.smem [#allocation18], 3
          %381 = sst [smem:[%s380]] 128
          %s382 = scalar_lea.smem [#allocation18], 4
          %383 = sst [smem:[%s382]] 128
          %s384 = scalar_lea.smem [#allocation18], 5
          %385 = sst [smem:[%s384]] 8
          %387 = dma.general %s367, 1536, %s369, %s343, [#allocation17], [#allocation18], %s365, 0
        $region40: #{_forward_impl.1} parent=31 // pred_fallthru
          _
        // Predicated region
        $region41: #{_forward_impl.1} parent=31 // pred_check
          %p388 = pneg %p113
        $region42: #{_forward_impl.1} parent=31 // pred_check_branch
          %390 = sbr.rel (%p388) target = $region44
        $region43: #{_forward_impl.1} parent=31 // pred_region
          %p391 = scmp.lt.s32.totalorder %s32, 1
          %s392 = scalar_select %p391, %s32, 1
          %s393 = smul.addr %s392, 16
          %s394 = smul.addr %s393, 4
          %s395 = scalar_lea.vmem %s2, %s394
        $region44: #{_forward_impl.1} parent=31 // pred_fallthru
          _
      $region32: #{_forward_impl.1} parent=5 // pred_fallthru
        _
      %p396 = scmp.le.s32.totalorder 1, %s25
      %p397 = scmp.lt.s32.totalorder %s25, 9
      %p398 = pnand %p396, %p397
      %p399 = pneg %p398
      // Predicated region
      $region45: #{_forward_impl.1} parent=5 // pred_check
        _
      $region46: #{_forward_impl.1} parent=5 // pred_check_branch
        %401 = sbr.rel (%p398) target = $region48
      $region47: #{_forward_impl.1} parent=5 // pred_region
        %s402 = ssub.s32 %s25, 1
        %s403 = sand.u32 %s52, 1
        %s404 = scalar_lea.sflag [#allocation3], %s403
        %s405 = sand.u32 %s52, 1
        %s406 = smul.addr %s405, 96
        %s407 = scalar_lea.vmem [#allocation2], %s406
        // Predicated region
        $region49: #{_forward_impl.1} parent=47 // pred_check
          %p408 = pneg %p65
        $region50: #{_forward_impl.1} parent=47 // pred_check_branch
          %410 = sbr.rel (%p408) target = $region52
        $region51: #{_forward_impl.1} parent=47 // pred_region
          %412 = dma.done %s404, 1536
        $region52: #{_forward_impl.1} parent=47 // pred_fallthru
          _
        %s413 = sand.u32 %s80, 1
        %s414 = scalar_lea.sflag [#allocation7], %s413
        %s415 = sand.u32 %s80, 1
        %s416 = smul.addr %s415, 96
        %s417 = scalar_lea.vmem [#allocation6], %s416
        // Predicated region
        $region53: #{_forward_impl.1} parent=47 // pred_check
          %p418 = pneg %p93
        $region54: #{_forward_impl.1} parent=47 // pred_check_branch
          %420 = sbr.rel (%p418) target = $region56
        $region55: #{_forward_impl.1} parent=47 // pred_region
          %422 = dma.done %s414, 1536
        $region56: #{_forward_impl.1} parent=47 // pred_fallthru
          _
        // Predicated region
        $region57: #{_forward_impl.1} parent=47 // pred_check
          %p423 = pneg %p140
        $region58: #{_forward_impl.1} parent=47 // pred_check_branch
          %425 = sbr.rel (%p423) target = $region60
        $region59: #{_forward_impl.1} parent=47 // pred_region
          %427 = dma.done [#allocation5], 128
        $region60: #{_forward_impl.1} parent=47 // pred_fallthru
          _
        // Predicated region
        $region61: #{_forward_impl.1} parent=47 // pred_check
          %p428 = pneg %p161
        $region62: #{_forward_impl.1} parent=47 // pred_check_branch
          %430 = sbr.rel (%p428) target = $region64
        $region63: #{_forward_impl.1} parent=47 // pred_region
          %432 = dma.done [#allocation10], 16
        $region64: #{_forward_impl.1} parent=47 // pred_fallthru
          _
        // Predicated region
        $region65: #{_forward_impl.1} parent=47 // pred_check
          %p433 = pneg %p182
        $region66: #{_forward_impl.1} parent=47 // pred_check_branch
          %435 = sbr.rel (%p433) target = $region68
        $region67: #{_forward_impl.1} parent=47 // pred_region
          %437 = dma.done [#allocation10], 128
        $region68: #{_forward_impl.1} parent=47 // pred_fallthru
          _
        // Predicated region
        $region69: #{_forward_impl.1} parent=47 // pred_check
          %p438 = pneg %p203
        $region70: #{_forward_impl.1} parent=47 // pred_check_branch
          %440 = sbr.rel (%p438) target = $region72
        $region71: #{_forward_impl.1} parent=47 // pred_region
          %442 = dma.done [#allocation13], 16
        $region72: #{_forward_impl.1} parent=47 // pred_fallthru
          _
        %443 = sfence
        %s444 = sand.u32 %s52, 1
        %s445 = scalar_lea.sflag [#allocation3], %s444
        %s446 = sand.u32 %s52, 1
        %s447 = smul.addr %s446, 96
        %s448 = scalar_lea.vmem [#allocation2], %s447
        %p449 = pneg %p65
        %p450 = pneg %p62
        %s451 = sand.u32 %s80, 1
        %s452 = scalar_lea.sflag [#allocation7], %s451
        %s453 = sand.u32 %s80, 1
        %s454 = smul.addr %s453, 96
        %s455 = scalar_lea.vmem [#allocation6], %s454
        %p456 = pneg %p93
        %p457 = pneg %p90
        %p458 = scmp.lt.s32.totalorder %s34, 1
        %s459 = scalar_select %p458, %s34, 1
        %s460 = smul.addr %s459, 16
        %s461 = smul.addr %s460, 4
        %s462 = scalar_lea.vmem %s2, %s461
        %p463 = pneg %p119
        %p464 = pneg %p116
        %p465 = pneg %p140
        %p466 = pneg %p137
        %p467 = pneg %p161
        %p468 = pneg %p158
        %p469 = pneg %p182
        %p470 = pneg %p179
        %p471 = pneg %p203
        %p472 = pneg %p200
        %p473 = pneg %p231
        %p474 = pneg %p228
        %s475 = sand.u32 %s218, 1
        %s476 = scalar_lea.sflag [#allocation4], %s475
        %s477 = sand.u32 %s218, 1
        %s478 = smul.addr %s477, 96
        %s479 = scalar_lea.vmem [#allocation14], %s478
        %s480 = smul.u32 4, %s35
        %s481 = smul.u32 4, %s35
        %p482 = scmp.lt.s32.totalorder %s34, 1
        %s483 = scalar_select %p482, %s34, 1
        %s484 = smul.addr %s483, 16
        %s485 = smul.addr %s484, 4
        %s486 = scalar_lea.vmem %s2, %s485
        %s487 = smul.u32 4, %s35
        %s488 = smul.u32 %s35, 32
        %v489 = vld [vmem:[%s486] sm:$0xf]
        %v490 = vld [vmem:[%s486 + $0x4] sm:$0xf]
        %v491 = vld [vmem:[%s486 + $0x8] sm:$0xf]
        %v492 = vld [vmem:[%s486 + $0xc] sm:$0xf]
        %v493 = vld [vmem:[%s486 + $0x10] sm:$0xf]
        %v494 = vld [vmem:[%s486 + $0x14] sm:$0xf]
        %v495 = vld [vmem:[%s486 + $0x18] sm:$0xf]
        %v496 = vld [vmem:[%s486 + $0x1c] sm:$0xf]
        %v497 = vld [vmem:[%s486 + $0x20] sm:$0xf]
        %v498 = vld [vmem:[%s486 + $0x24] sm:$0xf]
        %v499 = vld [vmem:[%s486 + $0x28] sm:$0xf]
        %v500 = vld [vmem:[%s486 + $0x2c] sm:$0xf]
        %v501 = vld [vmem:[%s486 + $0x30] sm:$0xf]
        %v502 = vld [vmem:[%s486 + $0x34] sm:$0xf]
        %v503 = vld [vmem:[%s486 + $0x38] sm:$0xf]
        %v504 = vld [vmem:[%s486 + $0x3c] sm:$0xf]
        %s505 = sshra.s32 %s488, 3
        %s506 = sand.u32 %s488, 7
        %s507 = smul.addr %s505, 4
        %s508 = scalar_lea.vmem %s486, %s507
        %v509 = vld [vmem:[%s508] sm:$0xf]
        %v510 = vld [vmem:[%s508 + $0x4] sm:$0xf]
        %v511 = vld [vmem:[%s508 + $0x8] sm:$0xf]
        %v512 = vld [vmem:[%s508 + $0xc] sm:$0xf]
        %v513 = vunpack.c.l.bf16 %v509
        %v514 = vunpack.c.l.bf16 %v510
        %v515 = vunpack.c.l.bf16 %v511
        %v516 = vunpack.c.l.bf16 %v512
        %v517 = vld [vmem:[%s407] sm:$0xff]
        %v518 = vld [vmem:[%s407 + $0x8] sm:$0xff]
        %v519 = vld [vmem:[%s407 + $0x10] sm:$0xff]
        %v520 = vld [vmem:[%s407 + $0x18] sm:$0xff]
        %s521 = sld [smem:[#allocation8]]
        %v522 = vstv %s521
        %v523 = vmul.f32 %v517, %v522
        %v524 = vmul.f32 %v518, %v522
        %v525 = vmul.f32 %v519, %v522
        %v526 = vmul.f32 %v520, %v522
        %s527 = scalar_lea.vmem %s407, 32 [#allocation2]
        %v528 = vld [vmem:[%s527] sm:$0xff]
        %v529 = vld [vmem:[%s527 + $0x8] sm:$0xff]
        %v530 = vld [vmem:[%s527 + $0x10] sm:$0xff]
        %v531 = vld [vmem:[%s527 + $0x18] sm:$0xff]
        %s532 = sld [smem:[#allocation8 + $0x80]]
        %v533 = vstv %s532
        %v534 = vmul.f32 %v528, %v533
        %v535 = vmul.f32 %v529, %v533
        %v536 = vmul.f32 %v530, %v533
        %v537 = vmul.f32 %v531, %v533
        %v538 = vadd.f32 %v523, %v534
        %v539 = vadd.f32 %v524, %v535
        %v540 = vadd.f32 %v525, %v536
        %v541 = vadd.f32 %v526, %v537
        %s542 = scalar_lea.vmem %s407, 64 [#allocation2]
        %v543 = vld [vmem:[%s542] sm:$0xff]
        %v544 = vld [vmem:[%s542 + $0x8] sm:$0xff]
        %v545 = vld [vmem:[%s542 + $0x10] sm:$0xff]
        %v546 = vld [vmem:[%s542 + $0x18] sm:$0xff]
        %s547 = sld [smem:[#allocation8 + $0x100]]
        %v548 = vstv %s547
        %v549 = vmul.f32 %v543, %v548
        %v550 = vmul.f32 %v544, %v548
        %v551 = vmul.f32 %v545, %v548
        %v552 = vmul.f32 %v546, %v548
        %v553 = vadd.f32 %v538, %v549
        %v554 = vadd.f32 %v539, %v550
        %v555 = vadd.f32 %v540, %v551
        %v556 = vadd.f32 %v541, %v552
        %v557 = vld [vmem:[%s417] sm:$0xff]
        %v558 = vld [vmem:[%s417 + $0x8] sm:$0xff]
        %v559 = vld [vmem:[%s417 + $0x10] sm:$0xff]
        %v560 = vld [vmem:[%s417 + $0x18] sm:$0xff]
        %v561 = vmul.f32 %v557, %v513
        %v562 = vmul.f32 %v558, %v514
        %v563 = vmul.f32 %v559, %v515
        %v564 = vmul.f32 %v560, %v516
        %s565 = sld [smem:[#allocation8 + $0x180]]
        %v566 = vstv %s565
        %v567 = vmul.f32 %v561, %v566
        %v568 = vmul.f32 %v562, %v566
        %v569 = vmul.f32 %v563, %v566
        %v570 = vmul.f32 %v564, %v566
        %v571 = vadd.f32 %v553, %v567
        %v572 = vadd.f32 %v554, %v568
        %v573 = vadd.f32 %v555, %v569
        %v574 = vadd.f32 %v556, %v570
        %s575 = scalar_lea.vmem %s417, 32 [#allocation6]
        %v576 = vld [vmem:[%s575] sm:$0xff]
        %v577 = vld [vmem:[%s575 + $0x8] sm:$0xff]
        %v578 = vld [vmem:[%s575 + $0x10] sm:$0xff]
        %v579 = vld [vmem:[%s575 + $0x18] sm:$0xff]
        %v580 = vmul.f32 %v576, %v513
        %v581 = vmul.f32 %v577, %v514
        %v582 = vmul.f32 %v578, %v515
        %v583 = vmul.f32 %v579, %v516
        %s584 = sld [smem:[#allocation8 + $0x200]]
        %v585 = vstv %s584
        %v586 = vmul.f32 %v580, %v585
        %v587 = vmul.f32 %v581, %v585
        %v588 = vmul.f32 %v582, %v585
        %v589 = vmul.f32 %v583, %v585
        %v590 = vadd.f32 %v571, %v586
        %v591 = vadd.f32 %v572, %v587
        %v592 = vadd.f32 %v573, %v588
        %v593 = vadd.f32 %v574, %v589
        %s594 = scalar_lea.vmem %s417, 64 [#allocation6]
        %v595 = vld [vmem:[%s594] sm:$0xff]
        %v596 = vld [vmem:[%s594 + $0x8] sm:$0xff]
        %v597 = vld [vmem:[%s594 + $0x10] sm:$0xff]
        %v598 = vld [vmem:[%s594 + $0x18] sm:$0xff]
        %v599 = vmul.f32 %v595, %v513
        %v600 = vmul.f32 %v596, %v514
        %v601 = vmul.f32 %v597, %v515
        %v602 = vmul.f32 %v598, %v516
        %s603 = sld [smem:[#allocation8 + $0x280]]
        %v604 = vstv %s603
        %v605 = vmul.f32 %v599, %v604
        %v606 = vmul.f32 %v600, %v604
        %v607 = vmul.f32 %v601, %v604
        %v608 = vmul.f32 %v602, %v604
        %v609 = vadd.f32 %v590, %v605
        %v610 = vadd.f32 %v591, %v606
        %v611 = vadd.f32 %v592, %v607
        %v612 = vadd.f32 %v593, %v608
        %s613 = sld [smem:[#allocation9]]
        %v614 = vstv %s613
        %v615 = vadd.f32 %v609, %v614
        %v616 = vadd.f32 %v610, %v614
        %v617 = vadd.f32 %v611, %v614
        %v618 = vadd.f32 %v612, %v614
        %s619 = sld [smem:[#allocation8 + $0x1]]
        %v620 = vstv %s619
        %v621 = vmul.f32 %v517, %v620
        %v622 = vmul.f32 %v518, %v620
        %v623 = vmul.f32 %v519, %v620
        %v624 = vmul.f32 %v520, %v620
        %s625 = sld [smem:[#allocation8 + $0x81]]
        %v626 = vstv %s625
        %v627 = vmul.f32 %v528, %v626
        %v628 = vmul.f32 %v529, %v626
        %v629 = vmul.f32 %v530, %v626
        %v630 = vmul.f32 %v531, %v626
        %v631 = vadd.f32 %v621, %v627
        %v632 = vadd.f32 %v622, %v628
        %v633 = vadd.f32 %v623, %v629
        %v634 = vadd.f32 %v624, %v630
        %s635 = sld [smem:[#allocation8 + $0x101]]
        %v636 = vstv %s635
        %v637 = vmul.f32 %v543, %v636
        %v638 = vmul.f32 %v544, %v636
        %v639 = vmul.f32 %v545, %v636
        %v640 = vmul.f32 %v546, %v636
        %v641 = vadd.f32 %v631, %v637
        %v642 = vadd.f32 %v632, %v638
        %v643 = vadd.f32 %v633, %v639
        %v644 = vadd.f32 %v634, %v640
        %s645 = sld [smem:[#allocation8 + $0x181]]
        %v646 = vstv %s645
        %v647 = vmul.f32 %v561, %v646
        %v648 = vmul.f32 %v562, %v646
        %v649 = vmul.f32 %v563, %v646
        %v650 = vmul.f32 %v564, %v646
        %v651 = vadd.f32 %v641, %v647
        %v652 = vadd.f32 %v642, %v648
        %v653 = vadd.f32 %v643, %v649
        %v654 = vadd.f32 %v644, %v650
        %s655 = sld [smem:[#allocation8 + $0x201]]
        %v656 = vstv %s655
        %v657 = vmul.f32 %v580, %v656
        %v658 = vmul.f32 %v581, %v656
        %v659 = vmul.f32 %v582, %v656
        %v660 = vmul.f32 %v583, %v656
        %v661 = vadd.f32 %v651, %v657
        %v662 = vadd.f32 %v652, %v658
        %v663 = vadd.f32 %v653, %v659
        %v664 = vadd.f32 %v654, %v660
        %s665 = sld [smem:[#allocation8 + $0x281]]
        %v666 = vstv %s665
        %v667 = vmul.f32 %v599, %v666
        %v668 = vmul.f32 %v600, %v666
        %v669 = vmul.f32 %v601, %v666
        %v670 = vmul.f32 %v602, %v666
        %v671 = vadd.f32 %v661, %v667
        %v672 = vadd.f32 %v662, %v668
        %v673 = vadd.f32 %v663, %v669
        %v674 = vadd.f32 %v664, %v670
        %s675 = sld [smem:[#allocation9 + $0x1]]
        %v676 = vstv %s675
        %v677 = vadd.f32 %v671, %v676
        %v678 = vadd.f32 %v672, %v676
        %v679 = vadd.f32 %v673, %v676
        %v680 = vadd.f32 %v674, %v676
        %s681 = sld [smem:[#allocation8 + $0x2]]
        %v682 = vstv %s681
        %v683 = vmul.f32 %v517, %v682
        %v684 = vmul.f32 %v518, %v682
        %v685 = vmul.f32 %v519, %v682
        %v686 = vmul.f32 %v520, %v682
        %s687 = sld [smem:[#allocation8 + $0x82]]
        %v688 = vstv %s687
        %v689 = vmul.f32 %v528, %v688
        %v690 = vmul.f32 %v529, %v688
        %v691 = vmul.f32 %v530, %v688
        %v692 = vmul.f32 %v531, %v688
        %v693 = vadd.f32 %v683, %v689
        %v694 = vadd.f32 %v684, %v690
        %v695 = vadd.f32 %v685, %v691
        %v696 = vadd.f32 %v686, %v692
        %s697 = sld [smem:[#allocation8 + $0x102]]
        %v698 = vstv %s697
        %v699 = vmul.f32 %v543, %v698
        %v700 = vmul.f32 %v544, %v698
        %v701 = vmul.f32 %v545, %v698
        %v702 = vmul.f32 %v546, %v698
        %v703 = vadd.f32 %v693, %v699
        %v704 = vadd.f32 %v694, %v700
        %v705 = vadd.f32 %v695, %v701
        %v706 = vadd.f32 %v696, %v702
        %s707 = sld [smem:[#allocation8 + $0x182]]
        %v708 = vstv %s707
        %v709 = vmul.f32 %v561, %v708
        %v710 = vmul.f32 %v562, %v708
        %v711 = vmul.f32 %v563, %v708
        %v712 = vmul.f32 %v564, %v708
        %v713 = vadd.f32 %v703, %v709
        %v714 = vadd.f32 %v704, %v710
        %v715 = vadd.f32 %v705, %v711
        %v716 = vadd.f32 %v706, %v712
        %s717 = sld [smem:[#allocation8 + $0x202]]
        %v718 = vstv %s717
        %v719 = vmul.f32 %v580, %v718
        %v720 = vmul.f32 %v581, %v718
        %v721 = vmul.f32 %v582, %v718
        %v722 = vmul.f32 %v583, %v718
        %v723 = vadd.f32 %v713, %v719
        %v724 = vadd.f32 %v714, %v720
        %v725 = vadd.f32 %v715, %v721
        %v726 = vadd.f32 %v716, %v722
        %s727 = sld [smem:[#allocation8 + $0x282]]
        %v728 = vstv %s727
        %v729 = vmul.f32 %v599, %v728
        %v730 = vmul.f32 %v600, %v728
        %v731 = vmul.f32 %v601, %v728
        %v732 = vmul.f32 %v602, %v728
        %v733 = vadd.f32 %v723, %v729
        %v734 = vadd.f32 %v724, %v730
        %v735 = vadd.f32 %v725, %v731
        %v736 = vadd.f32 %v726, %v732
        %s737 = sld [smem:[#allocation9 + $0x2]]
        %v738 = vstv %s737
        %v739 = vadd.f32 %v733, %v738
        %v740 = vadd.f32 %v734, %v738
        %v741 = vadd.f32 %v735, %v738
        %v742 = vadd.f32 %v736, %v738
        %s743 = sld [smem:[#allocation8 + $0x3]]
        %v744 = vstv %s743
        %v745 = vmul.f32 %v517, %v744
        %v746 = vmul.f32 %v518, %v744
        %v747 = vmul.f32 %v519, %v744
        %v748 = vmul.f32 %v520, %v744
        %s749 = sld [smem:[#allocation8 + $0x83]]
        %v750 = vstv %s749
        %v751 = vmul.f32 %v528, %v750
        %v752 = vmul.f32 %v529, %v750
        %v753 = vmul.f32 %v530, %v750
        %v754 = vmul.f32 %v531, %v750
        %v755 = vadd.f32 %v745, %v751
        %v756 = vadd.f32 %v746, %v752
        %v757 = vadd.f32 %v747, %v753
        %v758 = vadd.f32 %v748, %v754
        %s759 = sld [smem:[#allocation8 + $0x103]]
        %v760 = vstv %s759
        %v761 = vmul.f32 %v543, %v760
        %v762 = vmul.f32 %v544, %v760
        %v763 = vmul.f32 %v545, %v760
        %v764 = vmul.f32 %v546, %v760
        %v765 = vadd.f32 %v755, %v761
        %v766 = vadd.f32 %v756, %v762
        %v767 = vadd.f32 %v757, %v763
        %v768 = vadd.f32 %v758, %v764
        %s769 = sld [smem:[#allocation8 + $0x183]]
        %v770 = vstv %s769
        %v771 = vmul.f32 %v561, %v770
        %v772 = vmul.f32 %v562, %v770
        %v773 = vmul.f32 %v563, %v770
        %v774 = vmul.f32 %v564, %v770
        %v775 = vadd.f32 %v765, %v771
        %v776 = vadd.f32 %v766, %v772
        %v777 = vadd.f32 %v767, %v773
        %v778 = vadd.f32 %v768, %v774
        %s779 = sld [smem:[#allocation8 + $0x203]]
        %v780 = vstv %s779
        %v781 = vmul.f32 %v580, %v780
        %v782 = vmul.f32 %v581, %v780
        %v783 = vmul.f32 %v582, %v780
        %v784 = vmul.f32 %v583, %v780
        %v785 = vadd.f32 %v775, %v781
        %v786 = vadd.f32 %v776, %v782
        %v787 = vadd.f32 %v777, %v783
        %v788 = vadd.f32 %v778, %v784
        %s789 = sld [smem:[#allocation8 + $0x283]]
        %v790 = vstv %s789
        %v791 = vmul.f32 %v599, %v790
        %v792 = vmul.f32 %v600, %v790
        %v793 = vmul.f32 %v601, %v790
        %v794 = vmul.f32 %v602, %v790
        %v795 = vadd.f32 %v785, %v791
        %v796 = vadd.f32 %v786, %v792
        %v797 = vadd.f32 %v787, %v793
        %v798 = vadd.f32 %v788, %v794
        %s799 = sld [smem:[#allocation9 + $0x3]]
        %v800 = vstv %s799
        %v801 = vadd.f32 %v795, %v800
        %v802 = vadd.f32 %v796, %v800
        %v803 = vadd.f32 %v797, %v800
        %v804 = vadd.f32 %v798, %v800
        %v805 = vtanh.pop %v801
        %v806 = vtanh.pop %v802
        %v807 = vtanh.pop %v803
        %v808 = vtanh.pop %v804
        %v809 = vadd.f32 %v805, 1.0
        %v810 = vadd.f32 %v806, 1.0
        %v811 = vadd.f32 %v807, 1.0
        %v812 = vadd.f32 %v808, 1.0
        %v813 = vmul.f32 %v809, 64.0
        %v814 = vmul.f32 %v810, 64.0
        %v815 = vmul.f32 %v811, 64.0
        %v816 = vmul.f32 %v812, 64.0
        %v817 = vsub.f32 %v813, 0.5
        %v818 = vsub.f32 %v814, 0.5
        %v819 = vsub.f32 %v815, 0.5
        %v820 = vsub.f32 %v816, 0.5
        %s821 = sld [smem:[#allocation8 + $0x4]]
        %v822 = vstv %s821
        %v823 = vmul.f32 %v517, %v822
        %v824 = vmul.f32 %v518, %v822
        %v825 = vmul.f32 %v519, %v822
        %v826 = vmul.f32 %v520, %v822
        %s827 = sld [smem:[#allocation8 + $0x84]]
        %v828 = vstv %s827
        %v829 = vmul.f32 %v528, %v828
        %v830 = vmul.f32 %v529, %v828
        %v831 = vmul.f32 %v530, %v828
        %v832 = vmul.f32 %v531, %v828
        %v833 = vadd.f32 %v823, %v829
        %v834 = vadd.f32 %v824, %v830
        %v835 = vadd.f32 %v825, %v831
        %v836 = vadd.f32 %v826, %v832
        %s837 = sld [smem:[#allocation8 + $0x104]]
        %v838 = vstv %s837
        %v839 = vmul.f32 %v543, %v838
        %v840 = vmul.f32 %v544, %v838
        %v841 = vmul.f32 %v545, %v838
        %v842 = vmul.f32 %v546, %v838
        %v843 = vadd.f32 %v833, %v839
        %v844 = vadd.f32 %v834, %v840
        %v845 = vadd.f32 %v835, %v841
        %v846 = vadd.f32 %v836, %v842
        %s847 = sld [smem:[#allocation8 + $0x184]]
        %v848 = vstv %s847
        %v849 = vmul.f32 %v561, %v848
        %v850 = vmul.f32 %v562, %v848
        %v851 = vmul.f32 %v563, %v848
        %v852 = vmul.f32 %v564, %v848
        %v853 = vadd.f32 %v843, %v849
        %v854 = vadd.f32 %v844, %v850
        %v855 = vadd.f32 %v845, %v851
        %v856 = vadd.f32 %v846, %v852
        %s857 = sld [smem:[#allocation8 + $0x204]]
        %v858 = vstv %s857
        %v859 = vmul.f32 %v580, %v858
        %v860 = vmul.f32 %v581, %v858
        %v861 = vmul.f32 %v582, %v858
        %v862 = vmul.f32 %v583, %v858
        %v863 = vadd.f32 %v853, %v859
        %v864 = vadd.f32 %v854, %v860
        %v865 = vadd.f32 %v855, %v861
        %v866 = vadd.f32 %v856, %v862
        %s867 = sld [smem:[#allocation8 + $0x284]]
        %v868 = vstv %s867
        %v869 = vmul.f32 %v599, %v868
        %v870 = vmul.f32 %v600, %v868
        %v871 = vmul.f32 %v601, %v868
        %v872 = vmul.f32 %v602, %v868
        %v873 = vadd.f32 %v863, %v869
        %v874 = vadd.f32 %v864, %v870
        %v875 = vadd.f32 %v865, %v871
        %v876 = vadd.f32 %v866, %v872
        %s877 = sld [smem:[#allocation9 + $0x4]]
        %v878 = vstv %s877
        %v879 = vadd.f32 %v873, %v878
        %v880 = vadd.f32 %v874, %v878
        %v881 = vadd.f32 %v875, %v878
        %v882 = vadd.f32 %v876, %v878
        %v883 = vtanh.pop %v879
        %v884 = vtanh.pop %v880
        %v885 = vtanh.pop %v881
        %v886 = vtanh.pop %v882
        %v887 = vadd.f32 %v883, 1.0
        %v888 = vadd.f32 %v884, 1.0
        %v889 = vadd.f32 %v885, 1.0
        %v890 = vadd.f32 %v886, 1.0
        %v891 = vmul.f32 %v887, 64.0
        %v892 = vmul.f32 %v888, 64.0
        %v893 = vmul.f32 %v889, 64.0
        %v894 = vmul.f32 %v890, 64.0
        %v895 = vsub.f32 %v891, 0.5
        %v896 = vsub.f32 %v892, 0.5
        %v897 = vsub.f32 %v893, 0.5
        %v898 = vsub.f32 %v894, 0.5
        %v899 = vlaneseq
        %v900 = vshrl.u32 %v899, 7
        %v901 = vadd.s32 %v900, 8
        %v902 = vadd.s32 %v900, 16
        %v903 = vadd.s32 %v900, 24
        %v904 = vadd.s32 %v900, 32
        %v905 = vadd.s32 %v900, 40
        %v906 = vadd.s32 %v900, 48
        %v907 = vadd.s32 %v900, 56
        %v908 = vadd.s32 %v900, 64
        %v909 = vadd.s32 %v900, 72
        %v910 = vadd.s32 %v900, 80
        %v911 = vadd.s32 %v900, 88
        %v912 = vadd.s32 %v900, 96
        %v913 = vadd.s32 %v900, 104
        %v914 = vadd.s32 %v900, 112
        %v915 = vadd.s32 %v900, 120
        %v916 = vcvt.s32.f32 %v900
        %v917 = vcvt.s32.f32 %v901
        %v918 = vcvt.s32.f32 %v902
        %v919 = vcvt.s32.f32 %v903
        %v920 = vcvt.s32.f32 %v904
        %v921 = vcvt.s32.f32 %v905
        %v922 = vcvt.s32.f32 %v906
        %v923 = vcvt.s32.f32 %v907
        %v924 = vcvt.s32.f32 %v908
        %v925 = vcvt.s32.f32 %v909
        %v926 = vcvt.s32.f32 %v910
        %v927 = vcvt.s32.f32 %v911
        %v928 = vcvt.s32.f32 %v912
        %v929 = vcvt.s32.f32 %v913
        %v930 = vcvt.s32.f32 %v914
        %v931 = vcvt.s32.f32 %v915
        %v936 = vperm.slane %v817, 0
        %v937 = vperm.slane %v817, 1
        %v938 = vperm.slane %v817, 2
        %v939 = vperm.slane %v817, 3
        %v940 = vperm.slane %v817, 4
        %v941 = vperm.slane %v817, 5
        %v942 = vperm.slane %v817, 6
        %v943 = vperm.slane %v817, 7
        %v944 = vperm.slane %v818, 0
        %v945 = vperm.slane %v818, 1
        %v946 = vperm.slane %v818, 2
        %v947 = vperm.slane %v818, 3
        %v948 = vperm.slane %v818, 4
        %v949 = vperm.slane %v818, 5
        %v950 = vperm.slane %v818, 6
        %v951 = vperm.slane %v818, 7
        %v952 = vperm.slane %v819, 0
        %v953 = vperm.slane %v819, 1
        %v954 = vperm.slane %v819, 2
        %v955 = vperm.slane %v819, 3
        %v956 = vperm.slane %v819, 4
        %v957 = vperm.slane %v819, 5
        %v958 = vperm.slane %v819, 6
        %v959 = vperm.slane %v819, 7
        %v960 = vperm.slane %v820, 0
        %v961 = vperm.slane %v820, 1
        %v962 = vperm.slane %v820, 2
        %v963 = vperm.slane %v820, 3
        %v964 = vperm.slane %v820, 4
        %v965 = vperm.slane %v820, 5
        %v966 = vperm.slane %v820, 6
        %v967 = vperm.slane %v820, 7
        %v1000 = vsub.f32 %v936, %v916
        %v1001 = vsub.f32 %v937, %v916
        %v1002 = vsub.f32 %v938, %v916
        %v1003 = vsub.f32 %v939, %v916
        %v1004 = vsub.f32 %v940, %v916
        %v1005 = vsub.f32 %v941, %v916
        %v1006 = vsub.f32 %v942, %v916
        %v1007 = vsub.f32 %v943, %v916
        %v1008 = vsub.f32 %v944, %v916
        %v1009 = vsub.f32 %v945, %v916
        %v1010 = vsub.f32 %v946, %v916
        %v1011 = vsub.f32 %v947, %v916
        %v1012 = vsub.f32 %v948, %v916
        %v1013 = vsub.f32 %v949, %v916
        %v1014 = vsub.f32 %v950, %v916
        %v1015 = vsub.f32 %v951, %v916
        %v1016 = vsub.f32 %v952, %v916
        %v1017 = vsub.f32 %v953, %v916
        %v1018 = vsub.f32 %v954, %v916
        %v1019 = vsub.f32 %v955, %v916
        %v1020 = vsub.f32 %v956, %v916
        %v1021 = vsub.f32 %v957, %v916
        %v1022 = vsub.f32 %v958, %v916
        %v1023 = vsub.f32 %v959, %v916
        %v1024 = vsub.f32 %v960, %v916
        %v1025 = vsub.f32 %v961, %v916
        %v1026 = vsub.f32 %v962, %v916
        %v1027 = vsub.f32 %v963, %v916
        %v1028 = vsub.f32 %v964, %v916
        %v1029 = vsub.f32 %v965, %v916
        %v1030 = vsub.f32 %v966, %v916
        %v1031 = vsub.f32 %v967, %v916
        %v1032 = vsub.f32 %v936, %v917
        %v1033 = vsub.f32 %v937, %v917
        %v1034 = vsub.f32 %v938, %v917
        %v1035 = vsub.f32 %v939, %v917
        %v1036 = vsub.f32 %v940, %v917
        %v1037 = vsub.f32 %v941, %v917
        %v1038 = vsub.f32 %v942, %v917
        %v1039 = vsub.f32 %v943, %v917
        %v1040 = vsub.f32 %v944, %v917
        %v1041 = vsub.f32 %v945, %v917
        %v1042 = vsub.f32 %v946, %v917
        %v1043 = vsub.f32 %v947, %v917
        %v1044 = vsub.f32 %v948, %v917
        %v1045 = vsub.f32 %v949, %v917
        %v1046 = vsub.f32 %v950, %v917
        %v1047 = vsub.f32 %v951, %v917
        %v1048 = vsub.f32 %v952, %v917
        %v1049 = vsub.f32 %v953, %v917
        %v1050 = vsub.f32 %v954, %v917
        %v1051 = vsub.f32 %v955, %v917
        %v1052 = vsub.f32 %v956, %v917
        %v1053 = vsub.f32 %v957, %v917
        %v1054 = vsub.f32 %v958, %v917
        %v1055 = vsub.f32 %v959, %v917
        %v1056 = vsub.f32 %v960, %v917
        %v1057 = vsub.f32 %v961, %v917
        %v1058 = vsub.f32 %v962, %v917
        %v1059 = vsub.f32 %v963, %v917
        %v1060 = vsub.f32 %v964, %v917
        %v1061 = vsub.f32 %v965, %v917
        %v1062 = vsub.f32 %v966, %v917
        %v1063 = vsub.f32 %v967, %v917
        %v1064 = vsub.f32 %v936, %v918
        %v1065 = vsub.f32 %v937, %v918
        %v1066 = vsub.f32 %v938, %v918
        %v1067 = vsub.f32 %v939, %v918
        %v1068 = vsub.f32 %v940, %v918
        %v1069 = vsub.f32 %v941, %v918
        %v1070 = vsub.f32 %v942, %v918
        %v1071 = vsub.f32 %v943, %v918
        %v1072 = vsub.f32 %v944, %v918
        %v1073 = vsub.f32 %v945, %v918
        %v1074 = vsub.f32 %v946, %v918
        %v1075 = vsub.f32 %v947, %v918
        %v1076 = vsub.f32 %v948, %v918
        %v1077 = vsub.f32 %v949, %v918
        %v1078 = vsub.f32 %v950, %v918
        %v1079 = vsub.f32 %v951, %v918
        %v1080 = vsub.f32 %v952, %v918
        %v1081 = vsub.f32 %v953, %v918
        %v1082 = vsub.f32 %v954, %v918
        %v1083 = vsub.f32 %v955, %v918
        %v1084 = vsub.f32 %v956, %v918
        %v1085 = vsub.f32 %v957, %v918
        %v1086 = vsub.f32 %v958, %v918
        %v1087 = vsub.f32 %v959, %v918
        %v1088 = vsub.f32 %v960, %v918
        %v1089 = vsub.f32 %v961, %v918
        %v1090 = vsub.f32 %v962, %v918
        %v1091 = vsub.f32 %v963, %v918
        %v1092 = vsub.f32 %v964, %v918
        %v1093 = vsub.f32 %v965, %v918
        %v1094 = vsub.f32 %v966, %v918
        %v1095 = vsub.f32 %v967, %v918
        %v1096 = vsub.f32 %v936, %v919
        %v1097 = vsub.f32 %v937, %v919
        %v1098 = vsub.f32 %v938, %v919
        %v1099 = vsub.f32 %v939, %v919
        %v1100 = vsub.f32 %v940, %v919
        %v1101 = vsub.f32 %v941, %v919
        %v1102 = vsub.f32 %v942, %v919
        %v1103 = vsub.f32 %v943, %v919
        %v1104 = vsub.f32 %v944, %v919
        %v1105 = vsub.f32 %v945, %v919
        %v1106 = vsub.f32 %v946, %v919
        %v1107 = vsub.f32 %v947, %v919
        %v1108 = vsub.f32 %v948, %v919
        %v1109 = vsub.f32 %v949, %v919
        %v1110 = vsub.f32 %v950, %v919
        %v1111 = vsub.f32 %v951, %v919
        %v1112 = vsub.f32 %v952, %v919
        %v1113 = vsub.f32 %v953, %v919
        %v1114 = vsub.f32 %v954, %v919
        %v1115 = vsub.f32 %v955, %v919
        %v1116 = vsub.f32 %v956, %v919
        %v1117 = vsub.f32 %v957, %v919
        %v1118 = vsub.f32 %v958, %v919
        %v1119 = vsub.f32 %v959, %v919
        %v1120 = vsub.f32 %v960, %v919
        %v1121 = vsub.f32 %v961, %v919
        %v1122 = vsub.f32 %v962, %v919
        %v1123 = vsub.f32 %v963, %v919
        %v1124 = vsub.f32 %v964, %v919
        %v1125 = vsub.f32 %v965, %v919
        %v1126 = vsub.f32 %v966, %v919
        %v1127 = vsub.f32 %v967, %v919
        %v1128 = vsub.f32 %v936, %v920
        %v1129 = vsub.f32 %v937, %v920
        %v1130 = vsub.f32 %v938, %v920
        %v1131 = vsub.f32 %v939, %v920
        %v1132 = vsub.f32 %v940, %v920
        %v1133 = vsub.f32 %v941, %v920
        %v1134 = vsub.f32 %v942, %v920
        %v1135 = vsub.f32 %v943, %v920
        %v1136 = vsub.f32 %v944, %v920
        %v1137 = vsub.f32 %v945, %v920
        %v1138 = vsub.f32 %v946, %v920
        %v1139 = vsub.f32 %v947, %v920
        %v1140 = vsub.f32 %v948, %v920
        %v1141 = vsub.f32 %v949, %v920
        %v1142 = vsub.f32 %v950, %v920
        %v1143 = vsub.f32 %v951, %v920
        %v1144 = vsub.f32 %v952, %v920
        %v1145 = vsub.f32 %v953, %v920
        %v1146 = vsub.f32 %v954, %v920
        %v1147 = vsub.f32 %v955, %v920
        %v1148 = vsub.f32 %v956, %v920
        %v1149 = vsub.f32 %v957, %v920
        %v1150 = vsub.f32 %v958, %v920
        %v1151 = vsub.f32 %v959, %v920
        %v1152 = vsub.f32 %v960, %v920
        %v1153 = vsub.f32 %v961, %v920
        %v1154 = vsub.f32 %v962, %v920
        %v1155 = vsub.f32 %v963, %v920
        %v1156 = vsub.f32 %v964, %v920
        %v1157 = vsub.f32 %v965, %v920
        %v1158 = vsub.f32 %v966, %v920
        %v1159 = vsub.f32 %v967, %v920
        %v1160 = vsub.f32 %v936, %v921
        %v1161 = vsub.f32 %v937, %v921
        %v1162 = vsub.f32 %v938, %v921
        %v1163 = vsub.f32 %v939, %v921
        %v1164 = vsub.f32 %v940, %v921
        %v1165 = vsub.f32 %v941, %v921
        %v1166 = vsub.f32 %v942, %v921
        %v1167 = vsub.f32 %v943, %v921
        %v1168 = vsub.f32 %v944, %v921
        %v1169 = vsub.f32 %v945, %v921
        %v1170 = vsub.f32 %v946, %v921
        %v1171 = vsub.f32 %v947, %v921
        %v1172 = vsub.f32 %v948, %v921
        %v1173 = vsub.f32 %v949, %v921
        %v1174 = vsub.f32 %v950, %v921
        %v1175 = vsub.f32 %v951, %v921
        %v1176 = vsub.f32 %v952, %v921
        %v1177 = vsub.f32 %v953, %v921
        %v1178 = vsub.f32 %v954, %v921
        %v1179 = vsub.f32 %v955, %v921
        %v1180 = vsub.f32 %v956, %v921
        %v1181 = vsub.f32 %v957, %v921
        %v1182 = vsub.f32 %v958, %v921
        %v1183 = vsub.f32 %v959, %v921
        %v1184 = vsub.f32 %v960, %v921
        %v1185 = vsub.f32 %v961, %v921
        %v1186 = vsub.f32 %v962, %v921
        %v1187 = vsub.f32 %v963, %v921
        %v1188 = vsub.f32 %v964, %v921
        %v1189 = vsub.f32 %v965, %v921
        %v1190 = vsub.f32 %v966, %v921
        %v1191 = vsub.f32 %v967, %v921
        %v1192 = vsub.f32 %v936, %v922
        %v1193 = vsub.f32 %v937, %v922
        %v1194 = vsub.f32 %v938, %v922
        %v1195 = vsub.f32 %v939, %v922
        %v1196 = vsub.f32 %v940, %v922
        %v1197 = vsub.f32 %v941, %v922
        %v1198 = vsub.f32 %v942, %v922
        %v1199 = vsub.f32 %v943, %v922
        %v1200 = vsub.f32 %v944, %v922
        %v1201 = vsub.f32 %v945, %v922
        %v1202 = vsub.f32 %v946, %v922
        %v1203 = vsub.f32 %v947, %v922
        %v1204 = vsub.f32 %v948, %v922
        %v1205 = vsub.f32 %v949, %v922
        %v1206 = vsub.f32 %v950, %v922
        %v1207 = vsub.f32 %v951, %v922
        %v1208 = vsub.f32 %v952, %v922
        %v1209 = vsub.f32 %v953, %v922
        %v1210 = vsub.f32 %v954, %v922
        %v1211 = vsub.f32 %v955, %v922
        %v1212 = vsub.f32 %v956, %v922
        %v1213 = vsub.f32 %v957, %v922
        %v1214 = vsub.f32 %v958, %v922
        %v1215 = vsub.f32 %v959, %v922
        %v1216 = vsub.f32 %v960, %v922
        %v1217 = vsub.f32 %v961, %v922
        %v1218 = vsub.f32 %v962, %v922
        %v1219 = vsub.f32 %v963, %v922
        %v1220 = vsub.f32 %v964, %v922
        %v1221 = vsub.f32 %v965, %v922
        %v1222 = vsub.f32 %v966, %v922
        %v1223 = vsub.f32 %v967, %v922
        %v1224 = vsub.f32 %v936, %v923
        %v1225 = vsub.f32 %v937, %v923
        %v1226 = vsub.f32 %v938, %v923
        %v1227 = vsub.f32 %v939, %v923
        %v1228 = vsub.f32 %v940, %v923
        %v1229 = vsub.f32 %v941, %v923
        %v1230 = vsub.f32 %v942, %v923
        %v1231 = vsub.f32 %v943, %v923
        %v1232 = vsub.f32 %v944, %v923
        %v1233 = vsub.f32 %v945, %v923
        %v1234 = vsub.f32 %v946, %v923
        %v1235 = vsub.f32 %v947, %v923
        %v1236 = vsub.f32 %v948, %v923
        %v1237 = vsub.f32 %v949, %v923
        %v1238 = vsub.f32 %v950, %v923
        %v1239 = vsub.f32 %v951, %v923
        %v1240 = vsub.f32 %v952, %v923
        %v1241 = vsub.f32 %v953, %v923
        %v1242 = vsub.f32 %v954, %v923
        %v1243 = vsub.f32 %v955, %v923
        %v1244 = vsub.f32 %v956, %v923
        %v1245 = vsub.f32 %v957, %v923
        %v1246 = vsub.f32 %v958, %v923
        %v1247 = vsub.f32 %v959, %v923
        %v1248 = vsub.f32 %v960, %v923
        %v1249 = vsub.f32 %v961, %v923
        %v1250 = vsub.f32 %v962, %v923
        %v1251 = vsub.f32 %v963, %v923
        %v1252 = vsub.f32 %v964, %v923
        %v1253 = vsub.f32 %v965, %v923
        %v1254 = vsub.f32 %v966, %v923
        %v1255 = vsub.f32 %v967, %v923
        %v1256 = vsub.f32 %v936, %v924
        %v1257 = vsub.f32 %v937, %v924
        %v1258 = vsub.f32 %v938, %v924
        %v1259 = vsub.f32 %v939, %v924
        %v1260 = vsub.f32 %v940, %v924
        %v1261 = vsub.f32 %v941, %v924
        %v1262 = vsub.f32 %v942, %v924
        %v1263 = vsub.f32 %v943, %v924
        %v1264 = vsub.f32 %v944, %v924
        %v1265 = vsub.f32 %v945, %v924
        %v1266 = vsub.f32 %v946, %v924
        %v1267 = vsub.f32 %v947, %v924
        %v1268 = vsub.f32 %v948, %v924
        %v1269 = vsub.f32 %v949, %v924
        %v1270 = vsub.f32 %v950, %v924
        %v1271 = vsub.f32 %v951, %v924
        %v1272 = vsub.f32 %v952, %v924
        %v1273 = vsub.f32 %v953, %v924
        %v1274 = vsub.f32 %v954, %v924
        %v1275 = vsub.f32 %v955, %v924
        %v1276 = vsub.f32 %v956, %v924
        %v1277 = vsub.f32 %v957, %v924
        %v1278 = vsub.f32 %v958, %v924
        %v1279 = vsub.f32 %v959, %v924
        %v1280 = vsub.f32 %v960, %v924
        %v1281 = vsub.f32 %v961, %v924
        %v1282 = vsub.f32 %v962, %v924
        %v1283 = vsub.f32 %v963, %v924
        %v1284 = vsub.f32 %v964, %v924
        %v1285 = vsub.f32 %v965, %v924
        %v1286 = vsub.f32 %v966, %v924
        %v1287 = vsub.f32 %v967, %v924
        %v1288 = vsub.f32 %v936, %v925
        %v1289 = vsub.f32 %v937, %v925
        %v1290 = vsub.f32 %v938, %v925
        %v1291 = vsub.f32 %v939, %v925
        %v1292 = vsub.f32 %v940, %v925
        %v1293 = vsub.f32 %v941, %v925
        %v1294 = vsub.f32 %v942, %v925
        %v1295 = vsub.f32 %v943, %v925
        %v1296 = vsub.f32 %v944, %v925
        %v1297 = vsub.f32 %v945, %v925
        %v1298 = vsub.f32 %v946, %v925
        %v1299 = vsub.f32 %v947, %v925
        %v1300 = vsub.f32 %v948, %v925
        %v1301 = vsub.f32 %v949, %v925
        %v1302 = vsub.f32 %v950, %v925
        %v1303 = vsub.f32 %v951, %v925
        %v1304 = vsub.f32 %v952, %v925
        %v1305 = vsub.f32 %v953, %v925
        %v1306 = vsub.f32 %v954, %v925
        %v1307 = vsub.f32 %v955, %v925
        %v1308 = vsub.f32 %v956, %v925
        %v1309 = vsub.f32 %v957, %v925
        %v1310 = vsub.f32 %v958, %v925
        %v1311 = vsub.f32 %v959, %v925
        %v1312 = vsub.f32 %v960, %v925
        %v1313 = vsub.f32 %v961, %v925
        %v1314 = vsub.f32 %v962, %v925
        %v1315 = vsub.f32 %v963, %v925
        %v1316 = vsub.f32 %v964, %v925
        %v1317 = vsub.f32 %v965, %v925
        %v1318 = vsub.f32 %v966, %v925
        %v1319 = vsub.f32 %v967, %v925
        %v1320 = vsub.f32 %v936, %v926
        %v1321 = vsub.f32 %v937, %v926
        %v1322 = vsub.f32 %v938, %v926
        %v1323 = vsub.f32 %v939, %v926
        %v1324 = vsub.f32 %v940, %v926
        %v1325 = vsub.f32 %v941, %v926
        %v1326 = vsub.f32 %v942, %v926
        %v1327 = vsub.f32 %v943, %v926
        %v1328 = vsub.f32 %v944, %v926
        %v1329 = vsub.f32 %v945, %v926
        %v1330 = vsub.f32 %v946, %v926
        %v1331 = vsub.f32 %v947, %v926
        %v1332 = vsub.f32 %v948, %v926
        %v1333 = vsub.f32 %v949, %v926
        %v1334 = vsub.f32 %v950, %v926
        %v1335 = vsub.f32 %v951, %v926
        %v1336 = vsub.f32 %v952, %v926
        %v1337 = vsub.f32 %v953, %v926
        %v1338 = vsub.f32 %v954, %v926
        %v1339 = vsub.f32 %v955, %v926
        %v1340 = vsub.f32 %v956, %v926
        %v1341 = vsub.f32 %v957, %v926
        %v1342 = vsub.f32 %v958, %v926
        %v1343 = vsub.f32 %v959, %v926
        %v1344 = vsub.f32 %v960, %v926
        %v1345 = vsub.f32 %v961, %v926
        %v1346 = vsub.f32 %v962, %v926
        %v1347 = vsub.f32 %v963, %v926
        %v1348 = vsub.f32 %v964, %v926
        %v1349 = vsub.f32 %v965, %v926
        %v1350 = vsub.f32 %v966, %v926
        %v1351 = vsub.f32 %v967, %v926
        %v1352 = vsub.f32 %v936, %v927
        %v1353 = vsub.f32 %v937, %v927
        %v1354 = vsub.f32 %v938, %v927
        %v1355 = vsub.f32 %v939, %v927
        %v1356 = vsub.f32 %v940, %v927
        %v1357 = vsub.f32 %v941, %v927
        %v1358 = vsub.f32 %v942, %v927
        %v1359 = vsub.f32 %v943, %v927
        %v1360 = vsub.f32 %v944, %v927
        %v1361 = vsub.f32 %v945, %v927
        %v1362 = vsub.f32 %v946, %v927
        %v1363 = vsub.f32 %v947, %v927
        %v1364 = vsub.f32 %v948, %v927
        %v1365 = vsub.f32 %v949, %v927
        %v1366 = vsub.f32 %v950, %v927
        %v1367 = vsub.f32 %v951, %v927
        %v1368 = vsub.f32 %v952, %v927
        %v1369 = vsub.f32 %v953, %v927
        %v1370 = vsub.f32 %v954, %v927
        %v1371 = vsub.f32 %v955, %v927
        %v1372 = vsub.f32 %v956, %v927
        %v1373 = vsub.f32 %v957, %v927
        %v1374 = vsub.f32 %v958, %v927
        %v1375 = vsub.f32 %v959, %v927
        %v1376 = vsub.f32 %v960, %v927
        %v1377 = vsub.f32 %v961, %v927
        %v1378 = vsub.f32 %v962, %v927
        %v1379 = vsub.f32 %v963, %v927
        %v1380 = vsub.f32 %v964, %v927
        %v1381 = vsub.f32 %v965, %v927
        %v1382 = vsub.f32 %v966, %v927
        %v1383 = vsub.f32 %v967, %v927
        %v1384 = vsub.f32 %v936, %v928
        %v1385 = vsub.f32 %v937, %v928
        %v1386 = vsub.f32 %v938, %v928
        %v1387 = vsub.f32 %v939, %v928
        %v1388 = vsub.f32 %v940, %v928
        %v1389 = vsub.f32 %v941, %v928
        %v1390 = vsub.f32 %v942, %v928
        %v1391 = vsub.f32 %v943, %v928
        %v1392 = vsub.f32 %v944, %v928
        %v1393 = vsub.f32 %v945, %v928
        %v1394 = vsub.f32 %v946, %v928
        %v1395 = vsub.f32 %v947, %v928
        %v1396 = vsub.f32 %v948, %v928
        %v1397 = vsub.f32 %v949, %v928
        %v1398 = vsub.f32 %v950, %v928
        %v1399 = vsub.f32 %v951, %v928
        %v1400 = vsub.f32 %v952, %v928
        %v1401 = vsub.f32 %v953, %v928
        %v1402 = vsub.f32 %v954, %v928
        %v1403 = vsub.f32 %v955, %v928
        %v1404 = vsub.f32 %v956, %v928
        %v1405 = vsub.f32 %v957, %v928
        %v1406 = vsub.f32 %v958, %v928
        %v1407 = vsub.f32 %v959, %v928
        %v1408 = vsub.f32 %v960, %v928
        %v1409 = vsub.f32 %v961, %v928
        %v1410 = vsub.f32 %v962, %v928
        %v1411 = vsub.f32 %v963, %v928
        %v1412 = vsub.f32 %v964, %v928
        %v1413 = vsub.f32 %v965, %v928
        %v1414 = vsub.f32 %v966, %v928
        %v1415 = vsub.f32 %v967, %v928
        %v1416 = vsub.f32 %v936, %v929
        %v1417 = vsub.f32 %v937, %v929
        %v1418 = vsub.f32 %v938, %v929
        %v1419 = vsub.f32 %v939, %v929
        %v1420 = vsub.f32 %v940, %v929
        %v1421 = vsub.f32 %v941, %v929
        %v1422 = vsub.f32 %v942, %v929
        %v1423 = vsub.f32 %v943, %v929
        %v1424 = vsub.f32 %v944, %v929
        %v1425 = vsub.f32 %v945, %v929
        %v1426 = vsub.f32 %v946, %v929
        %v1427 = vsub.f32 %v947, %v929
        %v1428 = vsub.f32 %v948, %v929
        %v1429 = vsub.f32 %v949, %v929
        %v1430 = vsub.f32 %v950, %v929
        %v1431 = vsub.f32 %v951, %v929
        %v1432 = vsub.f32 %v952, %v929
        %v1433 = vsub.f32 %v953, %v929
        %v1434 = vsub.f32 %v954, %v929
        %v1435 = vsub.f32 %v955, %v929
        %v1436 = vsub.f32 %v956, %v929
        %v1437 = vsub.f32 %v957, %v929
        %v1438 = vsub.f32 %v958, %v929
        %v1439 = vsub.f32 %v959, %v929
        %v1440 = vsub.f32 %v960, %v929
        %v1441 = vsub.f32 %v961, %v929
        %v1442 = vsub.f32 %v962, %v929
        %v1443 = vsub.f32 %v963, %v929
        %v1444 = vsub.f32 %v964, %v929
        %v1445 = vsub.f32 %v965, %v929
        %v1446 = vsub.f32 %v966, %v929
        %v1447 = vsub.f32 %v967, %v929
        %v1448 = vsub.f32 %v936, %v930
        %v1449 = vsub.f32 %v937, %v930
        %v1450 = vsub.f32 %v938, %v930
        %v1451 = vsub.f32 %v939, %v930
        %v1452 = vsub.f32 %v940, %v930
        %v1453 = vsub.f32 %v941, %v930
        %v1454 = vsub.f32 %v942, %v930
        %v1455 = vsub.f32 %v943, %v930
        %v1456 = vsub.f32 %v944, %v930
        %v1457 = vsub.f32 %v945, %v930
        %v1458 = vsub.f32 %v946, %v930
        %v1459 = vsub.f32 %v947, %v930
        %v1460 = vsub.f32 %v948, %v930
        %v1461 = vsub.f32 %v949, %v930
        %v1462 = vsub.f32 %v950, %v930
        %v1463 = vsub.f32 %v951, %v930
        %v1464 = vsub.f32 %v952, %v930
        %v1465 = vsub.f32 %v953, %v930
        %v1466 = vsub.f32 %v954, %v930
        %v1467 = vsub.f32 %v955, %v930
        %v1468 = vsub.f32 %v956, %v930
        %v1469 = vsub.f32 %v957, %v930
        %v1470 = vsub.f32 %v958, %v930
        %v1471 = vsub.f32 %v959, %v930
        %v1472 = vsub.f32 %v960, %v930
        %v1473 = vsub.f32 %v961, %v930
        %v1474 = vsub.f32 %v962, %v930
        %v1475 = vsub.f32 %v963, %v930
        %v1476 = vsub.f32 %v964, %v930
        %v1477 = vsub.f32 %v965, %v930
        %v1478 = vsub.f32 %v966, %v930
        %v1479 = vsub.f32 %v967, %v930
        %v1480 = vsub.f32 %v936, %v931
        %v1481 = vsub.f32 %v937, %v931
        %v1482 = vsub.f32 %v938, %v931
        %v1483 = vsub.f32 %v939, %v931
        %v1484 = vsub.f32 %v940, %v931
        %v1485 = vsub.f32 %v941, %v931
        %v1486 = vsub.f32 %v942, %v931
        %v1487 = vsub.f32 %v943, %v931
        %v1488 = vsub.f32 %v944, %v931
        %v1489 = vsub.f32 %v945, %v931
        %v1490 = vsub.f32 %v946, %v931
        %v1491 = vsub.f32 %v947, %v931
        %v1492 = vsub.f32 %v948, %v931
        %v1493 = vsub.f32 %v949, %v931
        %v1494 = vsub.f32 %v950, %v931
        %v1495 = vsub.f32 %v951, %v931
        %v1496 = vsub.f32 %v952, %v931
        %v1497 = vsub.f32 %v953, %v931
        %v1498 = vsub.f32 %v954, %v931
        %v1499 = vsub.f32 %v955, %v931
        %v1500 = vsub.f32 %v956, %v931
        %v1501 = vsub.f32 %v957, %v931
        %v1502 = vsub.f32 %v958, %v931
        %v1503 = vsub.f32 %v959, %v931
        %v1504 = vsub.f32 %v960, %v931
        %v1505 = vsub.f32 %v961, %v931
        %v1506 = vsub.f32 %v962, %v931
        %v1507 = vsub.f32 %v963, %v931
        %v1508 = vsub.f32 %v964, %v931
        %v1509 = vsub.f32 %v965, %v931
        %v1510 = vsub.f32 %v966, %v931
        %v1511 = vsub.f32 %v967, %v931
        %v1512 = vand.u32 2147483647, %v1000
        %v1513 = vand.u32 2147483647, %v1001
        %v1514 = vand.u32 2147483647, %v1002
        %v1515 = vand.u32 2147483647, %v1003
        %v1516 = vand.u32 2147483647, %v1004
        %v1517 = vand.u32 2147483647, %v1005
        %v1518 = vand.u32 2147483647, %v1006
        %v1519 = vand.u32 2147483647, %v1007
        %v1520 = vand.u32 2147483647, %v1008
        %v1521 = vand.u32 2147483647, %v1009
        %v1522 = vand.u32 2147483647, %v1010
        %v1523 = vand.u32 2147483647, %v1011
        %v1524 = vand.u32 2147483647, %v1012
        %v1525 = vand.u32 2147483647, %v1013
        %v1526 = vand.u32 2147483647, %v1014
        %v1527 = vand.u32 2147483647, %v1015
        %v1528 = vand.u32 2147483647, %v1016
        %v1529 = vand.u32 2147483647, %v1017
        %v1530 = vand.u32 2147483647, %v1018
        %v1531 = vand.u32 2147483647, %v1019
        %v1532 = vand.u32 2147483647, %v1020
        %v1533 = vand.u32 2147483647, %v1021
        %v1534 = vand.u32 2147483647, %v1022
        %v1535 = vand.u32 2147483647, %v1023
        %v1536 = vand.u32 2147483647, %v1024
        %v1537 = vand.u32 2147483647, %v1025
        %v1538 = vand.u32 2147483647, %v1026
        %v1539 = vand.u32 2147483647, %v1027
        %v1540 = vand.u32 2147483647, %v1028
        %v1541 = vand.u32 2147483647, %v1029
        %v1542 = vand.u32 2147483647, %v1030
        %v1543 = vand.u32 2147483647, %v1031
        %v1544 = vand.u32 2147483647, %v1032
        %v1545 = vand.u32 2147483647, %v1033
        %v1546 = vand.u32 2147483647, %v1034
        %v1547 = vand.u32 2147483647, %v1035
        %v1548 = vand.u32 2147483647, %v1036
        %v1549 = vand.u32 2147483647, %v1037
        %v1550 = vand.u32 2147483647, %v1038
        %v1551 = vand.u32 2147483647, %v1039
        %v1552 = vand.u32 2147483647, %v1040
        %v1553 = vand.u32 2147483647, %v1041
        %v1554 = vand.u32 2147483647, %v1042
        %v1555 = vand.u32 2147483647, %v1043
        %v1556 = vand.u32 2147483647, %v1044
        %v1557 = vand.u32 2147483647, %v1045
        %v1558 = vand.u32 2147483647, %v1046
        %v1559 = vand.u32 2147483647, %v1047
        %v1560 = vand.u32 2147483647, %v1048
        %v1561 = vand.u32 2147483647, %v1049
        %v1562 = vand.u32 2147483647, %v1050
        %v1563 = vand.u32 2147483647, %v1051
        %v1564 = vand.u32 2147483647, %v1052
        %v1565 = vand.u32 2147483647, %v1053
        %v1566 = vand.u32 2147483647, %v1054
        %v1567 = vand.u32 2147483647, %v1055
        %v1568 = vand.u32 2147483647, %v1056
        %v1569 = vand.u32 2147483647, %v1057
        %v1570 = vand.u32 2147483647, %v1058
        %v1571 = vand.u32 2147483647, %v1059
        %v1572 = vand.u32 2147483647, %v1060
        %v1573 = vand.u32 2147483647, %v1061
        %v1574 = vand.u32 2147483647, %v1062
        %v1575 = vand.u32 2147483647, %v1063
        %v1576 = vand.u32 2147483647, %v1064
        %v1577 = vand.u32 2147483647, %v1065
        %v1578 = vand.u32 2147483647, %v1066
        %v1579 = vand.u32 2147483647, %v1067
        %v1580 = vand.u32 2147483647, %v1068
        %v1581 = vand.u32 2147483647, %v1069
        %v1582 = vand.u32 2147483647, %v1070
        %v1583 = vand.u32 2147483647, %v1071
        %v1584 = vand.u32 2147483647, %v1072
        %v1585 = vand.u32 2147483647, %v1073
        %v1586 = vand.u32 2147483647, %v1074
        %v1587 = vand.u32 2147483647, %v1075
        %v1588 = vand.u32 2147483647, %v1076
        %v1589 = vand.u32 2147483647, %v1077
        %v1590 = vand.u32 2147483647, %v1078
        %v1591 = vand.u32 2147483647, %v1079
        %v1592 = vand.u32 2147483647, %v1080
        %v1593 = vand.u32 2147483647, %v1081
        %v1594 = vand.u32 2147483647, %v1082
        %v1595 = vand.u32 2147483647, %v1083
        %v1596 = vand.u32 2147483647, %v1084
        %v1597 = vand.u32 2147483647, %v1085
        %v1598 = vand.u32 2147483647, %v1086
        %v1599 = vand.u32 2147483647, %v1087
        %v1600 = vand.u32 2147483647, %v1088
        %v1601 = vand.u32 2147483647, %v1089
        %v1602 = vand.u32 2147483647, %v1090
        %v1603 = vand.u32 2147483647, %v1091
        %v1604 = vand.u32 2147483647, %v1092
        %v1605 = vand.u32 2147483647, %v1093
        %v1606 = vand.u32 2147483647, %v1094
        %v1607 = vand.u32 2147483647, %v1095
        %v1608 = vand.u32 2147483647, %v1096
        %v1609 = vand.u32 2147483647, %v1097
        %v1610 = vand.u32 2147483647, %v1098
        %v1611 = vand.u32 2147483647, %v1099
        %v1612 = vand.u32 2147483647, %v1100
        %v1613 = vand.u32 2147483647, %v1101
        %v1614 = vand.u32 2147483647, %v1102
        %v1615 = vand.u32 2147483647, %v1103
        %v1616 = vand.u32 2147483647, %v1104
        %v1617 = vand.u32 2147483647, %v1105
        %v1618 = vand.u32 2147483647, %v1106
        %v1619 = vand.u32 2147483647, %v1107
        %v1620 = vand.u32 2147483647, %v1108
        %v1621 = vand.u32 2147483647, %v1109
        %v1622 = vand.u32 2147483647, %v1110
        %v1623 = vand.u32 2147483647, %v1111
        %v1624 = vand.u32 2147483647, %v1112
        %v1625 = vand.u32 2147483647, %v1113
        %v1626 = vand.u32 2147483647, %v1114
        %v1627 = vand.u32 2147483647, %v1115
        %v1628 = vand.u32 2147483647, %v1116
        %v1629 = vand.u32 2147483647, %v1117
        %v1630 = vand.u32 2147483647, %v1118
        %v1631 = vand.u32 2147483647, %v1119
        %v1632 = vand.u32 2147483647, %v1120
        %v1633 = vand.u32 2147483647, %v1121
        %v1634 = vand.u32 2147483647, %v1122
        %v1635 = vand.u32 2147483647, %v1123
        %v1636 = vand.u32 2147483647, %v1124
        %v1637 = vand.u32 2147483647, %v1125
        %v1638 = vand.u32 2147483647, %v1126
        %v1639 = vand.u32 2147483647, %v1127
        %v1640 = vand.u32 2147483647, %v1128
        %v1641 = vand.u32 2147483647, %v1129
        %v1642 = vand.u32 2147483647, %v1130
        %v1643 = vand.u32 2147483647, %v1131
        %v1644 = vand.u32 2147483647, %v1132
        %v1645 = vand.u32 2147483647, %v1133
        %v1646 = vand.u32 2147483647, %v1134
        %v1647 = vand.u32 2147483647, %v1135
        %v1648 = vand.u32 2147483647, %v1136
        %v1649 = vand.u32 2147483647, %v1137
        %v1650 = vand.u32 2147483647, %v1138
        %v1651 = vand.u32 2147483647, %v1139
        %v1652 = vand.u32 2147483647, %v1140
        %v1653 = vand.u32 2147483647, %v1141
        %v1654 = vand.u32 2147483647, %v1142
        %v1655 = vand.u32 2147483647, %v1143
        %v1656 = vand.u32 2147483647, %v1144
        %v1657 = vand.u32 2147483647, %v1145
        %v1658 = vand.u32 2147483647, %v1146
        %v1659 = vand.u32 2147483647, %v1147
        %v1660 = vand.u32 2147483647, %v1148
        %v1661 = vand.u32 2147483647, %v1149
        %v1662 = vand.u32 2147483647, %v1150
        %v1663 = vand.u32 2147483647, %v1151
        %v1664 = vand.u32 2147483647, %v1152
        %v1665 = vand.u32 2147483647, %v1153
        %v1666 = vand.u32 2147483647, %v1154
        %v1667 = vand.u32 2147483647, %v1155
        %v1668 = vand.u32 2147483647, %v1156
        %v1669 = vand.u32 2147483647, %v1157
        %v1670 = vand.u32 2147483647, %v1158
        %v1671 = vand.u32 2147483647, %v1159
        %v1672 = vand.u32 2147483647, %v1160
        %v1673 = vand.u32 2147483647, %v1161
        %v1674 = vand.u32 2147483647, %v1162
        %v1675 = vand.u32 2147483647, %v1163
        %v1676 = vand.u32 2147483647, %v1164
        %v1677 = vand.u32 2147483647, %v1165
        %v1678 = vand.u32 2147483647, %v1166
        %v1679 = vand.u32 2147483647, %v1167
        %v1680 = vand.u32 2147483647, %v1168
        %v1681 = vand.u32 2147483647, %v1169
        %v1682 = vand.u32 2147483647, %v1170
        %v1683 = vand.u32 2147483647, %v1171
        %v1684 = vand.u32 2147483647, %v1172
        %v1685 = vand.u32 2147483647, %v1173
        %v1686 = vand.u32 2147483647, %v1174
        %v1687 = vand.u32 2147483647, %v1175
        %v1688 = vand.u32 2147483647, %v1176
        %v1689 = vand.u32 2147483647, %v1177
        %v1690 = vand.u32 2147483647, %v1178
        %v1691 = vand.u32 2147483647, %v1179
        %v1692 = vand.u32 2147483647, %v1180
        %v1693 = vand.u32 2147483647, %v1181
        %v1694 = vand.u32 2147483647, %v1182
        %v1695 = vand.u32 2147483647, %v1183
        %v1696 = vand.u32 2147483647, %v1184
        %v1697 = vand.u32 2147483647, %v1185
        %v1698 = vand.u32 2147483647, %v1186
        %v1699 = vand.u32 2147483647, %v1187
        %v1700 = vand.u32 2147483647, %v1188
        %v1701 = vand.u32 2147483647, %v1189
        %v1702 = vand.u32 2147483647, %v1190
        %v1703 = vand.u32 2147483647, %v1191
        %v1704 = vand.u32 2147483647, %v1192
        %v1705 = vand.u32 2147483647, %v1193
        %v1706 = vand.u32 2147483647, %v1194
        %v1707 = vand.u32 2147483647, %v1195
        %v1708 = vand.u32 2147483647, %v1196
        %v1709 = vand.u32 2147483647, %v1197
        %v1710 = vand.u32 2147483647, %v1198
        %v1711 = vand.u32 2147483647, %v1199
        %v1712 = vand.u32 2147483647, %v1200
        %v1713 = vand.u32 2147483647, %v1201
        %v1714 = vand.u32 2147483647, %v1202
        %v1715 = vand.u32 2147483647, %v1203
        %v1716 = vand.u32 2147483647, %v1204
        %v1717 = vand.u32 2147483647, %v1205
        %v1718 = vand.u32 2147483647, %v1206
        %v1719 = vand.u32 2147483647, %v1207
        %v1720 = vand.u32 2147483647, %v1208
        %v1721 = vand.u32 2147483647, %v1209
        %v1722 = vand.u32 2147483647, %v1210
        %v1723 = vand.u32 2147483647, %v1211
        %v1724 = vand.u32 2147483647, %v1212
        %v1725 = vand.u32 2147483647, %v1213
        %v1726 = vand.u32 2147483647, %v1214
        %v1727 = vand.u32 2147483647, %v1215
        %v1728 = vand.u32 2147483647, %v1216
        %v1729 = vand.u32 2147483647, %v1217
        %v1730 = vand.u32 2147483647, %v1218
        %v1731 = vand.u32 2147483647, %v1219
        %v1732 = vand.u32 2147483647, %v1220
        %v1733 = vand.u32 2147483647, %v1221
        %v1734 = vand.u32 2147483647, %v1222
        %v1735 = vand.u32 2147483647, %v1223
        %v1736 = vand.u32 2147483647, %v1224
        %v1737 = vand.u32 2147483647, %v1225
        %v1738 = vand.u32 2147483647, %v1226
        %v1739 = vand.u32 2147483647, %v1227
        %v1740 = vand.u32 2147483647, %v1228
        %v1741 = vand.u32 2147483647, %v1229
        %v1742 = vand.u32 2147483647, %v1230
        %v1743 = vand.u32 2147483647, %v1231
        %v1744 = vand.u32 2147483647, %v1232
        %v1745 = vand.u32 2147483647, %v1233
        %v1746 = vand.u32 2147483647, %v1234
        %v1747 = vand.u32 2147483647, %v1235
        %v1748 = vand.u32 2147483647, %v1236
        %v1749 = vand.u32 2147483647, %v1237
        %v1750 = vand.u32 2147483647, %v1238
        %v1751 = vand.u32 2147483647, %v1239
        %v1752 = vand.u32 2147483647, %v1240
        %v1753 = vand.u32 2147483647, %v1241
        %v1754 = vand.u32 2147483647, %v1242
        %v1755 = vand.u32 2147483647, %v1243
        %v1756 = vand.u32 2147483647, %v1244
        %v1757 = vand.u32 2147483647, %v1245
        %v1758 = vand.u32 2147483647, %v1246
        %v1759 = vand.u32 2147483647, %v1247
        %v1760 = vand.u32 2147483647, %v1248
        %v1761 = vand.u32 2147483647, %v1249
        %v1762 = vand.u32 2147483647, %v1250
        %v1763 = vand.u32 2147483647, %v1251
        %v1764 = vand.u32 2147483647, %v1252
        %v1765 = vand.u32 2147483647, %v1253
        %v1766 = vand.u32 2147483647, %v1254
        %v1767 = vand.u32 2147483647, %v1255
        %v1768 = vand.u32 2147483647, %v1256
        %v1769 = vand.u32 2147483647, %v1257
        %v1770 = vand.u32 2147483647, %v1258
        %v1771 = vand.u32 2147483647, %v1259
        %v1772 = vand.u32 2147483647, %v1260
        %v1773 = vand.u32 2147483647, %v1261
        %v1774 = vand.u32 2147483647, %v1262
        %v1775 = vand.u32 2147483647, %v1263
        %v1776 = vand.u32 2147483647, %v1264
        %v1777 = vand.u32 2147483647, %v1265
        %v1778 = vand.u32 2147483647, %v1266
        %v1779 = vand.u32 2147483647, %v1267
        %v1780 = vand.u32 2147483647, %v1268
        %v1781 = vand.u32 2147483647, %v1269
        %v1782 = vand.u32 2147483647, %v1270
        %v1783 = vand.u32 2147483647, %v1271
        %v1784 = vand.u32 2147483647, %v1272
        %v1785 = vand.u32 2147483647, %v1273
        %v1786 = vand.u32 2147483647, %v1274
        %v1787 = vand.u32 2147483647, %v1275
        %v1788 = vand.u32 2147483647, %v1276
        %v1789 = vand.u32 2147483647, %v1277
        %v1790 = vand.u32 2147483647, %v1278
        %v1791 = vand.u32 2147483647, %v1279
        %v1792 = vand.u32 2147483647, %v1280
        %v1793 = vand.u32 2147483647, %v1281
        %v1794 = vand.u32 2147483647, %v1282
        %v1795 = vand.u32 2147483647, %v1283
        %v1796 = vand.u32 2147483647, %v1284
        %v1797 = vand.u32 2147483647, %v1285
        %v1798 = vand.u32 2147483647, %v1286
        %v1799 = vand.u32 2147483647, %v1287
        %v1800 = vand.u32 2147483647, %v1288
        %v1801 = vand.u32 2147483647, %v1289
        %v1802 = vand.u32 2147483647, %v1290
        %v1803 = vand.u32 2147483647, %v1291
        %v1804 = vand.u32 2147483647, %v1292
        %v1805 = vand.u32 2147483647, %v1293
        %v1806 = vand.u32 2147483647, %v1294
        %v1807 = vand.u32 2147483647, %v1295
        %v1808 = vand.u32 2147483647, %v1296
        %v1809 = vand.u32 2147483647, %v1297
        %v1810 = vand.u32 2147483647, %v1298
        %v1811 = vand.u32 2147483647, %v1299
        %v1812 = vand.u32 2147483647, %v1300
        %v1813 = vand.u32 2147483647, %v1301
        %v1814 = vand.u32 2147483647, %v1302
        %v1815 = vand.u32 2147483647, %v1303
        %v1816 = vand.u32 2147483647, %v1304
        %v1817 = vand.u32 2147483647, %v1305
        %v1818 = vand.u32 2147483647, %v1306
        %v1819 = vand.u32 2147483647, %v1307
        %v1820 = vand.u32 2147483647, %v1308
        %v1821 = vand.u32 2147483647, %v1309
        %v1822 = vand.u32 2147483647, %v1310
        %v1823 = vand.u32 2147483647, %v1311
        %v1824 = vand.u32 2147483647, %v1312
        %v1825 = vand.u32 2147483647, %v1313
        %v1826 = vand.u32 2147483647, %v1314
        %v1827 = vand.u32 2147483647, %v1315
        %v1828 = vand.u32 2147483647, %v1316
        %v1829 = vand.u32 2147483647, %v1317
        %v1830 = vand.u32 2147483647, %v1318
        %v1831 = vand.u32 2147483647, %v1319
        %v1832 = vand.u32 2147483647, %v1320
        %v1833 = vand.u32 2147483647, %v1321
        %v1834 = vand.u32 2147483647, %v1322
        %v1835 = vand.u32 2147483647, %v1323
        %v1836 = vand.u32 2147483647, %v1324
        %v1837 = vand.u32 2147483647, %v1325
        %v1838 = vand.u32 2147483647, %v1326
        %v1839 = vand.u32 2147483647, %v1327
        %v1840 = vand.u32 2147483647, %v1328
        %v1841 = vand.u32 2147483647, %v1329
        %v1842 = vand.u32 2147483647, %v1330
        %v1843 = vand.u32 2147483647, %v1331
        %v1844 = vand.u32 2147483647, %v1332
        %v1845 = vand.u32 2147483647, %v1333
        %v1846 = vand.u32 2147483647, %v1334
        %v1847 = vand.u32 2147483647, %v1335
        %v1848 = vand.u32 2147483647, %v1336
        %v1849 = vand.u32 2147483647, %v1337
        %v1850 = vand.u32 2147483647, %v1338
        %v1851 = vand.u32 2147483647, %v1339
        %v1852 = vand.u32 2147483647, %v1340
        %v1853 = vand.u32 2147483647, %v1341
        %v1854 = vand.u32 2147483647, %v1342
        %v1855 = vand.u32 2147483647, %v1343
        %v1856 = vand.u32 2147483647, %v1344
        %v1857 = vand.u32 2147483647, %v1345
        %v1858 = vand.u32 2147483647, %v1346
        %v1859 = vand.u32 2147483647, %v1347
        %v1860 = vand.u32 2147483647, %v1348
        %v1861 = vand.u32 2147483647, %v1349
        %v1862 = vand.u32 2147483647, %v1350
        %v1863 = vand.u32 2147483647, %v1351
        %v1864 = vand.u32 2147483647, %v1352
        %v1865 = vand.u32 2147483647, %v1353
        %v1866 = vand.u32 2147483647, %v1354
        %v1867 = vand.u32 2147483647, %v1355
        %v1868 = vand.u32 2147483647, %v1356
        %v1869 = vand.u32 2147483647, %v1357
        %v1870 = vand.u32 2147483647, %v1358
        %v1871 = vand.u32 2147483647, %v1359
        %v1872 = vand.u32 2147483647, %v1360
        %v1873 = vand.u32 2147483647, %v1361
        %v1874 = vand.u32 2147483647, %v1362
        %v1875 = vand.u32 2147483647, %v1363
        %v1876 = vand.u32 2147483647, %v1364
        %v1877 = vand.u32 2147483647, %v1365
        %v1878 = vand.u32 2147483647, %v1366
        %v1879 = vand.u32 2147483647, %v1367
        %v1880 = vand.u32 2147483647, %v1368
        %v1881 = vand.u32 2147483647, %v1369
        %v1882 = vand.u32 2147483647, %v1370
        %v1883 = vand.u32 2147483647, %v1371
        %v1884 = vand.u32 2147483647, %v1372
        %v1885 = vand.u32 2147483647, %v1373
        %v1886 = vand.u32 2147483647, %v1374
        %v1887 = vand.u32 2147483647, %v1375
        %v1888 = vand.u32 2147483647, %v1376
        %v1889 = vand.u32 2147483647, %v1377
        %v1890 = vand.u32 2147483647, %v1378
        %v1891 = vand.u32 2147483647, %v1379
        %v1892 = vand.u32 2147483647, %v1380
        %v1893 = vand.u32 2147483647, %v1381
        %v1894 = vand.u32 2147483647, %v1382
        %v1895 = vand.u32 2147483647, %v1383
        %v1896 = vand.u32 2147483647, %v1384
        %v1897 = vand.u32 2147483647, %v1385
        %v1898 = vand.u32 2147483647, %v1386
        %v1899 = vand.u32 2147483647, %v1387
        %v1900 = vand.u32 2147483647, %v1388
        %v1901 = vand.u32 2147483647, %v1389
        %v1902 = vand.u32 2147483647, %v1390
        %v1903 = vand.u32 2147483647, %v1391
        %v1904 = vand.u32 2147483647, %v1392
        %v1905 = vand.u32 2147483647, %v1393
        %v1906 = vand.u32 2147483647, %v1394
        %v1907 = vand.u32 2147483647, %v1395
        %v1908 = vand.u32 2147483647, %v1396
        %v1909 = vand.u32 2147483647, %v1397
        %v1910 = vand.u32 2147483647, %v1398
        %v1911 = vand.u32 2147483647, %v1399
        %v1912 = vand.u32 2147483647, %v1400
        %v1913 = vand.u32 2147483647, %v1401
        %v1914 = vand.u32 2147483647, %v1402
        %v1915 = vand.u32 2147483647, %v1403
        %v1916 = vand.u32 2147483647, %v1404
        %v1917 = vand.u32 2147483647, %v1405
        %v1918 = vand.u32 2147483647, %v1406
        %v1919 = vand.u32 2147483647, %v1407
        %v1920 = vand.u32 2147483647, %v1408
        %v1921 = vand.u32 2147483647, %v1409
        %v1922 = vand.u32 2147483647, %v1410
        %v1923 = vand.u32 2147483647, %v1411
        %v1924 = vand.u32 2147483647, %v1412
        %v1925 = vand.u32 2147483647, %v1413
        %v1926 = vand.u32 2147483647, %v1414
        %v1927 = vand.u32 2147483647, %v1415
        %v1928 = vand.u32 2147483647, %v1416
        %v1929 = vand.u32 2147483647, %v1417
        %v1930 = vand.u32 2147483647, %v1418
        %v1931 = vand.u32 2147483647, %v1419
        %v1932 = vand.u32 2147483647, %v1420
        %v1933 = vand.u32 2147483647, %v1421
        %v1934 = vand.u32 2147483647, %v1422
        %v1935 = vand.u32 2147483647, %v1423
        %v1936 = vand.u32 2147483647, %v1424
        %v1937 = vand.u32 2147483647, %v1425
        %v1938 = vand.u32 2147483647, %v1426
        %v1939 = vand.u32 2147483647, %v1427
        %v1940 = vand.u32 2147483647, %v1428
        %v1941 = vand.u32 2147483647, %v1429
        %v1942 = vand.u32 2147483647, %v1430
        %v1943 = vand.u32 2147483647, %v1431
        %v1944 = vand.u32 2147483647, %v1432
        %v1945 = vand.u32 2147483647, %v1433
        %v1946 = vand.u32 2147483647, %v1434
        %v1947 = vand.u32 2147483647, %v1435
        %v1948 = vand.u32 2147483647, %v1436
        %v1949 = vand.u32 2147483647, %v1437
        %v1950 = vand.u32 2147483647, %v1438
        %v1951 = vand.u32 2147483647, %v1439
        %v1952 = vand.u32 2147483647, %v1440
        %v1953 = vand.u32 2147483647, %v1441
        %v1954 = vand.u32 2147483647, %v1442
        %v1955 = vand.u32 2147483647, %v1443
        %v1956 = vand.u32 2147483647, %v1444
        %v1957 = vand.u32 2147483647, %v1445
        %v1958 = vand.u32 2147483647, %v1446
        %v1959 = vand.u32 2147483647, %v1447
        %v1960 = vand.u32 2147483647, %v1448
        %v1961 = vand.u32 2147483647, %v1449
        %v1962 = vand.u32 2147483647, %v1450
        %v1963 = vand.u32 2147483647, %v1451
        %v1964 = vand.u32 2147483647, %v1452
        %v1965 = vand.u32 2147483647, %v1453
        %v1966 = vand.u32 2147483647, %v1454
        %v1967 = vand.u32 2147483647, %v1455
        %v1968 = vand.u32 2147483647, %v1456
        %v1969 = vand.u32 2147483647, %v1457
        %v1970 = vand.u32 2147483647, %v1458
        %v1971 = vand.u32 2147483647, %v1459
        %v1972 = vand.u32 2147483647, %v1460
        %v1973 = vand.u32 2147483647, %v1461
        %v1974 = vand.u32 2147483647, %v1462
        %v1975 = vand.u32 2147483647, %v1463
        %v1976 = vand.u32 2147483647, %v1464
        %v1977 = vand.u32 2147483647, %v1465
        %v1978 = vand.u32 2147483647, %v1466
        %v1979 = vand.u32 2147483647, %v1467
        %v1980 = vand.u32 2147483647, %v1468
        %v1981 = vand.u32 2147483647, %v1469
        %v1982 = vand.u32 2147483647, %v1470
        %v1983 = vand.u32 2147483647, %v1471
        %v1984 = vand.u32 2147483647, %v1472
        %v1985 = vand.u32 2147483647, %v1473
        %v1986 = vand.u32 2147483647, %v1474
        %v1987 = vand.u32 2147483647, %v1475
        %v1988 = vand.u32 2147483647, %v1476
        %v1989 = vand.u32 2147483647, %v1477
        %v1990 = vand.u32 2147483647, %v1478
        %v1991 = vand.u32 2147483647, %v1479
        %v1992 = vand.u32 2147483647, %v1480
        %v1993 = vand.u32 2147483647, %v1481
        %v1994 = vand.u32 2147483647, %v1482
        %v1995 = vand.u32 2147483647, %v1483
        %v1996 = vand.u32 2147483647, %v1484
        %v1997 = vand.u32 2147483647, %v1485
        %v1998 = vand.u32 2147483647, %v1486
        %v1999 = vand.u32 2147483647, %v1487
        %v2000 = vand.u32 2147483647, %v1488
        %v2001 = vand.u32 2147483647, %v1489
        %v2002 = vand.u32 2147483647, %v1490
        %v2003 = vand.u32 2147483647, %v1491
        %v2004 = vand.u32 2147483647, %v1492
        %v2005 = vand.u32 2147483647, %v1493
        %v2006 = vand.u32 2147483647, %v1494
        %v2007 = vand.u32 2147483647, %v1495
        %v2008 = vand.u32 2147483647, %v1496
        %v2009 = vand.u32 2147483647, %v1497
        %v2010 = vand.u32 2147483647, %v1498
        %v2011 = vand.u32 2147483647, %v1499
        %v2012 = vand.u32 2147483647, %v1500
        %v2013 = vand.u32 2147483647, %v1501
        %v2014 = vand.u32 2147483647, %v1502
        %v2015 = vand.u32 2147483647, %v1503
        %v2016 = vand.u32 2147483647, %v1504
        %v2017 = vand.u32 2147483647, %v1505
        %v2018 = vand.u32 2147483647, %v1506
        %v2019 = vand.u32 2147483647, %v1507
        %v2020 = vand.u32 2147483647, %v1508
        %v2021 = vand.u32 2147483647, %v1509
        %v2022 = vand.u32 2147483647, %v1510
        %v2023 = vand.u32 2147483647, %v1511
        %v2024 = vsub.f32 1.0, %v1512
        %v2025 = vsub.f32 1.0, %v1513
        %v2026 = vsub.f32 1.0, %v1514
        %v2027 = vsub.f32 1.0, %v1515
        %v2028 = vsub.f32 1.0, %v1516
        %v2029 = vsub.f32 1.0, %v1517
        %v2030 = vsub.f32 1.0, %v1518
        %v2031 = vsub.f32 1.0, %v1519
        %v2032 = vsub.f32 1.0, %v1520
        %v2033 = vsub.f32 1.0, %v1521
        %v2034 = vsub.f32 1.0, %v1522
        %v2035 = vsub.f32 1.0, %v1523
        %v2036 = vsub.f32 1.0, %v1524
        %v2037 = vsub.f32 1.0, %v1525
        %v2038 = vsub.f32 1.0, %v1526
        %v2039 = vsub.f32 1.0, %v1527
        %v2040 = vsub.f32 1.0, %v1528
        %v2041 = vsub.f32 1.0, %v1529
        %v2042 = vsub.f32 1.0, %v1530
        %v2043 = vsub.f32 1.0, %v1531
        %v2044 = vsub.f32 1.0, %v1532
        %v2045 = vsub.f32 1.0, %v1533
        %v2046 = vsub.f32 1.0, %v1534
        %v2047 = vsub.f32 1.0, %v1535
        %v2048 = vsub.f32 1.0, %v1536
        %v2049 = vsub.f32 1.0, %v1537
        %v2050 = vsub.f32 1.0, %v1538
        %v2051 = vsub.f32 1.0, %v1539
        %v2052 = vsub.f32 1.0, %v1540
        %v2053 = vsub.f32 1.0, %v1541
        %v2054 = vsub.f32 1.0, %v1542
        %v2055 = vsub.f32 1.0, %v1543
        %v2056 = vsub.f32 1.0, %v1544
        %v2057 = vsub.f32 1.0, %v1545
        %v2058 = vsub.f32 1.0, %v1546
        %v2059 = vsub.f32 1.0, %v1547
        %v2060 = vsub.f32 1.0, %v1548
        %v2061 = vsub.f32 1.0, %v1549
        %v2062 = vsub.f32 1.0, %v1550
        %v2063 = vsub.f32 1.0, %v1551
        %v2064 = vsub.f32 1.0, %v1552
        %v2065 = vsub.f32 1.0, %v1553
        %v2066 = vsub.f32 1.0, %v1554
        %v2067 = vsub.f32 1.0, %v1555
        %v2068 = vsub.f32 1.0, %v1556
        %v2069 = vsub.f32 1.0, %v1557
        %v2070 = vsub.f32 1.0, %v1558
        %v2071 = vsub.f32 1.0, %v1559
        %v2072 = vsub.f32 1.0, %v1560
        %v2073 = vsub.f32 1.0, %v1561
        %v2074 = vsub.f32 1.0, %v1562
        %v2075 = vsub.f32 1.0, %v1563
        %v2076 = vsub.f32 1.0, %v1564
        %v2077 = vsub.f32 1.0, %v1565
        %v2078 = vsub.f32 1.0, %v1566
        %v2079 = vsub.f32 1.0, %v1567
        %v2080 = vsub.f32 1.0, %v1568
        %v2081 = vsub.f32 1.0, %v1569
        %v2082 = vsub.f32 1.0, %v1570
        %v2083 = vsub.f32 1.0, %v1571
        %v2084 = vsub.f32 1.0, %v1572
        %v2085 = vsub.f32 1.0, %v1573
        %v2086 = vsub.f32 1.0, %v1574
        %v2087 = vsub.f32 1.0, %v1575
        %v2088 = vsub.f32 1.0, %v1576
        %v2089 = vsub.f32 1.0, %v1577
        %v2090 = vsub.f32 1.0, %v1578
        %v2091 = vsub.f32 1.0, %v1579
        %v2092 = vsub.f32 1.0, %v1580
        %v2093 = vsub.f32 1.0, %v1581
        %v2094 = vsub.f32 1.0, %v1582
        %v2095 = vsub.f32 1.0, %v1583
        %v2096 = vsub.f32 1.0, %v1584
        %v2097 = vsub.f32 1.0, %v1585
        %v2098 = vsub.f32 1.0, %v1586
        %v2099 = vsub.f32 1.0, %v1587
        %v2100 = vsub.f32 1.0, %v1588
        %v2101 = vsub.f32 1.0, %v1589
        %v2102 = vsub.f32 1.0, %v1590
        %v2103 = vsub.f32 1.0, %v1591
        %v2104 = vsub.f32 1.0, %v1592
        %v2105 = vsub.f32 1.0, %v1593
        %v2106 = vsub.f32 1.0, %v1594
        %v2107 = vsub.f32 1.0, %v1595
        %v2108 = vsub.f32 1.0, %v1596
        %v2109 = vsub.f32 1.0, %v1597
        %v2110 = vsub.f32 1.0, %v1598
        %v2111 = vsub.f32 1.0, %v1599
        %v2112 = vsub.f32 1.0, %v1600
        %v2113 = vsub.f32 1.0, %v1601
        %v2114 = vsub.f32 1.0, %v1602
        %v2115 = vsub.f32 1.0, %v1603
        %v2116 = vsub.f32 1.0, %v1604
        %v2117 = vsub.f32 1.0, %v1605
        %v2118 = vsub.f32 1.0, %v1606
        %v2119 = vsub.f32 1.0, %v1607
        %v2120 = vsub.f32 1.0, %v1608
        %v2121 = vsub.f32 1.0, %v1609
        %v2122 = vsub.f32 1.0, %v1610
        %v2123 = vsub.f32 1.0, %v1611
        %v2124 = vsub.f32 1.0, %v1612
        %v2125 = vsub.f32 1.0, %v1613
        %v2126 = vsub.f32 1.0, %v1614
        %v2127 = vsub.f32 1.0, %v1615
        %v2128 = vsub.f32 1.0, %v1616
        %v2129 = vsub.f32 1.0, %v1617
        %v2130 = vsub.f32 1.0, %v1618
        %v2131 = vsub.f32 1.0, %v1619
        %v2132 = vsub.f32 1.0, %v1620
        %v2133 = vsub.f32 1.0, %v1621
        %v2134 = vsub.f32 1.0, %v1622
        %v2135 = vsub.f32 1.0, %v1623
        %v2136 = vsub.f32 1.0, %v1624
        %v2137 = vsub.f32 1.0, %v1625
        %v2138 = vsub.f32 1.0, %v1626
        %v2139 = vsub.f32 1.0, %v1627
        %v2140 = vsub.f32 1.0, %v1628
        %v2141 = vsub.f32 1.0, %v1629
        %v2142 = vsub.f32 1.0, %v1630
        %v2143 = vsub.f32 1.0, %v1631
        %v2144 = vsub.f32 1.0, %v1632
        %v2145 = vsub.f32 1.0, %v1633
        %v2146 = vsub.f32 1.0, %v1634
        %v2147 = vsub.f32 1.0, %v1635
        %v2148 = vsub.f32 1.0, %v1636
        %v2149 = vsub.f32 1.0, %v1637
        %v2150 = vsub.f32 1.0, %v1638
        %v2151 = vsub.f32 1.0, %v1639
        %v2152 = vsub.f32 1.0, %v1640
        %v2153 = vsub.f32 1.0, %v1641
        %v2154 = vsub.f32 1.0, %v1642
        %v2155 = vsub.f32 1.0, %v1643
        %v2156 = vsub.f32 1.0, %v1644
        %v2157 = vsub.f32 1.0, %v1645
        %v2158 = vsub.f32 1.0, %v1646
        %v2159 = vsub.f32 1.0, %v1647
        %v2160 = vsub.f32 1.0, %v1648
        %v2161 = vsub.f32 1.0, %v1649
        %v2162 = vsub.f32 1.0, %v1650
        %v2163 = vsub.f32 1.0, %v1651
        %v2164 = vsub.f32 1.0, %v1652
        %v2165 = vsub.f32 1.0, %v1653
        %v2166 = vsub.f32 1.0, %v1654
        %v2167 = vsub.f32 1.0, %v1655
        %v2168 = vsub.f32 1.0, %v1656
        %v2169 = vsub.f32 1.0, %v1657
        %v2170 = vsub.f32 1.0, %v1658
        %v2171 = vsub.f32 1.0, %v1659
        %v2172 = vsub.f32 1.0, %v1660
        %v2173 = vsub.f32 1.0, %v1661
        %v2174 = vsub.f32 1.0, %v1662
        %v2175 = vsub.f32 1.0, %v1663
        %v2176 = vsub.f32 1.0, %v1664
        %v2177 = vsub.f32 1.0, %v1665
        %v2178 = vsub.f32 1.0, %v1666
        %v2179 = vsub.f32 1.0, %v1667
        %v2180 = vsub.f32 1.0, %v1668
        %v2181 = vsub.f32 1.0, %v1669
        %v2182 = vsub.f32 1.0, %v1670
        %v2183 = vsub.f32 1.0, %v1671
        %v2184 = vsub.f32 1.0, %v1672
        %v2185 = vsub.f32 1.0, %v1673
        %v2186 = vsub.f32 1.0, %v1674
        %v2187 = vsub.f32 1.0, %v1675
        %v2188 = vsub.f32 1.0, %v1676
        %v2189 = vsub.f32 1.0, %v1677
        %v2190 = vsub.f32 1.0, %v1678
        %v2191 = vsub.f32 1.0, %v1679
        %v2192 = vsub.f32 1.0, %v1680
        %v2193 = vsub.f32 1.0, %v1681
        %v2194 = vsub.f32 1.0, %v1682
        %v2195 = vsub.f32 1.0, %v1683
        %v2196 = vsub.f32 1.0, %v1684
        %v2197 = vsub.f32 1.0, %v1685
        %v2198 = vsub.f32 1.0, %v1686
        %v2199 = vsub.f32 1.0, %v1687
        %v2200 = vsub.f32 1.0, %v1688
        %v2201 = vsub.f32 1.0, %v1689
        %v2202 = vsub.f32 1.0, %v1690
        %v2203 = vsub.f32 1.0, %v1691
        %v2204 = vsub.f32 1.0, %v1692
        %v2205 = vsub.f32 1.0, %v1693
        %v2206 = vsub.f32 1.0, %v1694
        %v2207 = vsub.f32 1.0, %v1695
        %v2208 = vsub.f32 1.0, %v1696
        %v2209 = vsub.f32 1.0, %v1697
        %v2210 = vsub.f32 1.0, %v1698
        %v2211 = vsub.f32 1.0, %v1699
        %v2212 = vsub.f32 1.0, %v1700
        %v2213 = vsub.f32 1.0, %v1701
        %v2214 = vsub.f32 1.0, %v1702
        %v2215 = vsub.f32 1.0, %v1703
        %v2216 = vsub.f32 1.0, %v1704
        %v2217 = vsub.f32 1.0, %v1705
        %v2218 = vsub.f32 1.0, %v1706
        %v2219 = vsub.f32 1.0, %v1707
        %v2220 = vsub.f32 1.0, %v1708
        %v2221 = vsub.f32 1.0, %v1709
        %v2222 = vsub.f32 1.0, %v1710
        %v2223 = vsub.f32 1.0, %v1711
        %v2224 = vsub.f32 1.0, %v1712
        %v2225 = vsub.f32 1.0, %v1713
        %v2226 = vsub.f32 1.0, %v1714
        %v2227 = vsub.f32 1.0, %v1715
        %v2228 = vsub.f32 1.0, %v1716
        %v2229 = vsub.f32 1.0, %v1717
        %v2230 = vsub.f32 1.0, %v1718
        %v2231 = vsub.f32 1.0, %v1719
        %v2232 = vsub.f32 1.0, %v1720
        %v2233 = vsub.f32 1.0, %v1721
        %v2234 = vsub.f32 1.0, %v1722
        %v2235 = vsub.f32 1.0, %v1723
        %v2236 = vsub.f32 1.0, %v1724
        %v2237 = vsub.f32 1.0, %v1725
        %v2238 = vsub.f32 1.0, %v1726
        %v2239 = vsub.f32 1.0, %v1727
        %v2240 = vsub.f32 1.0, %v1728
        %v2241 = vsub.f32 1.0, %v1729
        %v2242 = vsub.f32 1.0, %v1730
        %v2243 = vsub.f32 1.0, %v1731
        %v2244 = vsub.f32 1.0, %v1732
        %v2245 = vsub.f32 1.0, %v1733
        %v2246 = vsub.f32 1.0, %v1734
        %v2247 = vsub.f32 1.0, %v1735
        %v2248 = vsub.f32 1.0, %v1736
        %v2249 = vsub.f32 1.0, %v1737
        %v2250 = vsub.f32 1.0, %v1738
        %v2251 = vsub.f32 1.0, %v1739
        %v2252 = vsub.f32 1.0, %v1740
        %v2253 = vsub.f32 1.0, %v1741
        %v2254 = vsub.f32 1.0, %v1742
        %v2255 = vsub.f32 1.0, %v1743
        %v2256 = vsub.f32 1.0, %v1744
        %v2257 = vsub.f32 1.0, %v1745
        %v2258 = vsub.f32 1.0, %v1746
        %v2259 = vsub.f32 1.0, %v1747
        %v2260 = vsub.f32 1.0, %v1748
        %v2261 = vsub.f32 1.0, %v1749
        %v2262 = vsub.f32 1.0, %v1750
        %v2263 = vsub.f32 1.0, %v1751
        %v2264 = vsub.f32 1.0, %v1752
        %v2265 = vsub.f32 1.0, %v1753
        %v2266 = vsub.f32 1.0, %v1754
        %v2267 = vsub.f32 1.0, %v1755
        %v2268 = vsub.f32 1.0, %v1756
        %v2269 = vsub.f32 1.0, %v1757
        %v2270 = vsub.f32 1.0, %v1758
        %v2271 = vsub.f32 1.0, %v1759
        %v2272 = vsub.f32 1.0, %v1760
        %v2273 = vsub.f32 1.0, %v1761
        %v2274 = vsub.f32 1.0, %v1762
        %v2275 = vsub.f32 1.0, %v1763
        %v2276 = vsub.f32 1.0, %v1764
        %v2277 = vsub.f32 1.0, %v1765
        %v2278 = vsub.f32 1.0, %v1766
        %v2279 = vsub.f32 1.0, %v1767
        %v2280 = vsub.f32 1.0, %v1768
        %v2281 = vsub.f32 1.0, %v1769
        %v2282 = vsub.f32 1.0, %v1770
        %v2283 = vsub.f32 1.0, %v1771
        %v2284 = vsub.f32 1.0, %v1772
        %v2285 = vsub.f32 1.0, %v1773
        %v2286 = vsub.f32 1.0, %v1774
        %v2287 = vsub.f32 1.0, %v1775
        %v2288 = vsub.f32 1.0, %v1776
        %v2289 = vsub.f32 1.0, %v1777
        %v2290 = vsub.f32 1.0, %v1778
        %v2291 = vsub.f32 1.0, %v1779
        %v2292 = vsub.f32 1.0, %v1780
        %v2293 = vsub.f32 1.0, %v1781
        %v2294 = vsub.f32 1.0, %v1782
        %v2295 = vsub.f32 1.0, %v1783
        %v2296 = vsub.f32 1.0, %v1784
        %v2297 = vsub.f32 1.0, %v1785
        %v2298 = vsub.f32 1.0, %v1786
        %v2299 = vsub.f32 1.0, %v1787
        %v2300 = vsub.f32 1.0, %v1788
        %v2301 = vsub.f32 1.0, %v1789
        %v2302 = vsub.f32 1.0, %v1790
        %v2303 = vsub.f32 1.0, %v1791
        %v2304 = vsub.f32 1.0, %v1792
        %v2305 = vsub.f32 1.0, %v1793
        %v2306 = vsub.f32 1.0, %v1794
        %v2307 = vsub.f32 1.0, %v1795
        %v2308 = vsub.f32 1.0, %v1796
        %v2309 = vsub.f32 1.0, %v1797
        %v2310 = vsub.f32 1.0, %v1798
        %v2311 = vsub.f32 1.0, %v1799
        %v2312 = vsub.f32 1.0, %v1800
        %v2313 = vsub.f32 1.0, %v1801
        %v2314 = vsub.f32 1.0, %v1802
        %v2315 = vsub.f32 1.0, %v1803
        %v2316 = vsub.f32 1.0, %v1804
        %v2317 = vsub.f32 1.0, %v1805
        %v2318 = vsub.f32 1.0, %v1806
        %v2319 = vsub.f32 1.0, %v1807
        %v2320 = vsub.f32 1.0, %v1808
        %v2321 = vsub.f32 1.0, %v1809
        %v2322 = vsub.f32 1.0, %v1810
        %v2323 = vsub.f32 1.0, %v1811
        %v2324 = vsub.f32 1.0, %v1812
        %v2325 = vsub.f32 1.0, %v1813
        %v2326 = vsub.f32 1.0, %v1814
        %v2327 = vsub.f32 1.0, %v1815
        %v2328 = vsub.f32 1.0, %v1816
        %v2329 = vsub.f32 1.0, %v1817
        %v2330 = vsub.f32 1.0, %v1818
        %v2331 = vsub.f32 1.0, %v1819
        %v2332 = vsub.f32 1.0, %v1820
        %v2333 = vsub.f32 1.0, %v1821
        %v2334 = vsub.f32 1.0, %v1822
        %v2335 = vsub.f32 1.0, %v1823
        %v2336 = vsub.f32 1.0, %v1824
        %v2337 = vsub.f32 1.0, %v1825
        %v2338 = vsub.f32 1.0, %v1826
        %v2339 = vsub.f32 1.0, %v1827
        %v2340 = vsub.f32 1.0, %v1828
        %v2341 = vsub.f32 1.0, %v1829
        %v2342 = vsub.f32 1.0, %v1830
        %v2343 = vsub.f32 1.0, %v1831
        %v2344 = vsub.f32 1.0, %v1832
        %v2345 = vsub.f32 1.0, %v1833
        %v2346 = vsub.f32 1.0, %v1834
        %v2347 = vsub.f32 1.0, %v1835
        %v2348 = vsub.f32 1.0, %v1836
        %v2349 = vsub.f32 1.0, %v1837
        %v2350 = vsub.f32 1.0, %v1838
        %v2351 = vsub.f32 1.0, %v1839
        %v2352 = vsub.f32 1.0, %v1840
        %v2353 = vsub.f32 1.0, %v1841
        %v2354 = vsub.f32 1.0, %v1842
        %v2355 = vsub.f32 1.0, %v1843
        %v2356 = vsub.f32 1.0, %v1844
        %v2357 = vsub.f32 1.0, %v1845
        %v2358 = vsub.f32 1.0, %v1846
        %v2359 = vsub.f32 1.0, %v1847
        %v2360 = vsub.f32 1.0, %v1848
        %v2361 = vsub.f32 1.0, %v1849
        %v2362 = vsub.f32 1.0, %v1850
        %v2363 = vsub.f32 1.0, %v1851
        %v2364 = vsub.f32 1.0, %v1852
        %v2365 = vsub.f32 1.0, %v1853
        %v2366 = vsub.f32 1.0, %v1854
        %v2367 = vsub.f32 1.0, %v1855
        %v2368 = vsub.f32 1.0, %v1856
        %v2369 = vsub.f32 1.0, %v1857
        %v2370 = vsub.f32 1.0, %v1858
        %v2371 = vsub.f32 1.0, %v1859
        %v2372 = vsub.f32 1.0, %v1860
        %v2373 = vsub.f32 1.0, %v1861
        %v2374 = vsub.f32 1.0, %v1862
        %v2375 = vsub.f32 1.0, %v1863
        %v2376 = vsub.f32 1.0, %v1864
        %v2377 = vsub.f32 1.0, %v1865
        %v2378 = vsub.f32 1.0, %v1866
        %v2379 = vsub.f32 1.0, %v1867
        %v2380 = vsub.f32 1.0, %v1868
        %v2381 = vsub.f32 1.0, %v1869
        %v2382 = vsub.f32 1.0, %v1870
        %v2383 = vsub.f32 1.0, %v1871
        %v2384 = vsub.f32 1.0, %v1872
        %v2385 = vsub.f32 1.0, %v1873
        %v2386 = vsub.f32 1.0, %v1874
        %v2387 = vsub.f32 1.0, %v1875
        %v2388 = vsub.f32 1.0, %v1876
        %v2389 = vsub.f32 1.0, %v1877
        %v2390 = vsub.f32 1.0, %v1878
        %v2391 = vsub.f32 1.0, %v1879
        %v2392 = vsub.f32 1.0, %v1880
        %v2393 = vsub.f32 1.0, %v1881
        %v2394 = vsub.f32 1.0, %v1882
        %v2395 = vsub.f32 1.0, %v1883
        %v2396 = vsub.f32 1.0, %v1884
        %v2397 = vsub.f32 1.0, %v1885
        %v2398 = vsub.f32 1.0, %v1886
        %v2399 = vsub.f32 1.0, %v1887
        %v2400 = vsub.f32 1.0, %v1888
        %v2401 = vsub.f32 1.0, %v1889
        %v2402 = vsub.f32 1.0, %v1890
        %v2403 = vsub.f32 1.0, %v1891
        %v2404 = vsub.f32 1.0, %v1892
        %v2405 = vsub.f32 1.0, %v1893
        %v2406 = vsub.f32 1.0, %v1894
        %v2407 = vsub.f32 1.0, %v1895
        %v2408 = vsub.f32 1.0, %v1896
        %v2409 = vsub.f32 1.0, %v1897
        %v2410 = vsub.f32 1.0, %v1898
        %v2411 = vsub.f32 1.0, %v1899
        %v2412 = vsub.f32 1.0, %v1900
        %v2413 = vsub.f32 1.0, %v1901
        %v2414 = vsub.f32 1.0, %v1902
        %v2415 = vsub.f32 1.0, %v1903
        %v2416 = vsub.f32 1.0, %v1904
        %v2417 = vsub.f32 1.0, %v1905
        %v2418 = vsub.f32 1.0, %v1906
        %v2419 = vsub.f32 1.0, %v1907
        %v2420 = vsub.f32 1.0, %v1908
        %v2421 = vsub.f32 1.0, %v1909
        %v2422 = vsub.f32 1.0, %v1910
        %v2423 = vsub.f32 1.0, %v1911
        %v2424 = vsub.f32 1.0, %v1912
        %v2425 = vsub.f32 1.0, %v1913
        %v2426 = vsub.f32 1.0, %v1914
        %v2427 = vsub.f32 1.0, %v1915
        %v2428 = vsub.f32 1.0, %v1916
        %v2429 = vsub.f32 1.0, %v1917
        %v2430 = vsub.f32 1.0, %v1918
        %v2431 = vsub.f32 1.0, %v1919
        %v2432 = vsub.f32 1.0, %v1920
        %v2433 = vsub.f32 1.0, %v1921
        %v2434 = vsub.f32 1.0, %v1922
        %v2435 = vsub.f32 1.0, %v1923
        %v2436 = vsub.f32 1.0, %v1924
        %v2437 = vsub.f32 1.0, %v1925
        %v2438 = vsub.f32 1.0, %v1926
        %v2439 = vsub.f32 1.0, %v1927
        %v2440 = vsub.f32 1.0, %v1928
        %v2441 = vsub.f32 1.0, %v1929
        %v2442 = vsub.f32 1.0, %v1930
        %v2443 = vsub.f32 1.0, %v1931
        %v2444 = vsub.f32 1.0, %v1932
        %v2445 = vsub.f32 1.0, %v1933
        %v2446 = vsub.f32 1.0, %v1934
        %v2447 = vsub.f32 1.0, %v1935
        %v2448 = vsub.f32 1.0, %v1936
        %v2449 = vsub.f32 1.0, %v1937
        %v2450 = vsub.f32 1.0, %v1938
        %v2451 = vsub.f32 1.0, %v1939
        %v2452 = vsub.f32 1.0, %v1940
        %v2453 = vsub.f32 1.0, %v1941
        %v2454 = vsub.f32 1.0, %v1942
        %v2455 = vsub.f32 1.0, %v1943
        %v2456 = vsub.f32 1.0, %v1944
        %v2457 = vsub.f32 1.0, %v1945
        %v2458 = vsub.f32 1.0, %v1946
        %v2459 = vsub.f32 1.0, %v1947
        %v2460 = vsub.f32 1.0, %v1948
        %v2461 = vsub.f32 1.0, %v1949
        %v2462 = vsub.f32 1.0, %v1950
        %v2463 = vsub.f32 1.0, %v1951
        %v2464 = vsub.f32 1.0, %v1952
        %v2465 = vsub.f32 1.0, %v1953
        %v2466 = vsub.f32 1.0, %v1954
        %v2467 = vsub.f32 1.0, %v1955
        %v2468 = vsub.f32 1.0, %v1956
        %v2469 = vsub.f32 1.0, %v1957
        %v2470 = vsub.f32 1.0, %v1958
        %v2471 = vsub.f32 1.0, %v1959
        %v2472 = vsub.f32 1.0, %v1960
        %v2473 = vsub.f32 1.0, %v1961
        %v2474 = vsub.f32 1.0, %v1962
        %v2475 = vsub.f32 1.0, %v1963
        %v2476 = vsub.f32 1.0, %v1964
        %v2477 = vsub.f32 1.0, %v1965
        %v2478 = vsub.f32 1.0, %v1966
        %v2479 = vsub.f32 1.0, %v1967
        %v2480 = vsub.f32 1.0, %v1968
        %v2481 = vsub.f32 1.0, %v1969
        %v2482 = vsub.f32 1.0, %v1970
        %v2483 = vsub.f32 1.0, %v1971
        %v2484 = vsub.f32 1.0, %v1972
        %v2485 = vsub.f32 1.0, %v1973
        %v2486 = vsub.f32 1.0, %v1974
        %v2487 = vsub.f32 1.0, %v1975
        %v2488 = vsub.f32 1.0, %v1976
        %v2489 = vsub.f32 1.0, %v1977
        %v2490 = vsub.f32 1.0, %v1978
        %v2491 = vsub.f32 1.0, %v1979
        %v2492 = vsub.f32 1.0, %v1980
        %v2493 = vsub.f32 1.0, %v1981
        %v2494 = vsub.f32 1.0, %v1982
        %v2495 = vsub.f32 1.0, %v1983
        %v2496 = vsub.f32 1.0, %v1984
        %v2497 = vsub.f32 1.0, %v1985
        %v2498 = vsub.f32 1.0, %v1986
        %v2499 = vsub.f32 1.0, %v1987
        %v2500 = vsub.f32 1.0, %v1988
        %v2501 = vsub.f32 1.0, %v1989
        %v2502 = vsub.f32 1.0, %v1990
        %v2503 = vsub.f32 1.0, %v1991
        %v2504 = vsub.f32 1.0, %v1992
        %v2505 = vsub.f32 1.0, %v1993
        %v2506 = vsub.f32 1.0, %v1994
        %v2507 = vsub.f32 1.0, %v1995
        %v2508 = vsub.f32 1.0, %v1996
        %v2509 = vsub.f32 1.0, %v1997
        %v2510 = vsub.f32 1.0, %v1998
        %v2511 = vsub.f32 1.0, %v1999
        %v2512 = vsub.f32 1.0, %v2000
        %v2513 = vsub.f32 1.0, %v2001
        %v2514 = vsub.f32 1.0, %v2002
        %v2515 = vsub.f32 1.0, %v2003
        %v2516 = vsub.f32 1.0, %v2004
        %v2517 = vsub.f32 1.0, %v2005
        %v2518 = vsub.f32 1.0, %v2006
        %v2519 = vsub.f32 1.0, %v2007
        %v2520 = vsub.f32 1.0, %v2008
        %v2521 = vsub.f32 1.0, %v2009
        %v2522 = vsub.f32 1.0, %v2010
        %v2523 = vsub.f32 1.0, %v2011
        %v2524 = vsub.f32 1.0, %v2012
        %v2525 = vsub.f32 1.0, %v2013
        %v2526 = vsub.f32 1.0, %v2014
        %v2527 = vsub.f32 1.0, %v2015
        %v2528 = vsub.f32 1.0, %v2016
        %v2529 = vsub.f32 1.0, %v2017
        %v2530 = vsub.f32 1.0, %v2018
        %v2531 = vsub.f32 1.0, %v2019
        %v2532 = vsub.f32 1.0, %v2020
        %v2533 = vsub.f32 1.0, %v2021
        %v2534 = vsub.f32 1.0, %v2022
        %v2535 = vsub.f32 1.0, %v2023
        %v2536 = vmax.f32 %v2024, 0.0
        %v2537 = vmax.f32 %v2025, 0.0
        %v2538 = vmax.f32 %v2026, 0.0
        %v2539 = vmax.f32 %v2027, 0.0
        %v2540 = vmax.f32 %v2028, 0.0
        %v2541 = vmax.f32 %v2029, 0.0
        %v2542 = vmax.f32 %v2030, 0.0
        %v2543 = vmax.f32 %v2031, 0.0
        %v2544 = vmax.f32 %v2032, 0.0
        %v2545 = vmax.f32 %v2033, 0.0
        %v2546 = vmax.f32 %v2034, 0.0
        %v2547 = vmax.f32 %v2035, 0.0
        %v2548 = vmax.f32 %v2036, 0.0
        %v2549 = vmax.f32 %v2037, 0.0
        %v2550 = vmax.f32 %v2038, 0.0
        %v2551 = vmax.f32 %v2039, 0.0
        %v2552 = vmax.f32 %v2040, 0.0
        %v2553 = vmax.f32 %v2041, 0.0
        %v2554 = vmax.f32 %v2042, 0.0
        %v2555 = vmax.f32 %v2043, 0.0
        %v2556 = vmax.f32 %v2044, 0.0
        %v2557 = vmax.f32 %v2045, 0.0
        %v2558 = vmax.f32 %v2046, 0.0
        %v2559 = vmax.f32 %v2047, 0.0
        %v2560 = vmax.f32 %v2048, 0.0
        %v2561 = vmax.f32 %v2049, 0.0
        %v2562 = vmax.f32 %v2050, 0.0
        %v2563 = vmax.f32 %v2051, 0.0
        %v2564 = vmax.f32 %v2052, 0.0
        %v2565 = vmax.f32 %v2053, 0.0
        %v2566 = vmax.f32 %v2054, 0.0
        %v2567 = vmax.f32 %v2055, 0.0
        %v2568 = vmax.f32 %v2056, 0.0
        %v2569 = vmax.f32 %v2057, 0.0
        %v2570 = vmax.f32 %v2058, 0.0
        %v2571 = vmax.f32 %v2059, 0.0
        %v2572 = vmax.f32 %v2060, 0.0
        %v2573 = vmax.f32 %v2061, 0.0
        %v2574 = vmax.f32 %v2062, 0.0
        %v2575 = vmax.f32 %v2063, 0.0
        %v2576 = vmax.f32 %v2064, 0.0
        %v2577 = vmax.f32 %v2065, 0.0
        %v2578 = vmax.f32 %v2066, 0.0
        %v2579 = vmax.f32 %v2067, 0.0
        %v2580 = vmax.f32 %v2068, 0.0
        %v2581 = vmax.f32 %v2069, 0.0
        %v2582 = vmax.f32 %v2070, 0.0
        %v2583 = vmax.f32 %v2071, 0.0
        %v2584 = vmax.f32 %v2072, 0.0
        %v2585 = vmax.f32 %v2073, 0.0
        %v2586 = vmax.f32 %v2074, 0.0
        %v2587 = vmax.f32 %v2075, 0.0
        %v2588 = vmax.f32 %v2076, 0.0
        %v2589 = vmax.f32 %v2077, 0.0
        %v2590 = vmax.f32 %v2078, 0.0
        %v2591 = vmax.f32 %v2079, 0.0
        %v2592 = vmax.f32 %v2080, 0.0
        %v2593 = vmax.f32 %v2081, 0.0
        %v2594 = vmax.f32 %v2082, 0.0
        %v2595 = vmax.f32 %v2083, 0.0
        %v2596 = vmax.f32 %v2084, 0.0
        %v2597 = vmax.f32 %v2085, 0.0
        %v2598 = vmax.f32 %v2086, 0.0
        %v2599 = vmax.f32 %v2087, 0.0
        %v2600 = vmax.f32 %v2088, 0.0
        %v2601 = vmax.f32 %v2089, 0.0
        %v2602 = vmax.f32 %v2090, 0.0
        %v2603 = vmax.f32 %v2091, 0.0
        %v2604 = vmax.f32 %v2092, 0.0
        %v2605 = vmax.f32 %v2093, 0.0
        %v2606 = vmax.f32 %v2094, 0.0
        %v2607 = vmax.f32 %v2095, 0.0
        %v2608 = vmax.f32 %v2096, 0.0
        %v2609 = vmax.f32 %v2097, 0.0
        %v2610 = vmax.f32 %v2098, 0.0
        %v2611 = vmax.f32 %v2099, 0.0
        %v2612 = vmax.f32 %v2100, 0.0
        %v2613 = vmax.f32 %v2101, 0.0
        %v2614 = vmax.f32 %v2102, 0.0
        %v2615 = vmax.f32 %v2103, 0.0
        %v2616 = vmax.f32 %v2104, 0.0
        %v2617 = vmax.f32 %v2105, 0.0
        %v2618 = vmax.f32 %v2106, 0.0
        %v2619 = vmax.f32 %v2107, 0.0
        %v2620 = vmax.f32 %v2108, 0.0
        %v2621 = vmax.f32 %v2109, 0.0
        %v2622 = vmax.f32 %v2110, 0.0
        %v2623 = vmax.f32 %v2111, 0.0
        %v2624 = vmax.f32 %v2112, 0.0
        %v2625 = vmax.f32 %v2113, 0.0
        %v2626 = vmax.f32 %v2114, 0.0
        %v2627 = vmax.f32 %v2115, 0.0
        %v2628 = vmax.f32 %v2116, 0.0
        %v2629 = vmax.f32 %v2117, 0.0
        %v2630 = vmax.f32 %v2118, 0.0
        %v2631 = vmax.f32 %v2119, 0.0
        %v2632 = vmax.f32 %v2120, 0.0
        %v2633 = vmax.f32 %v2121, 0.0
        %v2634 = vmax.f32 %v2122, 0.0
        %v2635 = vmax.f32 %v2123, 0.0
        %v2636 = vmax.f32 %v2124, 0.0
        %v2637 = vmax.f32 %v2125, 0.0
        %v2638 = vmax.f32 %v2126, 0.0
        %v2639 = vmax.f32 %v2127, 0.0
        %v2640 = vmax.f32 %v2128, 0.0
        %v2641 = vmax.f32 %v2129, 0.0
        %v2642 = vmax.f32 %v2130, 0.0
        %v2643 = vmax.f32 %v2131, 0.0
        %v2644 = vmax.f32 %v2132, 0.0
        %v2645 = vmax.f32 %v2133, 0.0
        %v2646 = vmax.f32 %v2134, 0.0
        %v2647 = vmax.f32 %v2135, 0.0
        %v2648 = vmax.f32 %v2136, 0.0
        %v2649 = vmax.f32 %v2137, 0.0
        %v2650 = vmax.f32 %v2138, 0.0
        %v2651 = vmax.f32 %v2139, 0.0
        %v2652 = vmax.f32 %v2140, 0.0
        %v2653 = vmax.f32 %v2141, 0.0
        %v2654 = vmax.f32 %v2142, 0.0
        %v2655 = vmax.f32 %v2143, 0.0
        %v2656 = vmax.f32 %v2144, 0.0
        %v2657 = vmax.f32 %v2145, 0.0
        %v2658 = vmax.f32 %v2146, 0.0
        %v2659 = vmax.f32 %v2147, 0.0
        %v2660 = vmax.f32 %v2148, 0.0
        %v2661 = vmax.f32 %v2149, 0.0
        %v2662 = vmax.f32 %v2150, 0.0
        %v2663 = vmax.f32 %v2151, 0.0
        %v2664 = vmax.f32 %v2152, 0.0
        %v2665 = vmax.f32 %v2153, 0.0
        %v2666 = vmax.f32 %v2154, 0.0
        %v2667 = vmax.f32 %v2155, 0.0
        %v2668 = vmax.f32 %v2156, 0.0
        %v2669 = vmax.f32 %v2157, 0.0
        %v2670 = vmax.f32 %v2158, 0.0
        %v2671 = vmax.f32 %v2159, 0.0
        %v2672 = vmax.f32 %v2160, 0.0
        %v2673 = vmax.f32 %v2161, 0.0
        %v2674 = vmax.f32 %v2162, 0.0
        %v2675 = vmax.f32 %v2163, 0.0
        %v2676 = vmax.f32 %v2164, 0.0
        %v2677 = vmax.f32 %v2165, 0.0
        %v2678 = vmax.f32 %v2166, 0.0
        %v2679 = vmax.f32 %v2167, 0.0
        %v2680 = vmax.f32 %v2168, 0.0
        %v2681 = vmax.f32 %v2169, 0.0
        %v2682 = vmax.f32 %v2170, 0.0
        %v2683 = vmax.f32 %v2171, 0.0
        %v2684 = vmax.f32 %v2172, 0.0
        %v2685 = vmax.f32 %v2173, 0.0
        %v2686 = vmax.f32 %v2174, 0.0
        %v2687 = vmax.f32 %v2175, 0.0
        %v2688 = vmax.f32 %v2176, 0.0
        %v2689 = vmax.f32 %v2177, 0.0
        %v2690 = vmax.f32 %v2178, 0.0
        %v2691 = vmax.f32 %v2179, 0.0
        %v2692 = vmax.f32 %v2180, 0.0
        %v2693 = vmax.f32 %v2181, 0.0
        %v2694 = vmax.f32 %v2182, 0.0
        %v2695 = vmax.f32 %v2183, 0.0
        %v2696 = vmax.f32 %v2184, 0.0
        %v2697 = vmax.f32 %v2185, 0.0
        %v2698 = vmax.f32 %v2186, 0.0
        %v2699 = vmax.f32 %v2187, 0.0
        %v2700 = vmax.f32 %v2188, 0.0
        %v2701 = vmax.f32 %v2189, 0.0
        %v2702 = vmax.f32 %v2190, 0.0
        %v2703 = vmax.f32 %v2191, 0.0
        %v2704 = vmax.f32 %v2192, 0.0
        %v2705 = vmax.f32 %v2193, 0.0
        %v2706 = vmax.f32 %v2194, 0.0
        %v2707 = vmax.f32 %v2195, 0.0
        %v2708 = vmax.f32 %v2196, 0.0
        %v2709 = vmax.f32 %v2197, 0.0
        %v2710 = vmax.f32 %v2198, 0.0
        %v2711 = vmax.f32 %v2199, 0.0
        %v2712 = vmax.f32 %v2200, 0.0
        %v2713 = vmax.f32 %v2201, 0.0
        %v2714 = vmax.f32 %v2202, 0.0
        %v2715 = vmax.f32 %v2203, 0.0
        %v2716 = vmax.f32 %v2204, 0.0
        %v2717 = vmax.f32 %v2205, 0.0
        %v2718 = vmax.f32 %v2206, 0.0
        %v2719 = vmax.f32 %v2207, 0.0
        %v2720 = vmax.f32 %v2208, 0.0
        %v2721 = vmax.f32 %v2209, 0.0
        %v2722 = vmax.f32 %v2210, 0.0
        %v2723 = vmax.f32 %v2211, 0.0
        %v2724 = vmax.f32 %v2212, 0.0
        %v2725 = vmax.f32 %v2213, 0.0
        %v2726 = vmax.f32 %v2214, 0.0
        %v2727 = vmax.f32 %v2215, 0.0
        %v2728 = vmax.f32 %v2216, 0.0
        %v2729 = vmax.f32 %v2217, 0.0
        %v2730 = vmax.f32 %v2218, 0.0
        %v2731 = vmax.f32 %v2219, 0.0
        %v2732 = vmax.f32 %v2220, 0.0
        %v2733 = vmax.f32 %v2221, 0.0
        %v2734 = vmax.f32 %v2222, 0.0
        %v2735 = vmax.f32 %v2223, 0.0
        %v2736 = vmax.f32 %v2224, 0.0
        %v2737 = vmax.f32 %v2225, 0.0
        %v2738 = vmax.f32 %v2226, 0.0
        %v2739 = vmax.f32 %v2227, 0.0
        %v2740 = vmax.f32 %v2228, 0.0
        %v2741 = vmax.f32 %v2229, 0.0
        %v2742 = vmax.f32 %v2230, 0.0
        %v2743 = vmax.f32 %v2231, 0.0
        %v2744 = vmax.f32 %v2232, 0.0
        %v2745 = vmax.f32 %v2233, 0.0
        %v2746 = vmax.f32 %v2234, 0.0
        %v2747 = vmax.f32 %v2235, 0.0
        %v2748 = vmax.f32 %v2236, 0.0
        %v2749 = vmax.f32 %v2237, 0.0
        %v2750 = vmax.f32 %v2238, 0.0
        %v2751 = vmax.f32 %v2239, 0.0
        %v2752 = vmax.f32 %v2240, 0.0
        %v2753 = vmax.f32 %v2241, 0.0
        %v2754 = vmax.f32 %v2242, 0.0
        %v2755 = vmax.f32 %v2243, 0.0
        %v2756 = vmax.f32 %v2244, 0.0
        %v2757 = vmax.f32 %v2245, 0.0
        %v2758 = vmax.f32 %v2246, 0.0
        %v2759 = vmax.f32 %v2247, 0.0
        %v2760 = vmax.f32 %v2248, 0.0
        %v2761 = vmax.f32 %v2249, 0.0
        %v2762 = vmax.f32 %v2250, 0.0
        %v2763 = vmax.f32 %v2251, 0.0
        %v2764 = vmax.f32 %v2252, 0.0
        %v2765 = vmax.f32 %v2253, 0.0
        %v2766 = vmax.f32 %v2254, 0.0
        %v2767 = vmax.f32 %v2255, 0.0
        %v2768 = vmax.f32 %v2256, 0.0
        %v2769 = vmax.f32 %v2257, 0.0
        %v2770 = vmax.f32 %v2258, 0.0
        %v2771 = vmax.f32 %v2259, 0.0
        %v2772 = vmax.f32 %v2260, 0.0
        %v2773 = vmax.f32 %v2261, 0.0
        %v2774 = vmax.f32 %v2262, 0.0
        %v2775 = vmax.f32 %v2263, 0.0
        %v2776 = vmax.f32 %v2264, 0.0
        %v2777 = vmax.f32 %v2265, 0.0
        %v2778 = vmax.f32 %v2266, 0.0
        %v2779 = vmax.f32 %v2267, 0.0
        %v2780 = vmax.f32 %v2268, 0.0
        %v2781 = vmax.f32 %v2269, 0.0
        %v2782 = vmax.f32 %v2270, 0.0
        %v2783 = vmax.f32 %v2271, 0.0
        %v2784 = vmax.f32 %v2272, 0.0
        %v2785 = vmax.f32 %v2273, 0.0
        %v2786 = vmax.f32 %v2274, 0.0
        %v2787 = vmax.f32 %v2275, 0.0
        %v2788 = vmax.f32 %v2276, 0.0
        %v2789 = vmax.f32 %v2277, 0.0
        %v2790 = vmax.f32 %v2278, 0.0
        %v2791 = vmax.f32 %v2279, 0.0
        %v2792 = vmax.f32 %v2280, 0.0
        %v2793 = vmax.f32 %v2281, 0.0
        %v2794 = vmax.f32 %v2282, 0.0
        %v2795 = vmax.f32 %v2283, 0.0
        %v2796 = vmax.f32 %v2284, 0.0
        %v2797 = vmax.f32 %v2285, 0.0
        %v2798 = vmax.f32 %v2286, 0.0
        %v2799 = vmax.f32 %v2287, 0.0
        %v2800 = vmax.f32 %v2288, 0.0
        %v2801 = vmax.f32 %v2289, 0.0
        %v2802 = vmax.f32 %v2290, 0.0
        %v2803 = vmax.f32 %v2291, 0.0
        %v2804 = vmax.f32 %v2292, 0.0
        %v2805 = vmax.f32 %v2293, 0.0
        %v2806 = vmax.f32 %v2294, 0.0
        %v2807 = vmax.f32 %v2295, 0.0
        %v2808 = vmax.f32 %v2296, 0.0
        %v2809 = vmax.f32 %v2297, 0.0
        %v2810 = vmax.f32 %v2298, 0.0
        %v2811 = vmax.f32 %v2299, 0.0
        %v2812 = vmax.f32 %v2300, 0.0
        %v2813 = vmax.f32 %v2301, 0.0
        %v2814 = vmax.f32 %v2302, 0.0
        %v2815 = vmax.f32 %v2303, 0.0
        %v2816 = vmax.f32 %v2304, 0.0
        %v2817 = vmax.f32 %v2305, 0.0
        %v2818 = vmax.f32 %v2306, 0.0
        %v2819 = vmax.f32 %v2307, 0.0
        %v2820 = vmax.f32 %v2308, 0.0
        %v2821 = vmax.f32 %v2309, 0.0
        %v2822 = vmax.f32 %v2310, 0.0
        %v2823 = vmax.f32 %v2311, 0.0
        %v2824 = vmax.f32 %v2312, 0.0
        %v2825 = vmax.f32 %v2313, 0.0
        %v2826 = vmax.f32 %v2314, 0.0
        %v2827 = vmax.f32 %v2315, 0.0
        %v2828 = vmax.f32 %v2316, 0.0
        %v2829 = vmax.f32 %v2317, 0.0
        %v2830 = vmax.f32 %v2318, 0.0
        %v2831 = vmax.f32 %v2319, 0.0
        %v2832 = vmax.f32 %v2320, 0.0
        %v2833 = vmax.f32 %v2321, 0.0
        %v2834 = vmax.f32 %v2322, 0.0
        %v2835 = vmax.f32 %v2323, 0.0
        %v2836 = vmax.f32 %v2324, 0.0
        %v2837 = vmax.f32 %v2325, 0.0
        %v2838 = vmax.f32 %v2326, 0.0
        %v2839 = vmax.f32 %v2327, 0.0
        %v2840 = vmax.f32 %v2328, 0.0
        %v2841 = vmax.f32 %v2329, 0.0
        %v2842 = vmax.f32 %v2330, 0.0
        %v2843 = vmax.f32 %v2331, 0.0
        %v2844 = vmax.f32 %v2332, 0.0
        %v2845 = vmax.f32 %v2333, 0.0
        %v2846 = vmax.f32 %v2334, 0.0
        %v2847 = vmax.f32 %v2335, 0.0
        %v2848 = vmax.f32 %v2336, 0.0
        %v2849 = vmax.f32 %v2337, 0.0
        %v2850 = vmax.f32 %v2338, 0.0
        %v2851 = vmax.f32 %v2339, 0.0
        %v2852 = vmax.f32 %v2340, 0.0
        %v2853 = vmax.f32 %v2341, 0.0
        %v2854 = vmax.f32 %v2342, 0.0
        %v2855 = vmax.f32 %v2343, 0.0
        %v2856 = vmax.f32 %v2344, 0.0
        %v2857 = vmax.f32 %v2345, 0.0
        %v2858 = vmax.f32 %v2346, 0.0
        %v2859 = vmax.f32 %v2347, 0.0
        %v2860 = vmax.f32 %v2348, 0.0
        %v2861 = vmax.f32 %v2349, 0.0
        %v2862 = vmax.f32 %v2350, 0.0
        %v2863 = vmax.f32 %v2351, 0.0
        %v2864 = vmax.f32 %v2352, 0.0
        %v2865 = vmax.f32 %v2353, 0.0
        %v2866 = vmax.f32 %v2354, 0.0
        %v2867 = vmax.f32 %v2355, 0.0
        %v2868 = vmax.f32 %v2356, 0.0
        %v2869 = vmax.f32 %v2357, 0.0
        %v2870 = vmax.f32 %v2358, 0.0
        %v2871 = vmax.f32 %v2359, 0.0
        %v2872 = vmax.f32 %v2360, 0.0
        %v2873 = vmax.f32 %v2361, 0.0
        %v2874 = vmax.f32 %v2362, 0.0
        %v2875 = vmax.f32 %v2363, 0.0
        %v2876 = vmax.f32 %v2364, 0.0
        %v2877 = vmax.f32 %v2365, 0.0
        %v2878 = vmax.f32 %v2366, 0.0
        %v2879 = vmax.f32 %v2367, 0.0
        %v2880 = vmax.f32 %v2368, 0.0
        %v2881 = vmax.f32 %v2369, 0.0
        %v2882 = vmax.f32 %v2370, 0.0
        %v2883 = vmax.f32 %v2371, 0.0
        %v2884 = vmax.f32 %v2372, 0.0
        %v2885 = vmax.f32 %v2373, 0.0
        %v2886 = vmax.f32 %v2374, 0.0
        %v2887 = vmax.f32 %v2375, 0.0
        %v2888 = vmax.f32 %v2376, 0.0
        %v2889 = vmax.f32 %v2377, 0.0
        %v2890 = vmax.f32 %v2378, 0.0
        %v2891 = vmax.f32 %v2379, 0.0
        %v2892 = vmax.f32 %v2380, 0.0
        %v2893 = vmax.f32 %v2381, 0.0
        %v2894 = vmax.f32 %v2382, 0.0
        %v2895 = vmax.f32 %v2383, 0.0
        %v2896 = vmax.f32 %v2384, 0.0
        %v2897 = vmax.f32 %v2385, 0.0
        %v2898 = vmax.f32 %v2386, 0.0
        %v2899 = vmax.f32 %v2387, 0.0
        %v2900 = vmax.f32 %v2388, 0.0
        %v2901 = vmax.f32 %v2389, 0.0
        %v2902 = vmax.f32 %v2390, 0.0
        %v2903 = vmax.f32 %v2391, 0.0
        %v2904 = vmax.f32 %v2392, 0.0
        %v2905 = vmax.f32 %v2393, 0.0
        %v2906 = vmax.f32 %v2394, 0.0
        %v2907 = vmax.f32 %v2395, 0.0
        %v2908 = vmax.f32 %v2396, 0.0
        %v2909 = vmax.f32 %v2397, 0.0
        %v2910 = vmax.f32 %v2398, 0.0
        %v2911 = vmax.f32 %v2399, 0.0
        %v2912 = vmax.f32 %v2400, 0.0
        %v2913 = vmax.f32 %v2401, 0.0
        %v2914 = vmax.f32 %v2402, 0.0
        %v2915 = vmax.f32 %v2403, 0.0
        %v2916 = vmax.f32 %v2404, 0.0
        %v2917 = vmax.f32 %v2405, 0.0
        %v2918 = vmax.f32 %v2406, 0.0
        %v2919 = vmax.f32 %v2407, 0.0
        %v2920 = vmax.f32 %v2408, 0.0
        %v2921 = vmax.f32 %v2409, 0.0
        %v2922 = vmax.f32 %v2410, 0.0
        %v2923 = vmax.f32 %v2411, 0.0
        %v2924 = vmax.f32 %v2412, 0.0
        %v2925 = vmax.f32 %v2413, 0.0
        %v2926 = vmax.f32 %v2414, 0.0
        %v2927 = vmax.f32 %v2415, 0.0
        %v2928 = vmax.f32 %v2416, 0.0
        %v2929 = vmax.f32 %v2417, 0.0
        %v2930 = vmax.f32 %v2418, 0.0
        %v2931 = vmax.f32 %v2419, 0.0
        %v2932 = vmax.f32 %v2420, 0.0
        %v2933 = vmax.f32 %v2421, 0.0
        %v2934 = vmax.f32 %v2422, 0.0
        %v2935 = vmax.f32 %v2423, 0.0
        %v2936 = vmax.f32 %v2424, 0.0
        %v2937 = vmax.f32 %v2425, 0.0
        %v2938 = vmax.f32 %v2426, 0.0
        %v2939 = vmax.f32 %v2427, 0.0
        %v2940 = vmax.f32 %v2428, 0.0
        %v2941 = vmax.f32 %v2429, 0.0
        %v2942 = vmax.f32 %v2430, 0.0
        %v2943 = vmax.f32 %v2431, 0.0
        %v2944 = vmax.f32 %v2432, 0.0
        %v2945 = vmax.f32 %v2433, 0.0
        %v2946 = vmax.f32 %v2434, 0.0
        %v2947 = vmax.f32 %v2435, 0.0
        %v2948 = vmax.f32 %v2436, 0.0
        %v2949 = vmax.f32 %v2437, 0.0
        %v2950 = vmax.f32 %v2438, 0.0
        %v2951 = vmax.f32 %v2439, 0.0
        %v2952 = vmax.f32 %v2440, 0.0
        %v2953 = vmax.f32 %v2441, 0.0
        %v2954 = vmax.f32 %v2442, 0.0
        %v2955 = vmax.f32 %v2443, 0.0
        %v2956 = vmax.f32 %v2444, 0.0
        %v2957 = vmax.f32 %v2445, 0.0
        %v2958 = vmax.f32 %v2446, 0.0
        %v2959 = vmax.f32 %v2447, 0.0
        %v2960 = vmax.f32 %v2448, 0.0
        %v2961 = vmax.f32 %v2449, 0.0
        %v2962 = vmax.f32 %v2450, 0.0
        %v2963 = vmax.f32 %v2451, 0.0
        %v2964 = vmax.f32 %v2452, 0.0
        %v2965 = vmax.f32 %v2453, 0.0
        %v2966 = vmax.f32 %v2454, 0.0
        %v2967 = vmax.f32 %v2455, 0.0
        %v2968 = vmax.f32 %v2456, 0.0
        %v2969 = vmax.f32 %v2457, 0.0
        %v2970 = vmax.f32 %v2458, 0.0
        %v2971 = vmax.f32 %v2459, 0.0
        %v2972 = vmax.f32 %v2460, 0.0
        %v2973 = vmax.f32 %v2461, 0.0
        %v2974 = vmax.f32 %v2462, 0.0
        %v2975 = vmax.f32 %v2463, 0.0
        %v2976 = vmax.f32 %v2464, 0.0
        %v2977 = vmax.f32 %v2465, 0.0
        %v2978 = vmax.f32 %v2466, 0.0
        %v2979 = vmax.f32 %v2467, 0.0
        %v2980 = vmax.f32 %v2468, 0.0
        %v2981 = vmax.f32 %v2469, 0.0
        %v2982 = vmax.f32 %v2470, 0.0
        %v2983 = vmax.f32 %v2471, 0.0
        %v2984 = vmax.f32 %v2472, 0.0
        %v2985 = vmax.f32 %v2473, 0.0
        %v2986 = vmax.f32 %v2474, 0.0
        %v2987 = vmax.f32 %v2475, 0.0
        %v2988 = vmax.f32 %v2476, 0.0
        %v2989 = vmax.f32 %v2477, 0.0
        %v2990 = vmax.f32 %v2478, 0.0
        %v2991 = vmax.f32 %v2479, 0.0
        %v2992 = vmax.f32 %v2480, 0.0
        %v2993 = vmax.f32 %v2481, 0.0
        %v2994 = vmax.f32 %v2482, 0.0
        %v2995 = vmax.f32 %v2483, 0.0
        %v2996 = vmax.f32 %v2484, 0.0
        %v2997 = vmax.f32 %v2485, 0.0
        %v2998 = vmax.f32 %v2486, 0.0
        %v2999 = vmax.f32 %v2487, 0.0
        %v3000 = vmax.f32 %v2488, 0.0
        %v3001 = vmax.f32 %v2489, 0.0
        %v3002 = vmax.f32 %v2490, 0.0
        %v3003 = vmax.f32 %v2491, 0.0
        %v3004 = vmax.f32 %v2492, 0.0
        %v3005 = vmax.f32 %v2493, 0.0
        %v3006 = vmax.f32 %v2494, 0.0
        %v3007 = vmax.f32 %v2495, 0.0
        %v3008 = vmax.f32 %v2496, 0.0
        %v3009 = vmax.f32 %v2497, 0.0
        %v3010 = vmax.f32 %v2498, 0.0
        %v3011 = vmax.f32 %v2499, 0.0
        %v3012 = vmax.f32 %v2500, 0.0
        %v3013 = vmax.f32 %v2501, 0.0
        %v3014 = vmax.f32 %v2502, 0.0
        %v3015 = vmax.f32 %v2503, 0.0
        %v3016 = vmax.f32 %v2504, 0.0
        %v3017 = vmax.f32 %v2505, 0.0
        %v3018 = vmax.f32 %v2506, 0.0
        %v3019 = vmax.f32 %v2507, 0.0
        %v3020 = vmax.f32 %v2508, 0.0
        %v3021 = vmax.f32 %v2509, 0.0
        %v3022 = vmax.f32 %v2510, 0.0
        %v3023 = vmax.f32 %v2511, 0.0
        %v3024 = vmax.f32 %v2512, 0.0
        %v3025 = vmax.f32 %v2513, 0.0
        %v3026 = vmax.f32 %v2514, 0.0
        %v3027 = vmax.f32 %v2515, 0.0
        %v3028 = vmax.f32 %v2516, 0.0
        %v3029 = vmax.f32 %v2517, 0.0
        %v3030 = vmax.f32 %v2518, 0.0
        %v3031 = vmax.f32 %v2519, 0.0
        %v3032 = vmax.f32 %v2520, 0.0
        %v3033 = vmax.f32 %v2521, 0.0
        %v3034 = vmax.f32 %v2522, 0.0
        %v3035 = vmax.f32 %v2523, 0.0
        %v3036 = vmax.f32 %v2524, 0.0
        %v3037 = vmax.f32 %v2525, 0.0
        %v3038 = vmax.f32 %v2526, 0.0
        %v3039 = vmax.f32 %v2527, 0.0
        %v3040 = vmax.f32 %v2528, 0.0
        %v3041 = vmax.f32 %v2529, 0.0
        %v3042 = vmax.f32 %v2530, 0.0
        %v3043 = vmax.f32 %v2531, 0.0
        %v3044 = vmax.f32 %v2532, 0.0
        %v3045 = vmax.f32 %v2533, 0.0
        %v3046 = vmax.f32 %v2534, 0.0
        %v3047 = vmax.f32 %v2535, 0.0
        %v3048 = vpack.c.bf16 %v2568, %v2536
        %v3049 = vpack.c.bf16 %v2569, %v2537
        %v3050 = vpack.c.bf16 %v2570, %v2538
        %v3051 = vpack.c.bf16 %v2571, %v2539
        %v3052 = vpack.c.bf16 %v2572, %v2540
        %v3053 = vpack.c.bf16 %v2573, %v2541
        %v3054 = vpack.c.bf16 %v2574, %v2542
        %v3055 = vpack.c.bf16 %v2575, %v2543
        %v3056 = vpack.c.bf16 %v2576, %v2544
        %v3057 = vpack.c.bf16 %v2577, %v2545
        %v3058 = vpack.c.bf16 %v2578, %v2546
        %v3059 = vpack.c.bf16 %v2579, %v2547
        %v3060 = vpack.c.bf16 %v2580, %v2548
        %v3061 = vpack.c.bf16 %v2581, %v2549
        %v3062 = vpack.c.bf16 %v2582, %v2550
        %v3063 = vpack.c.bf16 %v2583, %v2551
        %v3064 = vpack.c.bf16 %v2584, %v2552
        %v3065 = vpack.c.bf16 %v2585, %v2553
        %v3066 = vpack.c.bf16 %v2586, %v2554
        %v3067 = vpack.c.bf16 %v2587, %v2555
        %v3068 = vpack.c.bf16 %v2588, %v2556
        %v3069 = vpack.c.bf16 %v2589, %v2557
        %v3070 = vpack.c.bf16 %v2590, %v2558
        %v3071 = vpack.c.bf16 %v2591, %v2559
        %v3072 = vpack.c.bf16 %v2592, %v2560
        %v3073 = vpack.c.bf16 %v2593, %v2561
        %v3074 = vpack.c.bf16 %v2594, %v2562
        %v3075 = vpack.c.bf16 %v2595, %v2563
        %v3076 = vpack.c.bf16 %v2596, %v2564
        %v3077 = vpack.c.bf16 %v2597, %v2565
        %v3078 = vpack.c.bf16 %v2598, %v2566
        %v3079 = vpack.c.bf16 %v2599, %v2567
        %v3080 = vpack.c.bf16 %v2632, %v2600
        %v3081 = vpack.c.bf16 %v2633, %v2601
        %v3082 = vpack.c.bf16 %v2634, %v2602
        %v3083 = vpack.c.bf16 %v2635, %v2603
        %v3084 = vpack.c.bf16 %v2636, %v2604
        %v3085 = vpack.c.bf16 %v2637, %v2605
        %v3086 = vpack.c.bf16 %v2638, %v2606
        %v3087 = vpack.c.bf16 %v2639, %v2607
        %v3088 = vpack.c.bf16 %v2640, %v2608
        %v3089 = vpack.c.bf16 %v2641, %v2609
        %v3090 = vpack.c.bf16 %v2642, %v2610
        %v3091 = vpack.c.bf16 %v2643, %v2611
        %v3092 = vpack.c.bf16 %v2644, %v2612
        %v3093 = vpack.c.bf16 %v2645, %v2613
        %v3094 = vpack.c.bf16 %v2646, %v2614
        %v3095 = vpack.c.bf16 %v2647, %v2615
        %v3096 = vpack.c.bf16 %v2648, %v2616
        %v3097 = vpack.c.bf16 %v2649, %v2617
        %v3098 = vpack.c.bf16 %v2650, %v2618
        %v3099 = vpack.c.bf16 %v2651, %v2619
        %v3100 = vpack.c.bf16 %v2652, %v2620
        %v3101 = vpack.c.bf16 %v2653, %v2621
        %v3102 = vpack.c.bf16 %v2654, %v2622
        %v3103 = vpack.c.bf16 %v2655, %v2623
        %v3104 = vpack.c.bf16 %v2656, %v2624
        %v3105 = vpack.c.bf16 %v2657, %v2625
        %v3106 = vpack.c.bf16 %v2658, %v2626
        %v3107 = vpack.c.bf16 %v2659, %v2627
        %v3108 = vpack.c.bf16 %v2660, %v2628
        %v3109 = vpack.c.bf16 %v2661, %v2629
        %v3110 = vpack.c.bf16 %v2662, %v2630
        %v3111 = vpack.c.bf16 %v2663, %v2631
        %v3112 = vpack.c.bf16 %v2696, %v2664
        %v3113 = vpack.c.bf16 %v2697, %v2665
        %v3114 = vpack.c.bf16 %v2698, %v2666
        %v3115 = vpack.c.bf16 %v2699, %v2667
        %v3116 = vpack.c.bf16 %v2700, %v2668
        %v3117 = vpack.c.bf16 %v2701, %v2669
        %v3118 = vpack.c.bf16 %v2702, %v2670
        %v3119 = vpack.c.bf16 %v2703, %v2671
        %v3120 = vpack.c.bf16 %v2704, %v2672
        %v3121 = vpack.c.bf16 %v2705, %v2673
        %v3122 = vpack.c.bf16 %v2706, %v2674
        %v3123 = vpack.c.bf16 %v2707, %v2675
        %v3124 = vpack.c.bf16 %v2708, %v2676
        %v3125 = vpack.c.bf16 %v2709, %v2677
        %v3126 = vpack.c.bf16 %v2710, %v2678
        %v3127 = vpack.c.bf16 %v2711, %v2679
        %v3128 = vpack.c.bf16 %v2712, %v2680
        %v3129 = vpack.c.bf16 %v2713, %v2681
        %v3130 = vpack.c.bf16 %v2714, %v2682
        %v3131 = vpack.c.bf16 %v2715, %v2683
        %v3132 = vpack.c.bf16 %v2716, %v2684
        %v3133 = vpack.c.bf16 %v2717, %v2685
        %v3134 = vpack.c.bf16 %v2718, %v2686
        %v3135 = vpack.c.bf16 %v2719, %v2687
        %v3136 = vpack.c.bf16 %v2720, %v2688
        %v3137 = vpack.c.bf16 %v2721, %v2689
        %v3138 = vpack.c.bf16 %v2722, %v2690
        %v3139 = vpack.c.bf16 %v2723, %v2691
        %v3140 = vpack.c.bf16 %v2724, %v2692
        %v3141 = vpack.c.bf16 %v2725, %v2693
        %v3142 = vpack.c.bf16 %v2726, %v2694
        %v3143 = vpack.c.bf16 %v2727, %v2695
        %v3144 = vpack.c.bf16 %v2760, %v2728
        %v3145 = vpack.c.bf16 %v2761, %v2729
        %v3146 = vpack.c.bf16 %v2762, %v2730
        %v3147 = vpack.c.bf16 %v2763, %v2731
        %v3148 = vpack.c.bf16 %v2764, %v2732
        %v3149 = vpack.c.bf16 %v2765, %v2733
        %v3150 = vpack.c.bf16 %v2766, %v2734
        %v3151 = vpack.c.bf16 %v2767, %v2735
        %v3152 = vpack.c.bf16 %v2768, %v2736
        %v3153 = vpack.c.bf16 %v2769, %v2737
        %v3154 = vpack.c.bf16 %v2770, %v2738
        %v3155 = vpack.c.bf16 %v2771, %v2739
        %v3156 = vpack.c.bf16 %v2772, %v2740
        %v3157 = vpack.c.bf16 %v2773, %v2741
        %v3158 = vpack.c.bf16 %v2774, %v2742
        %v3159 = vpack.c.bf16 %v2775, %v2743
        %v3160 = vpack.c.bf16 %v2776, %v2744
        %v3161 = vpack.c.bf16 %v2777, %v2745
        %v3162 = vpack.c.bf16 %v2778, %v2746
        %v3163 = vpack.c.bf16 %v2779, %v2747
        %v3164 = vpack.c.bf16 %v2780, %v2748
        %v3165 = vpack.c.bf16 %v2781, %v2749
        %v3166 = vpack.c.bf16 %v2782, %v2750
        %v3167 = vpack.c.bf16 %v2783, %v2751
        %v3168 = vpack.c.bf16 %v2784, %v2752
        %v3169 = vpack.c.bf16 %v2785, %v2753
        %v3170 = vpack.c.bf16 %v2786, %v2754
        %v3171 = vpack.c.bf16 %v2787, %v2755
        %v3172 = vpack.c.bf16 %v2788, %v2756
        %v3173 = vpack.c.bf16 %v2789, %v2757
        %v3174 = vpack.c.bf16 %v2790, %v2758
        %v3175 = vpack.c.bf16 %v2791, %v2759
        %v3176 = vpack.c.bf16 %v2824, %v2792
        %v3177 = vpack.c.bf16 %v2825, %v2793
        %v3178 = vpack.c.bf16 %v2826, %v2794
        %v3179 = vpack.c.bf16 %v2827, %v2795
        %v3180 = vpack.c.bf16 %v2828, %v2796
        %v3181 = vpack.c.bf16 %v2829, %v2797
        %v3182 = vpack.c.bf16 %v2830, %v2798
        %v3183 = vpack.c.bf16 %v2831, %v2799
        %v3184 = vpack.c.bf16 %v2832, %v2800
        %v3185 = vpack.c.bf16 %v2833, %v2801
        %v3186 = vpack.c.bf16 %v2834, %v2802
        %v3187 = vpack.c.bf16 %v2835, %v2803
        %v3188 = vpack.c.bf16 %v2836, %v2804
        %v3189 = vpack.c.bf16 %v2837, %v2805
        %v3190 = vpack.c.bf16 %v2838, %v2806
        %v3191 = vpack.c.bf16 %v2839, %v2807
        %v3192 = vpack.c.bf16 %v2840, %v2808
        %v3193 = vpack.c.bf16 %v2841, %v2809
        %v3194 = vpack.c.bf16 %v2842, %v2810
        %v3195 = vpack.c.bf16 %v2843, %v2811
        %v3196 = vpack.c.bf16 %v2844, %v2812
        %v3197 = vpack.c.bf16 %v2845, %v2813
        %v3198 = vpack.c.bf16 %v2846, %v2814
        %v3199 = vpack.c.bf16 %v2847, %v2815
        %v3200 = vpack.c.bf16 %v2848, %v2816
        %v3201 = vpack.c.bf16 %v2849, %v2817
        %v3202 = vpack.c.bf16 %v2850, %v2818
        %v3203 = vpack.c.bf16 %v2851, %v2819
        %v3204 = vpack.c.bf16 %v2852, %v2820
        %v3205 = vpack.c.bf16 %v2853, %v2821
        %v3206 = vpack.c.bf16 %v2854, %v2822
        %v3207 = vpack.c.bf16 %v2855, %v2823
        %v3208 = vpack.c.bf16 %v2888, %v2856
        %v3209 = vpack.c.bf16 %v2889, %v2857
        %v3210 = vpack.c.bf16 %v2890, %v2858
        %v3211 = vpack.c.bf16 %v2891, %v2859
        %v3212 = vpack.c.bf16 %v2892, %v2860
        %v3213 = vpack.c.bf16 %v2893, %v2861
        %v3214 = vpack.c.bf16 %v2894, %v2862
        %v3215 = vpack.c.bf16 %v2895, %v2863
        %v3216 = vpack.c.bf16 %v2896, %v2864
        %v3217 = vpack.c.bf16 %v2897, %v2865
        %v3218 = vpack.c.bf16 %v2898, %v2866
        %v3219 = vpack.c.bf16 %v2899, %v2867
        %v3220 = vpack.c.bf16 %v2900, %v2868
        %v3221 = vpack.c.bf16 %v2901, %v2869
        %v3222 = vpack.c.bf16 %v2902, %v2870
        %v3223 = vpack.c.bf16 %v2903, %v2871
        %v3224 = vpack.c.bf16 %v2904, %v2872
        %v3225 = vpack.c.bf16 %v2905, %v2873
        %v3226 = vpack.c.bf16 %v2906, %v2874
        %v3227 = vpack.c.bf16 %v2907, %v2875
        %v3228 = vpack.c.bf16 %v2908, %v2876
        %v3229 = vpack.c.bf16 %v2909, %v2877
        %v3230 = vpack.c.bf16 %v2910, %v2878
        %v3231 = vpack.c.bf16 %v2911, %v2879
        %v3232 = vpack.c.bf16 %v2912, %v2880
        %v3233 = vpack.c.bf16 %v2913, %v2881
        %v3234 = vpack.c.bf16 %v2914, %v2882
        %v3235 = vpack.c.bf16 %v2915, %v2883
        %v3236 = vpack.c.bf16 %v2916, %v2884
        %v3237 = vpack.c.bf16 %v2917, %v2885
        %v3238 = vpack.c.bf16 %v2918, %v2886
        %v3239 = vpack.c.bf16 %v2919, %v2887
        %v3240 = vpack.c.bf16 %v2952, %v2920
        %v3241 = vpack.c.bf16 %v2953, %v2921
        %v3242 = vpack.c.bf16 %v2954, %v2922
        %v3243 = vpack.c.bf16 %v2955, %v2923
        %v3244 = vpack.c.bf16 %v2956, %v2924
        %v3245 = vpack.c.bf16 %v2957, %v2925
        %v3246 = vpack.c.bf16 %v2958, %v2926
        %v3247 = vpack.c.bf16 %v2959, %v2927
        %v3248 = vpack.c.bf16 %v2960, %v2928
        %v3249 = vpack.c.bf16 %v2961, %v2929
        %v3250 = vpack.c.bf16 %v2962, %v2930
        %v3251 = vpack.c.bf16 %v2963, %v2931
        %v3252 = vpack.c.bf16 %v2964, %v2932
        %v3253 = vpack.c.bf16 %v2965, %v2933
        %v3254 = vpack.c.bf16 %v2966, %v2934
        %v3255 = vpack.c.bf16 %v2967, %v2935
        %v3256 = vpack.c.bf16 %v2968, %v2936
        %v3257 = vpack.c.bf16 %v2969, %v2937
        %v3258 = vpack.c.bf16 %v2970, %v2938
        %v3259 = vpack.c.bf16 %v2971, %v2939
        %v3260 = vpack.c.bf16 %v2972, %v2940
        %v3261 = vpack.c.bf16 %v2973, %v2941
        %v3262 = vpack.c.bf16 %v2974, %v2942
        %v3263 = vpack.c.bf16 %v2975, %v2943
        %v3264 = vpack.c.bf16 %v2976, %v2944
        %v3265 = vpack.c.bf16 %v2977, %v2945
        %v3266 = vpack.c.bf16 %v2978, %v2946
        %v3267 = vpack.c.bf16 %v2979, %v2947
        %v3268 = vpack.c.bf16 %v2980, %v2948
        %v3269 = vpack.c.bf16 %v2981, %v2949
        %v3270 = vpack.c.bf16 %v2982, %v2950
        %v3271 = vpack.c.bf16 %v2983, %v2951
        %v3272 = vpack.c.bf16 %v3016, %v2984
        %v3273 = vpack.c.bf16 %v3017, %v2985
        %v3274 = vpack.c.bf16 %v3018, %v2986
        %v3275 = vpack.c.bf16 %v3019, %v2987
        %v3276 = vpack.c.bf16 %v3020, %v2988
        %v3277 = vpack.c.bf16 %v3021, %v2989
        %v3278 = vpack.c.bf16 %v3022, %v2990
        %v3279 = vpack.c.bf16 %v3023, %v2991
        %v3280 = vpack.c.bf16 %v3024, %v2992
        %v3281 = vpack.c.bf16 %v3025, %v2993
        %v3282 = vpack.c.bf16 %v3026, %v2994
        %v3283 = vpack.c.bf16 %v3027, %v2995
        %v3284 = vpack.c.bf16 %v3028, %v2996
        %v3285 = vpack.c.bf16 %v3029, %v2997
        %v3286 = vpack.c.bf16 %v3030, %v2998
        %v3287 = vpack.c.bf16 %v3031, %v2999
        %v3288 = vpack.c.bf16 %v3032, %v3000
        %v3289 = vpack.c.bf16 %v3033, %v3001
        %v3290 = vpack.c.bf16 %v3034, %v3002
        %v3291 = vpack.c.bf16 %v3035, %v3003
        %v3292 = vpack.c.bf16 %v3036, %v3004
        %v3293 = vpack.c.bf16 %v3037, %v3005
        %v3294 = vpack.c.bf16 %v3038, %v3006
        %v3295 = vpack.c.bf16 %v3039, %v3007
        %v3296 = vpack.c.bf16 %v3040, %v3008
        %v3297 = vpack.c.bf16 %v3041, %v3009
        %v3298 = vpack.c.bf16 %v3042, %v3010
        %v3299 = vpack.c.bf16 %v3043, %v3011
        %v3300 = vpack.c.bf16 %v3044, %v3012
        %v3301 = vpack.c.bf16 %v3045, %v3013
        %v3302 = vpack.c.bf16 %v3046, %v3014
        %v3303 = vpack.c.bf16 %v3047, %v3015
        %v3320 = vunpack.c.l.b16 %v489
        %v3321 = vunpack.c.l.b16 %v490
        %v3322 = vunpack.c.l.b16 %v491
        %v3323 = vunpack.c.l.b16 %v492
        %v3324 = vunpack.c.l.b16 %v493
        %v3325 = vunpack.c.l.b16 %v494
        %v3326 = vunpack.c.l.b16 %v495
        %v3327 = vunpack.c.l.b16 %v496
        %v3328 = vunpack.c.l.b16 %v497
        %v3329 = vunpack.c.l.b16 %v498
        %v3330 = vunpack.c.l.b16 %v499
        %v3331 = vunpack.c.l.b16 %v500
        %v3332 = vunpack.c.l.b16 %v501
        %v3333 = vunpack.c.l.b16 %v502
        %v3334 = vunpack.c.l.b16 %v503
        %v3335 = vunpack.c.l.b16 %v504
        %v3336 = vpack.c.b16 %v3321, %v3320
        %v3337 = vpack.c.b16 %v3323, %v3322
        %v3338 = vpack.c.b16 %v3325, %v3324
        %v3339 = vpack.c.b16 %v3327, %v3326
        %v3340 = vpack.c.b16 %v3329, %v3328
        %v3341 = vpack.c.b16 %v3331, %v3330
        %v3342 = vpack.c.b16 %v3333, %v3332
        %v3343 = vpack.c.b16 %v3335, %v3334
        %3352 = vmatpush.bf16.msra.mxu0 %v3272
        %3353 = vmatpush.bf16.msra.mxu0 %v3240
        %3354 = vmatpush.bf16.msra.mxu0 %v3208
        %3355 = vmatpush.bf16.msra.mxu0 %v3176
        %3356 = vmatpush.bf16.msra.mxu0 %v3144
        %3357 = vmatpush.bf16.msra.mxu0 %v3112
        %3358 = vmatpush.bf16.msra.mxu0 %v3080
        %3359 = vmatpush.bf16.msra.mxu0 %v3048
        %3360 = vmatmul.bf16.gmra.mxu0 %v3336
        %v3361 = vpop.f32.mrf.mxu0
        %v3362 = vadd.f32 0.0, %v3361
        %v3363 = vpop.f32.mrf.mxu0
        %v3364 = vadd.f32 0.0, %v3363
        %3365 = vmatmul.bf16.gmra.mxu0 %v3337
        %v3366 = vpop.f32.mrf.mxu0
        %v3367 = vadd.f32 0.0, %v3366
        %v3368 = vpop.f32.mrf.mxu0
        %v3369 = vadd.f32 0.0, %v3368
        %3370 = vmatmul.bf16.gmra.mxu0 %v3338
        %v3371 = vpop.f32.mrf.mxu0
        %v3372 = vadd.f32 0.0, %v3371
        %v3373 = vpop.f32.mrf.mxu0
        %v3374 = vadd.f32 0.0, %v3373
        %3375 = vmatmul.bf16.gmra.mxu0 %v3339
        %v3376 = vpop.f32.mrf.mxu0
        %v3377 = vadd.f32 0.0, %v3376
        %v3378 = vpop.f32.mrf.mxu0
        %v3379 = vadd.f32 0.0, %v3378
        %3380 = vmatmul.bf16.gmra.mxu0 %v3340
        %v3381 = vpop.f32.mrf.mxu0
        %v3382 = vadd.f32 0.0, %v3381
        %v3383 = vpop.f32.mrf.mxu0
        %v3384 = vadd.f32 0.0, %v3383
        %3385 = vmatmul.bf16.gmra.mxu0 %v3341
        %v3386 = vpop.f32.mrf.mxu0
        %v3387 = vadd.f32 0.0, %v3386
        %v3388 = vpop.f32.mrf.mxu0
        %v3389 = vadd.f32 0.0, %v3388
        %3390 = vmatmul.bf16.gmra.mxu0 %v3342
        %v3391 = vpop.f32.mrf.mxu0
        %v3392 = vadd.f32 0.0, %v3391
        %v3393 = vpop.f32.mrf.mxu0
        %v3394 = vadd.f32 0.0, %v3393
        %3395 = vmatmul.bf16.gmra.mxu0 %v3343
        %v3396 = vpop.f32.mrf.mxu0
        %v3397 = vadd.f32 0.0, %v3396
        %v3398 = vpop.f32.mrf.mxu0
        %v3399 = vadd.f32 0.0, %v3398
        %3400 = vdwg.mxu0
        %3401 = vmatpush.bf16.msra.mxu0 %v3273
        %3402 = vmatpush.bf16.msra.mxu0 %v3241
        %3403 = vmatpush.bf16.msra.mxu0 %v3209
        %3404 = vmatpush.bf16.msra.mxu0 %v3177
        %3405 = vmatpush.bf16.msra.mxu0 %v3145
        %3406 = vmatpush.bf16.msra.mxu0 %v3113
        %3407 = vmatpush.bf16.msra.mxu0 %v3081
        %3408 = vmatpush.bf16.msra.mxu0 %v3049
        %3409 = vmatmul.bf16.gmra.mxu0 %v3336
        %v3410 = vpop.f32.mrf.mxu0
        %v3411 = vadd.f32 0.0, %v3410
        %v3412 = vpop.f32.mrf.mxu0
        %v3413 = vadd.f32 0.0, %v3412
        %3414 = vmatmul.bf16.gmra.mxu0 %v3337
        %v3415 = vpop.f32.mrf.mxu0
        %v3416 = vadd.f32 0.0, %v3415
        %v3417 = vpop.f32.mrf.mxu0
        %v3418 = vadd.f32 0.0, %v3417
        %3419 = vmatmul.bf16.gmra.mxu0 %v3338
        %v3420 = vpop.f32.mrf.mxu0
        %v3421 = vadd.f32 0.0, %v3420
        %v3422 = vpop.f32.mrf.mxu0
        %v3423 = vadd.f32 0.0, %v3422
        %3424 = vmatmul.bf16.gmra.mxu0 %v3339
        %v3425 = vpop.f32.mrf.mxu0
        %v3426 = vadd.f32 0.0, %v3425
        %v3427 = vpop.f32.mrf.mxu0
        %v3428 = vadd.f32 0.0, %v3427
        %3429 = vmatmul.bf16.gmra.mxu0 %v3340
        %v3430 = vpop.f32.mrf.mxu0
        %v3431 = vadd.f32 0.0, %v3430
        %v3432 = vpop.f32.mrf.mxu0
        %v3433 = vadd.f32 0.0, %v3432
        %3434 = vmatmul.bf16.gmra.mxu0 %v3341
        %v3435 = vpop.f32.mrf.mxu0
        %v3436 = vadd.f32 0.0, %v3435
        %v3437 = vpop.f32.mrf.mxu0
        %v3438 = vadd.f32 0.0, %v3437
        %3439 = vmatmul.bf16.gmra.mxu0 %v3342
        %v3440 = vpop.f32.mrf.mxu0
        %v3441 = vadd.f32 0.0, %v3440
        %v3442 = vpop.f32.mrf.mxu0
        %v3443 = vadd.f32 0.0, %v3442
        %3444 = vmatmul.bf16.gmra.mxu0 %v3343
        %v3445 = vpop.f32.mrf.mxu0
        %v3446 = vadd.f32 0.0, %v3445
        %v3447 = vpop.f32.mrf.mxu0
        %v3448 = vadd.f32 0.0, %v3447
        %3449 = vdwg.mxu0
        %3450 = vmatpush.bf16.msra.mxu0 %v3274
        %3451 = vmatpush.bf16.msra.mxu0 %v3242
        %3452 = vmatpush.bf16.msra.mxu0 %v3210
        %3453 = vmatpush.bf16.msra.mxu0 %v3178
        %3454 = vmatpush.bf16.msra.mxu0 %v3146
        %3455 = vmatpush.bf16.msra.mxu0 %v3114
        %3456 = vmatpush.bf16.msra.mxu0 %v3082
        %3457 = vmatpush.bf16.msra.mxu0 %v3050
        %3458 = vmatmul.bf16.gmra.mxu0 %v3336
        %v3459 = vpop.f32.mrf.mxu0
        %v3460 = vadd.f32 0.0, %v3459
        %v3461 = vpop.f32.mrf.mxu0
        %v3462 = vadd.f32 0.0, %v3461
        %3463 = vmatmul.bf16.gmra.mxu0 %v3337
        %v3464 = vpop.f32.mrf.mxu0
        %v3465 = vadd.f32 0.0, %v3464
        %v3466 = vpop.f32.mrf.mxu0
        %v3467 = vadd.f32 0.0, %v3466
        %3468 = vmatmul.bf16.gmra.mxu0 %v3338
        %v3469 = vpop.f32.mrf.mxu0
        %v3470 = vadd.f32 0.0, %v3469
        %v3471 = vpop.f32.mrf.mxu0
        %v3472 = vadd.f32 0.0, %v3471
        %3473 = vmatmul.bf16.gmra.mxu0 %v3339
        %v3474 = vpop.f32.mrf.mxu0
        %v3475 = vadd.f32 0.0, %v3474
        %v3476 = vpop.f32.mrf.mxu0
        %v3477 = vadd.f32 0.0, %v3476
        %3478 = vmatmul.bf16.gmra.mxu0 %v3340
        %v3479 = vpop.f32.mrf.mxu0
        %v3480 = vadd.f32 0.0, %v3479
        %v3481 = vpop.f32.mrf.mxu0
        %v3482 = vadd.f32 0.0, %v3481
        %3483 = vmatmul.bf16.gmra.mxu0 %v3341
        %v3484 = vpop.f32.mrf.mxu0
        %v3485 = vadd.f32 0.0, %v3484
        %v3486 = vpop.f32.mrf.mxu0
        %v3487 = vadd.f32 0.0, %v3486
        %3488 = vmatmul.bf16.gmra.mxu0 %v3342
        %v3489 = vpop.f32.mrf.mxu0
        %v3490 = vadd.f32 0.0, %v3489
        %v3491 = vpop.f32.mrf.mxu0
        %v3492 = vadd.f32 0.0, %v3491
        %3493 = vmatmul.bf16.gmra.mxu0 %v3343
        %v3494 = vpop.f32.mrf.mxu0
        %v3495 = vadd.f32 0.0, %v3494
        %v3496 = vpop.f32.mrf.mxu0
        %v3497 = vadd.f32 0.0, %v3496
        %3498 = vdwg.mxu0
        %3499 = vmatpush.bf16.msra.mxu0 %v3275
        %3500 = vmatpush.bf16.msra.mxu0 %v3243
        %3501 = vmatpush.bf16.msra.mxu0 %v3211
        %3502 = vmatpush.bf16.msra.mxu0 %v3179
        %3503 = vmatpush.bf16.msra.mxu0 %v3147
        %3504 = vmatpush.bf16.msra.mxu0 %v3115
        %3505 = vmatpush.bf16.msra.mxu0 %v3083
        %3506 = vmatpush.bf16.msra.mxu0 %v3051
        %3507 = vmatmul.bf16.gmra.mxu0 %v3336
        %v3508 = vpop.f32.mrf.mxu0
        %v3509 = vadd.f32 0.0, %v3508
        %v3510 = vpop.f32.mrf.mxu0
        %v3511 = vadd.f32 0.0, %v3510
        %3512 = vmatmul.bf16.gmra.mxu0 %v3337
        %v3513 = vpop.f32.mrf.mxu0
        %v3514 = vadd.f32 0.0, %v3513
        %v3515 = vpop.f32.mrf.mxu0
        %v3516 = vadd.f32 0.0, %v3515
        %3517 = vmatmul.bf16.gmra.mxu0 %v3338
        %v3518 = vpop.f32.mrf.mxu0
        %v3519 = vadd.f32 0.0, %v3518
        %v3520 = vpop.f32.mrf.mxu0
        %v3521 = vadd.f32 0.0, %v3520
        %3522 = vmatmul.bf16.gmra.mxu0 %v3339
        %v3523 = vpop.f32.mrf.mxu0
        %v3524 = vadd.f32 0.0, %v3523
        %v3525 = vpop.f32.mrf.mxu0
        %v3526 = vadd.f32 0.0, %v3525
        %3527 = vmatmul.bf16.gmra.mxu0 %v3340
        %v3528 = vpop.f32.mrf.mxu0
        %v3529 = vadd.f32 0.0, %v3528
        %v3530 = vpop.f32.mrf.mxu0
        %v3531 = vadd.f32 0.0, %v3530
        %3532 = vmatmul.bf16.gmra.mxu0 %v3341
        %v3533 = vpop.f32.mrf.mxu0
        %v3534 = vadd.f32 0.0, %v3533
        %v3535 = vpop.f32.mrf.mxu0
        %v3536 = vadd.f32 0.0, %v3535
        %3537 = vmatmul.bf16.gmra.mxu0 %v3342
        %v3538 = vpop.f32.mrf.mxu0
        %v3539 = vadd.f32 0.0, %v3538
        %v3540 = vpop.f32.mrf.mxu0
        %v3541 = vadd.f32 0.0, %v3540
        %3542 = vmatmul.bf16.gmra.mxu0 %v3343
        %v3543 = vpop.f32.mrf.mxu0
        %v3544 = vadd.f32 0.0, %v3543
        %v3545 = vpop.f32.mrf.mxu0
        %v3546 = vadd.f32 0.0, %v3545
        %3547 = vdwg.mxu0
        %3548 = vmatpush.bf16.msra.mxu0 %v3276
        %3549 = vmatpush.bf16.msra.mxu0 %v3244
        %3550 = vmatpush.bf16.msra.mxu0 %v3212
        %3551 = vmatpush.bf16.msra.mxu0 %v3180
        %3552 = vmatpush.bf16.msra.mxu0 %v3148
        %3553 = vmatpush.bf16.msra.mxu0 %v3116
        %3554 = vmatpush.bf16.msra.mxu0 %v3084
        %3555 = vmatpush.bf16.msra.mxu0 %v3052
        %3556 = vmatmul.bf16.gmra.mxu0 %v3336
        %v3557 = vpop.f32.mrf.mxu0
        %v3558 = vadd.f32 0.0, %v3557
        %v3559 = vpop.f32.mrf.mxu0
        %v3560 = vadd.f32 0.0, %v3559
        %3561 = vmatmul.bf16.gmra.mxu0 %v3337
        %v3562 = vpop.f32.mrf.mxu0
        %v3563 = vadd.f32 0.0, %v3562
        %v3564 = vpop.f32.mrf.mxu0
        %v3565 = vadd.f32 0.0, %v3564
        %3566 = vmatmul.bf16.gmra.mxu0 %v3338
        %v3567 = vpop.f32.mrf.mxu0
        %v3568 = vadd.f32 0.0, %v3567
        %v3569 = vpop.f32.mrf.mxu0
        %v3570 = vadd.f32 0.0, %v3569
        %3571 = vmatmul.bf16.gmra.mxu0 %v3339
        %v3572 = vpop.f32.mrf.mxu0
        %v3573 = vadd.f32 0.0, %v3572
        %v3574 = vpop.f32.mrf.mxu0
        %v3575 = vadd.f32 0.0, %v3574
        %3576 = vmatmul.bf16.gmra.mxu0 %v3340
        %v3577 = vpop.f32.mrf.mxu0
        %v3578 = vadd.f32 0.0, %v3577
        %v3579 = vpop.f32.mrf.mxu0
        %v3580 = vadd.f32 0.0, %v3579
        %3581 = vmatmul.bf16.gmra.mxu0 %v3341
        %v3582 = vpop.f32.mrf.mxu0
        %v3583 = vadd.f32 0.0, %v3582
        %v3584 = vpop.f32.mrf.mxu0
        %v3585 = vadd.f32 0.0, %v3584
        %3586 = vmatmul.bf16.gmra.mxu0 %v3342
        %v3587 = vpop.f32.mrf.mxu0
        %v3588 = vadd.f32 0.0, %v3587
        %v3589 = vpop.f32.mrf.mxu0
        %v3590 = vadd.f32 0.0, %v3589
        %3591 = vmatmul.bf16.gmra.mxu0 %v3343
        %v3592 = vpop.f32.mrf.mxu0
        %v3593 = vadd.f32 0.0, %v3592
        %v3594 = vpop.f32.mrf.mxu0
        %v3595 = vadd.f32 0.0, %v3594
        %3596 = vdwg.mxu0
        %3597 = vmatpush.bf16.msra.mxu0 %v3277
        %3598 = vmatpush.bf16.msra.mxu0 %v3245
        %3599 = vmatpush.bf16.msra.mxu0 %v3213
        %3600 = vmatpush.bf16.msra.mxu0 %v3181
        %3601 = vmatpush.bf16.msra.mxu0 %v3149
        %3602 = vmatpush.bf16.msra.mxu0 %v3117
        %3603 = vmatpush.bf16.msra.mxu0 %v3085
        %3604 = vmatpush.bf16.msra.mxu0 %v3053
        %3605 = vmatmul.bf16.gmra.mxu0 %v3336
        %v3606 = vpop.f32.mrf.mxu0
        %v3607 = vadd.f32 0.0, %v3606
        %v3608 = vpop.f32.mrf.mxu0
        %v3609 = vadd.f32 0.0, %v3608
        %3610 = vmatmul.bf16.gmra.mxu0 %v3337
        %v3611 = vpop.f32.mrf.mxu0
        %v3612 = vadd.f32 0.0, %v3611
        %v3613 = vpop.f32.mrf.mxu0
        %v3614 = vadd.f32 0.0, %v3613
        %3615 = vmatmul.bf16.gmra.mxu0 %v3338
        %v3616 = vpop.f32.mrf.mxu0
        %v3617 = vadd.f32 0.0, %v3616
        %v3618 = vpop.f32.mrf.mxu0
        %v3619 = vadd.f32 0.0, %v3618
        %3620 = vmatmul.bf16.gmra.mxu0 %v3339
        %v3621 = vpop.f32.mrf.mxu0
        %v3622 = vadd.f32 0.0, %v3621
        %v3623 = vpop.f32.mrf.mxu0
        %v3624 = vadd.f32 0.0, %v3623
        %3625 = vmatmul.bf16.gmra.mxu0 %v3340
        %v3626 = vpop.f32.mrf.mxu0
        %v3627 = vadd.f32 0.0, %v3626
        %v3628 = vpop.f32.mrf.mxu0
        %v3629 = vadd.f32 0.0, %v3628
        %3630 = vmatmul.bf16.gmra.mxu0 %v3341
        %v3631 = vpop.f32.mrf.mxu0
        %v3632 = vadd.f32 0.0, %v3631
        %v3633 = vpop.f32.mrf.mxu0
        %v3634 = vadd.f32 0.0, %v3633
        %3635 = vmatmul.bf16.gmra.mxu0 %v3342
        %v3636 = vpop.f32.mrf.mxu0
        %v3637 = vadd.f32 0.0, %v3636
        %v3638 = vpop.f32.mrf.mxu0
        %v3639 = vadd.f32 0.0, %v3638
        %3640 = vmatmul.bf16.gmra.mxu0 %v3343
        %v3641 = vpop.f32.mrf.mxu0
        %v3642 = vadd.f32 0.0, %v3641
        %v3643 = vpop.f32.mrf.mxu0
        %v3644 = vadd.f32 0.0, %v3643
        %3645 = vdwg.mxu0
        %3646 = vmatpush.bf16.msra.mxu0 %v3278
        %3647 = vmatpush.bf16.msra.mxu0 %v3246
        %3648 = vmatpush.bf16.msra.mxu0 %v3214
        %3649 = vmatpush.bf16.msra.mxu0 %v3182
        %3650 = vmatpush.bf16.msra.mxu0 %v3150
        %3651 = vmatpush.bf16.msra.mxu0 %v3118
        %3652 = vmatpush.bf16.msra.mxu0 %v3086
        %3653 = vmatpush.bf16.msra.mxu0 %v3054
        %3654 = vmatmul.bf16.gmra.mxu0 %v3336
        %v3655 = vpop.f32.mrf.mxu0
        %v3656 = vadd.f32 0.0, %v3655
        %v3657 = vpop.f32.mrf.mxu0
        %v3658 = vadd.f32 0.0, %v3657
        %3659 = vmatmul.bf16.gmra.mxu0 %v3337
        %v3660 = vpop.f32.mrf.mxu0
        %v3661 = vadd.f32 0.0, %v3660
        %v3662 = vpop.f32.mrf.mxu0
        %v3663 = vadd.f32 0.0, %v3662
        %3664 = vmatmul.bf16.gmra.mxu0 %v3338
        %v3665 = vpop.f32.mrf.mxu0
        %v3666 = vadd.f32 0.0, %v3665
        %v3667 = vpop.f32.mrf.mxu0
        %v3668 = vadd.f32 0.0, %v3667
        %3669 = vmatmul.bf16.gmra.mxu0 %v3339
        %v3670 = vpop.f32.mrf.mxu0
        %v3671 = vadd.f32 0.0, %v3670
        %v3672 = vpop.f32.mrf.mxu0
        %v3673 = vadd.f32 0.0, %v3672
        %3674 = vmatmul.bf16.gmra.mxu0 %v3340
        %v3675 = vpop.f32.mrf.mxu0
        %v3676 = vadd.f32 0.0, %v3675
        %v3677 = vpop.f32.mrf.mxu0
        %v3678 = vadd.f32 0.0, %v3677
        %3679 = vmatmul.bf16.gmra.mxu0 %v3341
        %v3680 = vpop.f32.mrf.mxu0
        %v3681 = vadd.f32 0.0, %v3680
        %v3682 = vpop.f32.mrf.mxu0
        %v3683 = vadd.f32 0.0, %v3682
        %3684 = vmatmul.bf16.gmra.mxu0 %v3342
        %v3685 = vpop.f32.mrf.mxu0
        %v3686 = vadd.f32 0.0, %v3685
        %v3687 = vpop.f32.mrf.mxu0
        %v3688 = vadd.f32 0.0, %v3687
        %3689 = vmatmul.bf16.gmra.mxu0 %v3343
        %v3690 = vpop.f32.mrf.mxu0
        %v3691 = vadd.f32 0.0, %v3690
        %v3692 = vpop.f32.mrf.mxu0
        %v3693 = vadd.f32 0.0, %v3692
        %3694 = vdwg.mxu0
        %3695 = vmatpush.bf16.msra.mxu0 %v3279
        %3696 = vmatpush.bf16.msra.mxu0 %v3247
        %3697 = vmatpush.bf16.msra.mxu0 %v3215
        %3698 = vmatpush.bf16.msra.mxu0 %v3183
        %3699 = vmatpush.bf16.msra.mxu0 %v3151
        %3700 = vmatpush.bf16.msra.mxu0 %v3119
        %3701 = vmatpush.bf16.msra.mxu0 %v3087
        %3702 = vmatpush.bf16.msra.mxu0 %v3055
        %3703 = vmatmul.bf16.gmra.mxu0 %v3336
        %v3704 = vpop.f32.mrf.mxu0
        %v3705 = vadd.f32 0.0, %v3704
        %v3706 = vpop.f32.mrf.mxu0
        %v3707 = vadd.f32 0.0, %v3706
        %3708 = vmatmul.bf16.gmra.mxu0 %v3337
        %v3709 = vpop.f32.mrf.mxu0
        %v3710 = vadd.f32 0.0, %v3709
        %v3711 = vpop.f32.mrf.mxu0
        %v3712 = vadd.f32 0.0, %v3711
        %3713 = vmatmul.bf16.gmra.mxu0 %v3338
        %v3714 = vpop.f32.mrf.mxu0
        %v3715 = vadd.f32 0.0, %v3714
        %v3716 = vpop.f32.mrf.mxu0
        %v3717 = vadd.f32 0.0, %v3716
        %3718 = vmatmul.bf16.gmra.mxu0 %v3339
        %v3719 = vpop.f32.mrf.mxu0
        %v3720 = vadd.f32 0.0, %v3719
        %v3721 = vpop.f32.mrf.mxu0
        %v3722 = vadd.f32 0.0, %v3721
        %3723 = vmatmul.bf16.gmra.mxu0 %v3340
        %v3724 = vpop.f32.mrf.mxu0
        %v3725 = vadd.f32 0.0, %v3724
        %v3726 = vpop.f32.mrf.mxu0
        %v3727 = vadd.f32 0.0, %v3726
        %3728 = vmatmul.bf16.gmra.mxu0 %v3341
        %v3729 = vpop.f32.mrf.mxu0
        %v3730 = vadd.f32 0.0, %v3729
        %v3731 = vpop.f32.mrf.mxu0
        %v3732 = vadd.f32 0.0, %v3731
        %3733 = vmatmul.bf16.gmra.mxu0 %v3342
        %v3734 = vpop.f32.mrf.mxu0
        %v3735 = vadd.f32 0.0, %v3734
        %v3736 = vpop.f32.mrf.mxu0
        %v3737 = vadd.f32 0.0, %v3736
        %3738 = vmatmul.bf16.gmra.mxu0 %v3343
        %v3739 = vpop.f32.mrf.mxu0
        %v3740 = vadd.f32 0.0, %v3739
        %v3741 = vpop.f32.mrf.mxu0
        %v3742 = vadd.f32 0.0, %v3741
        %3743 = vdwg.mxu0
        %3744 = vmatpush.bf16.msra.mxu0 %v3280
        %3745 = vmatpush.bf16.msra.mxu0 %v3248
        %3746 = vmatpush.bf16.msra.mxu0 %v3216
        %3747 = vmatpush.bf16.msra.mxu0 %v3184
        %3748 = vmatpush.bf16.msra.mxu0 %v3152
        %3749 = vmatpush.bf16.msra.mxu0 %v3120
        %3750 = vmatpush.bf16.msra.mxu0 %v3088
        %3751 = vmatpush.bf16.msra.mxu0 %v3056
        %3752 = vmatmul.bf16.gmra.mxu0 %v3336
        %v3753 = vpop.f32.mrf.mxu0
        %v3754 = vadd.f32 0.0, %v3753
        %v3755 = vpop.f32.mrf.mxu0
        %v3756 = vadd.f32 0.0, %v3755
        %3757 = vmatmul.bf16.gmra.mxu0 %v3337
        %v3758 = vpop.f32.mrf.mxu0
        %v3759 = vadd.f32 0.0, %v3758
        %v3760 = vpop.f32.mrf.mxu0
        %v3761 = vadd.f32 0.0, %v3760
        %3762 = vmatmul.bf16.gmra.mxu0 %v3338
        %v3763 = vpop.f32.mrf.mxu0
        %v3764 = vadd.f32 0.0, %v3763
        %v3765 = vpop.f32.mrf.mxu0
        %v3766 = vadd.f32 0.0, %v3765
        %3767 = vmatmul.bf16.gmra.mxu0 %v3339
        %v3768 = vpop.f32.mrf.mxu0
        %v3769 = vadd.f32 0.0, %v3768
        %v3770 = vpop.f32.mrf.mxu0
        %v3771 = vadd.f32 0.0, %v3770
        %3772 = vmatmul.bf16.gmra.mxu0 %v3340
        %v3773 = vpop.f32.mrf.mxu0
        %v3774 = vadd.f32 0.0, %v3773
        %v3775 = vpop.f32.mrf.mxu0
        %v3776 = vadd.f32 0.0, %v3775
        %3777 = vmatmul.bf16.gmra.mxu0 %v3341
        %v3778 = vpop.f32.mrf.mxu0
        %v3779 = vadd.f32 0.0, %v3778
        %v3780 = vpop.f32.mrf.mxu0
        %v3781 = vadd.f32 0.0, %v3780
        %3782 = vmatmul.bf16.gmra.mxu0 %v3342
        %v3783 = vpop.f32.mrf.mxu0
        %v3784 = vadd.f32 0.0, %v3783
        %v3785 = vpop.f32.mrf.mxu0
        %v3786 = vadd.f32 0.0, %v3785
        %3787 = vmatmul.bf16.gmra.mxu0 %v3343
        %v3788 = vpop.f32.mrf.mxu0
        %v3789 = vadd.f32 0.0, %v3788
        %v3790 = vpop.f32.mrf.mxu0
        %v3791 = vadd.f32 0.0, %v3790
        %3792 = vdwg.mxu0
        %3793 = vmatpush.bf16.msra.mxu0 %v3281
        %3794 = vmatpush.bf16.msra.mxu0 %v3249
        %3795 = vmatpush.bf16.msra.mxu0 %v3217
        %3796 = vmatpush.bf16.msra.mxu0 %v3185
        %3797 = vmatpush.bf16.msra.mxu0 %v3153
        %3798 = vmatpush.bf16.msra.mxu0 %v3121
        %3799 = vmatpush.bf16.msra.mxu0 %v3089
        %3800 = vmatpush.bf16.msra.mxu0 %v3057
        %3801 = vmatmul.bf16.gmra.mxu0 %v3336
        %v3802 = vpop.f32.mrf.mxu0
        %v3803 = vadd.f32 0.0, %v3802
        %v3804 = vpop.f32.mrf.mxu0
        %v3805 = vadd.f32 0.0, %v3804
        %3806 = vmatmul.bf16.gmra.mxu0 %v3337
        %v3807 = vpop.f32.mrf.mxu0
        %v3808 = vadd.f32 0.0, %v3807
        %v3809 = vpop.f32.mrf.mxu0
        %v3810 = vadd.f32 0.0, %v3809
        %3811 = vmatmul.bf16.gmra.mxu0 %v3338
        %v3812 = vpop.f32.mrf.mxu0
        %v3813 = vadd.f32 0.0, %v3812
        %v3814 = vpop.f32.mrf.mxu0
        %v3815 = vadd.f32 0.0, %v3814
        %3816 = vmatmul.bf16.gmra.mxu0 %v3339
        %v3817 = vpop.f32.mrf.mxu0
        %v3818 = vadd.f32 0.0, %v3817
        %v3819 = vpop.f32.mrf.mxu0
        %v3820 = vadd.f32 0.0, %v3819
        %3821 = vmatmul.bf16.gmra.mxu0 %v3340
        %v3822 = vpop.f32.mrf.mxu0
        %v3823 = vadd.f32 0.0, %v3822
        %v3824 = vpop.f32.mrf.mxu0
        %v3825 = vadd.f32 0.0, %v3824
        %3826 = vmatmul.bf16.gmra.mxu0 %v3341
        %v3827 = vpop.f32.mrf.mxu0
        %v3828 = vadd.f32 0.0, %v3827
        %v3829 = vpop.f32.mrf.mxu0
        %v3830 = vadd.f32 0.0, %v3829
        %3831 = vmatmul.bf16.gmra.mxu0 %v3342
        %v3832 = vpop.f32.mrf.mxu0
        %v3833 = vadd.f32 0.0, %v3832
        %v3834 = vpop.f32.mrf.mxu0
        %v3835 = vadd.f32 0.0, %v3834
        %3836 = vmatmul.bf16.gmra.mxu0 %v3343
        %v3837 = vpop.f32.mrf.mxu0
        %v3838 = vadd.f32 0.0, %v3837
        %v3839 = vpop.f32.mrf.mxu0
        %v3840 = vadd.f32 0.0, %v3839
        %3841 = vdwg.mxu0
        %3842 = vmatpush.bf16.msra.mxu0 %v3282
        %3843 = vmatpush.bf16.msra.mxu0 %v3250
        %3844 = vmatpush.bf16.msra.mxu0 %v3218
        %3845 = vmatpush.bf16.msra.mxu0 %v3186
        %3846 = vmatpush.bf16.msra.mxu0 %v3154
        %3847 = vmatpush.bf16.msra.mxu0 %v3122
        %3848 = vmatpush.bf16.msra.mxu0 %v3090
        %3849 = vmatpush.bf16.msra.mxu0 %v3058
        %3850 = vmatmul.bf16.gmra.mxu0 %v3336
        %v3851 = vpop.f32.mrf.mxu0
        %v3852 = vadd.f32 0.0, %v3851
        %v3853 = vpop.f32.mrf.mxu0
        %v3854 = vadd.f32 0.0, %v3853
        %3855 = vmatmul.bf16.gmra.mxu0 %v3337
        %v3856 = vpop.f32.mrf.mxu0
        %v3857 = vadd.f32 0.0, %v3856
        %v3858 = vpop.f32.mrf.mxu0
        %v3859 = vadd.f32 0.0, %v3858
        %3860 = vmatmul.bf16.gmra.mxu0 %v3338
        %v3861 = vpop.f32.mrf.mxu0
        %v3862 = vadd.f32 0.0, %v3861
        %v3863 = vpop.f32.mrf.mxu0
        %v3864 = vadd.f32 0.0, %v3863
        %3865 = vmatmul.bf16.gmra.mxu0 %v3339
        %v3866 = vpop.f32.mrf.mxu0
        %v3867 = vadd.f32 0.0, %v3866
        %v3868 = vpop.f32.mrf.mxu0
        %v3869 = vadd.f32 0.0, %v3868
        %3870 = vmatmul.bf16.gmra.mxu0 %v3340
        %v3871 = vpop.f32.mrf.mxu0
        %v3872 = vadd.f32 0.0, %v3871
        %v3873 = vpop.f32.mrf.mxu0
        %v3874 = vadd.f32 0.0, %v3873
        %3875 = vmatmul.bf16.gmra.mxu0 %v3341
        %v3876 = vpop.f32.mrf.mxu0
        %v3877 = vadd.f32 0.0, %v3876
        %v3878 = vpop.f32.mrf.mxu0
        %v3879 = vadd.f32 0.0, %v3878
        %3880 = vmatmul.bf16.gmra.mxu0 %v3342
        %v3881 = vpop.f32.mrf.mxu0
        %v3882 = vadd.f32 0.0, %v3881
        %v3883 = vpop.f32.mrf.mxu0
        %v3884 = vadd.f32 0.0, %v3883
        %3885 = vmatmul.bf16.gmra.mxu0 %v3343
        %v3886 = vpop.f32.mrf.mxu0
        %v3887 = vadd.f32 0.0, %v3886
        %v3888 = vpop.f32.mrf.mxu0
        %v3889 = vadd.f32 0.0, %v3888
        %3890 = vdwg.mxu0
        %3891 = vmatpush.bf16.msra.mxu0 %v3283
        %3892 = vmatpush.bf16.msra.mxu0 %v3251
        %3893 = vmatpush.bf16.msra.mxu0 %v3219
        %3894 = vmatpush.bf16.msra.mxu0 %v3187
        %3895 = vmatpush.bf16.msra.mxu0 %v3155
        %3896 = vmatpush.bf16.msra.mxu0 %v3123
        %3897 = vmatpush.bf16.msra.mxu0 %v3091
        %3898 = vmatpush.bf16.msra.mxu0 %v3059
        %3899 = vmatmul.bf16.gmra.mxu0 %v3336
        %v3900 = vpop.f32.mrf.mxu0
        %v3901 = vadd.f32 0.0, %v3900
        %v3902 = vpop.f32.mrf.mxu0
        %v3903 = vadd.f32 0.0, %v3902
        %3904 = vmatmul.bf16.gmra.mxu0 %v3337
        %v3905 = vpop.f32.mrf.mxu0
        %v3906 = vadd.f32 0.0, %v3905
        %v3907 = vpop.f32.mrf.mxu0
        %v3908 = vadd.f32 0.0, %v3907
        %3909 = vmatmul.bf16.gmra.mxu0 %v3338
        %v3910 = vpop.f32.mrf.mxu0
        %v3911 = vadd.f32 0.0, %v3910
        %v3912 = vpop.f32.mrf.mxu0
        %v3913 = vadd.f32 0.0, %v3912
        %3914 = vmatmul.bf16.gmra.mxu0 %v3339
        %v3915 = vpop.f32.mrf.mxu0
        %v3916 = vadd.f32 0.0, %v3915
        %v3917 = vpop.f32.mrf.mxu0
        %v3918 = vadd.f32 0.0, %v3917
        %3919 = vmatmul.bf16.gmra.mxu0 %v3340
        %v3920 = vpop.f32.mrf.mxu0
        %v3921 = vadd.f32 0.0, %v3920
        %v3922 = vpop.f32.mrf.mxu0
        %v3923 = vadd.f32 0.0, %v3922
        %3924 = vmatmul.bf16.gmra.mxu0 %v3341
        %v3925 = vpop.f32.mrf.mxu0
        %v3926 = vadd.f32 0.0, %v3925
        %v3927 = vpop.f32.mrf.mxu0
        %v3928 = vadd.f32 0.0, %v3927
        %3929 = vmatmul.bf16.gmra.mxu0 %v3342
        %v3930 = vpop.f32.mrf.mxu0
        %v3931 = vadd.f32 0.0, %v3930
        %v3932 = vpop.f32.mrf.mxu0
        %v3933 = vadd.f32 0.0, %v3932
        %3934 = vmatmul.bf16.gmra.mxu0 %v3343
        %v3935 = vpop.f32.mrf.mxu0
        %v3936 = vadd.f32 0.0, %v3935
        %v3937 = vpop.f32.mrf.mxu0
        %v3938 = vadd.f32 0.0, %v3937
        %3939 = vdwg.mxu0
        %3940 = vmatpush.bf16.msra.mxu0 %v3284
        %3941 = vmatpush.bf16.msra.mxu0 %v3252
        %3942 = vmatpush.bf16.msra.mxu0 %v3220
        %3943 = vmatpush.bf16.msra.mxu0 %v3188
        %3944 = vmatpush.bf16.msra.mxu0 %v3156
        %3945 = vmatpush.bf16.msra.mxu0 %v3124
        %3946 = vmatpush.bf16.msra.mxu0 %v3092
        %3947 = vmatpush.bf16.msra.mxu0 %v3060
        %3948 = vmatmul.bf16.gmra.mxu0 %v3336
        %v3949 = vpop.f32.mrf.mxu0
        %v3950 = vadd.f32 0.0, %v3949
        %v3951 = vpop.f32.mrf.mxu0
        %v3952 = vadd.f32 0.0, %v3951
        %3953 = vmatmul.bf16.gmra.mxu0 %v3337
        %v3954 = vpop.f32.mrf.mxu0
        %v3955 = vadd.f32 0.0, %v3954
        %v3956 = vpop.f32.mrf.mxu0
        %v3957 = vadd.f32 0.0, %v3956
        %3958 = vmatmul.bf16.gmra.mxu0 %v3338
        %v3959 = vpop.f32.mrf.mxu0
        %v3960 = vadd.f32 0.0, %v3959
        %v3961 = vpop.f32.mrf.mxu0
        %v3962 = vadd.f32 0.0, %v3961
        %3963 = vmatmul.bf16.gmra.mxu0 %v3339
        %v3964 = vpop.f32.mrf.mxu0
        %v3965 = vadd.f32 0.0, %v3964
        %v3966 = vpop.f32.mrf.mxu0
        %v3967 = vadd.f32 0.0, %v3966
        %3968 = vmatmul.bf16.gmra.mxu0 %v3340
        %v3969 = vpop.f32.mrf.mxu0
        %v3970 = vadd.f32 0.0, %v3969
        %v3971 = vpop.f32.mrf.mxu0
        %v3972 = vadd.f32 0.0, %v3971
        %3973 = vmatmul.bf16.gmra.mxu0 %v3341
        %v3974 = vpop.f32.mrf.mxu0
        %v3975 = vadd.f32 0.0, %v3974
        %v3976 = vpop.f32.mrf.mxu0
        %v3977 = vadd.f32 0.0, %v3976
        %3978 = vmatmul.bf16.gmra.mxu0 %v3342
        %v3979 = vpop.f32.mrf.mxu0
        %v3980 = vadd.f32 0.0, %v3979
        %v3981 = vpop.f32.mrf.mxu0
        %v3982 = vadd.f32 0.0, %v3981
        %3983 = vmatmul.bf16.gmra.mxu0 %v3343
        %v3984 = vpop.f32.mrf.mxu0
        %v3985 = vadd.f32 0.0, %v3984
        %v3986 = vpop.f32.mrf.mxu0
        %v3987 = vadd.f32 0.0, %v3986
        %3988 = vdwg.mxu0
        %3989 = vmatpush.bf16.msra.mxu0 %v3285
        %3990 = vmatpush.bf16.msra.mxu0 %v3253
        %3991 = vmatpush.bf16.msra.mxu0 %v3221
        %3992 = vmatpush.bf16.msra.mxu0 %v3189
        %3993 = vmatpush.bf16.msra.mxu0 %v3157
        %3994 = vmatpush.bf16.msra.mxu0 %v3125
        %3995 = vmatpush.bf16.msra.mxu0 %v3093
        %3996 = vmatpush.bf16.msra.mxu0 %v3061
        %3997 = vmatmul.bf16.gmra.mxu0 %v3336
        %v3998 = vpop.f32.mrf.mxu0
        %v3999 = vadd.f32 0.0, %v3998
        %v4000 = vpop.f32.mrf.mxu0
        %v4001 = vadd.f32 0.0, %v4000
        %4002 = vmatmul.bf16.gmra.mxu0 %v3337
        %v4003 = vpop.f32.mrf.mxu0
        %v4004 = vadd.f32 0.0, %v4003
        %v4005 = vpop.f32.mrf.mxu0
        %v4006 = vadd.f32 0.0, %v4005
        %4007 = vmatmul.bf16.gmra.mxu0 %v3338
        %v4008 = vpop.f32.mrf.mxu0
        %v4009 = vadd.f32 0.0, %v4008
        %v4010 = vpop.f32.mrf.mxu0
        %v4011 = vadd.f32 0.0, %v4010
        %4012 = vmatmul.bf16.gmra.mxu0 %v3339
        %v4013 = vpop.f32.mrf.mxu0
        %v4014 = vadd.f32 0.0, %v4013
        %v4015 = vpop.f32.mrf.mxu0
        %v4016 = vadd.f32 0.0, %v4015
        %4017 = vmatmul.bf16.gmra.mxu0 %v3340
        %v4018 = vpop.f32.mrf.mxu0
        %v4019 = vadd.f32 0.0, %v4018
        %v4020 = vpop.f32.mrf.mxu0
        %v4021 = vadd.f32 0.0, %v4020
        %4022 = vmatmul.bf16.gmra.mxu0 %v3341
        %v4023 = vpop.f32.mrf.mxu0
        %v4024 = vadd.f32 0.0, %v4023
        %v4025 = vpop.f32.mrf.mxu0
        %v4026 = vadd.f32 0.0, %v4025
        %4027 = vmatmul.bf16.gmra.mxu0 %v3342
        %v4028 = vpop.f32.mrf.mxu0
        %v4029 = vadd.f32 0.0, %v4028
        %v4030 = vpop.f32.mrf.mxu0
        %v4031 = vadd.f32 0.0, %v4030
        %4032 = vmatmul.bf16.gmra.mxu0 %v3343
        %v4033 = vpop.f32.mrf.mxu0
        %v4034 = vadd.f32 0.0, %v4033
        %v4035 = vpop.f32.mrf.mxu0
        %v4036 = vadd.f32 0.0, %v4035
        %4037 = vdwg.mxu0
        %4038 = vmatpush.bf16.msra.mxu0 %v3286
        %4039 = vmatpush.bf16.msra.mxu0 %v3254
        %4040 = vmatpush.bf16.msra.mxu0 %v3222
        %4041 = vmatpush.bf16.msra.mxu0 %v3190
        %4042 = vmatpush.bf16.msra.mxu0 %v3158
        %4043 = vmatpush.bf16.msra.mxu0 %v3126
        %4044 = vmatpush.bf16.msra.mxu0 %v3094
        %4045 = vmatpush.bf16.msra.mxu0 %v3062
        %4046 = vmatmul.bf16.gmra.mxu0 %v3336
        %v4047 = vpop.f32.mrf.mxu0
        %v4048 = vadd.f32 0.0, %v4047
        %v4049 = vpop.f32.mrf.mxu0
        %v4050 = vadd.f32 0.0, %v4049
        %4051 = vmatmul.bf16.gmra.mxu0 %v3337
        %v4052 = vpop.f32.mrf.mxu0
        %v4053 = vadd.f32 0.0, %v4052
        %v4054 = vpop.f32.mrf.mxu0
        %v4055 = vadd.f32 0.0, %v4054
        %4056 = vmatmul.bf16.gmra.mxu0 %v3338
        %v4057 = vpop.f32.mrf.mxu0
        %v4058 = vadd.f32 0.0, %v4057
        %v4059 = vpop.f32.mrf.mxu0
        %v4060 = vadd.f32 0.0, %v4059
        %4061 = vmatmul.bf16.gmra.mxu0 %v3339
        %v4062 = vpop.f32.mrf.mxu0
        %v4063 = vadd.f32 0.0, %v4062
        %v4064 = vpop.f32.mrf.mxu0
        %v4065 = vadd.f32 0.0, %v4064
        %4066 = vmatmul.bf16.gmra.mxu0 %v3340
        %v4067 = vpop.f32.mrf.mxu0
        %v4068 = vadd.f32 0.0, %v4067
        %v4069 = vpop.f32.mrf.mxu0
        %v4070 = vadd.f32 0.0, %v4069
        %4071 = vmatmul.bf16.gmra.mxu0 %v3341
        %v4072 = vpop.f32.mrf.mxu0
        %v4073 = vadd.f32 0.0, %v4072
        %v4074 = vpop.f32.mrf.mxu0
        %v4075 = vadd.f32 0.0, %v4074
        %4076 = vmatmul.bf16.gmra.mxu0 %v3342
        %v4077 = vpop.f32.mrf.mxu0
        %v4078 = vadd.f32 0.0, %v4077
        %v4079 = vpop.f32.mrf.mxu0
        %v4080 = vadd.f32 0.0, %v4079
        %4081 = vmatmul.bf16.gmra.mxu0 %v3343
        %v4082 = vpop.f32.mrf.mxu0
        %v4083 = vadd.f32 0.0, %v4082
        %v4084 = vpop.f32.mrf.mxu0
        %v4085 = vadd.f32 0.0, %v4084
        %4086 = vdwg.mxu0
        %4087 = vmatpush.bf16.msra.mxu0 %v3287
        %4088 = vmatpush.bf16.msra.mxu0 %v3255
        %4089 = vmatpush.bf16.msra.mxu0 %v3223
        %4090 = vmatpush.bf16.msra.mxu0 %v3191
        %4091 = vmatpush.bf16.msra.mxu0 %v3159
        %4092 = vmatpush.bf16.msra.mxu0 %v3127
        %4093 = vmatpush.bf16.msra.mxu0 %v3095
        %4094 = vmatpush.bf16.msra.mxu0 %v3063
        %4095 = vmatmul.bf16.gmra.mxu0 %v3336
        %v4096 = vpop.f32.mrf.mxu0
        %v4097 = vadd.f32 0.0, %v4096
        %v4098 = vpop.f32.mrf.mxu0
        %v4099 = vadd.f32 0.0, %v4098
        %4100 = vmatmul.bf16.gmra.mxu0 %v3337
        %v4101 = vpop.f32.mrf.mxu0
        %v4102 = vadd.f32 0.0, %v4101
        %v4103 = vpop.f32.mrf.mxu0
        %v4104 = vadd.f32 0.0, %v4103
        %4105 = vmatmul.bf16.gmra.mxu0 %v3338
        %v4106 = vpop.f32.mrf.mxu0
        %v4107 = vadd.f32 0.0, %v4106
        %v4108 = vpop.f32.mrf.mxu0
        %v4109 = vadd.f32 0.0, %v4108
        %4110 = vmatmul.bf16.gmra.mxu0 %v3339
        %v4111 = vpop.f32.mrf.mxu0
        %v4112 = vadd.f32 0.0, %v4111
        %v4113 = vpop.f32.mrf.mxu0
        %v4114 = vadd.f32 0.0, %v4113
        %4115 = vmatmul.bf16.gmra.mxu0 %v3340
        %v4116 = vpop.f32.mrf.mxu0
        %v4117 = vadd.f32 0.0, %v4116
        %v4118 = vpop.f32.mrf.mxu0
        %v4119 = vadd.f32 0.0, %v4118
        %4120 = vmatmul.bf16.gmra.mxu0 %v3341
        %v4121 = vpop.f32.mrf.mxu0
        %v4122 = vadd.f32 0.0, %v4121
        %v4123 = vpop.f32.mrf.mxu0
        %v4124 = vadd.f32 0.0, %v4123
        %4125 = vmatmul.bf16.gmra.mxu0 %v3342
        %v4126 = vpop.f32.mrf.mxu0
        %v4127 = vadd.f32 0.0, %v4126
        %v4128 = vpop.f32.mrf.mxu0
        %v4129 = vadd.f32 0.0, %v4128
        %4130 = vmatmul.bf16.gmra.mxu0 %v3343
        %v4131 = vpop.f32.mrf.mxu0
        %v4132 = vadd.f32 0.0, %v4131
        %v4133 = vpop.f32.mrf.mxu0
        %v4134 = vadd.f32 0.0, %v4133
        %4135 = vdwg.mxu0
        %4136 = vmatpush.bf16.msra.mxu0 %v3288
        %4137 = vmatpush.bf16.msra.mxu0 %v3256
        %4138 = vmatpush.bf16.msra.mxu0 %v3224
        %4139 = vmatpush.bf16.msra.mxu0 %v3192
        %4140 = vmatpush.bf16.msra.mxu0 %v3160
        %4141 = vmatpush.bf16.msra.mxu0 %v3128
        %4142 = vmatpush.bf16.msra.mxu0 %v3096
        %4143 = vmatpush.bf16.msra.mxu0 %v3064
        %4144 = vmatmul.bf16.gmra.mxu0 %v3336
        %v4145 = vpop.f32.mrf.mxu0
        %v4146 = vadd.f32 0.0, %v4145
        %v4147 = vpop.f32.mrf.mxu0
        %v4148 = vadd.f32 0.0, %v4147
        %4149 = vmatmul.bf16.gmra.mxu0 %v3337
        %v4150 = vpop.f32.mrf.mxu0
        %v4151 = vadd.f32 0.0, %v4150
        %v4152 = vpop.f32.mrf.mxu0
        %v4153 = vadd.f32 0.0, %v4152
        %4154 = vmatmul.bf16.gmra.mxu0 %v3338
        %v4155 = vpop.f32.mrf.mxu0
        %v4156 = vadd.f32 0.0, %v4155
        %v4157 = vpop.f32.mrf.mxu0
        %v4158 = vadd.f32 0.0, %v4157
        %4159 = vmatmul.bf16.gmra.mxu0 %v3339
        %v4160 = vpop.f32.mrf.mxu0
        %v4161 = vadd.f32 0.0, %v4160
        %v4162 = vpop.f32.mrf.mxu0
        %v4163 = vadd.f32 0.0, %v4162
        %4164 = vmatmul.bf16.gmra.mxu0 %v3340
        %v4165 = vpop.f32.mrf.mxu0
        %v4166 = vadd.f32 0.0, %v4165
        %v4167 = vpop.f32.mrf.mxu0
        %v4168 = vadd.f32 0.0, %v4167
        %4169 = vmatmul.bf16.gmra.mxu0 %v3341
        %v4170 = vpop.f32.mrf.mxu0
        %v4171 = vadd.f32 0.0, %v4170
        %v4172 = vpop.f32.mrf.mxu0
        %v4173 = vadd.f32 0.0, %v4172
        %4174 = vmatmul.bf16.gmra.mxu0 %v3342
        %v4175 = vpop.f32.mrf.mxu0
        %v4176 = vadd.f32 0.0, %v4175
        %v4177 = vpop.f32.mrf.mxu0
        %v4178 = vadd.f32 0.0, %v4177
        %4179 = vmatmul.bf16.gmra.mxu0 %v3343
        %v4180 = vpop.f32.mrf.mxu0
        %v4181 = vadd.f32 0.0, %v4180
        %v4182 = vpop.f32.mrf.mxu0
        %v4183 = vadd.f32 0.0, %v4182
        %4184 = vdwg.mxu0
        %4185 = vmatpush.bf16.msra.mxu0 %v3289
        %4186 = vmatpush.bf16.msra.mxu0 %v3257
        %4187 = vmatpush.bf16.msra.mxu0 %v3225
        %4188 = vmatpush.bf16.msra.mxu0 %v3193
        %4189 = vmatpush.bf16.msra.mxu0 %v3161
        %4190 = vmatpush.bf16.msra.mxu0 %v3129
        %4191 = vmatpush.bf16.msra.mxu0 %v3097
        %4192 = vmatpush.bf16.msra.mxu0 %v3065
        %4193 = vmatmul.bf16.gmra.mxu0 %v3336
        %v4194 = vpop.f32.mrf.mxu0
        %v4195 = vadd.f32 0.0, %v4194
        %v4196 = vpop.f32.mrf.mxu0
        %v4197 = vadd.f32 0.0, %v4196
        %4198 = vmatmul.bf16.gmra.mxu0 %v3337
        %v4199 = vpop.f32.mrf.mxu0
        %v4200 = vadd.f32 0.0, %v4199
        %v4201 = vpop.f32.mrf.mxu0
        %v4202 = vadd.f32 0.0, %v4201
        %4203 = vmatmul.bf16.gmra.mxu0 %v3338
        %v4204 = vpop.f32.mrf.mxu0
        %v4205 = vadd.f32 0.0, %v4204
        %v4206 = vpop.f32.mrf.mxu0
        %v4207 = vadd.f32 0.0, %v4206
        %4208 = vmatmul.bf16.gmra.mxu0 %v3339
        %v4209 = vpop.f32.mrf.mxu0
        %v4210 = vadd.f32 0.0, %v4209
        %v4211 = vpop.f32.mrf.mxu0
        %v4212 = vadd.f32 0.0, %v4211
        %4213 = vmatmul.bf16.gmra.mxu0 %v3340
        %v4214 = vpop.f32.mrf.mxu0
        %v4215 = vadd.f32 0.0, %v4214
        %v4216 = vpop.f32.mrf.mxu0
        %v4217 = vadd.f32 0.0, %v4216
        %4218 = vmatmul.bf16.gmra.mxu0 %v3341
        %v4219 = vpop.f32.mrf.mxu0
        %v4220 = vadd.f32 0.0, %v4219
        %v4221 = vpop.f32.mrf.mxu0
        %v4222 = vadd.f32 0.0, %v4221
        %4223 = vmatmul.bf16.gmra.mxu0 %v3342
        %v4224 = vpop.f32.mrf.mxu0
        %v4225 = vadd.f32 0.0, %v4224
        %v4226 = vpop.f32.mrf.mxu0
        %v4227 = vadd.f32 0.0, %v4226
        %4228 = vmatmul.bf16.gmra.mxu0 %v3343
        %v4229 = vpop.f32.mrf.mxu0
        %v4230 = vadd.f32 0.0, %v4229
        %v4231 = vpop.f32.mrf.mxu0
        %v4232 = vadd.f32 0.0, %v4231
        %4233 = vdwg.mxu0
        %4234 = vmatpush.bf16.msra.mxu0 %v3290
        %4235 = vmatpush.bf16.msra.mxu0 %v3258
        %4236 = vmatpush.bf16.msra.mxu0 %v3226
        %4237 = vmatpush.bf16.msra.mxu0 %v3194
        %4238 = vmatpush.bf16.msra.mxu0 %v3162
        %4239 = vmatpush.bf16.msra.mxu0 %v3130
        %4240 = vmatpush.bf16.msra.mxu0 %v3098
        %4241 = vmatpush.bf16.msra.mxu0 %v3066
        %4242 = vmatmul.bf16.gmra.mxu0 %v3336
        %v4243 = vpop.f32.mrf.mxu0
        %v4244 = vadd.f32 0.0, %v4243
        %v4245 = vpop.f32.mrf.mxu0
        %v4246 = vadd.f32 0.0, %v4245
        %4247 = vmatmul.bf16.gmra.mxu0 %v3337
        %v4248 = vpop.f32.mrf.mxu0
        %v4249 = vadd.f32 0.0, %v4248
        %v4250 = vpop.f32.mrf.mxu0
        %v4251 = vadd.f32 0.0, %v4250
        %4252 = vmatmul.bf16.gmra.mxu0 %v3338
        %v4253 = vpop.f32.mrf.mxu0
        %v4254 = vadd.f32 0.0, %v4253
        %v4255 = vpop.f32.mrf.mxu0
        %v4256 = vadd.f32 0.0, %v4255
        %4257 = vmatmul.bf16.gmra.mxu0 %v3339
        %v4258 = vpop.f32.mrf.mxu0
        %v4259 = vadd.f32 0.0, %v4258
        %v4260 = vpop.f32.mrf.mxu0
        %v4261 = vadd.f32 0.0, %v4260
        %4262 = vmatmul.bf16.gmra.mxu0 %v3340
        %v4263 = vpop.f32.mrf.mxu0
        %v4264 = vadd.f32 0.0, %v4263
        %v4265 = vpop.f32.mrf.mxu0
        %v4266 = vadd.f32 0.0, %v4265
        %4267 = vmatmul.bf16.gmra.mxu0 %v3341
        %v4268 = vpop.f32.mrf.mxu0
        %v4269 = vadd.f32 0.0, %v4268
        %v4270 = vpop.f32.mrf.mxu0
        %v4271 = vadd.f32 0.0, %v4270
        %4272 = vmatmul.bf16.gmra.mxu0 %v3342
        %v4273 = vpop.f32.mrf.mxu0
        %v4274 = vadd.f32 0.0, %v4273
        %v4275 = vpop.f32.mrf.mxu0
        %v4276 = vadd.f32 0.0, %v4275
        %4277 = vmatmul.bf16.gmra.mxu0 %v3343
        %v4278 = vpop.f32.mrf.mxu0
        %v4279 = vadd.f32 0.0, %v4278
        %v4280 = vpop.f32.mrf.mxu0
        %v4281 = vadd.f32 0.0, %v4280
        %4282 = vdwg.mxu0
        %4283 = vmatpush.bf16.msra.mxu0 %v3291
        %4284 = vmatpush.bf16.msra.mxu0 %v3259
        %4285 = vmatpush.bf16.msra.mxu0 %v3227
        %4286 = vmatpush.bf16.msra.mxu0 %v3195
        %4287 = vmatpush.bf16.msra.mxu0 %v3163
        %4288 = vmatpush.bf16.msra.mxu0 %v3131
        %4289 = vmatpush.bf16.msra.mxu0 %v3099
        %4290 = vmatpush.bf16.msra.mxu0 %v3067
        %4291 = vmatmul.bf16.gmra.mxu0 %v3336
        %v4292 = vpop.f32.mrf.mxu0
        %v4293 = vadd.f32 0.0, %v4292
        %v4294 = vpop.f32.mrf.mxu0
        %v4295 = vadd.f32 0.0, %v4294
        %4296 = vmatmul.bf16.gmra.mxu0 %v3337
        %v4297 = vpop.f32.mrf.mxu0
        %v4298 = vadd.f32 0.0, %v4297
        %v4299 = vpop.f32.mrf.mxu0
        %v4300 = vadd.f32 0.0, %v4299
        %4301 = vmatmul.bf16.gmra.mxu0 %v3338
        %v4302 = vpop.f32.mrf.mxu0
        %v4303 = vadd.f32 0.0, %v4302
        %v4304 = vpop.f32.mrf.mxu0
        %v4305 = vadd.f32 0.0, %v4304
        %4306 = vmatmul.bf16.gmra.mxu0 %v3339
        %v4307 = vpop.f32.mrf.mxu0
        %v4308 = vadd.f32 0.0, %v4307
        %v4309 = vpop.f32.mrf.mxu0
        %v4310 = vadd.f32 0.0, %v4309
        %4311 = vmatmul.bf16.gmra.mxu0 %v3340
        %v4312 = vpop.f32.mrf.mxu0
        %v4313 = vadd.f32 0.0, %v4312
        %v4314 = vpop.f32.mrf.mxu0
        %v4315 = vadd.f32 0.0, %v4314
        %4316 = vmatmul.bf16.gmra.mxu0 %v3341
        %v4317 = vpop.f32.mrf.mxu0
        %v4318 = vadd.f32 0.0, %v4317
        %v4319 = vpop.f32.mrf.mxu0
        %v4320 = vadd.f32 0.0, %v4319
        %4321 = vmatmul.bf16.gmra.mxu0 %v3342
        %v4322 = vpop.f32.mrf.mxu0
        %v4323 = vadd.f32 0.0, %v4322
        %v4324 = vpop.f32.mrf.mxu0
        %v4325 = vadd.f32 0.0, %v4324
        %4326 = vmatmul.bf16.gmra.mxu0 %v3343
        %v4327 = vpop.f32.mrf.mxu0
        %v4328 = vadd.f32 0.0, %v4327
        %v4329 = vpop.f32.mrf.mxu0
        %v4330 = vadd.f32 0.0, %v4329
        %4331 = vdwg.mxu0
        %4332 = vmatpush.bf16.msra.mxu0 %v3292
        %4333 = vmatpush.bf16.msra.mxu0 %v3260
        %4334 = vmatpush.bf16.msra.mxu0 %v3228
        %4335 = vmatpush.bf16.msra.mxu0 %v3196
        %4336 = vmatpush.bf16.msra.mxu0 %v3164
        %4337 = vmatpush.bf16.msra.mxu0 %v3132
        %4338 = vmatpush.bf16.msra.mxu0 %v3100
        %4339 = vmatpush.bf16.msra.mxu0 %v3068
        %4340 = vmatmul.bf16.gmra.mxu0 %v3336
        %v4341 = vpop.f32.mrf.mxu0
        %v4342 = vadd.f32 0.0, %v4341
        %v4343 = vpop.f32.mrf.mxu0
        %v4344 = vadd.f32 0.0, %v4343
        %4345 = vmatmul.bf16.gmra.mxu0 %v3337
        %v4346 = vpop.f32.mrf.mxu0
        %v4347 = vadd.f32 0.0, %v4346
        %v4348 = vpop.f32.mrf.mxu0
        %v4349 = vadd.f32 0.0, %v4348
        %4350 = vmatmul.bf16.gmra.mxu0 %v3338
        %v4351 = vpop.f32.mrf.mxu0
        %v4352 = vadd.f32 0.0, %v4351
        %v4353 = vpop.f32.mrf.mxu0
        %v4354 = vadd.f32 0.0, %v4353
        %4355 = vmatmul.bf16.gmra.mxu0 %v3339
        %v4356 = vpop.f32.mrf.mxu0
        %v4357 = vadd.f32 0.0, %v4356
        %v4358 = vpop.f32.mrf.mxu0
        %v4359 = vadd.f32 0.0, %v4358
        %4360 = vmatmul.bf16.gmra.mxu0 %v3340
        %v4361 = vpop.f32.mrf.mxu0
        %v4362 = vadd.f32 0.0, %v4361
        %v4363 = vpop.f32.mrf.mxu0
        %v4364 = vadd.f32 0.0, %v4363
        %4365 = vmatmul.bf16.gmra.mxu0 %v3341
        %v4366 = vpop.f32.mrf.mxu0
        %v4367 = vadd.f32 0.0, %v4366
        %v4368 = vpop.f32.mrf.mxu0
        %v4369 = vadd.f32 0.0, %v4368
        %4370 = vmatmul.bf16.gmra.mxu0 %v3342
        %v4371 = vpop.f32.mrf.mxu0
        %v4372 = vadd.f32 0.0, %v4371
        %v4373 = vpop.f32.mrf.mxu0
        %v4374 = vadd.f32 0.0, %v4373
        %4375 = vmatmul.bf16.gmra.mxu0 %v3343
        %v4376 = vpop.f32.mrf.mxu0
        %v4377 = vadd.f32 0.0, %v4376
        %v4378 = vpop.f32.mrf.mxu0
        %v4379 = vadd.f32 0.0, %v4378
        %4380 = vdwg.mxu0
        %4381 = vmatpush.bf16.msra.mxu0 %v3293
        %4382 = vmatpush.bf16.msra.mxu0 %v3261
        %4383 = vmatpush.bf16.msra.mxu0 %v3229
        %4384 = vmatpush.bf16.msra.mxu0 %v3197
        %4385 = vmatpush.bf16.msra.mxu0 %v3165
        %4386 = vmatpush.bf16.msra.mxu0 %v3133
        %4387 = vmatpush.bf16.msra.mxu0 %v3101
        %4388 = vmatpush.bf16.msra.mxu0 %v3069
        %4389 = vmatmul.bf16.gmra.mxu0 %v3336
        %v4390 = vpop.f32.mrf.mxu0
        %v4391 = vadd.f32 0.0, %v4390
        %v4392 = vpop.f32.mrf.mxu0
        %v4393 = vadd.f32 0.0, %v4392
        %4394 = vmatmul.bf16.gmra.mxu0 %v3337
        %v4395 = vpop.f32.mrf.mxu0
        %v4396 = vadd.f32 0.0, %v4395
        %v4397 = vpop.f32.mrf.mxu0
        %v4398 = vadd.f32 0.0, %v4397
        %4399 = vmatmul.bf16.gmra.mxu0 %v3338
        %v4400 = vpop.f32.mrf.mxu0
        %v4401 = vadd.f32 0.0, %v4400
        %v4402 = vpop.f32.mrf.mxu0
        %v4403 = vadd.f32 0.0, %v4402
        %4404 = vmatmul.bf16.gmra.mxu0 %v3339
        %v4405 = vpop.f32.mrf.mxu0
        %v4406 = vadd.f32 0.0, %v4405
        %v4407 = vpop.f32.mrf.mxu0
        %v4408 = vadd.f32 0.0, %v4407
        %4409 = vmatmul.bf16.gmra.mxu0 %v3340
        %v4410 = vpop.f32.mrf.mxu0
        %v4411 = vadd.f32 0.0, %v4410
        %v4412 = vpop.f32.mrf.mxu0
        %v4413 = vadd.f32 0.0, %v4412
        %4414 = vmatmul.bf16.gmra.mxu0 %v3341
        %v4415 = vpop.f32.mrf.mxu0
        %v4416 = vadd.f32 0.0, %v4415
        %v4417 = vpop.f32.mrf.mxu0
        %v4418 = vadd.f32 0.0, %v4417
        %4419 = vmatmul.bf16.gmra.mxu0 %v3342
        %v4420 = vpop.f32.mrf.mxu0
        %v4421 = vadd.f32 0.0, %v4420
        %v4422 = vpop.f32.mrf.mxu0
        %v4423 = vadd.f32 0.0, %v4422
        %4424 = vmatmul.bf16.gmra.mxu0 %v3343
        %v4425 = vpop.f32.mrf.mxu0
        %v4426 = vadd.f32 0.0, %v4425
        %v4427 = vpop.f32.mrf.mxu0
        %v4428 = vadd.f32 0.0, %v4427
        %4429 = vdwg.mxu0
        %4430 = vmatpush.bf16.msra.mxu0 %v3294
        %4431 = vmatpush.bf16.msra.mxu0 %v3262
        %4432 = vmatpush.bf16.msra.mxu0 %v3230
        %4433 = vmatpush.bf16.msra.mxu0 %v3198
        %4434 = vmatpush.bf16.msra.mxu0 %v3166
        %4435 = vmatpush.bf16.msra.mxu0 %v3134
        %4436 = vmatpush.bf16.msra.mxu0 %v3102
        %4437 = vmatpush.bf16.msra.mxu0 %v3070
        %4438 = vmatmul.bf16.gmra.mxu0 %v3336
        %v4439 = vpop.f32.mrf.mxu0
        %v4440 = vadd.f32 0.0, %v4439
        %v4441 = vpop.f32.mrf.mxu0
        %v4442 = vadd.f32 0.0, %v4441
        %4443 = vmatmul.bf16.gmra.mxu0 %v3337
        %v4444 = vpop.f32.mrf.mxu0
        %v4445 = vadd.f32 0.0, %v4444
        %v4446 = vpop.f32.mrf.mxu0
        %v4447 = vadd.f32 0.0, %v4446
        %4448 = vmatmul.bf16.gmra.mxu0 %v3338
        %v4449 = vpop.f32.mrf.mxu0
        %v4450 = vadd.f32 0.0, %v4449
        %v4451 = vpop.f32.mrf.mxu0
        %v4452 = vadd.f32 0.0, %v4451
        %4453 = vmatmul.bf16.gmra.mxu0 %v3339
        %v4454 = vpop.f32.mrf.mxu0
        %v4455 = vadd.f32 0.0, %v4454
        %v4456 = vpop.f32.mrf.mxu0
        %v4457 = vadd.f32 0.0, %v4456
        %4458 = vmatmul.bf16.gmra.mxu0 %v3340
        %v4459 = vpop.f32.mrf.mxu0
        %v4460 = vadd.f32 0.0, %v4459
        %v4461 = vpop.f32.mrf.mxu0
        %v4462 = vadd.f32 0.0, %v4461
        %4463 = vmatmul.bf16.gmra.mxu0 %v3341
        %v4464 = vpop.f32.mrf.mxu0
        %v4465 = vadd.f32 0.0, %v4464
        %v4466 = vpop.f32.mrf.mxu0
        %v4467 = vadd.f32 0.0, %v4466
        %4468 = vmatmul.bf16.gmra.mxu0 %v3342
        %v4469 = vpop.f32.mrf.mxu0
        %v4470 = vadd.f32 0.0, %v4469
        %v4471 = vpop.f32.mrf.mxu0
        %v4472 = vadd.f32 0.0, %v4471
        %4473 = vmatmul.bf16.gmra.mxu0 %v3343
        %v4474 = vpop.f32.mrf.mxu0
        %v4475 = vadd.f32 0.0, %v4474
        %v4476 = vpop.f32.mrf.mxu0
        %v4477 = vadd.f32 0.0, %v4476
        %4478 = vdwg.mxu0
        %4479 = vmatpush.bf16.msra.mxu0 %v3295
        %4480 = vmatpush.bf16.msra.mxu0 %v3263
        %4481 = vmatpush.bf16.msra.mxu0 %v3231
        %4482 = vmatpush.bf16.msra.mxu0 %v3199
        %4483 = vmatpush.bf16.msra.mxu0 %v3167
        %4484 = vmatpush.bf16.msra.mxu0 %v3135
        %4485 = vmatpush.bf16.msra.mxu0 %v3103
        %4486 = vmatpush.bf16.msra.mxu0 %v3071
        %4487 = vmatmul.bf16.gmra.mxu0 %v3336
        %v4488 = vpop.f32.mrf.mxu0
        %v4489 = vadd.f32 0.0, %v4488
        %v4490 = vpop.f32.mrf.mxu0
        %v4491 = vadd.f32 0.0, %v4490
        %4492 = vmatmul.bf16.gmra.mxu0 %v3337
        %v4493 = vpop.f32.mrf.mxu0
        %v4494 = vadd.f32 0.0, %v4493
        %v4495 = vpop.f32.mrf.mxu0
        %v4496 = vadd.f32 0.0, %v4495
        %4497 = vmatmul.bf16.gmra.mxu0 %v3338
        %v4498 = vpop.f32.mrf.mxu0
        %v4499 = vadd.f32 0.0, %v4498
        %v4500 = vpop.f32.mrf.mxu0
        %v4501 = vadd.f32 0.0, %v4500
        %4502 = vmatmul.bf16.gmra.mxu0 %v3339
        %v4503 = vpop.f32.mrf.mxu0
        %v4504 = vadd.f32 0.0, %v4503
        %v4505 = vpop.f32.mrf.mxu0
        %v4506 = vadd.f32 0.0, %v4505
        %4507 = vmatmul.bf16.gmra.mxu0 %v3340
        %v4508 = vpop.f32.mrf.mxu0
        %v4509 = vadd.f32 0.0, %v4508
        %v4510 = vpop.f32.mrf.mxu0
        %v4511 = vadd.f32 0.0, %v4510
        %4512 = vmatmul.bf16.gmra.mxu0 %v3341
        %v4513 = vpop.f32.mrf.mxu0
        %v4514 = vadd.f32 0.0, %v4513
        %v4515 = vpop.f32.mrf.mxu0
        %v4516 = vadd.f32 0.0, %v4515
        %4517 = vmatmul.bf16.gmra.mxu0 %v3342
        %v4518 = vpop.f32.mrf.mxu0
        %v4519 = vadd.f32 0.0, %v4518
        %v4520 = vpop.f32.mrf.mxu0
        %v4521 = vadd.f32 0.0, %v4520
        %4522 = vmatmul.bf16.gmra.mxu0 %v3343
        %v4523 = vpop.f32.mrf.mxu0
        %v4524 = vadd.f32 0.0, %v4523
        %v4525 = vpop.f32.mrf.mxu0
        %v4526 = vadd.f32 0.0, %v4525
        %4527 = vdwg.mxu0
        %4528 = vmatpush.bf16.msra.mxu0 %v3296
        %4529 = vmatpush.bf16.msra.mxu0 %v3264
        %4530 = vmatpush.bf16.msra.mxu0 %v3232
        %4531 = vmatpush.bf16.msra.mxu0 %v3200
        %4532 = vmatpush.bf16.msra.mxu0 %v3168
        %4533 = vmatpush.bf16.msra.mxu0 %v3136
        %4534 = vmatpush.bf16.msra.mxu0 %v3104
        %4535 = vmatpush.bf16.msra.mxu0 %v3072
        %4536 = vmatmul.bf16.gmra.mxu0 %v3336
        %v4537 = vpop.f32.mrf.mxu0
        %v4538 = vadd.f32 0.0, %v4537
        %v4539 = vpop.f32.mrf.mxu0
        %v4540 = vadd.f32 0.0, %v4539
        %4541 = vmatmul.bf16.gmra.mxu0 %v3337
        %v4542 = vpop.f32.mrf.mxu0
        %v4543 = vadd.f32 0.0, %v4542
        %v4544 = vpop.f32.mrf.mxu0
        %v4545 = vadd.f32 0.0, %v4544
        %4546 = vmatmul.bf16.gmra.mxu0 %v3338
        %v4547 = vpop.f32.mrf.mxu0
        %v4548 = vadd.f32 0.0, %v4547
        %v4549 = vpop.f32.mrf.mxu0
        %v4550 = vadd.f32 0.0, %v4549
        %4551 = vmatmul.bf16.gmra.mxu0 %v3339
        %v4552 = vpop.f32.mrf.mxu0
        %v4553 = vadd.f32 0.0, %v4552
        %v4554 = vpop.f32.mrf.mxu0
        %v4555 = vadd.f32 0.0, %v4554
        %4556 = vmatmul.bf16.gmra.mxu0 %v3340
        %v4557 = vpop.f32.mrf.mxu0
        %v4558 = vadd.f32 0.0, %v4557
        %v4559 = vpop.f32.mrf.mxu0
        %v4560 = vadd.f32 0.0, %v4559
        %4561 = vmatmul.bf16.gmra.mxu0 %v3341
        %v4562 = vpop.f32.mrf.mxu0
        %v4563 = vadd.f32 0.0, %v4562
        %v4564 = vpop.f32.mrf.mxu0
        %v4565 = vadd.f32 0.0, %v4564
        %4566 = vmatmul.bf16.gmra.mxu0 %v3342
        %v4567 = vpop.f32.mrf.mxu0
        %v4568 = vadd.f32 0.0, %v4567
        %v4569 = vpop.f32.mrf.mxu0
        %v4570 = vadd.f32 0.0, %v4569
        %4571 = vmatmul.bf16.gmra.mxu0 %v3343
        %v4572 = vpop.f32.mrf.mxu0
        %v4573 = vadd.f32 0.0, %v4572
        %v4574 = vpop.f32.mrf.mxu0
        %v4575 = vadd.f32 0.0, %v4574
        %4576 = vdwg.mxu0
        %4577 = vmatpush.bf16.msra.mxu0 %v3297
        %4578 = vmatpush.bf16.msra.mxu0 %v3265
        %4579 = vmatpush.bf16.msra.mxu0 %v3233
        %4580 = vmatpush.bf16.msra.mxu0 %v3201
        %4581 = vmatpush.bf16.msra.mxu0 %v3169
        %4582 = vmatpush.bf16.msra.mxu0 %v3137
        %4583 = vmatpush.bf16.msra.mxu0 %v3105
        %4584 = vmatpush.bf16.msra.mxu0 %v3073
        %4585 = vmatmul.bf16.gmra.mxu0 %v3336
        %v4586 = vpop.f32.mrf.mxu0
        %v4587 = vadd.f32 0.0, %v4586
        %v4588 = vpop.f32.mrf.mxu0
        %v4589 = vadd.f32 0.0, %v4588
        %4590 = vmatmul.bf16.gmra.mxu0 %v3337
        %v4591 = vpop.f32.mrf.mxu0
        %v4592 = vadd.f32 0.0, %v4591
        %v4593 = vpop.f32.mrf.mxu0
        %v4594 = vadd.f32 0.0, %v4593
        %4595 = vmatmul.bf16.gmra.mxu0 %v3338
        %v4596 = vpop.f32.mrf.mxu0
        %v4597 = vadd.f32 0.0, %v4596
        %v4598 = vpop.f32.mrf.mxu0
        %v4599 = vadd.f32 0.0, %v4598
        %4600 = vmatmul.bf16.gmra.mxu0 %v3339
        %v4601 = vpop.f32.mrf.mxu0
        %v4602 = vadd.f32 0.0, %v4601
        %v4603 = vpop.f32.mrf.mxu0
        %v4604 = vadd.f32 0.0, %v4603
        %4605 = vmatmul.bf16.gmra.mxu0 %v3340
        %v4606 = vpop.f32.mrf.mxu0
        %v4607 = vadd.f32 0.0, %v4606
        %v4608 = vpop.f32.mrf.mxu0
        %v4609 = vadd.f32 0.0, %v4608
        %4610 = vmatmul.bf16.gmra.mxu0 %v3341
        %v4611 = vpop.f32.mrf.mxu0
        %v4612 = vadd.f32 0.0, %v4611
        %v4613 = vpop.f32.mrf.mxu0
        %v4614 = vadd.f32 0.0, %v4613
        %4615 = vmatmul.bf16.gmra.mxu0 %v3342
        %v4616 = vpop.f32.mrf.mxu0
        %v4617 = vadd.f32 0.0, %v4616
        %v4618 = vpop.f32.mrf.mxu0
        %v4619 = vadd.f32 0.0, %v4618
        %4620 = vmatmul.bf16.gmra.mxu0 %v3343
        %v4621 = vpop.f32.mrf.mxu0
        %v4622 = vadd.f32 0.0, %v4621
        %v4623 = vpop.f32.mrf.mxu0
        %v4624 = vadd.f32 0.0, %v4623
        %4625 = vdwg.mxu0
        %4626 = vmatpush.bf16.msra.mxu0 %v3298
        %4627 = vmatpush.bf16.msra.mxu0 %v3266
        %4628 = vmatpush.bf16.msra.mxu0 %v3234
        %4629 = vmatpush.bf16.msra.mxu0 %v3202
        %4630 = vmatpush.bf16.msra.mxu0 %v3170
        %4631 = vmatpush.bf16.msra.mxu0 %v3138
        %4632 = vmatpush.bf16.msra.mxu0 %v3106
        %4633 = vmatpush.bf16.msra.mxu0 %v3074
        %4634 = vmatmul.bf16.gmra.mxu0 %v3336
        %v4635 = vpop.f32.mrf.mxu0
        %v4636 = vadd.f32 0.0, %v4635
        %v4637 = vpop.f32.mrf.mxu0
        %v4638 = vadd.f32 0.0, %v4637
        %4639 = vmatmul.bf16.gmra.mxu0 %v3337
        %v4640 = vpop.f32.mrf.mxu0
        %v4641 = vadd.f32 0.0, %v4640
        %v4642 = vpop.f32.mrf.mxu0
        %v4643 = vadd.f32 0.0, %v4642
        %4644 = vmatmul.bf16.gmra.mxu0 %v3338
        %v4645 = vpop.f32.mrf.mxu0
        %v4646 = vadd.f32 0.0, %v4645
        %v4647 = vpop.f32.mrf.mxu0
        %v4648 = vadd.f32 0.0, %v4647
        %4649 = vmatmul.bf16.gmra.mxu0 %v3339
        %v4650 = vpop.f32.mrf.mxu0
        %v4651 = vadd.f32 0.0, %v4650
        %v4652 = vpop.f32.mrf.mxu0
        %v4653 = vadd.f32 0.0, %v4652
        %4654 = vmatmul.bf16.gmra.mxu0 %v3340
        %v4655 = vpop.f32.mrf.mxu0
        %v4656 = vadd.f32 0.0, %v4655
        %v4657 = vpop.f32.mrf.mxu0
        %v4658 = vadd.f32 0.0, %v4657
        %4659 = vmatmul.bf16.gmra.mxu0 %v3341
        %v4660 = vpop.f32.mrf.mxu0
        %v4661 = vadd.f32 0.0, %v4660
        %v4662 = vpop.f32.mrf.mxu0
        %v4663 = vadd.f32 0.0, %v4662
        %4664 = vmatmul.bf16.gmra.mxu0 %v3342
        %v4665 = vpop.f32.mrf.mxu0
        %v4666 = vadd.f32 0.0, %v4665
        %v4667 = vpop.f32.mrf.mxu0
        %v4668 = vadd.f32 0.0, %v4667
        %4669 = vmatmul.bf16.gmra.mxu0 %v3343
        %v4670 = vpop.f32.mrf.mxu0
        %v4671 = vadd.f32 0.0, %v4670
        %v4672 = vpop.f32.mrf.mxu0
        %v4673 = vadd.f32 0.0, %v4672
        %4674 = vdwg.mxu0
        %4675 = vmatpush.bf16.msra.mxu0 %v3299
        %4676 = vmatpush.bf16.msra.mxu0 %v3267
        %4677 = vmatpush.bf16.msra.mxu0 %v3235
        %4678 = vmatpush.bf16.msra.mxu0 %v3203
        %4679 = vmatpush.bf16.msra.mxu0 %v3171
        %4680 = vmatpush.bf16.msra.mxu0 %v3139
        %4681 = vmatpush.bf16.msra.mxu0 %v3107
        %4682 = vmatpush.bf16.msra.mxu0 %v3075
        %4683 = vmatmul.bf16.gmra.mxu0 %v3336
        %v4684 = vpop.f32.mrf.mxu0
        %v4685 = vadd.f32 0.0, %v4684
        %v4686 = vpop.f32.mrf.mxu0
        %v4687 = vadd.f32 0.0, %v4686
        %4688 = vmatmul.bf16.gmra.mxu0 %v3337
        %v4689 = vpop.f32.mrf.mxu0
        %v4690 = vadd.f32 0.0, %v4689
        %v4691 = vpop.f32.mrf.mxu0
        %v4692 = vadd.f32 0.0, %v4691
        %4693 = vmatmul.bf16.gmra.mxu0 %v3338
        %v4694 = vpop.f32.mrf.mxu0
        %v4695 = vadd.f32 0.0, %v4694
        %v4696 = vpop.f32.mrf.mxu0
        %v4697 = vadd.f32 0.0, %v4696
        %4698 = vmatmul.bf16.gmra.mxu0 %v3339
        %v4699 = vpop.f32.mrf.mxu0
        %v4700 = vadd.f32 0.0, %v4699
        %v4701 = vpop.f32.mrf.mxu0
        %v4702 = vadd.f32 0.0, %v4701
        %4703 = vmatmul.bf16.gmra.mxu0 %v3340
        %v4704 = vpop.f32.mrf.mxu0
        %v4705 = vadd.f32 0.0, %v4704
        %v4706 = vpop.f32.mrf.mxu0
        %v4707 = vadd.f32 0.0, %v4706
        %4708 = vmatmul.bf16.gmra.mxu0 %v3341
        %v4709 = vpop.f32.mrf.mxu0
        %v4710 = vadd.f32 0.0, %v4709
        %v4711 = vpop.f32.mrf.mxu0
        %v4712 = vadd.f32 0.0, %v4711
        %4713 = vmatmul.bf16.gmra.mxu0 %v3342
        %v4714 = vpop.f32.mrf.mxu0
        %v4715 = vadd.f32 0.0, %v4714
        %v4716 = vpop.f32.mrf.mxu0
        %v4717 = vadd.f32 0.0, %v4716
        %4718 = vmatmul.bf16.gmra.mxu0 %v3343
        %v4719 = vpop.f32.mrf.mxu0
        %v4720 = vadd.f32 0.0, %v4719
        %v4721 = vpop.f32.mrf.mxu0
        %v4722 = vadd.f32 0.0, %v4721
        %4723 = vdwg.mxu0
        %4724 = vmatpush.bf16.msra.mxu0 %v3300
        %4725 = vmatpush.bf16.msra.mxu0 %v3268
        %4726 = vmatpush.bf16.msra.mxu0 %v3236
        %4727 = vmatpush.bf16.msra.mxu0 %v3204
        %4728 = vmatpush.bf16.msra.mxu0 %v3172
        %4729 = vmatpush.bf16.msra.mxu0 %v3140
        %4730 = vmatpush.bf16.msra.mxu0 %v3108
        %4731 = vmatpush.bf16.msra.mxu0 %v3076
        %4732 = vmatmul.bf16.gmra.mxu0 %v3336
        %v4733 = vpop.f32.mrf.mxu0
        %v4734 = vadd.f32 0.0, %v4733
        %v4735 = vpop.f32.mrf.mxu0
        %v4736 = vadd.f32 0.0, %v4735
        %4737 = vmatmul.bf16.gmra.mxu0 %v3337
        %v4738 = vpop.f32.mrf.mxu0
        %v4739 = vadd.f32 0.0, %v4738
        %v4740 = vpop.f32.mrf.mxu0
        %v4741 = vadd.f32 0.0, %v4740
        %4742 = vmatmul.bf16.gmra.mxu0 %v3338
        %v4743 = vpop.f32.mrf.mxu0
        %v4744 = vadd.f32 0.0, %v4743
        %v4745 = vpop.f32.mrf.mxu0
        %v4746 = vadd.f32 0.0, %v4745
        %4747 = vmatmul.bf16.gmra.mxu0 %v3339
        %v4748 = vpop.f32.mrf.mxu0
        %v4749 = vadd.f32 0.0, %v4748
        %v4750 = vpop.f32.mrf.mxu0
        %v4751 = vadd.f32 0.0, %v4750
        %4752 = vmatmul.bf16.gmra.mxu0 %v3340
        %v4753 = vpop.f32.mrf.mxu0
        %v4754 = vadd.f32 0.0, %v4753
        %v4755 = vpop.f32.mrf.mxu0
        %v4756 = vadd.f32 0.0, %v4755
        %4757 = vmatmul.bf16.gmra.mxu0 %v3341
        %v4758 = vpop.f32.mrf.mxu0
        %v4759 = vadd.f32 0.0, %v4758
        %v4760 = vpop.f32.mrf.mxu0
        %v4761 = vadd.f32 0.0, %v4760
        %4762 = vmatmul.bf16.gmra.mxu0 %v3342
        %v4763 = vpop.f32.mrf.mxu0
        %v4764 = vadd.f32 0.0, %v4763
        %v4765 = vpop.f32.mrf.mxu0
        %v4766 = vadd.f32 0.0, %v4765
        %4767 = vmatmul.bf16.gmra.mxu0 %v3343
        %v4768 = vpop.f32.mrf.mxu0
        %v4769 = vadd.f32 0.0, %v4768
        %v4770 = vpop.f32.mrf.mxu0
        %v4771 = vadd.f32 0.0, %v4770
        %4772 = vdwg.mxu0
        %4773 = vmatpush.bf16.msra.mxu0 %v3301
        %4774 = vmatpush.bf16.msra.mxu0 %v3269
        %4775 = vmatpush.bf16.msra.mxu0 %v3237
        %4776 = vmatpush.bf16.msra.mxu0 %v3205
        %4777 = vmatpush.bf16.msra.mxu0 %v3173
        %4778 = vmatpush.bf16.msra.mxu0 %v3141
        %4779 = vmatpush.bf16.msra.mxu0 %v3109
        %4780 = vmatpush.bf16.msra.mxu0 %v3077
        %4781 = vmatmul.bf16.gmra.mxu0 %v3336
        %v4782 = vpop.f32.mrf.mxu0
        %v4783 = vadd.f32 0.0, %v4782
        %v4784 = vpop.f32.mrf.mxu0
        %v4785 = vadd.f32 0.0, %v4784
        %4786 = vmatmul.bf16.gmra.mxu0 %v3337
        %v4787 = vpop.f32.mrf.mxu0
        %v4788 = vadd.f32 0.0, %v4787
        %v4789 = vpop.f32.mrf.mxu0
        %v4790 = vadd.f32 0.0, %v4789
        %4791 = vmatmul.bf16.gmra.mxu0 %v3338
        %v4792 = vpop.f32.mrf.mxu0
        %v4793 = vadd.f32 0.0, %v4792
        %v4794 = vpop.f32.mrf.mxu0
        %v4795 = vadd.f32 0.0, %v4794
        %4796 = vmatmul.bf16.gmra.mxu0 %v3339
        %v4797 = vpop.f32.mrf.mxu0
        %v4798 = vadd.f32 0.0, %v4797
        %v4799 = vpop.f32.mrf.mxu0
        %v4800 = vadd.f32 0.0, %v4799
        %4801 = vmatmul.bf16.gmra.mxu0 %v3340
        %v4802 = vpop.f32.mrf.mxu0
        %v4803 = vadd.f32 0.0, %v4802
        %v4804 = vpop.f32.mrf.mxu0
        %v4805 = vadd.f32 0.0, %v4804
        %4806 = vmatmul.bf16.gmra.mxu0 %v3341
        %v4807 = vpop.f32.mrf.mxu0
        %v4808 = vadd.f32 0.0, %v4807
        %v4809 = vpop.f32.mrf.mxu0
        %v4810 = vadd.f32 0.0, %v4809
        %4811 = vmatmul.bf16.gmra.mxu0 %v3342
        %v4812 = vpop.f32.mrf.mxu0
        %v4813 = vadd.f32 0.0, %v4812
        %v4814 = vpop.f32.mrf.mxu0
        %v4815 = vadd.f32 0.0, %v4814
        %4816 = vmatmul.bf16.gmra.mxu0 %v3343
        %v4817 = vpop.f32.mrf.mxu0
        %v4818 = vadd.f32 0.0, %v4817
        %v4819 = vpop.f32.mrf.mxu0
        %v4820 = vadd.f32 0.0, %v4819
        %4821 = vdwg.mxu0
        %4822 = vmatpush.bf16.msra.mxu0 %v3302
        %4823 = vmatpush.bf16.msra.mxu0 %v3270
        %4824 = vmatpush.bf16.msra.mxu0 %v3238
        %4825 = vmatpush.bf16.msra.mxu0 %v3206
        %4826 = vmatpush.bf16.msra.mxu0 %v3174
        %4827 = vmatpush.bf16.msra.mxu0 %v3142
        %4828 = vmatpush.bf16.msra.mxu0 %v3110
        %4829 = vmatpush.bf16.msra.mxu0 %v3078
        %4830 = vmatmul.bf16.gmra.mxu0 %v3336
        %v4831 = vpop.f32.mrf.mxu0
        %v4832 = vadd.f32 0.0, %v4831
        %v4833 = vpop.f32.mrf.mxu0
        %v4834 = vadd.f32 0.0, %v4833
        %4835 = vmatmul.bf16.gmra.mxu0 %v3337
        %v4836 = vpop.f32.mrf.mxu0
        %v4837 = vadd.f32 0.0, %v4836
        %v4838 = vpop.f32.mrf.mxu0
        %v4839 = vadd.f32 0.0, %v4838
        %4840 = vmatmul.bf16.gmra.mxu0 %v3338
        %v4841 = vpop.f32.mrf.mxu0
        %v4842 = vadd.f32 0.0, %v4841
        %v4843 = vpop.f32.mrf.mxu0
        %v4844 = vadd.f32 0.0, %v4843
        %4845 = vmatmul.bf16.gmra.mxu0 %v3339
        %v4846 = vpop.f32.mrf.mxu0
        %v4847 = vadd.f32 0.0, %v4846
        %v4848 = vpop.f32.mrf.mxu0
        %v4849 = vadd.f32 0.0, %v4848
        %4850 = vmatmul.bf16.gmra.mxu0 %v3340
        %v4851 = vpop.f32.mrf.mxu0
        %v4852 = vadd.f32 0.0, %v4851
        %v4853 = vpop.f32.mrf.mxu0
        %v4854 = vadd.f32 0.0, %v4853
        %4855 = vmatmul.bf16.gmra.mxu0 %v3341
        %v4856 = vpop.f32.mrf.mxu0
        %v4857 = vadd.f32 0.0, %v4856
        %v4858 = vpop.f32.mrf.mxu0
        %v4859 = vadd.f32 0.0, %v4858
        %4860 = vmatmul.bf16.gmra.mxu0 %v3342
        %v4861 = vpop.f32.mrf.mxu0
        %v4862 = vadd.f32 0.0, %v4861
        %v4863 = vpop.f32.mrf.mxu0
        %v4864 = vadd.f32 0.0, %v4863
        %4865 = vmatmul.bf16.gmra.mxu0 %v3343
        %v4866 = vpop.f32.mrf.mxu0
        %v4867 = vadd.f32 0.0, %v4866
        %v4868 = vpop.f32.mrf.mxu0
        %v4869 = vadd.f32 0.0, %v4868
        %4870 = vdwg.mxu0
        %4871 = vmatpush.bf16.msra.mxu0 %v3303
        %4872 = vmatpush.bf16.msra.mxu0 %v3271
        %4873 = vmatpush.bf16.msra.mxu0 %v3239
        %4874 = vmatpush.bf16.msra.mxu0 %v3207
        %4875 = vmatpush.bf16.msra.mxu0 %v3175
        %4876 = vmatpush.bf16.msra.mxu0 %v3143
        %4877 = vmatpush.bf16.msra.mxu0 %v3111
        %4878 = vmatpush.bf16.msra.mxu0 %v3079
        %4879 = vmatmul.bf16.gmra.mxu0 %v3336
        %v4880 = vpop.f32.mrf.mxu0
        %v4881 = vadd.f32 0.0, %v4880
        %v4882 = vpop.f32.mrf.mxu0
        %v4883 = vadd.f32 0.0, %v4882
        %4884 = vmatmul.bf16.gmra.mxu0 %v3337
        %v4885 = vpop.f32.mrf.mxu0
        %v4886 = vadd.f32 0.0, %v4885
        %v4887 = vpop.f32.mrf.mxu0
        %v4888 = vadd.f32 0.0, %v4887
        %4889 = vmatmul.bf16.gmra.mxu0 %v3338
        %v4890 = vpop.f32.mrf.mxu0
        %v4891 = vadd.f32 0.0, %v4890
        %v4892 = vpop.f32.mrf.mxu0
        %v4893 = vadd.f32 0.0, %v4892
        %4894 = vmatmul.bf16.gmra.mxu0 %v3339
        %v4895 = vpop.f32.mrf.mxu0
        %v4896 = vadd.f32 0.0, %v4895
        %v4897 = vpop.f32.mrf.mxu0
        %v4898 = vadd.f32 0.0, %v4897
        %4899 = vmatmul.bf16.gmra.mxu0 %v3340
        %v4900 = vpop.f32.mrf.mxu0
        %v4901 = vadd.f32 0.0, %v4900
        %v4902 = vpop.f32.mrf.mxu0
        %v4903 = vadd.f32 0.0, %v4902
        %4904 = vmatmul.bf16.gmra.mxu0 %v3341
        %v4905 = vpop.f32.mrf.mxu0
        %v4906 = vadd.f32 0.0, %v4905
        %v4907 = vpop.f32.mrf.mxu0
        %v4908 = vadd.f32 0.0, %v4907
        %4909 = vmatmul.bf16.gmra.mxu0 %v3342
        %v4910 = vpop.f32.mrf.mxu0
        %v4911 = vadd.f32 0.0, %v4910
        %v4912 = vpop.f32.mrf.mxu0
        %v4913 = vadd.f32 0.0, %v4912
        %4914 = vmatmul.bf16.gmra.mxu0 %v3343
        %v4915 = vpop.f32.mrf.mxu0
        %v4916 = vadd.f32 0.0, %v4915
        %v4917 = vpop.f32.mrf.mxu0
        %v4918 = vadd.f32 0.0, %v4917
        %4919 = vdwg.mxu0
        %v4924 = vperm.slane %v895, 0
        %v4925 = vperm.slane %v895, 1
        %v4926 = vperm.slane %v895, 2
        %v4927 = vperm.slane %v895, 3
        %v4928 = vperm.slane %v895, 4
        %v4929 = vperm.slane %v895, 5
        %v4930 = vperm.slane %v895, 6
        %v4931 = vperm.slane %v895, 7
        %v4932 = vperm.slane %v896, 0
        %v4933 = vperm.slane %v896, 1
        %v4934 = vperm.slane %v896, 2
        %v4935 = vperm.slane %v896, 3
        %v4936 = vperm.slane %v896, 4
        %v4937 = vperm.slane %v896, 5
        %v4938 = vperm.slane %v896, 6
        %v4939 = vperm.slane %v896, 7
        %v4940 = vperm.slane %v897, 0
        %v4941 = vperm.slane %v897, 1
        %v4942 = vperm.slane %v897, 2
        %v4943 = vperm.slane %v897, 3
        %v4944 = vperm.slane %v897, 4
        %v4945 = vperm.slane %v897, 5
        %v4946 = vperm.slane %v897, 6
        %v4947 = vperm.slane %v897, 7
        %v4948 = vperm.slane %v898, 0
        %v4949 = vperm.slane %v898, 1
        %v4950 = vperm.slane %v898, 2
        %v4951 = vperm.slane %v898, 3
        %v4952 = vperm.slane %v898, 4
        %v4953 = vperm.slane %v898, 5
        %v4954 = vperm.slane %v898, 6
        %v4955 = vperm.slane %v898, 7
        %v4988 = vsub.f32 %v4924, %v916
        %v4989 = vsub.f32 %v4925, %v916
        %v4990 = vsub.f32 %v4926, %v916
        %v4991 = vsub.f32 %v4927, %v916
        %v4992 = vsub.f32 %v4928, %v916
        %v4993 = vsub.f32 %v4929, %v916
        %v4994 = vsub.f32 %v4930, %v916
        %v4995 = vsub.f32 %v4931, %v916
        %v4996 = vsub.f32 %v4932, %v916
        %v4997 = vsub.f32 %v4933, %v916
        %v4998 = vsub.f32 %v4934, %v916
        %v4999 = vsub.f32 %v4935, %v916
        %v5000 = vsub.f32 %v4936, %v916
        %v5001 = vsub.f32 %v4937, %v916
        %v5002 = vsub.f32 %v4938, %v916
        %v5003 = vsub.f32 %v4939, %v916
        %v5004 = vsub.f32 %v4940, %v916
        %v5005 = vsub.f32 %v4941, %v916
        %v5006 = vsub.f32 %v4942, %v916
        %v5007 = vsub.f32 %v4943, %v916
        %v5008 = vsub.f32 %v4944, %v916
        %v5009 = vsub.f32 %v4945, %v916
        %v5010 = vsub.f32 %v4946, %v916
        %v5011 = vsub.f32 %v4947, %v916
        %v5012 = vsub.f32 %v4948, %v916
        %v5013 = vsub.f32 %v4949, %v916
        %v5014 = vsub.f32 %v4950, %v916
        %v5015 = vsub.f32 %v4951, %v916
        %v5016 = vsub.f32 %v4952, %v916
        %v5017 = vsub.f32 %v4953, %v916
        %v5018 = vsub.f32 %v4954, %v916
        %v5019 = vsub.f32 %v4955, %v916
        %v5020 = vsub.f32 %v4924, %v917
        %v5021 = vsub.f32 %v4925, %v917
        %v5022 = vsub.f32 %v4926, %v917
        %v5023 = vsub.f32 %v4927, %v917
        %v5024 = vsub.f32 %v4928, %v917
        %v5025 = vsub.f32 %v4929, %v917
        %v5026 = vsub.f32 %v4930, %v917
        %v5027 = vsub.f32 %v4931, %v917
        %v5028 = vsub.f32 %v4932, %v917
        %v5029 = vsub.f32 %v4933, %v917
        %v5030 = vsub.f32 %v4934, %v917
        %v5031 = vsub.f32 %v4935, %v917
        %v5032 = vsub.f32 %v4936, %v917
        %v5033 = vsub.f32 %v4937, %v917
        %v5034 = vsub.f32 %v4938, %v917
        %v5035 = vsub.f32 %v4939, %v917
        %v5036 = vsub.f32 %v4940, %v917
        %v5037 = vsub.f32 %v4941, %v917
        %v5038 = vsub.f32 %v4942, %v917
        %v5039 = vsub.f32 %v4943, %v917
        %v5040 = vsub.f32 %v4944, %v917
        %v5041 = vsub.f32 %v4945, %v917
        %v5042 = vsub.f32 %v4946, %v917
        %v5043 = vsub.f32 %v4947, %v917
        %v5044 = vsub.f32 %v4948, %v917
        %v5045 = vsub.f32 %v4949, %v917
        %v5046 = vsub.f32 %v4950, %v917
        %v5047 = vsub.f32 %v4951, %v917
        %v5048 = vsub.f32 %v4952, %v917
        %v5049 = vsub.f32 %v4953, %v917
        %v5050 = vsub.f32 %v4954, %v917
        %v5051 = vsub.f32 %v4955, %v917
        %v5052 = vsub.f32 %v4924, %v918
        %v5053 = vsub.f32 %v4925, %v918
        %v5054 = vsub.f32 %v4926, %v918
        %v5055 = vsub.f32 %v4927, %v918
        %v5056 = vsub.f32 %v4928, %v918
        %v5057 = vsub.f32 %v4929, %v918
        %v5058 = vsub.f32 %v4930, %v918
        %v5059 = vsub.f32 %v4931, %v918
        %v5060 = vsub.f32 %v4932, %v918
        %v5061 = vsub.f32 %v4933, %v918
        %v5062 = vsub.f32 %v4934, %v918
        %v5063 = vsub.f32 %v4935, %v918
        %v5064 = vsub.f32 %v4936, %v918
        %v5065 = vsub.f32 %v4937, %v918
        %v5066 = vsub.f32 %v4938, %v918
        %v5067 = vsub.f32 %v4939, %v918
        %v5068 = vsub.f32 %v4940, %v918
        %v5069 = vsub.f32 %v4941, %v918
        %v5070 = vsub.f32 %v4942, %v918
        %v5071 = vsub.f32 %v4943, %v918
        %v5072 = vsub.f32 %v4944, %v918
        %v5073 = vsub.f32 %v4945, %v918
        %v5074 = vsub.f32 %v4946, %v918
        %v5075 = vsub.f32 %v4947, %v918
        %v5076 = vsub.f32 %v4948, %v918
        %v5077 = vsub.f32 %v4949, %v918
        %v5078 = vsub.f32 %v4950, %v918
        %v5079 = vsub.f32 %v4951, %v918
        %v5080 = vsub.f32 %v4952, %v918
        %v5081 = vsub.f32 %v4953, %v918
        %v5082 = vsub.f32 %v4954, %v918
        %v5083 = vsub.f32 %v4955, %v918
        %v5084 = vsub.f32 %v4924, %v919
        %v5085 = vsub.f32 %v4925, %v919
        %v5086 = vsub.f32 %v4926, %v919
        %v5087 = vsub.f32 %v4927, %v919
        %v5088 = vsub.f32 %v4928, %v919
        %v5089 = vsub.f32 %v4929, %v919
        %v5090 = vsub.f32 %v4930, %v919
        %v5091 = vsub.f32 %v4931, %v919
        %v5092 = vsub.f32 %v4932, %v919
        %v5093 = vsub.f32 %v4933, %v919
        %v5094 = vsub.f32 %v4934, %v919
        %v5095 = vsub.f32 %v4935, %v919
        %v5096 = vsub.f32 %v4936, %v919
        %v5097 = vsub.f32 %v4937, %v919
        %v5098 = vsub.f32 %v4938, %v919
        %v5099 = vsub.f32 %v4939, %v919
        %v5100 = vsub.f32 %v4940, %v919
        %v5101 = vsub.f32 %v4941, %v919
        %v5102 = vsub.f32 %v4942, %v919
        %v5103 = vsub.f32 %v4943, %v919
        %v5104 = vsub.f32 %v4944, %v919
        %v5105 = vsub.f32 %v4945, %v919
        %v5106 = vsub.f32 %v4946, %v919
        %v5107 = vsub.f32 %v4947, %v919
        %v5108 = vsub.f32 %v4948, %v919
        %v5109 = vsub.f32 %v4949, %v919
        %v5110 = vsub.f32 %v4950, %v919
        %v5111 = vsub.f32 %v4951, %v919
        %v5112 = vsub.f32 %v4952, %v919
        %v5113 = vsub.f32 %v4953, %v919
        %v5114 = vsub.f32 %v4954, %v919
        %v5115 = vsub.f32 %v4955, %v919
        %v5116 = vsub.f32 %v4924, %v920
        %v5117 = vsub.f32 %v4925, %v920
        %v5118 = vsub.f32 %v4926, %v920
        %v5119 = vsub.f32 %v4927, %v920
        %v5120 = vsub.f32 %v4928, %v920
        %v5121 = vsub.f32 %v4929, %v920
        %v5122 = vsub.f32 %v4930, %v920
        %v5123 = vsub.f32 %v4931, %v920
        %v5124 = vsub.f32 %v4932, %v920
        %v5125 = vsub.f32 %v4933, %v920
        %v5126 = vsub.f32 %v4934, %v920
        %v5127 = vsub.f32 %v4935, %v920
        %v5128 = vsub.f32 %v4936, %v920
        %v5129 = vsub.f32 %v4937, %v920
        %v5130 = vsub.f32 %v4938, %v920
        %v5131 = vsub.f32 %v4939, %v920
        %v5132 = vsub.f32 %v4940, %v920
        %v5133 = vsub.f32 %v4941, %v920
        %v5134 = vsub.f32 %v4942, %v920
        %v5135 = vsub.f32 %v4943, %v920
        %v5136 = vsub.f32 %v4944, %v920
        %v5137 = vsub.f32 %v4945, %v920
        %v5138 = vsub.f32 %v4946, %v920
        %v5139 = vsub.f32 %v4947, %v920
        %v5140 = vsub.f32 %v4948, %v920
        %v5141 = vsub.f32 %v4949, %v920
        %v5142 = vsub.f32 %v4950, %v920
        %v5143 = vsub.f32 %v4951, %v920
        %v5144 = vsub.f32 %v4952, %v920
        %v5145 = vsub.f32 %v4953, %v920
        %v5146 = vsub.f32 %v4954, %v920
        %v5147 = vsub.f32 %v4955, %v920
        %v5148 = vsub.f32 %v4924, %v921
        %v5149 = vsub.f32 %v4925, %v921
        %v5150 = vsub.f32 %v4926, %v921
        %v5151 = vsub.f32 %v4927, %v921
        %v5152 = vsub.f32 %v4928, %v921
        %v5153 = vsub.f32 %v4929, %v921
        %v5154 = vsub.f32 %v4930, %v921
        %v5155 = vsub.f32 %v4931, %v921
        %v5156 = vsub.f32 %v4932, %v921
        %v5157 = vsub.f32 %v4933, %v921
        %v5158 = vsub.f32 %v4934, %v921
        %v5159 = vsub.f32 %v4935, %v921
        %v5160 = vsub.f32 %v4936, %v921
        %v5161 = vsub.f32 %v4937, %v921
        %v5162 = vsub.f32 %v4938, %v921
        %v5163 = vsub.f32 %v4939, %v921
        %v5164 = vsub.f32 %v4940, %v921
        %v5165 = vsub.f32 %v4941, %v921
        %v5166 = vsub.f32 %v4942, %v921
        %v5167 = vsub.f32 %v4943, %v921
        %v5168 = vsub.f32 %v4944, %v921
        %v5169 = vsub.f32 %v4945, %v921
        %v5170 = vsub.f32 %v4946, %v921
        %v5171 = vsub.f32 %v4947, %v921
        %v5172 = vsub.f32 %v4948, %v921
        %v5173 = vsub.f32 %v4949, %v921
        %v5174 = vsub.f32 %v4950, %v921
        %v5175 = vsub.f32 %v4951, %v921
        %v5176 = vsub.f32 %v4952, %v921
        %v5177 = vsub.f32 %v4953, %v921
        %v5178 = vsub.f32 %v4954, %v921
        %v5179 = vsub.f32 %v4955, %v921
        %v5180 = vsub.f32 %v4924, %v922
        %v5181 = vsub.f32 %v4925, %v922
        %v5182 = vsub.f32 %v4926, %v922
        %v5183 = vsub.f32 %v4927, %v922
        %v5184 = vsub.f32 %v4928, %v922
        %v5185 = vsub.f32 %v4929, %v922
        %v5186 = vsub.f32 %v4930, %v922
        %v5187 = vsub.f32 %v4931, %v922
        %v5188 = vsub.f32 %v4932, %v922
        %v5189 = vsub.f32 %v4933, %v922
        %v5190 = vsub.f32 %v4934, %v922
        %v5191 = vsub.f32 %v4935, %v922
        %v5192 = vsub.f32 %v4936, %v922
        %v5193 = vsub.f32 %v4937, %v922
        %v5194 = vsub.f32 %v4938, %v922
        %v5195 = vsub.f32 %v4939, %v922
        %v5196 = vsub.f32 %v4940, %v922
        %v5197 = vsub.f32 %v4941, %v922
        %v5198 = vsub.f32 %v4942, %v922
        %v5199 = vsub.f32 %v4943, %v922
        %v5200 = vsub.f32 %v4944, %v922
        %v5201 = vsub.f32 %v4945, %v922
        %v5202 = vsub.f32 %v4946, %v922
        %v5203 = vsub.f32 %v4947, %v922
        %v5204 = vsub.f32 %v4948, %v922
        %v5205 = vsub.f32 %v4949, %v922
        %v5206 = vsub.f32 %v4950, %v922
        %v5207 = vsub.f32 %v4951, %v922
        %v5208 = vsub.f32 %v4952, %v922
        %v5209 = vsub.f32 %v4953, %v922
        %v5210 = vsub.f32 %v4954, %v922
        %v5211 = vsub.f32 %v4955, %v922
        %v5212 = vsub.f32 %v4924, %v923
        %v5213 = vsub.f32 %v4925, %v923
        %v5214 = vsub.f32 %v4926, %v923
        %v5215 = vsub.f32 %v4927, %v923
        %v5216 = vsub.f32 %v4928, %v923
        %v5217 = vsub.f32 %v4929, %v923
        %v5218 = vsub.f32 %v4930, %v923
        %v5219 = vsub.f32 %v4931, %v923
        %v5220 = vsub.f32 %v4932, %v923
        %v5221 = vsub.f32 %v4933, %v923
        %v5222 = vsub.f32 %v4934, %v923
        %v5223 = vsub.f32 %v4935, %v923
        %v5224 = vsub.f32 %v4936, %v923
        %v5225 = vsub.f32 %v4937, %v923
        %v5226 = vsub.f32 %v4938, %v923
        %v5227 = vsub.f32 %v4939, %v923
        %v5228 = vsub.f32 %v4940, %v923
        %v5229 = vsub.f32 %v4941, %v923
        %v5230 = vsub.f32 %v4942, %v923
        %v5231 = vsub.f32 %v4943, %v923
        %v5232 = vsub.f32 %v4944, %v923
        %v5233 = vsub.f32 %v4945, %v923
        %v5234 = vsub.f32 %v4946, %v923
        %v5235 = vsub.f32 %v4947, %v923
        %v5236 = vsub.f32 %v4948, %v923
        %v5237 = vsub.f32 %v4949, %v923
        %v5238 = vsub.f32 %v4950, %v923
        %v5239 = vsub.f32 %v4951, %v923
        %v5240 = vsub.f32 %v4952, %v923
        %v5241 = vsub.f32 %v4953, %v923
        %v5242 = vsub.f32 %v4954, %v923
        %v5243 = vsub.f32 %v4955, %v923
        %v5244 = vsub.f32 %v4924, %v924
        %v5245 = vsub.f32 %v4925, %v924
        %v5246 = vsub.f32 %v4926, %v924
        %v5247 = vsub.f32 %v4927, %v924
        %v5248 = vsub.f32 %v4928, %v924
        %v5249 = vsub.f32 %v4929, %v924
        %v5250 = vsub.f32 %v4930, %v924
        %v5251 = vsub.f32 %v4931, %v924
        %v5252 = vsub.f32 %v4932, %v924
        %v5253 = vsub.f32 %v4933, %v924
        %v5254 = vsub.f32 %v4934, %v924
        %v5255 = vsub.f32 %v4935, %v924
        %v5256 = vsub.f32 %v4936, %v924
        %v5257 = vsub.f32 %v4937, %v924
        %v5258 = vsub.f32 %v4938, %v924
        %v5259 = vsub.f32 %v4939, %v924
        %v5260 = vsub.f32 %v4940, %v924
        %v5261 = vsub.f32 %v4941, %v924
        %v5262 = vsub.f32 %v4942, %v924
        %v5263 = vsub.f32 %v4943, %v924
        %v5264 = vsub.f32 %v4944, %v924
        %v5265 = vsub.f32 %v4945, %v924
        %v5266 = vsub.f32 %v4946, %v924
        %v5267 = vsub.f32 %v4947, %v924
        %v5268 = vsub.f32 %v4948, %v924
        %v5269 = vsub.f32 %v4949, %v924
        %v5270 = vsub.f32 %v4950, %v924
        %v5271 = vsub.f32 %v4951, %v924
        %v5272 = vsub.f32 %v4952, %v924
        %v5273 = vsub.f32 %v4953, %v924
        %v5274 = vsub.f32 %v4954, %v924
        %v5275 = vsub.f32 %v4955, %v924
        %v5276 = vsub.f32 %v4924, %v925
        %v5277 = vsub.f32 %v4925, %v925
        %v5278 = vsub.f32 %v4926, %v925
        %v5279 = vsub.f32 %v4927, %v925
        %v5280 = vsub.f32 %v4928, %v925
        %v5281 = vsub.f32 %v4929, %v925
        %v5282 = vsub.f32 %v4930, %v925
        %v5283 = vsub.f32 %v4931, %v925
        %v5284 = vsub.f32 %v4932, %v925
        %v5285 = vsub.f32 %v4933, %v925
        %v5286 = vsub.f32 %v4934, %v925
        %v5287 = vsub.f32 %v4935, %v925
        %v5288 = vsub.f32 %v4936, %v925
        %v5289 = vsub.f32 %v4937, %v925
        %v5290 = vsub.f32 %v4938, %v925
        %v5291 = vsub.f32 %v4939, %v925
        %v5292 = vsub.f32 %v4940, %v925
        %v5293 = vsub.f32 %v4941, %v925
        %v5294 = vsub.f32 %v4942, %v925
        %v5295 = vsub.f32 %v4943, %v925
        %v5296 = vsub.f32 %v4944, %v925
        %v5297 = vsub.f32 %v4945, %v925
        %v5298 = vsub.f32 %v4946, %v925
        %v5299 = vsub.f32 %v4947, %v925
        %v5300 = vsub.f32 %v4948, %v925
        %v5301 = vsub.f32 %v4949, %v925
        %v5302 = vsub.f32 %v4950, %v925
        %v5303 = vsub.f32 %v4951, %v925
        %v5304 = vsub.f32 %v4952, %v925
        %v5305 = vsub.f32 %v4953, %v925
        %v5306 = vsub.f32 %v4954, %v925
        %v5307 = vsub.f32 %v4955, %v925
        %v5308 = vsub.f32 %v4924, %v926
        %v5309 = vsub.f32 %v4925, %v926
        %v5310 = vsub.f32 %v4926, %v926
        %v5311 = vsub.f32 %v4927, %v926
        %v5312 = vsub.f32 %v4928, %v926
        %v5313 = vsub.f32 %v4929, %v926
        %v5314 = vsub.f32 %v4930, %v926
        %v5315 = vsub.f32 %v4931, %v926
        %v5316 = vsub.f32 %v4932, %v926
        %v5317 = vsub.f32 %v4933, %v926
        %v5318 = vsub.f32 %v4934, %v926
        %v5319 = vsub.f32 %v4935, %v926
        %v5320 = vsub.f32 %v4936, %v926
        %v5321 = vsub.f32 %v4937, %v926
        %v5322 = vsub.f32 %v4938, %v926
        %v5323 = vsub.f32 %v4939, %v926
        %v5324 = vsub.f32 %v4940, %v926
        %v5325 = vsub.f32 %v4941, %v926
        %v5326 = vsub.f32 %v4942, %v926
        %v5327 = vsub.f32 %v4943, %v926
        %v5328 = vsub.f32 %v4944, %v926
        %v5329 = vsub.f32 %v4945, %v926
        %v5330 = vsub.f32 %v4946, %v926
        %v5331 = vsub.f32 %v4947, %v926
        %v5332 = vsub.f32 %v4948, %v926
        %v5333 = vsub.f32 %v4949, %v926
        %v5334 = vsub.f32 %v4950, %v926
        %v5335 = vsub.f32 %v4951, %v926
        %v5336 = vsub.f32 %v4952, %v926
        %v5337 = vsub.f32 %v4953, %v926
        %v5338 = vsub.f32 %v4954, %v926
        %v5339 = vsub.f32 %v4955, %v926
        %v5340 = vsub.f32 %v4924, %v927
        %v5341 = vsub.f32 %v4925, %v927
        %v5342 = vsub.f32 %v4926, %v927
        %v5343 = vsub.f32 %v4927, %v927
        %v5344 = vsub.f32 %v4928, %v927
        %v5345 = vsub.f32 %v4929, %v927
        %v5346 = vsub.f32 %v4930, %v927
        %v5347 = vsub.f32 %v4931, %v927
        %v5348 = vsub.f32 %v4932, %v927
        %v5349 = vsub.f32 %v4933, %v927
        %v5350 = vsub.f32 %v4934, %v927
        %v5351 = vsub.f32 %v4935, %v927
        %v5352 = vsub.f32 %v4936, %v927
        %v5353 = vsub.f32 %v4937, %v927
        %v5354 = vsub.f32 %v4938, %v927
        %v5355 = vsub.f32 %v4939, %v927
        %v5356 = vsub.f32 %v4940, %v927
        %v5357 = vsub.f32 %v4941, %v927
        %v5358 = vsub.f32 %v4942, %v927
        %v5359 = vsub.f32 %v4943, %v927
        %v5360 = vsub.f32 %v4944, %v927
        %v5361 = vsub.f32 %v4945, %v927
        %v5362 = vsub.f32 %v4946, %v927
        %v5363 = vsub.f32 %v4947, %v927
        %v5364 = vsub.f32 %v4948, %v927
        %v5365 = vsub.f32 %v4949, %v927
        %v5366 = vsub.f32 %v4950, %v927
        %v5367 = vsub.f32 %v4951, %v927
        %v5368 = vsub.f32 %v4952, %v927
        %v5369 = vsub.f32 %v4953, %v927
        %v5370 = vsub.f32 %v4954, %v927
        %v5371 = vsub.f32 %v4955, %v927
        %v5372 = vsub.f32 %v4924, %v928
        %v5373 = vsub.f32 %v4925, %v928
        %v5374 = vsub.f32 %v4926, %v928
        %v5375 = vsub.f32 %v4927, %v928
        %v5376 = vsub.f32 %v4928, %v928
        %v5377 = vsub.f32 %v4929, %v928
        %v5378 = vsub.f32 %v4930, %v928
        %v5379 = vsub.f32 %v4931, %v928
        %v5380 = vsub.f32 %v4932, %v928
        %v5381 = vsub.f32 %v4933, %v928
        %v5382 = vsub.f32 %v4934, %v928
        %v5383 = vsub.f32 %v4935, %v928
        %v5384 = vsub.f32 %v4936, %v928
        %v5385 = vsub.f32 %v4937, %v928
        %v5386 = vsub.f32 %v4938, %v928
        %v5387 = vsub.f32 %v4939, %v928
        %v5388 = vsub.f32 %v4940, %v928
        %v5389 = vsub.f32 %v4941, %v928
        %v5390 = vsub.f32 %v4942, %v928
        %v5391 = vsub.f32 %v4943, %v928
        %v5392 = vsub.f32 %v4944, %v928
        %v5393 = vsub.f32 %v4945, %v928
        %v5394 = vsub.f32 %v4946, %v928
        %v5395 = vsub.f32 %v4947, %v928
        %v5396 = vsub.f32 %v4948, %v928
        %v5397 = vsub.f32 %v4949, %v928
        %v5398 = vsub.f32 %v4950, %v928
        %v5399 = vsub.f32 %v4951, %v928
        %v5400 = vsub.f32 %v4952, %v928
        %v5401 = vsub.f32 %v4953, %v928
        %v5402 = vsub.f32 %v4954, %v928
        %v5403 = vsub.f32 %v4955, %v928
        %v5404 = vsub.f32 %v4924, %v929
        %v5405 = vsub.f32 %v4925, %v929
        %v5406 = vsub.f32 %v4926, %v929
        %v5407 = vsub.f32 %v4927, %v929
        %v5408 = vsub.f32 %v4928, %v929
        %v5409 = vsub.f32 %v4929, %v929
        %v5410 = vsub.f32 %v4930, %v929
        %v5411 = vsub.f32 %v4931, %v929
        %v5412 = vsub.f32 %v4932, %v929
        %v5413 = vsub.f32 %v4933, %v929
        %v5414 = vsub.f32 %v4934, %v929
        %v5415 = vsub.f32 %v4935, %v929
        %v5416 = vsub.f32 %v4936, %v929
        %v5417 = vsub.f32 %v4937, %v929
        %v5418 = vsub.f32 %v4938, %v929
        %v5419 = vsub.f32 %v4939, %v929
        %v5420 = vsub.f32 %v4940, %v929
        %v5421 = vsub.f32 %v4941, %v929
        %v5422 = vsub.f32 %v4942, %v929
        %v5423 = vsub.f32 %v4943, %v929
        %v5424 = vsub.f32 %v4944, %v929
        %v5425 = vsub.f32 %v4945, %v929
        %v5426 = vsub.f32 %v4946, %v929
        %v5427 = vsub.f32 %v4947, %v929
        %v5428 = vsub.f32 %v4948, %v929
        %v5429 = vsub.f32 %v4949, %v929
        %v5430 = vsub.f32 %v4950, %v929
        %v5431 = vsub.f32 %v4951, %v929
        %v5432 = vsub.f32 %v4952, %v929
        %v5433 = vsub.f32 %v4953, %v929
        %v5434 = vsub.f32 %v4954, %v929
        %v5435 = vsub.f32 %v4955, %v929
        %v5436 = vsub.f32 %v4924, %v930
        %v5437 = vsub.f32 %v4925, %v930
        %v5438 = vsub.f32 %v4926, %v930
        %v5439 = vsub.f32 %v4927, %v930
        %v5440 = vsub.f32 %v4928, %v930
        %v5441 = vsub.f32 %v4929, %v930
        %v5442 = vsub.f32 %v4930, %v930
        %v5443 = vsub.f32 %v4931, %v930
        %v5444 = vsub.f32 %v4932, %v930
        %v5445 = vsub.f32 %v4933, %v930
        %v5446 = vsub.f32 %v4934, %v930
        %v5447 = vsub.f32 %v4935, %v930
        %v5448 = vsub.f32 %v4936, %v930
        %v5449 = vsub.f32 %v4937, %v930
        %v5450 = vsub.f32 %v4938, %v930
        %v5451 = vsub.f32 %v4939, %v930
        %v5452 = vsub.f32 %v4940, %v930
        %v5453 = vsub.f32 %v4941, %v930
        %v5454 = vsub.f32 %v4942, %v930
        %v5455 = vsub.f32 %v4943, %v930
        %v5456 = vsub.f32 %v4944, %v930
        %v5457 = vsub.f32 %v4945, %v930
        %v5458 = vsub.f32 %v4946, %v930
        %v5459 = vsub.f32 %v4947, %v930
        %v5460 = vsub.f32 %v4948, %v930
        %v5461 = vsub.f32 %v4949, %v930
        %v5462 = vsub.f32 %v4950, %v930
        %v5463 = vsub.f32 %v4951, %v930
        %v5464 = vsub.f32 %v4952, %v930
        %v5465 = vsub.f32 %v4953, %v930
        %v5466 = vsub.f32 %v4954, %v930
        %v5467 = vsub.f32 %v4955, %v930
        %v5468 = vsub.f32 %v4924, %v931
        %v5469 = vsub.f32 %v4925, %v931
        %v5470 = vsub.f32 %v4926, %v931
        %v5471 = vsub.f32 %v4927, %v931
        %v5472 = vsub.f32 %v4928, %v931
        %v5473 = vsub.f32 %v4929, %v931
        %v5474 = vsub.f32 %v4930, %v931
        %v5475 = vsub.f32 %v4931, %v931
        %v5476 = vsub.f32 %v4932, %v931
        %v5477 = vsub.f32 %v4933, %v931
        %v5478 = vsub.f32 %v4934, %v931
        %v5479 = vsub.f32 %v4935, %v931
        %v5480 = vsub.f32 %v4936, %v931
        %v5481 = vsub.f32 %v4937, %v931
        %v5482 = vsub.f32 %v4938, %v931
        %v5483 = vsub.f32 %v4939, %v931
        %v5484 = vsub.f32 %v4940, %v931
        %v5485 = vsub.f32 %v4941, %v931
        %v5486 = vsub.f32 %v4942, %v931
        %v5487 = vsub.f32 %v4943, %v931
        %v5488 = vsub.f32 %v4944, %v931
        %v5489 = vsub.f32 %v4945, %v931
        %v5490 = vsub.f32 %v4946, %v931
        %v5491 = vsub.f32 %v4947, %v931
        %v5492 = vsub.f32 %v4948, %v931
        %v5493 = vsub.f32 %v4949, %v931
        %v5494 = vsub.f32 %v4950, %v931
        %v5495 = vsub.f32 %v4951, %v931
        %v5496 = vsub.f32 %v4952, %v931
        %v5497 = vsub.f32 %v4953, %v931
        %v5498 = vsub.f32 %v4954, %v931
        %v5499 = vsub.f32 %v4955, %v931
        %v5500 = vand.u32 2147483647, %v4988
        %v5501 = vand.u32 2147483647, %v4989
        %v5502 = vand.u32 2147483647, %v4990
        %v5503 = vand.u32 2147483647, %v4991
        %v5504 = vand.u32 2147483647, %v4992
        %v5505 = vand.u32 2147483647, %v4993
        %v5506 = vand.u32 2147483647, %v4994
        %v5507 = vand.u32 2147483647, %v4995
        %v5508 = vand.u32 2147483647, %v4996
        %v5509 = vand.u32 2147483647, %v4997
        %v5510 = vand.u32 2147483647, %v4998
        %v5511 = vand.u32 2147483647, %v4999
        %v5512 = vand.u32 2147483647, %v5000
        %v5513 = vand.u32 2147483647, %v5001
        %v5514 = vand.u32 2147483647, %v5002
        %v5515 = vand.u32 2147483647, %v5003
        %v5516 = vand.u32 2147483647, %v5004
        %v5517 = vand.u32 2147483647, %v5005
        %v5518 = vand.u32 2147483647, %v5006
        %v5519 = vand.u32 2147483647, %v5007
        %v5520 = vand.u32 2147483647, %v5008
        %v5521 = vand.u32 2147483647, %v5009
        %v5522 = vand.u32 2147483647, %v5010
        %v5523 = vand.u32 2147483647, %v5011
        %v5524 = vand.u32 2147483647, %v5012
        %v5525 = vand.u32 2147483647, %v5013
        %v5526 = vand.u32 2147483647, %v5014
        %v5527 = vand.u32 2147483647, %v5015
        %v5528 = vand.u32 2147483647, %v5016
        %v5529 = vand.u32 2147483647, %v5017
        %v5530 = vand.u32 2147483647, %v5018
        %v5531 = vand.u32 2147483647, %v5019
        %v5532 = vand.u32 2147483647, %v5020
        %v5533 = vand.u32 2147483647, %v5021
        %v5534 = vand.u32 2147483647, %v5022
        %v5535 = vand.u32 2147483647, %v5023
        %v5536 = vand.u32 2147483647, %v5024
        %v5537 = vand.u32 2147483647, %v5025
        %v5538 = vand.u32 2147483647, %v5026
        %v5539 = vand.u32 2147483647, %v5027
        %v5540 = vand.u32 2147483647, %v5028
        %v5541 = vand.u32 2147483647, %v5029
        %v5542 = vand.u32 2147483647, %v5030
        %v5543 = vand.u32 2147483647, %v5031
        %v5544 = vand.u32 2147483647, %v5032
        %v5545 = vand.u32 2147483647, %v5033
        %v5546 = vand.u32 2147483647, %v5034
        %v5547 = vand.u32 2147483647, %v5035
        %v5548 = vand.u32 2147483647, %v5036
        %v5549 = vand.u32 2147483647, %v5037
        %v5550 = vand.u32 2147483647, %v5038
        %v5551 = vand.u32 2147483647, %v5039
        %v5552 = vand.u32 2147483647, %v5040
        %v5553 = vand.u32 2147483647, %v5041
        %v5554 = vand.u32 2147483647, %v5042
        %v5555 = vand.u32 2147483647, %v5043
        %v5556 = vand.u32 2147483647, %v5044
        %v5557 = vand.u32 2147483647, %v5045
        %v5558 = vand.u32 2147483647, %v5046
        %v5559 = vand.u32 2147483647, %v5047
        %v5560 = vand.u32 2147483647, %v5048
        %v5561 = vand.u32 2147483647, %v5049
        %v5562 = vand.u32 2147483647, %v5050
        %v5563 = vand.u32 2147483647, %v5051
        %v5564 = vand.u32 2147483647, %v5052
        %v5565 = vand.u32 2147483647, %v5053
        %v5566 = vand.u32 2147483647, %v5054
        %v5567 = vand.u32 2147483647, %v5055
        %v5568 = vand.u32 2147483647, %v5056
        %v5569 = vand.u32 2147483647, %v5057
        %v5570 = vand.u32 2147483647, %v5058
        %v5571 = vand.u32 2147483647, %v5059
        %v5572 = vand.u32 2147483647, %v5060
        %v5573 = vand.u32 2147483647, %v5061
        %v5574 = vand.u32 2147483647, %v5062
        %v5575 = vand.u32 2147483647, %v5063
        %v5576 = vand.u32 2147483647, %v5064
        %v5577 = vand.u32 2147483647, %v5065
        %v5578 = vand.u32 2147483647, %v5066
        %v5579 = vand.u32 2147483647, %v5067
        %v5580 = vand.u32 2147483647, %v5068
        %v5581 = vand.u32 2147483647, %v5069
        %v5582 = vand.u32 2147483647, %v5070
        %v5583 = vand.u32 2147483647, %v5071
        %v5584 = vand.u32 2147483647, %v5072
        %v5585 = vand.u32 2147483647, %v5073
        %v5586 = vand.u32 2147483647, %v5074
        %v5587 = vand.u32 2147483647, %v5075
        %v5588 = vand.u32 2147483647, %v5076
        %v5589 = vand.u32 2147483647, %v5077
        %v5590 = vand.u32 2147483647, %v5078
        %v5591 = vand.u32 2147483647, %v5079
        %v5592 = vand.u32 2147483647, %v5080
        %v5593 = vand.u32 2147483647, %v5081
        %v5594 = vand.u32 2147483647, %v5082
        %v5595 = vand.u32 2147483647, %v5083
        %v5596 = vand.u32 2147483647, %v5084
        %v5597 = vand.u32 2147483647, %v5085
        %v5598 = vand.u32 2147483647, %v5086
        %v5599 = vand.u32 2147483647, %v5087
        %v5600 = vand.u32 2147483647, %v5088
        %v5601 = vand.u32 2147483647, %v5089
        %v5602 = vand.u32 2147483647, %v5090
        %v5603 = vand.u32 2147483647, %v5091
        %v5604 = vand.u32 2147483647, %v5092
        %v5605 = vand.u32 2147483647, %v5093
        %v5606 = vand.u32 2147483647, %v5094
        %v5607 = vand.u32 2147483647, %v5095
        %v5608 = vand.u32 2147483647, %v5096
        %v5609 = vand.u32 2147483647, %v5097
        %v5610 = vand.u32 2147483647, %v5098
        %v5611 = vand.u32 2147483647, %v5099
        %v5612 = vand.u32 2147483647, %v5100
        %v5613 = vand.u32 2147483647, %v5101
        %v5614 = vand.u32 2147483647, %v5102
        %v5615 = vand.u32 2147483647, %v5103
        %v5616 = vand.u32 2147483647, %v5104
        %v5617 = vand.u32 2147483647, %v5105
        %v5618 = vand.u32 2147483647, %v5106
        %v5619 = vand.u32 2147483647, %v5107
        %v5620 = vand.u32 2147483647, %v5108
        %v5621 = vand.u32 2147483647, %v5109
        %v5622 = vand.u32 2147483647, %v5110
        %v5623 = vand.u32 2147483647, %v5111
        %v5624 = vand.u32 2147483647, %v5112
        %v5625 = vand.u32 2147483647, %v5113
        %v5626 = vand.u32 2147483647, %v5114
        %v5627 = vand.u32 2147483647, %v5115
        %v5628 = vand.u32 2147483647, %v5116
        %v5629 = vand.u32 2147483647, %v5117
        %v5630 = vand.u32 2147483647, %v5118
        %v5631 = vand.u32 2147483647, %v5119
        %v5632 = vand.u32 2147483647, %v5120
        %v5633 = vand.u32 2147483647, %v5121
        %v5634 = vand.u32 2147483647, %v5122
        %v5635 = vand.u32 2147483647, %v5123
        %v5636 = vand.u32 2147483647, %v5124
        %v5637 = vand.u32 2147483647, %v5125
        %v5638 = vand.u32 2147483647, %v5126
        %v5639 = vand.u32 2147483647, %v5127
        %v5640 = vand.u32 2147483647, %v5128
        %v5641 = vand.u32 2147483647, %v5129
        %v5642 = vand.u32 2147483647, %v5130
        %v5643 = vand.u32 2147483647, %v5131
        %v5644 = vand.u32 2147483647, %v5132
        %v5645 = vand.u32 2147483647, %v5133
        %v5646 = vand.u32 2147483647, %v5134
        %v5647 = vand.u32 2147483647, %v5135
        %v5648 = vand.u32 2147483647, %v5136
        %v5649 = vand.u32 2147483647, %v5137
        %v5650 = vand.u32 2147483647, %v5138
        %v5651 = vand.u32 2147483647, %v5139
        %v5652 = vand.u32 2147483647, %v5140
        %v5653 = vand.u32 2147483647, %v5141
        %v5654 = vand.u32 2147483647, %v5142
        %v5655 = vand.u32 2147483647, %v5143
        %v5656 = vand.u32 2147483647, %v5144
        %v5657 = vand.u32 2147483647, %v5145
        %v5658 = vand.u32 2147483647, %v5146
        %v5659 = vand.u32 2147483647, %v5147
        %v5660 = vand.u32 2147483647, %v5148
        %v5661 = vand.u32 2147483647, %v5149
        %v5662 = vand.u32 2147483647, %v5150
        %v5663 = vand.u32 2147483647, %v5151
        %v5664 = vand.u32 2147483647, %v5152
        %v5665 = vand.u32 2147483647, %v5153
        %v5666 = vand.u32 2147483647, %v5154
        %v5667 = vand.u32 2147483647, %v5155
        %v5668 = vand.u32 2147483647, %v5156
        %v5669 = vand.u32 2147483647, %v5157
        %v5670 = vand.u32 2147483647, %v5158
        %v5671 = vand.u32 2147483647, %v5159
        %v5672 = vand.u32 2147483647, %v5160
        %v5673 = vand.u32 2147483647, %v5161
        %v5674 = vand.u32 2147483647, %v5162
        %v5675 = vand.u32 2147483647, %v5163
        %v5676 = vand.u32 2147483647, %v5164
        %v5677 = vand.u32 2147483647, %v5165
        %v5678 = vand.u32 2147483647, %v5166
        %v5679 = vand.u32 2147483647, %v5167
        %v5680 = vand.u32 2147483647, %v5168
        %v5681 = vand.u32 2147483647, %v5169
        %v5682 = vand.u32 2147483647, %v5170
        %v5683 = vand.u32 2147483647, %v5171
        %v5684 = vand.u32 2147483647, %v5172
        %v5685 = vand.u32 2147483647, %v5173
        %v5686 = vand.u32 2147483647, %v5174
        %v5687 = vand.u32 2147483647, %v5175
        %v5688 = vand.u32 2147483647, %v5176
        %v5689 = vand.u32 2147483647, %v5177
        %v5690 = vand.u32 2147483647, %v5178
        %v5691 = vand.u32 2147483647, %v5179
        %v5692 = vand.u32 2147483647, %v5180
        %v5693 = vand.u32 2147483647, %v5181
        %v5694 = vand.u32 2147483647, %v5182
        %v5695 = vand.u32 2147483647, %v5183
        %v5696 = vand.u32 2147483647, %v5184
        %v5697 = vand.u32 2147483647, %v5185
        %v5698 = vand.u32 2147483647, %v5186
        %v5699 = vand.u32 2147483647, %v5187
        %v5700 = vand.u32 2147483647, %v5188
        %v5701 = vand.u32 2147483647, %v5189
        %v5702 = vand.u32 2147483647, %v5190
        %v5703 = vand.u32 2147483647, %v5191
        %v5704 = vand.u32 2147483647, %v5192
        %v5705 = vand.u32 2147483647, %v5193
        %v5706 = vand.u32 2147483647, %v5194
        %v5707 = vand.u32 2147483647, %v5195
        %v5708 = vand.u32 2147483647, %v5196
        %v5709 = vand.u32 2147483647, %v5197
        %v5710 = vand.u32 2147483647, %v5198
        %v5711 = vand.u32 2147483647, %v5199
        %v5712 = vand.u32 2147483647, %v5200
        %v5713 = vand.u32 2147483647, %v5201
        %v5714 = vand.u32 2147483647, %v5202
        %v5715 = vand.u32 2147483647, %v5203
        %v5716 = vand.u32 2147483647, %v5204
        %v5717 = vand.u32 2147483647, %v5205
        %v5718 = vand.u32 2147483647, %v5206
        %v5719 = vand.u32 2147483647, %v5207
        %v5720 = vand.u32 2147483647, %v5208
        %v5721 = vand.u32 2147483647, %v5209
        %v5722 = vand.u32 2147483647, %v5210
        %v5723 = vand.u32 2147483647, %v5211
        %v5724 = vand.u32 2147483647, %v5212
        %v5725 = vand.u32 2147483647, %v5213
        %v5726 = vand.u32 2147483647, %v5214
        %v5727 = vand.u32 2147483647, %v5215
        %v5728 = vand.u32 2147483647, %v5216
        %v5729 = vand.u32 2147483647, %v5217
        %v5730 = vand.u32 2147483647, %v5218
        %v5731 = vand.u32 2147483647, %v5219
        %v5732 = vand.u32 2147483647, %v5220
        %v5733 = vand.u32 2147483647, %v5221
        %v5734 = vand.u32 2147483647, %v5222
        %v5735 = vand.u32 2147483647, %v5223
        %v5736 = vand.u32 2147483647, %v5224
        %v5737 = vand.u32 2147483647, %v5225
        %v5738 = vand.u32 2147483647, %v5226
        %v5739 = vand.u32 2147483647, %v5227
        %v5740 = vand.u32 2147483647, %v5228
        %v5741 = vand.u32 2147483647, %v5229
        %v5742 = vand.u32 2147483647, %v5230
        %v5743 = vand.u32 2147483647, %v5231
        %v5744 = vand.u32 2147483647, %v5232
        %v5745 = vand.u32 2147483647, %v5233
        %v5746 = vand.u32 2147483647, %v5234
        %v5747 = vand.u32 2147483647, %v5235
        %v5748 = vand.u32 2147483647, %v5236
        %v5749 = vand.u32 2147483647, %v5237
        %v5750 = vand.u32 2147483647, %v5238
        %v5751 = vand.u32 2147483647, %v5239
        %v5752 = vand.u32 2147483647, %v5240
        %v5753 = vand.u32 2147483647, %v5241
        %v5754 = vand.u32 2147483647, %v5242
        %v5755 = vand.u32 2147483647, %v5243
        %v5756 = vand.u32 2147483647, %v5244
        %v5757 = vand.u32 2147483647, %v5245
        %v5758 = vand.u32 2147483647, %v5246
        %v5759 = vand.u32 2147483647, %v5247
        %v5760 = vand.u32 2147483647, %v5248
        %v5761 = vand.u32 2147483647, %v5249
        %v5762 = vand.u32 2147483647, %v5250
        %v5763 = vand.u32 2147483647, %v5251
        %v5764 = vand.u32 2147483647, %v5252
        %v5765 = vand.u32 2147483647, %v5253
        %v5766 = vand.u32 2147483647, %v5254
        %v5767 = vand.u32 2147483647, %v5255
        %v5768 = vand.u32 2147483647, %v5256
        %v5769 = vand.u32 2147483647, %v5257
        %v5770 = vand.u32 2147483647, %v5258
        %v5771 = vand.u32 2147483647, %v5259
        %v5772 = vand.u32 2147483647, %v5260
        %v5773 = vand.u32 2147483647, %v5261
        %v5774 = vand.u32 2147483647, %v5262
        %v5775 = vand.u32 2147483647, %v5263
        %v5776 = vand.u32 2147483647, %v5264
        %v5777 = vand.u32 2147483647, %v5265
        %v5778 = vand.u32 2147483647, %v5266
        %v5779 = vand.u32 2147483647, %v5267
        %v5780 = vand.u32 2147483647, %v5268
        %v5781 = vand.u32 2147483647, %v5269
        %v5782 = vand.u32 2147483647, %v5270
        %v5783 = vand.u32 2147483647, %v5271
        %v5784 = vand.u32 2147483647, %v5272
        %v5785 = vand.u32 2147483647, %v5273
        %v5786 = vand.u32 2147483647, %v5274
        %v5787 = vand.u32 2147483647, %v5275
        %v5788 = vand.u32 2147483647, %v5276
        %v5789 = vand.u32 2147483647, %v5277
        %v5790 = vand.u32 2147483647, %v5278
        %v5791 = vand.u32 2147483647, %v5279
        %v5792 = vand.u32 2147483647, %v5280
        %v5793 = vand.u32 2147483647, %v5281
        %v5794 = vand.u32 2147483647, %v5282
        %v5795 = vand.u32 2147483647, %v5283
        %v5796 = vand.u32 2147483647, %v5284
        %v5797 = vand.u32 2147483647, %v5285
        %v5798 = vand.u32 2147483647, %v5286
        %v5799 = vand.u32 2147483647, %v5287
        %v5800 = vand.u32 2147483647, %v5288
        %v5801 = vand.u32 2147483647, %v5289
        %v5802 = vand.u32 2147483647, %v5290
        %v5803 = vand.u32 2147483647, %v5291
        %v5804 = vand.u32 2147483647, %v5292
        %v5805 = vand.u32 2147483647, %v5293
        %v5806 = vand.u32 2147483647, %v5294
        %v5807 = vand.u32 2147483647, %v5295
        %v5808 = vand.u32 2147483647, %v5296
        %v5809 = vand.u32 2147483647, %v5297
        %v5810 = vand.u32 2147483647, %v5298
        %v5811 = vand.u32 2147483647, %v5299
        %v5812 = vand.u32 2147483647, %v5300
        %v5813 = vand.u32 2147483647, %v5301
        %v5814 = vand.u32 2147483647, %v5302
        %v5815 = vand.u32 2147483647, %v5303
        %v5816 = vand.u32 2147483647, %v5304
        %v5817 = vand.u32 2147483647, %v5305
        %v5818 = vand.u32 2147483647, %v5306
        %v5819 = vand.u32 2147483647, %v5307
        %v5820 = vand.u32 2147483647, %v5308
        %v5821 = vand.u32 2147483647, %v5309
        %v5822 = vand.u32 2147483647, %v5310
        %v5823 = vand.u32 2147483647, %v5311
        %v5824 = vand.u32 2147483647, %v5312
        %v5825 = vand.u32 2147483647, %v5313
        %v5826 = vand.u32 2147483647, %v5314
        %v5827 = vand.u32 2147483647, %v5315
        %v5828 = vand.u32 2147483647, %v5316
        %v5829 = vand.u32 2147483647, %v5317
        %v5830 = vand.u32 2147483647, %v5318
        %v5831 = vand.u32 2147483647, %v5319
        %v5832 = vand.u32 2147483647, %v5320
        %v5833 = vand.u32 2147483647, %v5321
        %v5834 = vand.u32 2147483647, %v5322
        %v5835 = vand.u32 2147483647, %v5323
        %v5836 = vand.u32 2147483647, %v5324
        %v5837 = vand.u32 2147483647, %v5325
        %v5838 = vand.u32 2147483647, %v5326
        %v5839 = vand.u32 2147483647, %v5327
        %v5840 = vand.u32 2147483647, %v5328
        %v5841 = vand.u32 2147483647, %v5329
        %v5842 = vand.u32 2147483647, %v5330
        %v5843 = vand.u32 2147483647, %v5331
        %v5844 = vand.u32 2147483647, %v5332
        %v5845 = vand.u32 2147483647, %v5333
        %v5846 = vand.u32 2147483647, %v5334
        %v5847 = vand.u32 2147483647, %v5335
        %v5848 = vand.u32 2147483647, %v5336
        %v5849 = vand.u32 2147483647, %v5337
        %v5850 = vand.u32 2147483647, %v5338
        %v5851 = vand.u32 2147483647, %v5339
        %v5852 = vand.u32 2147483647, %v5340
        %v5853 = vand.u32 2147483647, %v5341
        %v5854 = vand.u32 2147483647, %v5342
        %v5855 = vand.u32 2147483647, %v5343
        %v5856 = vand.u32 2147483647, %v5344
        %v5857 = vand.u32 2147483647, %v5345
        %v5858 = vand.u32 2147483647, %v5346
        %v5859 = vand.u32 2147483647, %v5347
        %v5860 = vand.u32 2147483647, %v5348
        %v5861 = vand.u32 2147483647, %v5349
        %v5862 = vand.u32 2147483647, %v5350
        %v5863 = vand.u32 2147483647, %v5351
        %v5864 = vand.u32 2147483647, %v5352
        %v5865 = vand.u32 2147483647, %v5353
        %v5866 = vand.u32 2147483647, %v5354
        %v5867 = vand.u32 2147483647, %v5355
        %v5868 = vand.u32 2147483647, %v5356
        %v5869 = vand.u32 2147483647, %v5357
        %v5870 = vand.u32 2147483647, %v5358
        %v5871 = vand.u32 2147483647, %v5359
        %v5872 = vand.u32 2147483647, %v5360
        %v5873 = vand.u32 2147483647, %v5361
        %v5874 = vand.u32 2147483647, %v5362
        %v5875 = vand.u32 2147483647, %v5363
        %v5876 = vand.u32 2147483647, %v5364
        %v5877 = vand.u32 2147483647, %v5365
        %v5878 = vand.u32 2147483647, %v5366
        %v5879 = vand.u32 2147483647, %v5367
        %v5880 = vand.u32 2147483647, %v5368
        %v5881 = vand.u32 2147483647, %v5369
        %v5882 = vand.u32 2147483647, %v5370
        %v5883 = vand.u32 2147483647, %v5371
        %v5884 = vand.u32 2147483647, %v5372
        %v5885 = vand.u32 2147483647, %v5373
        %v5886 = vand.u32 2147483647, %v5374
        %v5887 = vand.u32 2147483647, %v5375
        %v5888 = vand.u32 2147483647, %v5376
        %v5889 = vand.u32 2147483647, %v5377
        %v5890 = vand.u32 2147483647, %v5378
        %v5891 = vand.u32 2147483647, %v5379
        %v5892 = vand.u32 2147483647, %v5380
        %v5893 = vand.u32 2147483647, %v5381
        %v5894 = vand.u32 2147483647, %v5382
        %v5895 = vand.u32 2147483647, %v5383
        %v5896 = vand.u32 2147483647, %v5384
        %v5897 = vand.u32 2147483647, %v5385
        %v5898 = vand.u32 2147483647, %v5386
        %v5899 = vand.u32 2147483647, %v5387
        %v5900 = vand.u32 2147483647, %v5388
        %v5901 = vand.u32 2147483647, %v5389
        %v5902 = vand.u32 2147483647, %v5390
        %v5903 = vand.u32 2147483647, %v5391
        %v5904 = vand.u32 2147483647, %v5392
        %v5905 = vand.u32 2147483647, %v5393
        %v5906 = vand.u32 2147483647, %v5394
        %v5907 = vand.u32 2147483647, %v5395
        %v5908 = vand.u32 2147483647, %v5396
        %v5909 = vand.u32 2147483647, %v5397
        %v5910 = vand.u32 2147483647, %v5398
        %v5911 = vand.u32 2147483647, %v5399
        %v5912 = vand.u32 2147483647, %v5400
        %v5913 = vand.u32 2147483647, %v5401
        %v5914 = vand.u32 2147483647, %v5402
        %v5915 = vand.u32 2147483647, %v5403
        %v5916 = vand.u32 2147483647, %v5404
        %v5917 = vand.u32 2147483647, %v5405
        %v5918 = vand.u32 2147483647, %v5406
        %v5919 = vand.u32 2147483647, %v5407
        %v5920 = vand.u32 2147483647, %v5408
        %v5921 = vand.u32 2147483647, %v5409
        %v5922 = vand.u32 2147483647, %v5410
        %v5923 = vand.u32 2147483647, %v5411
        %v5924 = vand.u32 2147483647, %v5412
        %v5925 = vand.u32 2147483647, %v5413
        %v5926 = vand.u32 2147483647, %v5414
        %v5927 = vand.u32 2147483647, %v5415
        %v5928 = vand.u32 2147483647, %v5416
        %v5929 = vand.u32 2147483647, %v5417
        %v5930 = vand.u32 2147483647, %v5418
        %v5931 = vand.u32 2147483647, %v5419
        %v5932 = vand.u32 2147483647, %v5420
        %v5933 = vand.u32 2147483647, %v5421
        %v5934 = vand.u32 2147483647, %v5422
        %v5935 = vand.u32 2147483647, %v5423
        %v5936 = vand.u32 2147483647, %v5424
        %v5937 = vand.u32 2147483647, %v5425
        %v5938 = vand.u32 2147483647, %v5426
        %v5939 = vand.u32 2147483647, %v5427
        %v5940 = vand.u32 2147483647, %v5428
        %v5941 = vand.u32 2147483647, %v5429
        %v5942 = vand.u32 2147483647, %v5430
        %v5943 = vand.u32 2147483647, %v5431
        %v5944 = vand.u32 2147483647, %v5432
        %v5945 = vand.u32 2147483647, %v5433
        %v5946 = vand.u32 2147483647, %v5434
        %v5947 = vand.u32 2147483647, %v5435
        %v5948 = vand.u32 2147483647, %v5436
        %v5949 = vand.u32 2147483647, %v5437
        %v5950 = vand.u32 2147483647, %v5438
        %v5951 = vand.u32 2147483647, %v5439
        %v5952 = vand.u32 2147483647, %v5440
        %v5953 = vand.u32 2147483647, %v5441
        %v5954 = vand.u32 2147483647, %v5442
        %v5955 = vand.u32 2147483647, %v5443
        %v5956 = vand.u32 2147483647, %v5444
        %v5957 = vand.u32 2147483647, %v5445
        %v5958 = vand.u32 2147483647, %v5446
        %v5959 = vand.u32 2147483647, %v5447
        %v5960 = vand.u32 2147483647, %v5448
        %v5961 = vand.u32 2147483647, %v5449
        %v5962 = vand.u32 2147483647, %v5450
        %v5963 = vand.u32 2147483647, %v5451
        %v5964 = vand.u32 2147483647, %v5452
        %v5965 = vand.u32 2147483647, %v5453
        %v5966 = vand.u32 2147483647, %v5454
        %v5967 = vand.u32 2147483647, %v5455
        %v5968 = vand.u32 2147483647, %v5456
        %v5969 = vand.u32 2147483647, %v5457
        %v5970 = vand.u32 2147483647, %v5458
        %v5971 = vand.u32 2147483647, %v5459
        %v5972 = vand.u32 2147483647, %v5460
        %v5973 = vand.u32 2147483647, %v5461
        %v5974 = vand.u32 2147483647, %v5462
        %v5975 = vand.u32 2147483647, %v5463
        %v5976 = vand.u32 2147483647, %v5464
        %v5977 = vand.u32 2147483647, %v5465
        %v5978 = vand.u32 2147483647, %v5466
        %v5979 = vand.u32 2147483647, %v5467
        %v5980 = vand.u32 2147483647, %v5468
        %v5981 = vand.u32 2147483647, %v5469
        %v5982 = vand.u32 2147483647, %v5470
        %v5983 = vand.u32 2147483647, %v5471
        %v5984 = vand.u32 2147483647, %v5472
        %v5985 = vand.u32 2147483647, %v5473
        %v5986 = vand.u32 2147483647, %v5474
        %v5987 = vand.u32 2147483647, %v5475
        %v5988 = vand.u32 2147483647, %v5476
        %v5989 = vand.u32 2147483647, %v5477
        %v5990 = vand.u32 2147483647, %v5478
        %v5991 = vand.u32 2147483647, %v5479
        %v5992 = vand.u32 2147483647, %v5480
        %v5993 = vand.u32 2147483647, %v5481
        %v5994 = vand.u32 2147483647, %v5482
        %v5995 = vand.u32 2147483647, %v5483
        %v5996 = vand.u32 2147483647, %v5484
        %v5997 = vand.u32 2147483647, %v5485
        %v5998 = vand.u32 2147483647, %v5486
        %v5999 = vand.u32 2147483647, %v5487
        %v6000 = vand.u32 2147483647, %v5488
        %v6001 = vand.u32 2147483647, %v5489
        %v6002 = vand.u32 2147483647, %v5490
        %v6003 = vand.u32 2147483647, %v5491
        %v6004 = vand.u32 2147483647, %v5492
        %v6005 = vand.u32 2147483647, %v5493
        %v6006 = vand.u32 2147483647, %v5494
        %v6007 = vand.u32 2147483647, %v5495
        %v6008 = vand.u32 2147483647, %v5496
        %v6009 = vand.u32 2147483647, %v5497
        %v6010 = vand.u32 2147483647, %v5498
        %v6011 = vand.u32 2147483647, %v5499
        %v6012 = vsub.f32 1.0, %v5500
        %v6013 = vsub.f32 1.0, %v5501
        %v6014 = vsub.f32 1.0, %v5502
        %v6015 = vsub.f32 1.0, %v5503
        %v6016 = vsub.f32 1.0, %v5504
        %v6017 = vsub.f32 1.0, %v5505
        %v6018 = vsub.f32 1.0, %v5506
        %v6019 = vsub.f32 1.0, %v5507
        %v6020 = vsub.f32 1.0, %v5508
        %v6021 = vsub.f32 1.0, %v5509
        %v6022 = vsub.f32 1.0, %v5510
        %v6023 = vsub.f32 1.0, %v5511
        %v6024 = vsub.f32 1.0, %v5512
        %v6025 = vsub.f32 1.0, %v5513
        %v6026 = vsub.f32 1.0, %v5514
        %v6027 = vsub.f32 1.0, %v5515
        %v6028 = vsub.f32 1.0, %v5516
        %v6029 = vsub.f32 1.0, %v5517
        %v6030 = vsub.f32 1.0, %v5518
        %v6031 = vsub.f32 1.0, %v5519
        %v6032 = vsub.f32 1.0, %v5520
        %v6033 = vsub.f32 1.0, %v5521
        %v6034 = vsub.f32 1.0, %v5522
        %v6035 = vsub.f32 1.0, %v5523
        %v6036 = vsub.f32 1.0, %v5524
        %v6037 = vsub.f32 1.0, %v5525
        %v6038 = vsub.f32 1.0, %v5526
        %v6039 = vsub.f32 1.0, %v5527
        %v6040 = vsub.f32 1.0, %v5528
        %v6041 = vsub.f32 1.0, %v5529
        %v6042 = vsub.f32 1.0, %v5530
        %v6043 = vsub.f32 1.0, %v5531
        %v6044 = vsub.f32 1.0, %v5532
        %v6045 = vsub.f32 1.0, %v5533
        %v6046 = vsub.f32 1.0, %v5534
        %v6047 = vsub.f32 1.0, %v5535
        %v6048 = vsub.f32 1.0, %v5536
        %v6049 = vsub.f32 1.0, %v5537
        %v6050 = vsub.f32 1.0, %v5538
        %v6051 = vsub.f32 1.0, %v5539
        %v6052 = vsub.f32 1.0, %v5540
        %v6053 = vsub.f32 1.0, %v5541
        %v6054 = vsub.f32 1.0, %v5542
        %v6055 = vsub.f32 1.0, %v5543
        %v6056 = vsub.f32 1.0, %v5544
        %v6057 = vsub.f32 1.0, %v5545
        %v6058 = vsub.f32 1.0, %v5546
        %v6059 = vsub.f32 1.0, %v5547
        %v6060 = vsub.f32 1.0, %v5548
        %v6061 = vsub.f32 1.0, %v5549
        %v6062 = vsub.f32 1.0, %v5550
        %v6063 = vsub.f32 1.0, %v5551
        %v6064 = vsub.f32 1.0, %v5552
        %v6065 = vsub.f32 1.0, %v5553
        %v6066 = vsub.f32 1.0, %v5554
        %v6067 = vsub.f32 1.0, %v5555
        %v6068 = vsub.f32 1.0, %v5556
        %v6069 = vsub.f32 1.0, %v5557
        %v6070 = vsub.f32 1.0, %v5558
        %v6071 = vsub.f32 1.0, %v5559
        %v6072 = vsub.f32 1.0, %v5560
        %v6073 = vsub.f32 1.0, %v5561
        %v6074 = vsub.f32 1.0, %v5562
        %v6075 = vsub.f32 1.0, %v5563
        %v6076 = vsub.f32 1.0, %v5564
        %v6077 = vsub.f32 1.0, %v5565
        %v6078 = vsub.f32 1.0, %v5566
        %v6079 = vsub.f32 1.0, %v5567
        %v6080 = vsub.f32 1.0, %v5568
        %v6081 = vsub.f32 1.0, %v5569
        %v6082 = vsub.f32 1.0, %v5570
        %v6083 = vsub.f32 1.0, %v5571
        %v6084 = vsub.f32 1.0, %v5572
        %v6085 = vsub.f32 1.0, %v5573
        %v6086 = vsub.f32 1.0, %v5574
        %v6087 = vsub.f32 1.0, %v5575
        %v6088 = vsub.f32 1.0, %v5576
        %v6089 = vsub.f32 1.0, %v5577
        %v6090 = vsub.f32 1.0, %v5578
        %v6091 = vsub.f32 1.0, %v5579
        %v6092 = vsub.f32 1.0, %v5580
        %v6093 = vsub.f32 1.0, %v5581
        %v6094 = vsub.f32 1.0, %v5582
        %v6095 = vsub.f32 1.0, %v5583
        %v6096 = vsub.f32 1.0, %v5584
        %v6097 = vsub.f32 1.0, %v5585
        %v6098 = vsub.f32 1.0, %v5586
        %v6099 = vsub.f32 1.0, %v5587
        %v6100 = vsub.f32 1.0, %v5588
        %v6101 = vsub.f32 1.0, %v5589
        %v6102 = vsub.f32 1.0, %v5590
        %v6103 = vsub.f32 1.0, %v5591
        %v6104 = vsub.f32 1.0, %v5592
        %v6105 = vsub.f32 1.0, %v5593
        %v6106 = vsub.f32 1.0, %v5594
        %v6107 = vsub.f32 1.0, %v5595
        %v6108 = vsub.f32 1.0, %v5596
        %v6109 = vsub.f32 1.0, %v5597
        %v6110 = vsub.f32 1.0, %v5598
        %v6111 = vsub.f32 1.0, %v5599
        %v6112 = vsub.f32 1.0, %v5600
        %v6113 = vsub.f32 1.0, %v5601
        %v6114 = vsub.f32 1.0, %v5602
        %v6115 = vsub.f32 1.0, %v5603
        %v6116 = vsub.f32 1.0, %v5604
        %v6117 = vsub.f32 1.0, %v5605
        %v6118 = vsub.f32 1.0, %v5606
        %v6119 = vsub.f32 1.0, %v5607
        %v6120 = vsub.f32 1.0, %v5608
        %v6121 = vsub.f32 1.0, %v5609
        %v6122 = vsub.f32 1.0, %v5610
        %v6123 = vsub.f32 1.0, %v5611
        %v6124 = vsub.f32 1.0, %v5612
        %v6125 = vsub.f32 1.0, %v5613
        %v6126 = vsub.f32 1.0, %v5614
        %v6127 = vsub.f32 1.0, %v5615
        %v6128 = vsub.f32 1.0, %v5616
        %v6129 = vsub.f32 1.0, %v5617
        %v6130 = vsub.f32 1.0, %v5618
        %v6131 = vsub.f32 1.0, %v5619
        %v6132 = vsub.f32 1.0, %v5620
        %v6133 = vsub.f32 1.0, %v5621
        %v6134 = vsub.f32 1.0, %v5622
        %v6135 = vsub.f32 1.0, %v5623
        %v6136 = vsub.f32 1.0, %v5624
        %v6137 = vsub.f32 1.0, %v5625
        %v6138 = vsub.f32 1.0, %v5626
        %v6139 = vsub.f32 1.0, %v5627
        %v6140 = vsub.f32 1.0, %v5628
        %v6141 = vsub.f32 1.0, %v5629
        %v6142 = vsub.f32 1.0, %v5630
        %v6143 = vsub.f32 1.0, %v5631
        %v6144 = vsub.f32 1.0, %v5632
        %v6145 = vsub.f32 1.0, %v5633
        %v6146 = vsub.f32 1.0, %v5634
        %v6147 = vsub.f32 1.0, %v5635
        %v6148 = vsub.f32 1.0, %v5636
        %v6149 = vsub.f32 1.0, %v5637
        %v6150 = vsub.f32 1.0, %v5638
        %v6151 = vsub.f32 1.0, %v5639
        %v6152 = vsub.f32 1.0, %v5640
        %v6153 = vsub.f32 1.0, %v5641
        %v6154 = vsub.f32 1.0, %v5642
        %v6155 = vsub.f32 1.0, %v5643
        %v6156 = vsub.f32 1.0, %v5644
        %v6157 = vsub.f32 1.0, %v5645
        %v6158 = vsub.f32 1.0, %v5646
        %v6159 = vsub.f32 1.0, %v5647
        %v6160 = vsub.f32 1.0, %v5648
        %v6161 = vsub.f32 1.0, %v5649
        %v6162 = vsub.f32 1.0, %v5650
        %v6163 = vsub.f32 1.0, %v5651
        %v6164 = vsub.f32 1.0, %v5652
        %v6165 = vsub.f32 1.0, %v5653
        %v6166 = vsub.f32 1.0, %v5654
        %v6167 = vsub.f32 1.0, %v5655
        %v6168 = vsub.f32 1.0, %v5656
        %v6169 = vsub.f32 1.0, %v5657
        %v6170 = vsub.f32 1.0, %v5658
        %v6171 = vsub.f32 1.0, %v5659
        %v6172 = vsub.f32 1.0, %v5660
        %v6173 = vsub.f32 1.0, %v5661
        %v6174 = vsub.f32 1.0, %v5662
        %v6175 = vsub.f32 1.0, %v5663
        %v6176 = vsub.f32 1.0, %v5664
        %v6177 = vsub.f32 1.0, %v5665
        %v6178 = vsub.f32 1.0, %v5666
        %v6179 = vsub.f32 1.0, %v5667
        %v6180 = vsub.f32 1.0, %v5668
        %v6181 = vsub.f32 1.0, %v5669
        %v6182 = vsub.f32 1.0, %v5670
        %v6183 = vsub.f32 1.0, %v5671
        %v6184 = vsub.f32 1.0, %v5672
        %v6185 = vsub.f32 1.0, %v5673
        %v6186 = vsub.f32 1.0, %v5674
        %v6187 = vsub.f32 1.0, %v5675
        %v6188 = vsub.f32 1.0, %v5676
        %v6189 = vsub.f32 1.0, %v5677
        %v6190 = vsub.f32 1.0, %v5678
        %v6191 = vsub.f32 1.0, %v5679
        %v6192 = vsub.f32 1.0, %v5680
        %v6193 = vsub.f32 1.0, %v5681
        %v6194 = vsub.f32 1.0, %v5682
        %v6195 = vsub.f32 1.0, %v5683
        %v6196 = vsub.f32 1.0, %v5684
        %v6197 = vsub.f32 1.0, %v5685
        %v6198 = vsub.f32 1.0, %v5686
        %v6199 = vsub.f32 1.0, %v5687
        %v6200 = vsub.f32 1.0, %v5688
        %v6201 = vsub.f32 1.0, %v5689
        %v6202 = vsub.f32 1.0, %v5690
        %v6203 = vsub.f32 1.0, %v5691
        %v6204 = vsub.f32 1.0, %v5692
        %v6205 = vsub.f32 1.0, %v5693
        %v6206 = vsub.f32 1.0, %v5694
        %v6207 = vsub.f32 1.0, %v5695
        %v6208 = vsub.f32 1.0, %v5696
        %v6209 = vsub.f32 1.0, %v5697
        %v6210 = vsub.f32 1.0, %v5698
        %v6211 = vsub.f32 1.0, %v5699
        %v6212 = vsub.f32 1.0, %v5700
        %v6213 = vsub.f32 1.0, %v5701
        %v6214 = vsub.f32 1.0, %v5702
        %v6215 = vsub.f32 1.0, %v5703
        %v6216 = vsub.f32 1.0, %v5704
        %v6217 = vsub.f32 1.0, %v5705
        %v6218 = vsub.f32 1.0, %v5706
        %v6219 = vsub.f32 1.0, %v5707
        %v6220 = vsub.f32 1.0, %v5708
        %v6221 = vsub.f32 1.0, %v5709
        %v6222 = vsub.f32 1.0, %v5710
        %v6223 = vsub.f32 1.0, %v5711
        %v6224 = vsub.f32 1.0, %v5712
        %v6225 = vsub.f32 1.0, %v5713
        %v6226 = vsub.f32 1.0, %v5714
        %v6227 = vsub.f32 1.0, %v5715
        %v6228 = vsub.f32 1.0, %v5716
        %v6229 = vsub.f32 1.0, %v5717
        %v6230 = vsub.f32 1.0, %v5718
        %v6231 = vsub.f32 1.0, %v5719
        %v6232 = vsub.f32 1.0, %v5720
        %v6233 = vsub.f32 1.0, %v5721
        %v6234 = vsub.f32 1.0, %v5722
        %v6235 = vsub.f32 1.0, %v5723
        %v6236 = vsub.f32 1.0, %v5724
        %v6237 = vsub.f32 1.0, %v5725
        %v6238 = vsub.f32 1.0, %v5726
        %v6239 = vsub.f32 1.0, %v5727
        %v6240 = vsub.f32 1.0, %v5728
        %v6241 = vsub.f32 1.0, %v5729
        %v6242 = vsub.f32 1.0, %v5730
        %v6243 = vsub.f32 1.0, %v5731
        %v6244 = vsub.f32 1.0, %v5732
        %v6245 = vsub.f32 1.0, %v5733
        %v6246 = vsub.f32 1.0, %v5734
        %v6247 = vsub.f32 1.0, %v5735
        %v6248 = vsub.f32 1.0, %v5736
        %v6249 = vsub.f32 1.0, %v5737
        %v6250 = vsub.f32 1.0, %v5738
        %v6251 = vsub.f32 1.0, %v5739
        %v6252 = vsub.f32 1.0, %v5740
        %v6253 = vsub.f32 1.0, %v5741
        %v6254 = vsub.f32 1.0, %v5742
        %v6255 = vsub.f32 1.0, %v5743
        %v6256 = vsub.f32 1.0, %v5744
        %v6257 = vsub.f32 1.0, %v5745
        %v6258 = vsub.f32 1.0, %v5746
        %v6259 = vsub.f32 1.0, %v5747
        %v6260 = vsub.f32 1.0, %v5748
        %v6261 = vsub.f32 1.0, %v5749
        %v6262 = vsub.f32 1.0, %v5750
        %v6263 = vsub.f32 1.0, %v5751
        %v6264 = vsub.f32 1.0, %v5752
        %v6265 = vsub.f32 1.0, %v5753
        %v6266 = vsub.f32 1.0, %v5754
        %v6267 = vsub.f32 1.0, %v5755
        %v6268 = vsub.f32 1.0, %v5756
        %v6269 = vsub.f32 1.0, %v5757
        %v6270 = vsub.f32 1.0, %v5758
        %v6271 = vsub.f32 1.0, %v5759
        %v6272 = vsub.f32 1.0, %v5760
        %v6273 = vsub.f32 1.0, %v5761
        %v6274 = vsub.f32 1.0, %v5762
        %v6275 = vsub.f32 1.0, %v5763
        %v6276 = vsub.f32 1.0, %v5764
        %v6277 = vsub.f32 1.0, %v5765
        %v6278 = vsub.f32 1.0, %v5766
        %v6279 = vsub.f32 1.0, %v5767
        %v6280 = vsub.f32 1.0, %v5768
        %v6281 = vsub.f32 1.0, %v5769
        %v6282 = vsub.f32 1.0, %v5770
        %v6283 = vsub.f32 1.0, %v5771
        %v6284 = vsub.f32 1.0, %v5772
        %v6285 = vsub.f32 1.0, %v5773
        %v6286 = vsub.f32 1.0, %v5774
        %v6287 = vsub.f32 1.0, %v5775
        %v6288 = vsub.f32 1.0, %v5776
        %v6289 = vsub.f32 1.0, %v5777
        %v6290 = vsub.f32 1.0, %v5778
        %v6291 = vsub.f32 1.0, %v5779
        %v6292 = vsub.f32 1.0, %v5780
        %v6293 = vsub.f32 1.0, %v5781
        %v6294 = vsub.f32 1.0, %v5782
        %v6295 = vsub.f32 1.0, %v5783
        %v6296 = vsub.f32 1.0, %v5784
        %v6297 = vsub.f32 1.0, %v5785
        %v6298 = vsub.f32 1.0, %v5786
        %v6299 = vsub.f32 1.0, %v5787
        %v6300 = vsub.f32 1.0, %v5788
        %v6301 = vsub.f32 1.0, %v5789
        %v6302 = vsub.f32 1.0, %v5790
        %v6303 = vsub.f32 1.0, %v5791
        %v6304 = vsub.f32 1.0, %v5792
        %v6305 = vsub.f32 1.0, %v5793
        %v6306 = vsub.f32 1.0, %v5794
        %v6307 = vsub.f32 1.0, %v5795
        %v6308 = vsub.f32 1.0, %v5796
        %v6309 = vsub.f32 1.0, %v5797
        %v6310 = vsub.f32 1.0, %v5798
        %v6311 = vsub.f32 1.0, %v5799
        %v6312 = vsub.f32 1.0, %v5800
        %v6313 = vsub.f32 1.0, %v5801
        %v6314 = vsub.f32 1.0, %v5802
        %v6315 = vsub.f32 1.0, %v5803
        %v6316 = vsub.f32 1.0, %v5804
        %v6317 = vsub.f32 1.0, %v5805
        %v6318 = vsub.f32 1.0, %v5806
        %v6319 = vsub.f32 1.0, %v5807
        %v6320 = vsub.f32 1.0, %v5808
        %v6321 = vsub.f32 1.0, %v5809
        %v6322 = vsub.f32 1.0, %v5810
        %v6323 = vsub.f32 1.0, %v5811
        %v6324 = vsub.f32 1.0, %v5812
        %v6325 = vsub.f32 1.0, %v5813
        %v6326 = vsub.f32 1.0, %v5814
        %v6327 = vsub.f32 1.0, %v5815
        %v6328 = vsub.f32 1.0, %v5816
        %v6329 = vsub.f32 1.0, %v5817
        %v6330 = vsub.f32 1.0, %v5818
        %v6331 = vsub.f32 1.0, %v5819
        %v6332 = vsub.f32 1.0, %v5820
        %v6333 = vsub.f32 1.0, %v5821
        %v6334 = vsub.f32 1.0, %v5822
        %v6335 = vsub.f32 1.0, %v5823
        %v6336 = vsub.f32 1.0, %v5824
        %v6337 = vsub.f32 1.0, %v5825
        %v6338 = vsub.f32 1.0, %v5826
        %v6339 = vsub.f32 1.0, %v5827
        %v6340 = vsub.f32 1.0, %v5828
        %v6341 = vsub.f32 1.0, %v5829
        %v6342 = vsub.f32 1.0, %v5830
        %v6343 = vsub.f32 1.0, %v5831
        %v6344 = vsub.f32 1.0, %v5832
        %v6345 = vsub.f32 1.0, %v5833
        %v6346 = vsub.f32 1.0, %v5834
        %v6347 = vsub.f32 1.0, %v5835
        %v6348 = vsub.f32 1.0, %v5836
        %v6349 = vsub.f32 1.0, %v5837
        %v6350 = vsub.f32 1.0, %v5838
        %v6351 = vsub.f32 1.0, %v5839
        %v6352 = vsub.f32 1.0, %v5840
        %v6353 = vsub.f32 1.0, %v5841
        %v6354 = vsub.f32 1.0, %v5842
        %v6355 = vsub.f32 1.0, %v5843
        %v6356 = vsub.f32 1.0, %v5844
        %v6357 = vsub.f32 1.0, %v5845
        %v6358 = vsub.f32 1.0, %v5846
        %v6359 = vsub.f32 1.0, %v5847
        %v6360 = vsub.f32 1.0, %v5848
        %v6361 = vsub.f32 1.0, %v5849
        %v6362 = vsub.f32 1.0, %v5850
        %v6363 = vsub.f32 1.0, %v5851
        %v6364 = vsub.f32 1.0, %v5852
        %v6365 = vsub.f32 1.0, %v5853
        %v6366 = vsub.f32 1.0, %v5854
        %v6367 = vsub.f32 1.0, %v5855
        %v6368 = vsub.f32 1.0, %v5856
        %v6369 = vsub.f32 1.0, %v5857
        %v6370 = vsub.f32 1.0, %v5858
        %v6371 = vsub.f32 1.0, %v5859
        %v6372 = vsub.f32 1.0, %v5860
        %v6373 = vsub.f32 1.0, %v5861
        %v6374 = vsub.f32 1.0, %v5862
        %v6375 = vsub.f32 1.0, %v5863
        %v6376 = vsub.f32 1.0, %v5864
        %v6377 = vsub.f32 1.0, %v5865
        %v6378 = vsub.f32 1.0, %v5866
        %v6379 = vsub.f32 1.0, %v5867
        %v6380 = vsub.f32 1.0, %v5868
        %v6381 = vsub.f32 1.0, %v5869
        %v6382 = vsub.f32 1.0, %v5870
        %v6383 = vsub.f32 1.0, %v5871
        %v6384 = vsub.f32 1.0, %v5872
        %v6385 = vsub.f32 1.0, %v5873
        %v6386 = vsub.f32 1.0, %v5874
        %v6387 = vsub.f32 1.0, %v5875
        %v6388 = vsub.f32 1.0, %v5876
        %v6389 = vsub.f32 1.0, %v5877
        %v6390 = vsub.f32 1.0, %v5878
        %v6391 = vsub.f32 1.0, %v5879
        %v6392 = vsub.f32 1.0, %v5880
        %v6393 = vsub.f32 1.0, %v5881
        %v6394 = vsub.f32 1.0, %v5882
        %v6395 = vsub.f32 1.0, %v5883
        %v6396 = vsub.f32 1.0, %v5884
        %v6397 = vsub.f32 1.0, %v5885
        %v6398 = vsub.f32 1.0, %v5886
        %v6399 = vsub.f32 1.0, %v5887
        %v6400 = vsub.f32 1.0, %v5888
        %v6401 = vsub.f32 1.0, %v5889
        %v6402 = vsub.f32 1.0, %v5890
        %v6403 = vsub.f32 1.0, %v5891
        %v6404 = vsub.f32 1.0, %v5892
        %v6405 = vsub.f32 1.0, %v5893
        %v6406 = vsub.f32 1.0, %v5894
        %v6407 = vsub.f32 1.0, %v5895
        %v6408 = vsub.f32 1.0, %v5896
        %v6409 = vsub.f32 1.0, %v5897
        %v6410 = vsub.f32 1.0, %v5898
        %v6411 = vsub.f32 1.0, %v5899
        %v6412 = vsub.f32 1.0, %v5900
        %v6413 = vsub.f32 1.0, %v5901
        %v6414 = vsub.f32 1.0, %v5902
        %v6415 = vsub.f32 1.0, %v5903
        %v6416 = vsub.f32 1.0, %v5904
        %v6417 = vsub.f32 1.0, %v5905
        %v6418 = vsub.f32 1.0, %v5906
        %v6419 = vsub.f32 1.0, %v5907
        %v6420 = vsub.f32 1.0, %v5908
        %v6421 = vsub.f32 1.0, %v5909
        %v6422 = vsub.f32 1.0, %v5910
        %v6423 = vsub.f32 1.0, %v5911
        %v6424 = vsub.f32 1.0, %v5912
        %v6425 = vsub.f32 1.0, %v5913
        %v6426 = vsub.f32 1.0, %v5914
        %v6427 = vsub.f32 1.0, %v5915
        %v6428 = vsub.f32 1.0, %v5916
        %v6429 = vsub.f32 1.0, %v5917
        %v6430 = vsub.f32 1.0, %v5918
        %v6431 = vsub.f32 1.0, %v5919
        %v6432 = vsub.f32 1.0, %v5920
        %v6433 = vsub.f32 1.0, %v5921
        %v6434 = vsub.f32 1.0, %v5922
        %v6435 = vsub.f32 1.0, %v5923
        %v6436 = vsub.f32 1.0, %v5924
        %v6437 = vsub.f32 1.0, %v5925
        %v6438 = vsub.f32 1.0, %v5926
        %v6439 = vsub.f32 1.0, %v5927
        %v6440 = vsub.f32 1.0, %v5928
        %v6441 = vsub.f32 1.0, %v5929
        %v6442 = vsub.f32 1.0, %v5930
        %v6443 = vsub.f32 1.0, %v5931
        %v6444 = vsub.f32 1.0, %v5932
        %v6445 = vsub.f32 1.0, %v5933
        %v6446 = vsub.f32 1.0, %v5934
        %v6447 = vsub.f32 1.0, %v5935
        %v6448 = vsub.f32 1.0, %v5936
        %v6449 = vsub.f32 1.0, %v5937
        %v6450 = vsub.f32 1.0, %v5938
        %v6451 = vsub.f32 1.0, %v5939
        %v6452 = vsub.f32 1.0, %v5940
        %v6453 = vsub.f32 1.0, %v5941
        %v6454 = vsub.f32 1.0, %v5942
        %v6455 = vsub.f32 1.0, %v5943
        %v6456 = vsub.f32 1.0, %v5944
        %v6457 = vsub.f32 1.0, %v5945
        %v6458 = vsub.f32 1.0, %v5946
        %v6459 = vsub.f32 1.0, %v5947
        %v6460 = vsub.f32 1.0, %v5948
        %v6461 = vsub.f32 1.0, %v5949
        %v6462 = vsub.f32 1.0, %v5950
        %v6463 = vsub.f32 1.0, %v5951
        %v6464 = vsub.f32 1.0, %v5952
        %v6465 = vsub.f32 1.0, %v5953
        %v6466 = vsub.f32 1.0, %v5954
        %v6467 = vsub.f32 1.0, %v5955
        %v6468 = vsub.f32 1.0, %v5956
        %v6469 = vsub.f32 1.0, %v5957
        %v6470 = vsub.f32 1.0, %v5958
        %v6471 = vsub.f32 1.0, %v5959
        %v6472 = vsub.f32 1.0, %v5960
        %v6473 = vsub.f32 1.0, %v5961
        %v6474 = vsub.f32 1.0, %v5962
        %v6475 = vsub.f32 1.0, %v5963
        %v6476 = vsub.f32 1.0, %v5964
        %v6477 = vsub.f32 1.0, %v5965
        %v6478 = vsub.f32 1.0, %v5966
        %v6479 = vsub.f32 1.0, %v5967
        %v6480 = vsub.f32 1.0, %v5968
        %v6481 = vsub.f32 1.0, %v5969
        %v6482 = vsub.f32 1.0, %v5970
        %v6483 = vsub.f32 1.0, %v5971
        %v6484 = vsub.f32 1.0, %v5972
        %v6485 = vsub.f32 1.0, %v5973
        %v6486 = vsub.f32 1.0, %v5974
        %v6487 = vsub.f32 1.0, %v5975
        %v6488 = vsub.f32 1.0, %v5976
        %v6489 = vsub.f32 1.0, %v5977
        %v6490 = vsub.f32 1.0, %v5978
        %v6491 = vsub.f32 1.0, %v5979
        %v6492 = vsub.f32 1.0, %v5980
        %v6493 = vsub.f32 1.0, %v5981
        %v6494 = vsub.f32 1.0, %v5982
        %v6495 = vsub.f32 1.0, %v5983
        %v6496 = vsub.f32 1.0, %v5984
        %v6497 = vsub.f32 1.0, %v5985
        %v6498 = vsub.f32 1.0, %v5986
        %v6499 = vsub.f32 1.0, %v5987
        %v6500 = vsub.f32 1.0, %v5988
        %v6501 = vsub.f32 1.0, %v5989
        %v6502 = vsub.f32 1.0, %v5990
        %v6503 = vsub.f32 1.0, %v5991
        %v6504 = vsub.f32 1.0, %v5992
        %v6505 = vsub.f32 1.0, %v5993
        %v6506 = vsub.f32 1.0, %v5994
        %v6507 = vsub.f32 1.0, %v5995
        %v6508 = vsub.f32 1.0, %v5996
        %v6509 = vsub.f32 1.0, %v5997
        %v6510 = vsub.f32 1.0, %v5998
        %v6511 = vsub.f32 1.0, %v5999
        %v6512 = vsub.f32 1.0, %v6000
        %v6513 = vsub.f32 1.0, %v6001
        %v6514 = vsub.f32 1.0, %v6002
        %v6515 = vsub.f32 1.0, %v6003
        %v6516 = vsub.f32 1.0, %v6004
        %v6517 = vsub.f32 1.0, %v6005
        %v6518 = vsub.f32 1.0, %v6006
        %v6519 = vsub.f32 1.0, %v6007
        %v6520 = vsub.f32 1.0, %v6008
        %v6521 = vsub.f32 1.0, %v6009
        %v6522 = vsub.f32 1.0, %v6010
        %v6523 = vsub.f32 1.0, %v6011
        %v6524 = vmax.f32 %v6012, 0.0
        %v6525 = vmax.f32 %v6013, 0.0
        %v6526 = vmax.f32 %v6014, 0.0
        %v6527 = vmax.f32 %v6015, 0.0
        %v6528 = vmax.f32 %v6016, 0.0
        %v6529 = vmax.f32 %v6017, 0.0
        %v6530 = vmax.f32 %v6018, 0.0
        %v6531 = vmax.f32 %v6019, 0.0
        %v6532 = vmax.f32 %v6020, 0.0
        %v6533 = vmax.f32 %v6021, 0.0
        %v6534 = vmax.f32 %v6022, 0.0
        %v6535 = vmax.f32 %v6023, 0.0
        %v6536 = vmax.f32 %v6024, 0.0
        %v6537 = vmax.f32 %v6025, 0.0
        %v6538 = vmax.f32 %v6026, 0.0
        %v6539 = vmax.f32 %v6027, 0.0
        %v6540 = vmax.f32 %v6028, 0.0
        %v6541 = vmax.f32 %v6029, 0.0
        %v6542 = vmax.f32 %v6030, 0.0
        %v6543 = vmax.f32 %v6031, 0.0
        %v6544 = vmax.f32 %v6032, 0.0
        %v6545 = vmax.f32 %v6033, 0.0
        %v6546 = vmax.f32 %v6034, 0.0
        %v6547 = vmax.f32 %v6035, 0.0
        %v6548 = vmax.f32 %v6036, 0.0
        %v6549 = vmax.f32 %v6037, 0.0
        %v6550 = vmax.f32 %v6038, 0.0
        %v6551 = vmax.f32 %v6039, 0.0
        %v6552 = vmax.f32 %v6040, 0.0
        %v6553 = vmax.f32 %v6041, 0.0
        %v6554 = vmax.f32 %v6042, 0.0
        %v6555 = vmax.f32 %v6043, 0.0
        %v6556 = vmax.f32 %v6044, 0.0
        %v6557 = vmax.f32 %v6045, 0.0
        %v6558 = vmax.f32 %v6046, 0.0
        %v6559 = vmax.f32 %v6047, 0.0
        %v6560 = vmax.f32 %v6048, 0.0
        %v6561 = vmax.f32 %v6049, 0.0
        %v6562 = vmax.f32 %v6050, 0.0
        %v6563 = vmax.f32 %v6051, 0.0
        %v6564 = vmax.f32 %v6052, 0.0
        %v6565 = vmax.f32 %v6053, 0.0
        %v6566 = vmax.f32 %v6054, 0.0
        %v6567 = vmax.f32 %v6055, 0.0
        %v6568 = vmax.f32 %v6056, 0.0
        %v6569 = vmax.f32 %v6057, 0.0
        %v6570 = vmax.f32 %v6058, 0.0
        %v6571 = vmax.f32 %v6059, 0.0
        %v6572 = vmax.f32 %v6060, 0.0
        %v6573 = vmax.f32 %v6061, 0.0
        %v6574 = vmax.f32 %v6062, 0.0
        %v6575 = vmax.f32 %v6063, 0.0
        %v6576 = vmax.f32 %v6064, 0.0
        %v6577 = vmax.f32 %v6065, 0.0
        %v6578 = vmax.f32 %v6066, 0.0
        %v6579 = vmax.f32 %v6067, 0.0
        %v6580 = vmax.f32 %v6068, 0.0
        %v6581 = vmax.f32 %v6069, 0.0
        %v6582 = vmax.f32 %v6070, 0.0
        %v6583 = vmax.f32 %v6071, 0.0
        %v6584 = vmax.f32 %v6072, 0.0
        %v6585 = vmax.f32 %v6073, 0.0
        %v6586 = vmax.f32 %v6074, 0.0
        %v6587 = vmax.f32 %v6075, 0.0
        %v6588 = vmax.f32 %v6076, 0.0
        %v6589 = vmax.f32 %v6077, 0.0
        %v6590 = vmax.f32 %v6078, 0.0
        %v6591 = vmax.f32 %v6079, 0.0
        %v6592 = vmax.f32 %v6080, 0.0
        %v6593 = vmax.f32 %v6081, 0.0
        %v6594 = vmax.f32 %v6082, 0.0
        %v6595 = vmax.f32 %v6083, 0.0
        %v6596 = vmax.f32 %v6084, 0.0
        %v6597 = vmax.f32 %v6085, 0.0
        %v6598 = vmax.f32 %v6086, 0.0
        %v6599 = vmax.f32 %v6087, 0.0
        %v6600 = vmax.f32 %v6088, 0.0
        %v6601 = vmax.f32 %v6089, 0.0
        %v6602 = vmax.f32 %v6090, 0.0
        %v6603 = vmax.f32 %v6091, 0.0
        %v6604 = vmax.f32 %v6092, 0.0
        %v6605 = vmax.f32 %v6093, 0.0
        %v6606 = vmax.f32 %v6094, 0.0
        %v6607 = vmax.f32 %v6095, 0.0
        %v6608 = vmax.f32 %v6096, 0.0
        %v6609 = vmax.f32 %v6097, 0.0
        %v6610 = vmax.f32 %v6098, 0.0
        %v6611 = vmax.f32 %v6099, 0.0
        %v6612 = vmax.f32 %v6100, 0.0
        %v6613 = vmax.f32 %v6101, 0.0
        %v6614 = vmax.f32 %v6102, 0.0
        %v6615 = vmax.f32 %v6103, 0.0
        %v6616 = vmax.f32 %v6104, 0.0
        %v6617 = vmax.f32 %v6105, 0.0
        %v6618 = vmax.f32 %v6106, 0.0
        %v6619 = vmax.f32 %v6107, 0.0
        %v6620 = vmax.f32 %v6108, 0.0
        %v6621 = vmax.f32 %v6109, 0.0
        %v6622 = vmax.f32 %v6110, 0.0
        %v6623 = vmax.f32 %v6111, 0.0
        %v6624 = vmax.f32 %v6112, 0.0
        %v6625 = vmax.f32 %v6113, 0.0
        %v6626 = vmax.f32 %v6114, 0.0
        %v6627 = vmax.f32 %v6115, 0.0
        %v6628 = vmax.f32 %v6116, 0.0
        %v6629 = vmax.f32 %v6117, 0.0
        %v6630 = vmax.f32 %v6118, 0.0
        %v6631 = vmax.f32 %v6119, 0.0
        %v6632 = vmax.f32 %v6120, 0.0
        %v6633 = vmax.f32 %v6121, 0.0
        %v6634 = vmax.f32 %v6122, 0.0
        %v6635 = vmax.f32 %v6123, 0.0
        %v6636 = vmax.f32 %v6124, 0.0
        %v6637 = vmax.f32 %v6125, 0.0
        %v6638 = vmax.f32 %v6126, 0.0
        %v6639 = vmax.f32 %v6127, 0.0
        %v6640 = vmax.f32 %v6128, 0.0
        %v6641 = vmax.f32 %v6129, 0.0
        %v6642 = vmax.f32 %v6130, 0.0
        %v6643 = vmax.f32 %v6131, 0.0
        %v6644 = vmax.f32 %v6132, 0.0
        %v6645 = vmax.f32 %v6133, 0.0
        %v6646 = vmax.f32 %v6134, 0.0
        %v6647 = vmax.f32 %v6135, 0.0
        %v6648 = vmax.f32 %v6136, 0.0
        %v6649 = vmax.f32 %v6137, 0.0
        %v6650 = vmax.f32 %v6138, 0.0
        %v6651 = vmax.f32 %v6139, 0.0
        %v6652 = vmax.f32 %v6140, 0.0
        %v6653 = vmax.f32 %v6141, 0.0
        %v6654 = vmax.f32 %v6142, 0.0
        %v6655 = vmax.f32 %v6143, 0.0
        %v6656 = vmax.f32 %v6144, 0.0
        %v6657 = vmax.f32 %v6145, 0.0
        %v6658 = vmax.f32 %v6146, 0.0
        %v6659 = vmax.f32 %v6147, 0.0
        %v6660 = vmax.f32 %v6148, 0.0
        %v6661 = vmax.f32 %v6149, 0.0
        %v6662 = vmax.f32 %v6150, 0.0
        %v6663 = vmax.f32 %v6151, 0.0
        %v6664 = vmax.f32 %v6152, 0.0
        %v6665 = vmax.f32 %v6153, 0.0
        %v6666 = vmax.f32 %v6154, 0.0
        %v6667 = vmax.f32 %v6155, 0.0
        %v6668 = vmax.f32 %v6156, 0.0
        %v6669 = vmax.f32 %v6157, 0.0
        %v6670 = vmax.f32 %v6158, 0.0
        %v6671 = vmax.f32 %v6159, 0.0
        %v6672 = vmax.f32 %v6160, 0.0
        %v6673 = vmax.f32 %v6161, 0.0
        %v6674 = vmax.f32 %v6162, 0.0
        %v6675 = vmax.f32 %v6163, 0.0
        %v6676 = vmax.f32 %v6164, 0.0
        %v6677 = vmax.f32 %v6165, 0.0
        %v6678 = vmax.f32 %v6166, 0.0
        %v6679 = vmax.f32 %v6167, 0.0
        %v6680 = vmax.f32 %v6168, 0.0
        %v6681 = vmax.f32 %v6169, 0.0
        %v6682 = vmax.f32 %v6170, 0.0
        %v6683 = vmax.f32 %v6171, 0.0
        %v6684 = vmax.f32 %v6172, 0.0
        %v6685 = vmax.f32 %v6173, 0.0
        %v6686 = vmax.f32 %v6174, 0.0
        %v6687 = vmax.f32 %v6175, 0.0
        %v6688 = vmax.f32 %v6176, 0.0
        %v6689 = vmax.f32 %v6177, 0.0
        %v6690 = vmax.f32 %v6178, 0.0
        %v6691 = vmax.f32 %v6179, 0.0
        %v6692 = vmax.f32 %v6180, 0.0
        %v6693 = vmax.f32 %v6181, 0.0
        %v6694 = vmax.f32 %v6182, 0.0
        %v6695 = vmax.f32 %v6183, 0.0
        %v6696 = vmax.f32 %v6184, 0.0
        %v6697 = vmax.f32 %v6185, 0.0
        %v6698 = vmax.f32 %v6186, 0.0
        %v6699 = vmax.f32 %v6187, 0.0
        %v6700 = vmax.f32 %v6188, 0.0
        %v6701 = vmax.f32 %v6189, 0.0
        %v6702 = vmax.f32 %v6190, 0.0
        %v6703 = vmax.f32 %v6191, 0.0
        %v6704 = vmax.f32 %v6192, 0.0
        %v6705 = vmax.f32 %v6193, 0.0
        %v6706 = vmax.f32 %v6194, 0.0
        %v6707 = vmax.f32 %v6195, 0.0
        %v6708 = vmax.f32 %v6196, 0.0
        %v6709 = vmax.f32 %v6197, 0.0
        %v6710 = vmax.f32 %v6198, 0.0
        %v6711 = vmax.f32 %v6199, 0.0
        %v6712 = vmax.f32 %v6200, 0.0
        %v6713 = vmax.f32 %v6201, 0.0
        %v6714 = vmax.f32 %v6202, 0.0
        %v6715 = vmax.f32 %v6203, 0.0
        %v6716 = vmax.f32 %v6204, 0.0
        %v6717 = vmax.f32 %v6205, 0.0
        %v6718 = vmax.f32 %v6206, 0.0
        %v6719 = vmax.f32 %v6207, 0.0
        %v6720 = vmax.f32 %v6208, 0.0
        %v6721 = vmax.f32 %v6209, 0.0
        %v6722 = vmax.f32 %v6210, 0.0
        %v6723 = vmax.f32 %v6211, 0.0
        %v6724 = vmax.f32 %v6212, 0.0
        %v6725 = vmax.f32 %v6213, 0.0
        %v6726 = vmax.f32 %v6214, 0.0
        %v6727 = vmax.f32 %v6215, 0.0
        %v6728 = vmax.f32 %v6216, 0.0
        %v6729 = vmax.f32 %v6217, 0.0
        %v6730 = vmax.f32 %v6218, 0.0
        %v6731 = vmax.f32 %v6219, 0.0
        %v6732 = vmax.f32 %v6220, 0.0
        %v6733 = vmax.f32 %v6221, 0.0
        %v6734 = vmax.f32 %v6222, 0.0
        %v6735 = vmax.f32 %v6223, 0.0
        %v6736 = vmax.f32 %v6224, 0.0
        %v6737 = vmax.f32 %v6225, 0.0
        %v6738 = vmax.f32 %v6226, 0.0
        %v6739 = vmax.f32 %v6227, 0.0
        %v6740 = vmax.f32 %v6228, 0.0
        %v6741 = vmax.f32 %v6229, 0.0
        %v6742 = vmax.f32 %v6230, 0.0
        %v6743 = vmax.f32 %v6231, 0.0
        %v6744 = vmax.f32 %v6232, 0.0
        %v6745 = vmax.f32 %v6233, 0.0
        %v6746 = vmax.f32 %v6234, 0.0
        %v6747 = vmax.f32 %v6235, 0.0
        %v6748 = vmax.f32 %v6236, 0.0
        %v6749 = vmax.f32 %v6237, 0.0
        %v6750 = vmax.f32 %v6238, 0.0
        %v6751 = vmax.f32 %v6239, 0.0
        %v6752 = vmax.f32 %v6240, 0.0
        %v6753 = vmax.f32 %v6241, 0.0
        %v6754 = vmax.f32 %v6242, 0.0
        %v6755 = vmax.f32 %v6243, 0.0
        %v6756 = vmax.f32 %v6244, 0.0
        %v6757 = vmax.f32 %v6245, 0.0
        %v6758 = vmax.f32 %v6246, 0.0
        %v6759 = vmax.f32 %v6247, 0.0
        %v6760 = vmax.f32 %v6248, 0.0
        %v6761 = vmax.f32 %v6249, 0.0
        %v6762 = vmax.f32 %v6250, 0.0
        %v6763 = vmax.f32 %v6251, 0.0
        %v6764 = vmax.f32 %v6252, 0.0
        %v6765 = vmax.f32 %v6253, 0.0
        %v6766 = vmax.f32 %v6254, 0.0
        %v6767 = vmax.f32 %v6255, 0.0
        %v6768 = vmax.f32 %v6256, 0.0
        %v6769 = vmax.f32 %v6257, 0.0
        %v6770 = vmax.f32 %v6258, 0.0
        %v6771 = vmax.f32 %v6259, 0.0
        %v6772 = vmax.f32 %v6260, 0.0
        %v6773 = vmax.f32 %v6261, 0.0
        %v6774 = vmax.f32 %v6262, 0.0
        %v6775 = vmax.f32 %v6263, 0.0
        %v6776 = vmax.f32 %v6264, 0.0
        %v6777 = vmax.f32 %v6265, 0.0
        %v6778 = vmax.f32 %v6266, 0.0
        %v6779 = vmax.f32 %v6267, 0.0
        %v6780 = vmax.f32 %v6268, 0.0
        %v6781 = vmax.f32 %v6269, 0.0
        %v6782 = vmax.f32 %v6270, 0.0
        %v6783 = vmax.f32 %v6271, 0.0
        %v6784 = vmax.f32 %v6272, 0.0
        %v6785 = vmax.f32 %v6273, 0.0
        %v6786 = vmax.f32 %v6274, 0.0
        %v6787 = vmax.f32 %v6275, 0.0
        %v6788 = vmax.f32 %v6276, 0.0
        %v6789 = vmax.f32 %v6277, 0.0
        %v6790 = vmax.f32 %v6278, 0.0
        %v6791 = vmax.f32 %v6279, 0.0
        %v6792 = vmax.f32 %v6280, 0.0
        %v6793 = vmax.f32 %v6281, 0.0
        %v6794 = vmax.f32 %v6282, 0.0
        %v6795 = vmax.f32 %v6283, 0.0
        %v6796 = vmax.f32 %v6284, 0.0
        %v6797 = vmax.f32 %v6285, 0.0
        %v6798 = vmax.f32 %v6286, 0.0
        %v6799 = vmax.f32 %v6287, 0.0
        %v6800 = vmax.f32 %v6288, 0.0
        %v6801 = vmax.f32 %v6289, 0.0
        %v6802 = vmax.f32 %v6290, 0.0
        %v6803 = vmax.f32 %v6291, 0.0
        %v6804 = vmax.f32 %v6292, 0.0
        %v6805 = vmax.f32 %v6293, 0.0
        %v6806 = vmax.f32 %v6294, 0.0
        %v6807 = vmax.f32 %v6295, 0.0
        %v6808 = vmax.f32 %v6296, 0.0
        %v6809 = vmax.f32 %v6297, 0.0
        %v6810 = vmax.f32 %v6298, 0.0
        %v6811 = vmax.f32 %v6299, 0.0
        %v6812 = vmax.f32 %v6300, 0.0
        %v6813 = vmax.f32 %v6301, 0.0
        %v6814 = vmax.f32 %v6302, 0.0
        %v6815 = vmax.f32 %v6303, 0.0
        %v6816 = vmax.f32 %v6304, 0.0
        %v6817 = vmax.f32 %v6305, 0.0
        %v6818 = vmax.f32 %v6306, 0.0
        %v6819 = vmax.f32 %v6307, 0.0
        %v6820 = vmax.f32 %v6308, 0.0
        %v6821 = vmax.f32 %v6309, 0.0
        %v6822 = vmax.f32 %v6310, 0.0
        %v6823 = vmax.f32 %v6311, 0.0
        %v6824 = vmax.f32 %v6312, 0.0
        %v6825 = vmax.f32 %v6313, 0.0
        %v6826 = vmax.f32 %v6314, 0.0
        %v6827 = vmax.f32 %v6315, 0.0
        %v6828 = vmax.f32 %v6316, 0.0
        %v6829 = vmax.f32 %v6317, 0.0
        %v6830 = vmax.f32 %v6318, 0.0
        %v6831 = vmax.f32 %v6319, 0.0
        %v6832 = vmax.f32 %v6320, 0.0
        %v6833 = vmax.f32 %v6321, 0.0
        %v6834 = vmax.f32 %v6322, 0.0
        %v6835 = vmax.f32 %v6323, 0.0
        %v6836 = vmax.f32 %v6324, 0.0
        %v6837 = vmax.f32 %v6325, 0.0
        %v6838 = vmax.f32 %v6326, 0.0
        %v6839 = vmax.f32 %v6327, 0.0
        %v6840 = vmax.f32 %v6328, 0.0
        %v6841 = vmax.f32 %v6329, 0.0
        %v6842 = vmax.f32 %v6330, 0.0
        %v6843 = vmax.f32 %v6331, 0.0
        %v6844 = vmax.f32 %v6332, 0.0
        %v6845 = vmax.f32 %v6333, 0.0
        %v6846 = vmax.f32 %v6334, 0.0
        %v6847 = vmax.f32 %v6335, 0.0
        %v6848 = vmax.f32 %v6336, 0.0
        %v6849 = vmax.f32 %v6337, 0.0
        %v6850 = vmax.f32 %v6338, 0.0
        %v6851 = vmax.f32 %v6339, 0.0
        %v6852 = vmax.f32 %v6340, 0.0
        %v6853 = vmax.f32 %v6341, 0.0
        %v6854 = vmax.f32 %v6342, 0.0
        %v6855 = vmax.f32 %v6343, 0.0
        %v6856 = vmax.f32 %v6344, 0.0
        %v6857 = vmax.f32 %v6345, 0.0
        %v6858 = vmax.f32 %v6346, 0.0
        %v6859 = vmax.f32 %v6347, 0.0
        %v6860 = vmax.f32 %v6348, 0.0
        %v6861 = vmax.f32 %v6349, 0.0
        %v6862 = vmax.f32 %v6350, 0.0
        %v6863 = vmax.f32 %v6351, 0.0
        %v6864 = vmax.f32 %v6352, 0.0
        %v6865 = vmax.f32 %v6353, 0.0
        %v6866 = vmax.f32 %v6354, 0.0
        %v6867 = vmax.f32 %v6355, 0.0
        %v6868 = vmax.f32 %v6356, 0.0
        %v6869 = vmax.f32 %v6357, 0.0
        %v6870 = vmax.f32 %v6358, 0.0
        %v6871 = vmax.f32 %v6359, 0.0
        %v6872 = vmax.f32 %v6360, 0.0
        %v6873 = vmax.f32 %v6361, 0.0
        %v6874 = vmax.f32 %v6362, 0.0
        %v6875 = vmax.f32 %v6363, 0.0
        %v6876 = vmax.f32 %v6364, 0.0
        %v6877 = vmax.f32 %v6365, 0.0
        %v6878 = vmax.f32 %v6366, 0.0
        %v6879 = vmax.f32 %v6367, 0.0
        %v6880 = vmax.f32 %v6368, 0.0
        %v6881 = vmax.f32 %v6369, 0.0
        %v6882 = vmax.f32 %v6370, 0.0
        %v6883 = vmax.f32 %v6371, 0.0
        %v6884 = vmax.f32 %v6372, 0.0
        %v6885 = vmax.f32 %v6373, 0.0
        %v6886 = vmax.f32 %v6374, 0.0
        %v6887 = vmax.f32 %v6375, 0.0
        %v6888 = vmax.f32 %v6376, 0.0
        %v6889 = vmax.f32 %v6377, 0.0
        %v6890 = vmax.f32 %v6378, 0.0
        %v6891 = vmax.f32 %v6379, 0.0
        %v6892 = vmax.f32 %v6380, 0.0
        %v6893 = vmax.f32 %v6381, 0.0
        %v6894 = vmax.f32 %v6382, 0.0
        %v6895 = vmax.f32 %v6383, 0.0
        %v6896 = vmax.f32 %v6384, 0.0
        %v6897 = vmax.f32 %v6385, 0.0
        %v6898 = vmax.f32 %v6386, 0.0
        %v6899 = vmax.f32 %v6387, 0.0
        %v6900 = vmax.f32 %v6388, 0.0
        %v6901 = vmax.f32 %v6389, 0.0
        %v6902 = vmax.f32 %v6390, 0.0
        %v6903 = vmax.f32 %v6391, 0.0
        %v6904 = vmax.f32 %v6392, 0.0
        %v6905 = vmax.f32 %v6393, 0.0
        %v6906 = vmax.f32 %v6394, 0.0
        %v6907 = vmax.f32 %v6395, 0.0
        %v6908 = vmax.f32 %v6396, 0.0
        %v6909 = vmax.f32 %v6397, 0.0
        %v6910 = vmax.f32 %v6398, 0.0
        %v6911 = vmax.f32 %v6399, 0.0
        %v6912 = vmax.f32 %v6400, 0.0
        %v6913 = vmax.f32 %v6401, 0.0
        %v6914 = vmax.f32 %v6402, 0.0
        %v6915 = vmax.f32 %v6403, 0.0
        %v6916 = vmax.f32 %v6404, 0.0
        %v6917 = vmax.f32 %v6405, 0.0
        %v6918 = vmax.f32 %v6406, 0.0
        %v6919 = vmax.f32 %v6407, 0.0
        %v6920 = vmax.f32 %v6408, 0.0
        %v6921 = vmax.f32 %v6409, 0.0
        %v6922 = vmax.f32 %v6410, 0.0
        %v6923 = vmax.f32 %v6411, 0.0
        %v6924 = vmax.f32 %v6412, 0.0
        %v6925 = vmax.f32 %v6413, 0.0
        %v6926 = vmax.f32 %v6414, 0.0
        %v6927 = vmax.f32 %v6415, 0.0
        %v6928 = vmax.f32 %v6416, 0.0
        %v6929 = vmax.f32 %v6417, 0.0
        %v6930 = vmax.f32 %v6418, 0.0
        %v6931 = vmax.f32 %v6419, 0.0
        %v6932 = vmax.f32 %v6420, 0.0
        %v6933 = vmax.f32 %v6421, 0.0
        %v6934 = vmax.f32 %v6422, 0.0
        %v6935 = vmax.f32 %v6423, 0.0
        %v6936 = vmax.f32 %v6424, 0.0
        %v6937 = vmax.f32 %v6425, 0.0
        %v6938 = vmax.f32 %v6426, 0.0
        %v6939 = vmax.f32 %v6427, 0.0
        %v6940 = vmax.f32 %v6428, 0.0
        %v6941 = vmax.f32 %v6429, 0.0
        %v6942 = vmax.f32 %v6430, 0.0
        %v6943 = vmax.f32 %v6431, 0.0
        %v6944 = vmax.f32 %v6432, 0.0
        %v6945 = vmax.f32 %v6433, 0.0
        %v6946 = vmax.f32 %v6434, 0.0
        %v6947 = vmax.f32 %v6435, 0.0
        %v6948 = vmax.f32 %v6436, 0.0
        %v6949 = vmax.f32 %v6437, 0.0
        %v6950 = vmax.f32 %v6438, 0.0
        %v6951 = vmax.f32 %v6439, 0.0
        %v6952 = vmax.f32 %v6440, 0.0
        %v6953 = vmax.f32 %v6441, 0.0
        %v6954 = vmax.f32 %v6442, 0.0
        %v6955 = vmax.f32 %v6443, 0.0
        %v6956 = vmax.f32 %v6444, 0.0
        %v6957 = vmax.f32 %v6445, 0.0
        %v6958 = vmax.f32 %v6446, 0.0
        %v6959 = vmax.f32 %v6447, 0.0
        %v6960 = vmax.f32 %v6448, 0.0
        %v6961 = vmax.f32 %v6449, 0.0
        %v6962 = vmax.f32 %v6450, 0.0
        %v6963 = vmax.f32 %v6451, 0.0
        %v6964 = vmax.f32 %v6452, 0.0
        %v6965 = vmax.f32 %v6453, 0.0
        %v6966 = vmax.f32 %v6454, 0.0
        %v6967 = vmax.f32 %v6455, 0.0
        %v6968 = vmax.f32 %v6456, 0.0
        %v6969 = vmax.f32 %v6457, 0.0
        %v6970 = vmax.f32 %v6458, 0.0
        %v6971 = vmax.f32 %v6459, 0.0
        %v6972 = vmax.f32 %v6460, 0.0
        %v6973 = vmax.f32 %v6461, 0.0
        %v6974 = vmax.f32 %v6462, 0.0
        %v6975 = vmax.f32 %v6463, 0.0
        %v6976 = vmax.f32 %v6464, 0.0
        %v6977 = vmax.f32 %v6465, 0.0
        %v6978 = vmax.f32 %v6466, 0.0
        %v6979 = vmax.f32 %v6467, 0.0
        %v6980 = vmax.f32 %v6468, 0.0
        %v6981 = vmax.f32 %v6469, 0.0
        %v6982 = vmax.f32 %v6470, 0.0
        %v6983 = vmax.f32 %v6471, 0.0
        %v6984 = vmax.f32 %v6472, 0.0
        %v6985 = vmax.f32 %v6473, 0.0
        %v6986 = vmax.f32 %v6474, 0.0
        %v6987 = vmax.f32 %v6475, 0.0
        %v6988 = vmax.f32 %v6476, 0.0
        %v6989 = vmax.f32 %v6477, 0.0
        %v6990 = vmax.f32 %v6478, 0.0
        %v6991 = vmax.f32 %v6479, 0.0
        %v6992 = vmax.f32 %v6480, 0.0
        %v6993 = vmax.f32 %v6481, 0.0
        %v6994 = vmax.f32 %v6482, 0.0
        %v6995 = vmax.f32 %v6483, 0.0
        %v6996 = vmax.f32 %v6484, 0.0
        %v6997 = vmax.f32 %v6485, 0.0
        %v6998 = vmax.f32 %v6486, 0.0
        %v6999 = vmax.f32 %v6487, 0.0
        %v7000 = vmax.f32 %v6488, 0.0
        %v7001 = vmax.f32 %v6489, 0.0
        %v7002 = vmax.f32 %v6490, 0.0
        %v7003 = vmax.f32 %v6491, 0.0
        %v7004 = vmax.f32 %v6492, 0.0
        %v7005 = vmax.f32 %v6493, 0.0
        %v7006 = vmax.f32 %v6494, 0.0
        %v7007 = vmax.f32 %v6495, 0.0
        %v7008 = vmax.f32 %v6496, 0.0
        %v7009 = vmax.f32 %v6497, 0.0
        %v7010 = vmax.f32 %v6498, 0.0
        %v7011 = vmax.f32 %v6499, 0.0
        %v7012 = vmax.f32 %v6500, 0.0
        %v7013 = vmax.f32 %v6501, 0.0
        %v7014 = vmax.f32 %v6502, 0.0
        %v7015 = vmax.f32 %v6503, 0.0
        %v7016 = vmax.f32 %v6504, 0.0
        %v7017 = vmax.f32 %v6505, 0.0
        %v7018 = vmax.f32 %v6506, 0.0
        %v7019 = vmax.f32 %v6507, 0.0
        %v7020 = vmax.f32 %v6508, 0.0
        %v7021 = vmax.f32 %v6509, 0.0
        %v7022 = vmax.f32 %v6510, 0.0
        %v7023 = vmax.f32 %v6511, 0.0
        %v7024 = vmax.f32 %v6512, 0.0
        %v7025 = vmax.f32 %v6513, 0.0
        %v7026 = vmax.f32 %v6514, 0.0
        %v7027 = vmax.f32 %v6515, 0.0
        %v7028 = vmax.f32 %v6516, 0.0
        %v7029 = vmax.f32 %v6517, 0.0
        %v7030 = vmax.f32 %v6518, 0.0
        %v7031 = vmax.f32 %v6519, 0.0
        %v7032 = vmax.f32 %v6520, 0.0
        %v7033 = vmax.f32 %v6521, 0.0
        %v7034 = vmax.f32 %v6522, 0.0
        %v7035 = vmax.f32 %v6523, 0.0
        %v7036 = vmul.f32 %v3362, %v6524
        %v7037 = vmul.f32 %v3411, %v6525
        %v7038 = vmul.f32 %v3460, %v6526
        %v7039 = vmul.f32 %v3509, %v6527
        %v7040 = vmul.f32 %v3558, %v6528
        %v7041 = vmul.f32 %v3607, %v6529
        %v7042 = vmul.f32 %v3656, %v6530
        %v7043 = vmul.f32 %v3705, %v6531
        %v7044 = vmul.f32 %v3754, %v6532
        %v7045 = vmul.f32 %v3803, %v6533
        %v7046 = vmul.f32 %v3852, %v6534
        %v7047 = vmul.f32 %v3901, %v6535
        %v7048 = vmul.f32 %v3950, %v6536
        %v7049 = vmul.f32 %v3999, %v6537
        %v7050 = vmul.f32 %v4048, %v6538
        %v7051 = vmul.f32 %v4097, %v6539
        %v7052 = vmul.f32 %v4146, %v6540
        %v7053 = vmul.f32 %v4195, %v6541
        %v7054 = vmul.f32 %v4244, %v6542
        %v7055 = vmul.f32 %v4293, %v6543
        %v7056 = vmul.f32 %v4342, %v6544
        %v7057 = vmul.f32 %v4391, %v6545
        %v7058 = vmul.f32 %v4440, %v6546
        %v7059 = vmul.f32 %v4489, %v6547
        %v7060 = vmul.f32 %v4538, %v6548
        %v7061 = vmul.f32 %v4587, %v6549
        %v7062 = vmul.f32 %v4636, %v6550
        %v7063 = vmul.f32 %v4685, %v6551
        %v7064 = vmul.f32 %v4734, %v6552
        %v7065 = vmul.f32 %v4783, %v6553
        %v7066 = vmul.f32 %v4832, %v6554
        %v7067 = vmul.f32 %v4881, %v6555
        %v7068 = vmul.f32 %v3364, %v6556
        %v7069 = vmul.f32 %v3413, %v6557
        %v7070 = vmul.f32 %v3462, %v6558
        %v7071 = vmul.f32 %v3511, %v6559
        %v7072 = vmul.f32 %v3560, %v6560
        %v7073 = vmul.f32 %v3609, %v6561
        %v7074 = vmul.f32 %v3658, %v6562
        %v7075 = vmul.f32 %v3707, %v6563
        %v7076 = vmul.f32 %v3756, %v6564
        %v7077 = vmul.f32 %v3805, %v6565
        %v7078 = vmul.f32 %v3854, %v6566
        %v7079 = vmul.f32 %v3903, %v6567
        %v7080 = vmul.f32 %v3952, %v6568
        %v7081 = vmul.f32 %v4001, %v6569
        %v7082 = vmul.f32 %v4050, %v6570
        %v7083 = vmul.f32 %v4099, %v6571
        %v7084 = vmul.f32 %v4148, %v6572
        %v7085 = vmul.f32 %v4197, %v6573
        %v7086 = vmul.f32 %v4246, %v6574
        %v7087 = vmul.f32 %v4295, %v6575
        %v7088 = vmul.f32 %v4344, %v6576
        %v7089 = vmul.f32 %v4393, %v6577
        %v7090 = vmul.f32 %v4442, %v6578
        %v7091 = vmul.f32 %v4491, %v6579
        %v7092 = vmul.f32 %v4540, %v6580
        %v7093 = vmul.f32 %v4589, %v6581
        %v7094 = vmul.f32 %v4638, %v6582
        %v7095 = vmul.f32 %v4687, %v6583
        %v7096 = vmul.f32 %v4736, %v6584
        %v7097 = vmul.f32 %v4785, %v6585
        %v7098 = vmul.f32 %v4834, %v6586
        %v7099 = vmul.f32 %v4883, %v6587
        %v7100 = vmul.f32 %v3367, %v6588
        %v7101 = vmul.f32 %v3416, %v6589
        %v7102 = vmul.f32 %v3465, %v6590
        %v7103 = vmul.f32 %v3514, %v6591
        %v7104 = vmul.f32 %v3563, %v6592
        %v7105 = vmul.f32 %v3612, %v6593
        %v7106 = vmul.f32 %v3661, %v6594
        %v7107 = vmul.f32 %v3710, %v6595
        %v7108 = vmul.f32 %v3759, %v6596
        %v7109 = vmul.f32 %v3808, %v6597
        %v7110 = vmul.f32 %v3857, %v6598
        %v7111 = vmul.f32 %v3906, %v6599
        %v7112 = vmul.f32 %v3955, %v6600
        %v7113 = vmul.f32 %v4004, %v6601
        %v7114 = vmul.f32 %v4053, %v6602
        %v7115 = vmul.f32 %v4102, %v6603
        %v7116 = vmul.f32 %v4151, %v6604
        %v7117 = vmul.f32 %v4200, %v6605
        %v7118 = vmul.f32 %v4249, %v6606
        %v7119 = vmul.f32 %v4298, %v6607
        %v7120 = vmul.f32 %v4347, %v6608
        %v7121 = vmul.f32 %v4396, %v6609
        %v7122 = vmul.f32 %v4445, %v6610
        %v7123 = vmul.f32 %v4494, %v6611
        %v7124 = vmul.f32 %v4543, %v6612
        %v7125 = vmul.f32 %v4592, %v6613
        %v7126 = vmul.f32 %v4641, %v6614
        %v7127 = vmul.f32 %v4690, %v6615
        %v7128 = vmul.f32 %v4739, %v6616
        %v7129 = vmul.f32 %v4788, %v6617
        %v7130 = vmul.f32 %v4837, %v6618
        %v7131 = vmul.f32 %v4886, %v6619
        %v7132 = vmul.f32 %v3369, %v6620
        %v7133 = vmul.f32 %v3418, %v6621
        %v7134 = vmul.f32 %v3467, %v6622
        %v7135 = vmul.f32 %v3516, %v6623
        %v7136 = vmul.f32 %v3565, %v6624
        %v7137 = vmul.f32 %v3614, %v6625
        %v7138 = vmul.f32 %v3663, %v6626
        %v7139 = vmul.f32 %v3712, %v6627
        %v7140 = vmul.f32 %v3761, %v6628
        %v7141 = vmul.f32 %v3810, %v6629
        %v7142 = vmul.f32 %v3859, %v6630
        %v7143 = vmul.f32 %v3908, %v6631
        %v7144 = vmul.f32 %v3957, %v6632
        %v7145 = vmul.f32 %v4006, %v6633
        %v7146 = vmul.f32 %v4055, %v6634
        %v7147 = vmul.f32 %v4104, %v6635
        %v7148 = vmul.f32 %v4153, %v6636
        %v7149 = vmul.f32 %v4202, %v6637
        %v7150 = vmul.f32 %v4251, %v6638
        %v7151 = vmul.f32 %v4300, %v6639
        %v7152 = vmul.f32 %v4349, %v6640
        %v7153 = vmul.f32 %v4398, %v6641
        %v7154 = vmul.f32 %v4447, %v6642
        %v7155 = vmul.f32 %v4496, %v6643
        %v7156 = vmul.f32 %v4545, %v6644
        %v7157 = vmul.f32 %v4594, %v6645
        %v7158 = vmul.f32 %v4643, %v6646
        %v7159 = vmul.f32 %v4692, %v6647
        %v7160 = vmul.f32 %v4741, %v6648
        %v7161 = vmul.f32 %v4790, %v6649
        %v7162 = vmul.f32 %v4839, %v6650
        %v7163 = vmul.f32 %v4888, %v6651
        %v7164 = vmul.f32 %v3372, %v6652
        %v7165 = vmul.f32 %v3421, %v6653
        %v7166 = vmul.f32 %v3470, %v6654
        %v7167 = vmul.f32 %v3519, %v6655
        %v7168 = vmul.f32 %v3568, %v6656
        %v7169 = vmul.f32 %v3617, %v6657
        %v7170 = vmul.f32 %v3666, %v6658
        %v7171 = vmul.f32 %v3715, %v6659
        %v7172 = vmul.f32 %v3764, %v6660
        %v7173 = vmul.f32 %v3813, %v6661
        %v7174 = vmul.f32 %v3862, %v6662
        %v7175 = vmul.f32 %v3911, %v6663
        %v7176 = vmul.f32 %v3960, %v6664
        %v7177 = vmul.f32 %v4009, %v6665
        %v7178 = vmul.f32 %v4058, %v6666
        %v7179 = vmul.f32 %v4107, %v6667
        %v7180 = vmul.f32 %v4156, %v6668
        %v7181 = vmul.f32 %v4205, %v6669
        %v7182 = vmul.f32 %v4254, %v6670
        %v7183 = vmul.f32 %v4303, %v6671
        %v7184 = vmul.f32 %v4352, %v6672
        %v7185 = vmul.f32 %v4401, %v6673
        %v7186 = vmul.f32 %v4450, %v6674
        %v7187 = vmul.f32 %v4499, %v6675
        %v7188 = vmul.f32 %v4548, %v6676
        %v7189 = vmul.f32 %v4597, %v6677
        %v7190 = vmul.f32 %v4646, %v6678
        %v7191 = vmul.f32 %v4695, %v6679
        %v7192 = vmul.f32 %v4744, %v6680
        %v7193 = vmul.f32 %v4793, %v6681
        %v7194 = vmul.f32 %v4842, %v6682
        %v7195 = vmul.f32 %v4891, %v6683
        %v7196 = vmul.f32 %v3374, %v6684
        %v7197 = vmul.f32 %v3423, %v6685
        %v7198 = vmul.f32 %v3472, %v6686
        %v7199 = vmul.f32 %v3521, %v6687
        %v7200 = vmul.f32 %v3570, %v6688
        %v7201 = vmul.f32 %v3619, %v6689
        %v7202 = vmul.f32 %v3668, %v6690
        %v7203 = vmul.f32 %v3717, %v6691
        %v7204 = vmul.f32 %v3766, %v6692
        %v7205 = vmul.f32 %v3815, %v6693
        %v7206 = vmul.f32 %v3864, %v6694
        %v7207 = vmul.f32 %v3913, %v6695
        %v7208 = vmul.f32 %v3962, %v6696
        %v7209 = vmul.f32 %v4011, %v6697
        %v7210 = vmul.f32 %v4060, %v6698
        %v7211 = vmul.f32 %v4109, %v6699
        %v7212 = vmul.f32 %v4158, %v6700
        %v7213 = vmul.f32 %v4207, %v6701
        %v7214 = vmul.f32 %v4256, %v6702
        %v7215 = vmul.f32 %v4305, %v6703
        %v7216 = vmul.f32 %v4354, %v6704
        %v7217 = vmul.f32 %v4403, %v6705
        %v7218 = vmul.f32 %v4452, %v6706
        %v7219 = vmul.f32 %v4501, %v6707
        %v7220 = vmul.f32 %v4550, %v6708
        %v7221 = vmul.f32 %v4599, %v6709
        %v7222 = vmul.f32 %v4648, %v6710
        %v7223 = vmul.f32 %v4697, %v6711
        %v7224 = vmul.f32 %v4746, %v6712
        %v7225 = vmul.f32 %v4795, %v6713
        %v7226 = vmul.f32 %v4844, %v6714
        %v7227 = vmul.f32 %v4893, %v6715
        %v7228 = vmul.f32 %v3377, %v6716
        %v7229 = vmul.f32 %v3426, %v6717
        %v7230 = vmul.f32 %v3475, %v6718
        %v7231 = vmul.f32 %v3524, %v6719
        %v7232 = vmul.f32 %v3573, %v6720
        %v7233 = vmul.f32 %v3622, %v6721
        %v7234 = vmul.f32 %v3671, %v6722
        %v7235 = vmul.f32 %v3720, %v6723
        %v7236 = vmul.f32 %v3769, %v6724
        %v7237 = vmul.f32 %v3818, %v6725
        %v7238 = vmul.f32 %v3867, %v6726
        %v7239 = vmul.f32 %v3916, %v6727
        %v7240 = vmul.f32 %v3965, %v6728
        %v7241 = vmul.f32 %v4014, %v6729
        %v7242 = vmul.f32 %v4063, %v6730
        %v7243 = vmul.f32 %v4112, %v6731
        %v7244 = vmul.f32 %v4161, %v6732
        %v7245 = vmul.f32 %v4210, %v6733
        %v7246 = vmul.f32 %v4259, %v6734
        %v7247 = vmul.f32 %v4308, %v6735
        %v7248 = vmul.f32 %v4357, %v6736
        %v7249 = vmul.f32 %v4406, %v6737
        %v7250 = vmul.f32 %v4455, %v6738
        %v7251 = vmul.f32 %v4504, %v6739
        %v7252 = vmul.f32 %v4553, %v6740
        %v7253 = vmul.f32 %v4602, %v6741
        %v7254 = vmul.f32 %v4651, %v6742
        %v7255 = vmul.f32 %v4700, %v6743
        %v7256 = vmul.f32 %v4749, %v6744
        %v7257 = vmul.f32 %v4798, %v6745
        %v7258 = vmul.f32 %v4847, %v6746
        %v7259 = vmul.f32 %v4896, %v6747
        %v7260 = vmul.f32 %v3379, %v6748
        %v7261 = vmul.f32 %v3428, %v6749
        %v7262 = vmul.f32 %v3477, %v6750
        %v7263 = vmul.f32 %v3526, %v6751
        %v7264 = vmul.f32 %v3575, %v6752
        %v7265 = vmul.f32 %v3624, %v6753
        %v7266 = vmul.f32 %v3673, %v6754
        %v7267 = vmul.f32 %v3722, %v6755
        %v7268 = vmul.f32 %v3771, %v6756
        %v7269 = vmul.f32 %v3820, %v6757
        %v7270 = vmul.f32 %v3869, %v6758
        %v7271 = vmul.f32 %v3918, %v6759
        %v7272 = vmul.f32 %v3967, %v6760
        %v7273 = vmul.f32 %v4016, %v6761
        %v7274 = vmul.f32 %v4065, %v6762
        %v7275 = vmul.f32 %v4114, %v6763
        %v7276 = vmul.f32 %v4163, %v6764
        %v7277 = vmul.f32 %v4212, %v6765
        %v7278 = vmul.f32 %v4261, %v6766
        %v7279 = vmul.f32 %v4310, %v6767
        %v7280 = vmul.f32 %v4359, %v6768
        %v7281 = vmul.f32 %v4408, %v6769
        %v7282 = vmul.f32 %v4457, %v6770
        %v7283 = vmul.f32 %v4506, %v6771
        %v7284 = vmul.f32 %v4555, %v6772
        %v7285 = vmul.f32 %v4604, %v6773
        %v7286 = vmul.f32 %v4653, %v6774
        %v7287 = vmul.f32 %v4702, %v6775
        %v7288 = vmul.f32 %v4751, %v6776
        %v7289 = vmul.f32 %v4800, %v6777
        %v7290 = vmul.f32 %v4849, %v6778
        %v7291 = vmul.f32 %v4898, %v6779
        %v7292 = vmul.f32 %v3382, %v6780
        %v7293 = vmul.f32 %v3431, %v6781
        %v7294 = vmul.f32 %v3480, %v6782
        %v7295 = vmul.f32 %v3529, %v6783
        %v7296 = vmul.f32 %v3578, %v6784
        %v7297 = vmul.f32 %v3627, %v6785
        %v7298 = vmul.f32 %v3676, %v6786
        %v7299 = vmul.f32 %v3725, %v6787
        %v7300 = vmul.f32 %v3774, %v6788
        %v7301 = vmul.f32 %v3823, %v6789
        %v7302 = vmul.f32 %v3872, %v6790
        %v7303 = vmul.f32 %v3921, %v6791
        %v7304 = vmul.f32 %v3970, %v6792
        %v7305 = vmul.f32 %v4019, %v6793
        %v7306 = vmul.f32 %v4068, %v6794
        %v7307 = vmul.f32 %v4117, %v6795
        %v7308 = vmul.f32 %v4166, %v6796
        %v7309 = vmul.f32 %v4215, %v6797
        %v7310 = vmul.f32 %v4264, %v6798
        %v7311 = vmul.f32 %v4313, %v6799
        %v7312 = vmul.f32 %v4362, %v6800
        %v7313 = vmul.f32 %v4411, %v6801
        %v7314 = vmul.f32 %v4460, %v6802
        %v7315 = vmul.f32 %v4509, %v6803
        %v7316 = vmul.f32 %v4558, %v6804
        %v7317 = vmul.f32 %v4607, %v6805
        %v7318 = vmul.f32 %v4656, %v6806
        %v7319 = vmul.f32 %v4705, %v6807
        %v7320 = vmul.f32 %v4754, %v6808
        %v7321 = vmul.f32 %v4803, %v6809
        %v7322 = vmul.f32 %v4852, %v6810
        %v7323 = vmul.f32 %v4901, %v6811
        %v7324 = vmul.f32 %v3384, %v6812
        %v7325 = vmul.f32 %v3433, %v6813
        %v7326 = vmul.f32 %v3482, %v6814
        %v7327 = vmul.f32 %v3531, %v6815
        %v7328 = vmul.f32 %v3580, %v6816
        %v7329 = vmul.f32 %v3629, %v6817
        %v7330 = vmul.f32 %v3678, %v6818
        %v7331 = vmul.f32 %v3727, %v6819
        %v7332 = vmul.f32 %v3776, %v6820
        %v7333 = vmul.f32 %v3825, %v6821
        %v7334 = vmul.f32 %v3874, %v6822
        %v7335 = vmul.f32 %v3923, %v6823
        %v7336 = vmul.f32 %v3972, %v6824
        %v7337 = vmul.f32 %v4021, %v6825
        %v7338 = vmul.f32 %v4070, %v6826
        %v7339 = vmul.f32 %v4119, %v6827
        %v7340 = vmul.f32 %v4168, %v6828
        %v7341 = vmul.f32 %v4217, %v6829
        %v7342 = vmul.f32 %v4266, %v6830
        %v7343 = vmul.f32 %v4315, %v6831
        %v7344 = vmul.f32 %v4364, %v6832
        %v7345 = vmul.f32 %v4413, %v6833
        %v7346 = vmul.f32 %v4462, %v6834
        %v7347 = vmul.f32 %v4511, %v6835
        %v7348 = vmul.f32 %v4560, %v6836
        %v7349 = vmul.f32 %v4609, %v6837
        %v7350 = vmul.f32 %v4658, %v6838
        %v7351 = vmul.f32 %v4707, %v6839
        %v7352 = vmul.f32 %v4756, %v6840
        %v7353 = vmul.f32 %v4805, %v6841
        %v7354 = vmul.f32 %v4854, %v6842
        %v7355 = vmul.f32 %v4903, %v6843
        %v7356 = vmul.f32 %v3387, %v6844
        %v7357 = vmul.f32 %v3436, %v6845
        %v7358 = vmul.f32 %v3485, %v6846
        %v7359 = vmul.f32 %v3534, %v6847
        %v7360 = vmul.f32 %v3583, %v6848
        %v7361 = vmul.f32 %v3632, %v6849
        %v7362 = vmul.f32 %v3681, %v6850
        %v7363 = vmul.f32 %v3730, %v6851
        %v7364 = vmul.f32 %v3779, %v6852
        %v7365 = vmul.f32 %v3828, %v6853
        %v7366 = vmul.f32 %v3877, %v6854
        %v7367 = vmul.f32 %v3926, %v6855
        %v7368 = vmul.f32 %v3975, %v6856
        %v7369 = vmul.f32 %v4024, %v6857
        %v7370 = vmul.f32 %v4073, %v6858
        %v7371 = vmul.f32 %v4122, %v6859
        %v7372 = vmul.f32 %v4171, %v6860
        %v7373 = vmul.f32 %v4220, %v6861
        %v7374 = vmul.f32 %v4269, %v6862
        %v7375 = vmul.f32 %v4318, %v6863
        %v7376 = vmul.f32 %v4367, %v6864
        %v7377 = vmul.f32 %v4416, %v6865
        %v7378 = vmul.f32 %v4465, %v6866
        %v7379 = vmul.f32 %v4514, %v6867
        %v7380 = vmul.f32 %v4563, %v6868
        %v7381 = vmul.f32 %v4612, %v6869
        %v7382 = vmul.f32 %v4661, %v6870
        %v7383 = vmul.f32 %v4710, %v6871
        %v7384 = vmul.f32 %v4759, %v6872
        %v7385 = vmul.f32 %v4808, %v6873
        %v7386 = vmul.f32 %v4857, %v6874
        %v7387 = vmul.f32 %v4906, %v6875
        %v7388 = vmul.f32 %v3389, %v6876
        %v7389 = vmul.f32 %v3438, %v6877
        %v7390 = vmul.f32 %v3487, %v6878
        %v7391 = vmul.f32 %v3536, %v6879
        %v7392 = vmul.f32 %v3585, %v6880
        %v7393 = vmul.f32 %v3634, %v6881
        %v7394 = vmul.f32 %v3683, %v6882
        %v7395 = vmul.f32 %v3732, %v6883
        %v7396 = vmul.f32 %v3781, %v6884
        %v7397 = vmul.f32 %v3830, %v6885
        %v7398 = vmul.f32 %v3879, %v6886
        %v7399 = vmul.f32 %v3928, %v6887
        %v7400 = vmul.f32 %v3977, %v6888
        %v7401 = vmul.f32 %v4026, %v6889
        %v7402 = vmul.f32 %v4075, %v6890
        %v7403 = vmul.f32 %v4124, %v6891
        %v7404 = vmul.f32 %v4173, %v6892
        %v7405 = vmul.f32 %v4222, %v6893
        %v7406 = vmul.f32 %v4271, %v6894
        %v7407 = vmul.f32 %v4320, %v6895
        %v7408 = vmul.f32 %v4369, %v6896
        %v7409 = vmul.f32 %v4418, %v6897
        %v7410 = vmul.f32 %v4467, %v6898
        %v7411 = vmul.f32 %v4516, %v6899
        %v7412 = vmul.f32 %v4565, %v6900
        %v7413 = vmul.f32 %v4614, %v6901
        %v7414 = vmul.f32 %v4663, %v6902
        %v7415 = vmul.f32 %v4712, %v6903
        %v7416 = vmul.f32 %v4761, %v6904
        %v7417 = vmul.f32 %v4810, %v6905
        %v7418 = vmul.f32 %v4859, %v6906
        %v7419 = vmul.f32 %v4908, %v6907
        %v7420 = vmul.f32 %v3392, %v6908
        %v7421 = vmul.f32 %v3441, %v6909
        %v7422 = vmul.f32 %v3490, %v6910
        %v7423 = vmul.f32 %v3539, %v6911
        %v7424 = vmul.f32 %v3588, %v6912
        %v7425 = vmul.f32 %v3637, %v6913
        %v7426 = vmul.f32 %v3686, %v6914
        %v7427 = vmul.f32 %v3735, %v6915
        %v7428 = vmul.f32 %v3784, %v6916
        %v7429 = vmul.f32 %v3833, %v6917
        %v7430 = vmul.f32 %v3882, %v6918
        %v7431 = vmul.f32 %v3931, %v6919
        %v7432 = vmul.f32 %v3980, %v6920
        %v7433 = vmul.f32 %v4029, %v6921
        %v7434 = vmul.f32 %v4078, %v6922
        %v7435 = vmul.f32 %v4127, %v6923
        %v7436 = vmul.f32 %v4176, %v6924
        %v7437 = vmul.f32 %v4225, %v6925
        %v7438 = vmul.f32 %v4274, %v6926
        %v7439 = vmul.f32 %v4323, %v6927
        %v7440 = vmul.f32 %v4372, %v6928
        %v7441 = vmul.f32 %v4421, %v6929
        %v7442 = vmul.f32 %v4470, %v6930
        %v7443 = vmul.f32 %v4519, %v6931
        %v7444 = vmul.f32 %v4568, %v6932
        %v7445 = vmul.f32 %v4617, %v6933
        %v7446 = vmul.f32 %v4666, %v6934
        %v7447 = vmul.f32 %v4715, %v6935
        %v7448 = vmul.f32 %v4764, %v6936
        %v7449 = vmul.f32 %v4813, %v6937
        %v7450 = vmul.f32 %v4862, %v6938
        %v7451 = vmul.f32 %v4911, %v6939
        %v7452 = vmul.f32 %v3394, %v6940
        %v7453 = vmul.f32 %v3443, %v6941
        %v7454 = vmul.f32 %v3492, %v6942
        %v7455 = vmul.f32 %v3541, %v6943
        %v7456 = vmul.f32 %v3590, %v6944
        %v7457 = vmul.f32 %v3639, %v6945
        %v7458 = vmul.f32 %v3688, %v6946
        %v7459 = vmul.f32 %v3737, %v6947
        %v7460 = vmul.f32 %v3786, %v6948
        %v7461 = vmul.f32 %v3835, %v6949
        %v7462 = vmul.f32 %v3884, %v6950
        %v7463 = vmul.f32 %v3933, %v6951
        %v7464 = vmul.f32 %v3982, %v6952
        %v7465 = vmul.f32 %v4031, %v6953
        %v7466 = vmul.f32 %v4080, %v6954
        %v7467 = vmul.f32 %v4129, %v6955
        %v7468 = vmul.f32 %v4178, %v6956
        %v7469 = vmul.f32 %v4227, %v6957
        %v7470 = vmul.f32 %v4276, %v6958
        %v7471 = vmul.f32 %v4325, %v6959
        %v7472 = vmul.f32 %v4374, %v6960
        %v7473 = vmul.f32 %v4423, %v6961
        %v7474 = vmul.f32 %v4472, %v6962
        %v7475 = vmul.f32 %v4521, %v6963
        %v7476 = vmul.f32 %v4570, %v6964
        %v7477 = vmul.f32 %v4619, %v6965
        %v7478 = vmul.f32 %v4668, %v6966
        %v7479 = vmul.f32 %v4717, %v6967
        %v7480 = vmul.f32 %v4766, %v6968
        %v7481 = vmul.f32 %v4815, %v6969
        %v7482 = vmul.f32 %v4864, %v6970
        %v7483 = vmul.f32 %v4913, %v6971
        %v7484 = vmul.f32 %v3397, %v6972
        %v7485 = vmul.f32 %v3446, %v6973
        %v7486 = vmul.f32 %v3495, %v6974
        %v7487 = vmul.f32 %v3544, %v6975
        %v7488 = vmul.f32 %v3593, %v6976
        %v7489 = vmul.f32 %v3642, %v6977
        %v7490 = vmul.f32 %v3691, %v6978
        %v7491 = vmul.f32 %v3740, %v6979
        %v7492 = vmul.f32 %v3789, %v6980
        %v7493 = vmul.f32 %v3838, %v6981
        %v7494 = vmul.f32 %v3887, %v6982
        %v7495 = vmul.f32 %v3936, %v6983
        %v7496 = vmul.f32 %v3985, %v6984
        %v7497 = vmul.f32 %v4034, %v6985
        %v7498 = vmul.f32 %v4083, %v6986
        %v7499 = vmul.f32 %v4132, %v6987
        %v7500 = vmul.f32 %v4181, %v6988
        %v7501 = vmul.f32 %v4230, %v6989
        %v7502 = vmul.f32 %v4279, %v6990
        %v7503 = vmul.f32 %v4328, %v6991
        %v7504 = vmul.f32 %v4377, %v6992
        %v7505 = vmul.f32 %v4426, %v6993
        %v7506 = vmul.f32 %v4475, %v6994
        %v7507 = vmul.f32 %v4524, %v6995
        %v7508 = vmul.f32 %v4573, %v6996
        %v7509 = vmul.f32 %v4622, %v6997
        %v7510 = vmul.f32 %v4671, %v6998
        %v7511 = vmul.f32 %v4720, %v6999
        %v7512 = vmul.f32 %v4769, %v7000
        %v7513 = vmul.f32 %v4818, %v7001
        %v7514 = vmul.f32 %v4867, %v7002
        %v7515 = vmul.f32 %v4916, %v7003
        %v7516 = vmul.f32 %v3399, %v7004
        %v7517 = vmul.f32 %v3448, %v7005
        %v7518 = vmul.f32 %v3497, %v7006
        %v7519 = vmul.f32 %v3546, %v7007
        %v7520 = vmul.f32 %v3595, %v7008
        %v7521 = vmul.f32 %v3644, %v7009
        %v7522 = vmul.f32 %v3693, %v7010
        %v7523 = vmul.f32 %v3742, %v7011
        %v7524 = vmul.f32 %v3791, %v7012
        %v7525 = vmul.f32 %v3840, %v7013
        %v7526 = vmul.f32 %v3889, %v7014
        %v7527 = vmul.f32 %v3938, %v7015
        %v7528 = vmul.f32 %v3987, %v7016
        %v7529 = vmul.f32 %v4036, %v7017
        %v7530 = vmul.f32 %v4085, %v7018
        %v7531 = vmul.f32 %v4134, %v7019
        %v7532 = vmul.f32 %v4183, %v7020
        %v7533 = vmul.f32 %v4232, %v7021
        %v7534 = vmul.f32 %v4281, %v7022
        %v7535 = vmul.f32 %v4330, %v7023
        %v7536 = vmul.f32 %v4379, %v7024
        %v7537 = vmul.f32 %v4428, %v7025
        %v7538 = vmul.f32 %v4477, %v7026
        %v7539 = vmul.f32 %v4526, %v7027
        %v7540 = vmul.f32 %v4575, %v7028
        %v7541 = vmul.f32 %v4624, %v7029
        %v7542 = vmul.f32 %v4673, %v7030
        %v7543 = vmul.f32 %v4722, %v7031
        %v7544 = vmul.f32 %v4771, %v7032
        %v7545 = vmul.f32 %v4820, %v7033
        %v7546 = vmul.f32 %v4869, %v7034
        %v7547 = vmul.f32 %v4918, %v7035
        %v7548 = vadd.f32 %v7036, %v7068
        %v7549 = vadd.f32 %v7548, %v7100
        %v7550 = vadd.f32 %v7549, %v7132
        %v7551 = vadd.f32 %v7550, %v7164
        %v7552 = vadd.f32 %v7551, %v7196
        %v7553 = vadd.f32 %v7552, %v7228
        %v7554 = vadd.f32 %v7553, %v7260
        %v7555 = vadd.f32 %v7554, %v7292
        %v7556 = vadd.f32 %v7555, %v7324
        %v7557 = vadd.f32 %v7556, %v7356
        %v7558 = vadd.f32 %v7557, %v7388
        %v7559 = vadd.f32 %v7558, %v7420
        %v7560 = vadd.f32 %v7559, %v7452
        %v7561 = vadd.f32 %v7560, %v7484
        %v7562 = vadd.f32 %v7561, %v7516
        %v7563 = vrot.slane %v7562, 4
        %v7564 = vadd.f32 %v7562, %v7563
        %v7565 = vrot.slane %v7564, 2
        %v7566 = vadd.f32 %v7564, %v7565
        %v7567 = vrot.slane %v7566, 1
        %v7568 = vadd.f32 %v7566, %v7567
        %v7569 = vadd.f32 %v7037, %v7069
        %v7570 = vadd.f32 %v7569, %v7101
        %v7571 = vadd.f32 %v7570, %v7133
        %v7572 = vadd.f32 %v7571, %v7165
        %v7573 = vadd.f32 %v7572, %v7197
        %v7574 = vadd.f32 %v7573, %v7229
        %v7575 = vadd.f32 %v7574, %v7261
        %v7576 = vadd.f32 %v7575, %v7293
        %v7577 = vadd.f32 %v7576, %v7325
        %v7578 = vadd.f32 %v7577, %v7357
        %v7579 = vadd.f32 %v7578, %v7389
        %v7580 = vadd.f32 %v7579, %v7421
        %v7581 = vadd.f32 %v7580, %v7453
        %v7582 = vadd.f32 %v7581, %v7485
        %v7583 = vadd.f32 %v7582, %v7517
        %v7584 = vrot.slane %v7583, 4
        %v7585 = vadd.f32 %v7583, %v7584
        %v7586 = vrot.slane %v7585, 2
        %v7587 = vadd.f32 %v7585, %v7586
        %v7588 = vrot.slane %v7587, 1
        %v7589 = vadd.f32 %v7587, %v7588
        %v7590 = vadd.f32 %v7038, %v7070
        %v7591 = vadd.f32 %v7590, %v7102
        %v7592 = vadd.f32 %v7591, %v7134
        %v7593 = vadd.f32 %v7592, %v7166
        %v7594 = vadd.f32 %v7593, %v7198
        %v7595 = vadd.f32 %v7594, %v7230
        %v7596 = vadd.f32 %v7595, %v7262
        %v7597 = vadd.f32 %v7596, %v7294
        %v7598 = vadd.f32 %v7597, %v7326
        %v7599 = vadd.f32 %v7598, %v7358
        %v7600 = vadd.f32 %v7599, %v7390
        %v7601 = vadd.f32 %v7600, %v7422
        %v7602 = vadd.f32 %v7601, %v7454
        %v7603 = vadd.f32 %v7602, %v7486
        %v7604 = vadd.f32 %v7603, %v7518
        %v7605 = vrot.slane %v7604, 4
        %v7606 = vadd.f32 %v7604, %v7605
        %v7607 = vrot.slane %v7606, 2
        %v7608 = vadd.f32 %v7606, %v7607
        %v7609 = vrot.slane %v7608, 1
        %v7610 = vadd.f32 %v7608, %v7609
        %v7611 = vadd.f32 %v7039, %v7071
        %v7612 = vadd.f32 %v7611, %v7103
        %v7613 = vadd.f32 %v7612, %v7135
        %v7614 = vadd.f32 %v7613, %v7167
        %v7615 = vadd.f32 %v7614, %v7199
        %v7616 = vadd.f32 %v7615, %v7231
        %v7617 = vadd.f32 %v7616, %v7263
        %v7618 = vadd.f32 %v7617, %v7295
        %v7619 = vadd.f32 %v7618, %v7327
        %v7620 = vadd.f32 %v7619, %v7359
        %v7621 = vadd.f32 %v7620, %v7391
        %v7622 = vadd.f32 %v7621, %v7423
        %v7623 = vadd.f32 %v7622, %v7455
        %v7624 = vadd.f32 %v7623, %v7487
        %v7625 = vadd.f32 %v7624, %v7519
        %v7626 = vrot.slane %v7625, 4
        %v7627 = vadd.f32 %v7625, %v7626
        %v7628 = vrot.slane %v7627, 2
        %v7629 = vadd.f32 %v7627, %v7628
        %v7630 = vrot.slane %v7629, 1
        %v7631 = vadd.f32 %v7629, %v7630
        %v7632 = vadd.f32 %v7040, %v7072
        %v7633 = vadd.f32 %v7632, %v7104
        %v7634 = vadd.f32 %v7633, %v7136
        %v7635 = vadd.f32 %v7634, %v7168
        %v7636 = vadd.f32 %v7635, %v7200
        %v7637 = vadd.f32 %v7636, %v7232
        %v7638 = vadd.f32 %v7637, %v7264
        %v7639 = vadd.f32 %v7638, %v7296
        %v7640 = vadd.f32 %v7639, %v7328
        %v7641 = vadd.f32 %v7640, %v7360
        %v7642 = vadd.f32 %v7641, %v7392
        %v7643 = vadd.f32 %v7642, %v7424
        %v7644 = vadd.f32 %v7643, %v7456
        %v7645 = vadd.f32 %v7644, %v7488
        %v7646 = vadd.f32 %v7645, %v7520
        %v7647 = vrot.slane %v7646, 4
        %v7648 = vadd.f32 %v7646, %v7647
        %v7649 = vrot.slane %v7648, 2
        %v7650 = vadd.f32 %v7648, %v7649
        %v7651 = vrot.slane %v7650, 1
        %v7652 = vadd.f32 %v7650, %v7651
        %v7653 = vadd.f32 %v7041, %v7073
        %v7654 = vadd.f32 %v7653, %v7105
        %v7655 = vadd.f32 %v7654, %v7137
        %v7656 = vadd.f32 %v7655, %v7169
        %v7657 = vadd.f32 %v7656, %v7201
        %v7658 = vadd.f32 %v7657, %v7233
        %v7659 = vadd.f32 %v7658, %v7265
        %v7660 = vadd.f32 %v7659, %v7297
        %v7661 = vadd.f32 %v7660, %v7329
        %v7662 = vadd.f32 %v7661, %v7361
        %v7663 = vadd.f32 %v7662, %v7393
        %v7664 = vadd.f32 %v7663, %v7425
        %v7665 = vadd.f32 %v7664, %v7457
        %v7666 = vadd.f32 %v7665, %v7489
        %v7667 = vadd.f32 %v7666, %v7521
        %v7668 = vrot.slane %v7667, 4
        %v7669 = vadd.f32 %v7667, %v7668
        %v7670 = vrot.slane %v7669, 2
        %v7671 = vadd.f32 %v7669, %v7670
        %v7672 = vrot.slane %v7671, 1
        %v7673 = vadd.f32 %v7671, %v7672
        %v7674 = vadd.f32 %v7042, %v7074
        %v7675 = vadd.f32 %v7674, %v7106
        %v7676 = vadd.f32 %v7675, %v7138
        %v7677 = vadd.f32 %v7676, %v7170
        %v7678 = vadd.f32 %v7677, %v7202
        %v7679 = vadd.f32 %v7678, %v7234
        %v7680 = vadd.f32 %v7679, %v7266
        %v7681 = vadd.f32 %v7680, %v7298
        %v7682 = vadd.f32 %v7681, %v7330
        %v7683 = vadd.f32 %v7682, %v7362
        %v7684 = vadd.f32 %v7683, %v7394
        %v7685 = vadd.f32 %v7684, %v7426
        %v7686 = vadd.f32 %v7685, %v7458
        %v7687 = vadd.f32 %v7686, %v7490
        %v7688 = vadd.f32 %v7687, %v7522
        %v7689 = vrot.slane %v7688, 4
        %v7690 = vadd.f32 %v7688, %v7689
        %v7691 = vrot.slane %v7690, 2
        %v7692 = vadd.f32 %v7690, %v7691
        %v7693 = vrot.slane %v7692, 1
        %v7694 = vadd.f32 %v7692, %v7693
        %v7695 = vadd.f32 %v7043, %v7075
        %v7696 = vadd.f32 %v7695, %v7107
        %v7697 = vadd.f32 %v7696, %v7139
        %v7698 = vadd.f32 %v7697, %v7171
        %v7699 = vadd.f32 %v7698, %v7203
        %v7700 = vadd.f32 %v7699, %v7235
        %v7701 = vadd.f32 %v7700, %v7267
        %v7702 = vadd.f32 %v7701, %v7299
        %v7703 = vadd.f32 %v7702, %v7331
        %v7704 = vadd.f32 %v7703, %v7363
        %v7705 = vadd.f32 %v7704, %v7395
        %v7706 = vadd.f32 %v7705, %v7427
        %v7707 = vadd.f32 %v7706, %v7459
        %v7708 = vadd.f32 %v7707, %v7491
        %v7709 = vadd.f32 %v7708, %v7523
        %v7710 = vrot.slane %v7709, 4
        %v7711 = vadd.f32 %v7709, %v7710
        %v7712 = vrot.slane %v7711, 2
        %v7713 = vadd.f32 %v7711, %v7712
        %v7714 = vrot.slane %v7713, 1
        %v7715 = vadd.f32 %v7713, %v7714
        %v7716 = vadd.f32 %v7044, %v7076
        %v7717 = vadd.f32 %v7716, %v7108
        %v7718 = vadd.f32 %v7717, %v7140
        %v7719 = vadd.f32 %v7718, %v7172
        %v7720 = vadd.f32 %v7719, %v7204
        %v7721 = vadd.f32 %v7720, %v7236
        %v7722 = vadd.f32 %v7721, %v7268
        %v7723 = vadd.f32 %v7722, %v7300
        %v7724 = vadd.f32 %v7723, %v7332
        %v7725 = vadd.f32 %v7724, %v7364
        %v7726 = vadd.f32 %v7725, %v7396
        %v7727 = vadd.f32 %v7726, %v7428
        %v7728 = vadd.f32 %v7727, %v7460
        %v7729 = vadd.f32 %v7728, %v7492
        %v7730 = vadd.f32 %v7729, %v7524
        %v7731 = vrot.slane %v7730, 4
        %v7732 = vadd.f32 %v7730, %v7731
        %v7733 = vrot.slane %v7732, 2
        %v7734 = vadd.f32 %v7732, %v7733
        %v7735 = vrot.slane %v7734, 1
        %v7736 = vadd.f32 %v7734, %v7735
        %v7737 = vadd.f32 %v7045, %v7077
        %v7738 = vadd.f32 %v7737, %v7109
        %v7739 = vadd.f32 %v7738, %v7141
        %v7740 = vadd.f32 %v7739, %v7173
        %v7741 = vadd.f32 %v7740, %v7205
        %v7742 = vadd.f32 %v7741, %v7237
        %v7743 = vadd.f32 %v7742, %v7269
        %v7744 = vadd.f32 %v7743, %v7301
        %v7745 = vadd.f32 %v7744, %v7333
        %v7746 = vadd.f32 %v7745, %v7365
        %v7747 = vadd.f32 %v7746, %v7397
        %v7748 = vadd.f32 %v7747, %v7429
        %v7749 = vadd.f32 %v7748, %v7461
        %v7750 = vadd.f32 %v7749, %v7493
        %v7751 = vadd.f32 %v7750, %v7525
        %v7752 = vrot.slane %v7751, 4
        %v7753 = vadd.f32 %v7751, %v7752
        %v7754 = vrot.slane %v7753, 2
        %v7755 = vadd.f32 %v7753, %v7754
        %v7756 = vrot.slane %v7755, 1
        %v7757 = vadd.f32 %v7755, %v7756
        %v7758 = vadd.f32 %v7046, %v7078
        %v7759 = vadd.f32 %v7758, %v7110
        %v7760 = vadd.f32 %v7759, %v7142
        %v7761 = vadd.f32 %v7760, %v7174
        %v7762 = vadd.f32 %v7761, %v7206
        %v7763 = vadd.f32 %v7762, %v7238
        %v7764 = vadd.f32 %v7763, %v7270
        %v7765 = vadd.f32 %v7764, %v7302
        %v7766 = vadd.f32 %v7765, %v7334
        %v7767 = vadd.f32 %v7766, %v7366
        %v7768 = vadd.f32 %v7767, %v7398
        %v7769 = vadd.f32 %v7768, %v7430
        %v7770 = vadd.f32 %v7769, %v7462
        %v7771 = vadd.f32 %v7770, %v7494
        %v7772 = vadd.f32 %v7771, %v7526
        %v7773 = vrot.slane %v7772, 4
        %v7774 = vadd.f32 %v7772, %v7773
        %v7775 = vrot.slane %v7774, 2
        %v7776 = vadd.f32 %v7774, %v7775
        %v7777 = vrot.slane %v7776, 1
        %v7778 = vadd.f32 %v7776, %v7777
        %v7779 = vadd.f32 %v7047, %v7079
        %v7780 = vadd.f32 %v7779, %v7111
        %v7781 = vadd.f32 %v7780, %v7143
        %v7782 = vadd.f32 %v7781, %v7175
        %v7783 = vadd.f32 %v7782, %v7207
        %v7784 = vadd.f32 %v7783, %v7239
        %v7785 = vadd.f32 %v7784, %v7271
        %v7786 = vadd.f32 %v7785, %v7303
        %v7787 = vadd.f32 %v7786, %v7335
        %v7788 = vadd.f32 %v7787, %v7367
        %v7789 = vadd.f32 %v7788, %v7399
        %v7790 = vadd.f32 %v7789, %v7431
        %v7791 = vadd.f32 %v7790, %v7463
        %v7792 = vadd.f32 %v7791, %v7495
        %v7793 = vadd.f32 %v7792, %v7527
        %v7794 = vrot.slane %v7793, 4
        %v7795 = vadd.f32 %v7793, %v7794
        %v7796 = vrot.slane %v7795, 2
        %v7797 = vadd.f32 %v7795, %v7796
        %v7798 = vrot.slane %v7797, 1
        %v7799 = vadd.f32 %v7797, %v7798
        %v7800 = vadd.f32 %v7048, %v7080
        %v7801 = vadd.f32 %v7800, %v7112
        %v7802 = vadd.f32 %v7801, %v7144
        %v7803 = vadd.f32 %v7802, %v7176
        %v7804 = vadd.f32 %v7803, %v7208
        %v7805 = vadd.f32 %v7804, %v7240
        %v7806 = vadd.f32 %v7805, %v7272
        %v7807 = vadd.f32 %v7806, %v7304
        %v7808 = vadd.f32 %v7807, %v7336
        %v7809 = vadd.f32 %v7808, %v7368
        %v7810 = vadd.f32 %v7809, %v7400
        %v7811 = vadd.f32 %v7810, %v7432
        %v7812 = vadd.f32 %v7811, %v7464
        %v7813 = vadd.f32 %v7812, %v7496
        %v7814 = vadd.f32 %v7813, %v7528
        %v7815 = vrot.slane %v7814, 4
        %v7816 = vadd.f32 %v7814, %v7815
        %v7817 = vrot.slane %v7816, 2
        %v7818 = vadd.f32 %v7816, %v7817
        %v7819 = vrot.slane %v7818, 1
        %v7820 = vadd.f32 %v7818, %v7819
        %v7821 = vadd.f32 %v7049, %v7081
        %v7822 = vadd.f32 %v7821, %v7113
        %v7823 = vadd.f32 %v7822, %v7145
        %v7824 = vadd.f32 %v7823, %v7177
        %v7825 = vadd.f32 %v7824, %v7209
        %v7826 = vadd.f32 %v7825, %v7241
        %v7827 = vadd.f32 %v7826, %v7273
        %v7828 = vadd.f32 %v7827, %v7305
        %v7829 = vadd.f32 %v7828, %v7337
        %v7830 = vadd.f32 %v7829, %v7369
        %v7831 = vadd.f32 %v7830, %v7401
        %v7832 = vadd.f32 %v7831, %v7433
        %v7833 = vadd.f32 %v7832, %v7465
        %v7834 = vadd.f32 %v7833, %v7497
        %v7835 = vadd.f32 %v7834, %v7529
        %v7836 = vrot.slane %v7835, 4
        %v7837 = vadd.f32 %v7835, %v7836
        %v7838 = vrot.slane %v7837, 2
        %v7839 = vadd.f32 %v7837, %v7838
        %v7840 = vrot.slane %v7839, 1
        %v7841 = vadd.f32 %v7839, %v7840
        %v7842 = vadd.f32 %v7050, %v7082
        %v7843 = vadd.f32 %v7842, %v7114
        %v7844 = vadd.f32 %v7843, %v7146
        %v7845 = vadd.f32 %v7844, %v7178
        %v7846 = vadd.f32 %v7845, %v7210
        %v7847 = vadd.f32 %v7846, %v7242
        %v7848 = vadd.f32 %v7847, %v7274
        %v7849 = vadd.f32 %v7848, %v7306
        %v7850 = vadd.f32 %v7849, %v7338
        %v7851 = vadd.f32 %v7850, %v7370
        %v7852 = vadd.f32 %v7851, %v7402
        %v7853 = vadd.f32 %v7852, %v7434
        %v7854 = vadd.f32 %v7853, %v7466
        %v7855 = vadd.f32 %v7854, %v7498
        %v7856 = vadd.f32 %v7855, %v7530
        %v7857 = vrot.slane %v7856, 4
        %v7858 = vadd.f32 %v7856, %v7857
        %v7859 = vrot.slane %v7858, 2
        %v7860 = vadd.f32 %v7858, %v7859
        %v7861 = vrot.slane %v7860, 1
        %v7862 = vadd.f32 %v7860, %v7861
        %v7863 = vadd.f32 %v7051, %v7083
        %v7864 = vadd.f32 %v7863, %v7115
        %v7865 = vadd.f32 %v7864, %v7147
        %v7866 = vadd.f32 %v7865, %v7179
        %v7867 = vadd.f32 %v7866, %v7211
        %v7868 = vadd.f32 %v7867, %v7243
        %v7869 = vadd.f32 %v7868, %v7275
        %v7870 = vadd.f32 %v7869, %v7307
        %v7871 = vadd.f32 %v7870, %v7339
        %v7872 = vadd.f32 %v7871, %v7371
        %v7873 = vadd.f32 %v7872, %v7403
        %v7874 = vadd.f32 %v7873, %v7435
        %v7875 = vadd.f32 %v7874, %v7467
        %v7876 = vadd.f32 %v7875, %v7499
        %v7877 = vadd.f32 %v7876, %v7531
        %v7878 = vrot.slane %v7877, 4
        %v7879 = vadd.f32 %v7877, %v7878
        %v7880 = vrot.slane %v7879, 2
        %v7881 = vadd.f32 %v7879, %v7880
        %v7882 = vrot.slane %v7881, 1
        %v7883 = vadd.f32 %v7881, %v7882
        %v7884 = vadd.f32 %v7052, %v7084
        %v7885 = vadd.f32 %v7884, %v7116
        %v7886 = vadd.f32 %v7885, %v7148
        %v7887 = vadd.f32 %v7886, %v7180
        %v7888 = vadd.f32 %v7887, %v7212
        %v7889 = vadd.f32 %v7888, %v7244
        %v7890 = vadd.f32 %v7889, %v7276
        %v7891 = vadd.f32 %v7890, %v7308
        %v7892 = vadd.f32 %v7891, %v7340
        %v7893 = vadd.f32 %v7892, %v7372
        %v7894 = vadd.f32 %v7893, %v7404
        %v7895 = vadd.f32 %v7894, %v7436
        %v7896 = vadd.f32 %v7895, %v7468
        %v7897 = vadd.f32 %v7896, %v7500
        %v7898 = vadd.f32 %v7897, %v7532
        %v7899 = vrot.slane %v7898, 4
        %v7900 = vadd.f32 %v7898, %v7899
        %v7901 = vrot.slane %v7900, 2
        %v7902 = vadd.f32 %v7900, %v7901
        %v7903 = vrot.slane %v7902, 1
        %v7904 = vadd.f32 %v7902, %v7903
        %v7905 = vadd.f32 %v7053, %v7085
        %v7906 = vadd.f32 %v7905, %v7117
        %v7907 = vadd.f32 %v7906, %v7149
        %v7908 = vadd.f32 %v7907, %v7181
        %v7909 = vadd.f32 %v7908, %v7213
        %v7910 = vadd.f32 %v7909, %v7245
        %v7911 = vadd.f32 %v7910, %v7277
        %v7912 = vadd.f32 %v7911, %v7309
        %v7913 = vadd.f32 %v7912, %v7341
        %v7914 = vadd.f32 %v7913, %v7373
        %v7915 = vadd.f32 %v7914, %v7405
        %v7916 = vadd.f32 %v7915, %v7437
        %v7917 = vadd.f32 %v7916, %v7469
        %v7918 = vadd.f32 %v7917, %v7501
        %v7919 = vadd.f32 %v7918, %v7533
        %v7920 = vrot.slane %v7919, 4
        %v7921 = vadd.f32 %v7919, %v7920
        %v7922 = vrot.slane %v7921, 2
        %v7923 = vadd.f32 %v7921, %v7922
        %v7924 = vrot.slane %v7923, 1
        %v7925 = vadd.f32 %v7923, %v7924
        %v7926 = vadd.f32 %v7054, %v7086
        %v7927 = vadd.f32 %v7926, %v7118
        %v7928 = vadd.f32 %v7927, %v7150
        %v7929 = vadd.f32 %v7928, %v7182
        %v7930 = vadd.f32 %v7929, %v7214
        %v7931 = vadd.f32 %v7930, %v7246
        %v7932 = vadd.f32 %v7931, %v7278
        %v7933 = vadd.f32 %v7932, %v7310
        %v7934 = vadd.f32 %v7933, %v7342
        %v7935 = vadd.f32 %v7934, %v7374
        %v7936 = vadd.f32 %v7935, %v7406
        %v7937 = vadd.f32 %v7936, %v7438
        %v7938 = vadd.f32 %v7937, %v7470
        %v7939 = vadd.f32 %v7938, %v7502
        %v7940 = vadd.f32 %v7939, %v7534
        %v7941 = vrot.slane %v7940, 4
        %v7942 = vadd.f32 %v7940, %v7941
        %v7943 = vrot.slane %v7942, 2
        %v7944 = vadd.f32 %v7942, %v7943
        %v7945 = vrot.slane %v7944, 1
        %v7946 = vadd.f32 %v7944, %v7945
        %v7947 = vadd.f32 %v7055, %v7087
        %v7948 = vadd.f32 %v7947, %v7119
        %v7949 = vadd.f32 %v7948, %v7151
        %v7950 = vadd.f32 %v7949, %v7183
        %v7951 = vadd.f32 %v7950, %v7215
        %v7952 = vadd.f32 %v7951, %v7247
        %v7953 = vadd.f32 %v7952, %v7279
        %v7954 = vadd.f32 %v7953, %v7311
        %v7955 = vadd.f32 %v7954, %v7343
        %v7956 = vadd.f32 %v7955, %v7375
        %v7957 = vadd.f32 %v7956, %v7407
        %v7958 = vadd.f32 %v7957, %v7439
        %v7959 = vadd.f32 %v7958, %v7471
        %v7960 = vadd.f32 %v7959, %v7503
        %v7961 = vadd.f32 %v7960, %v7535
        %v7962 = vrot.slane %v7961, 4
        %v7963 = vadd.f32 %v7961, %v7962
        %v7964 = vrot.slane %v7963, 2
        %v7965 = vadd.f32 %v7963, %v7964
        %v7966 = vrot.slane %v7965, 1
        %v7967 = vadd.f32 %v7965, %v7966
        %v7968 = vadd.f32 %v7056, %v7088
        %v7969 = vadd.f32 %v7968, %v7120
        %v7970 = vadd.f32 %v7969, %v7152
        %v7971 = vadd.f32 %v7970, %v7184
        %v7972 = vadd.f32 %v7971, %v7216
        %v7973 = vadd.f32 %v7972, %v7248
        %v7974 = vadd.f32 %v7973, %v7280
        %v7975 = vadd.f32 %v7974, %v7312
        %v7976 = vadd.f32 %v7975, %v7344
        %v7977 = vadd.f32 %v7976, %v7376
        %v7978 = vadd.f32 %v7977, %v7408
        %v7979 = vadd.f32 %v7978, %v7440
        %v7980 = vadd.f32 %v7979, %v7472
        %v7981 = vadd.f32 %v7980, %v7504
        %v7982 = vadd.f32 %v7981, %v7536
        %v7983 = vrot.slane %v7982, 4
        %v7984 = vadd.f32 %v7982, %v7983
        %v7985 = vrot.slane %v7984, 2
        %v7986 = vadd.f32 %v7984, %v7985
        %v7987 = vrot.slane %v7986, 1
        %v7988 = vadd.f32 %v7986, %v7987
        %v7989 = vadd.f32 %v7057, %v7089
        %v7990 = vadd.f32 %v7989, %v7121
        %v7991 = vadd.f32 %v7990, %v7153
        %v7992 = vadd.f32 %v7991, %v7185
        %v7993 = vadd.f32 %v7992, %v7217
        %v7994 = vadd.f32 %v7993, %v7249
        %v7995 = vadd.f32 %v7994, %v7281
        %v7996 = vadd.f32 %v7995, %v7313
        %v7997 = vadd.f32 %v7996, %v7345
        %v7998 = vadd.f32 %v7997, %v7377
        %v7999 = vadd.f32 %v7998, %v7409
        %v8000 = vadd.f32 %v7999, %v7441
        %v8001 = vadd.f32 %v8000, %v7473
        %v8002 = vadd.f32 %v8001, %v7505
        %v8003 = vadd.f32 %v8002, %v7537
        %v8004 = vrot.slane %v8003, 4
        %v8005 = vadd.f32 %v8003, %v8004
        %v8006 = vrot.slane %v8005, 2
        %v8007 = vadd.f32 %v8005, %v8006
        %v8008 = vrot.slane %v8007, 1
        %v8009 = vadd.f32 %v8007, %v8008
        %v8010 = vadd.f32 %v7058, %v7090
        %v8011 = vadd.f32 %v8010, %v7122
        %v8012 = vadd.f32 %v8011, %v7154
        %v8013 = vadd.f32 %v8012, %v7186
        %v8014 = vadd.f32 %v8013, %v7218
        %v8015 = vadd.f32 %v8014, %v7250
        %v8016 = vadd.f32 %v8015, %v7282
        %v8017 = vadd.f32 %v8016, %v7314
        %v8018 = vadd.f32 %v8017, %v7346
        %v8019 = vadd.f32 %v8018, %v7378
        %v8020 = vadd.f32 %v8019, %v7410
        %v8021 = vadd.f32 %v8020, %v7442
        %v8022 = vadd.f32 %v8021, %v7474
        %v8023 = vadd.f32 %v8022, %v7506
        %v8024 = vadd.f32 %v8023, %v7538
        %v8025 = vrot.slane %v8024, 4
        %v8026 = vadd.f32 %v8024, %v8025
        %v8027 = vrot.slane %v8026, 2
        %v8028 = vadd.f32 %v8026, %v8027
        %v8029 = vrot.slane %v8028, 1
        %v8030 = vadd.f32 %v8028, %v8029
        %v8031 = vadd.f32 %v7059, %v7091
        %v8032 = vadd.f32 %v8031, %v7123
        %v8033 = vadd.f32 %v8032, %v7155
        %v8034 = vadd.f32 %v8033, %v7187
        %v8035 = vadd.f32 %v8034, %v7219
        %v8036 = vadd.f32 %v8035, %v7251
        %v8037 = vadd.f32 %v8036, %v7283
        %v8038 = vadd.f32 %v8037, %v7315
        %v8039 = vadd.f32 %v8038, %v7347
        %v8040 = vadd.f32 %v8039, %v7379
        %v8041 = vadd.f32 %v8040, %v7411
        %v8042 = vadd.f32 %v8041, %v7443
        %v8043 = vadd.f32 %v8042, %v7475
        %v8044 = vadd.f32 %v8043, %v7507
        %v8045 = vadd.f32 %v8044, %v7539
        %v8046 = vrot.slane %v8045, 4
        %v8047 = vadd.f32 %v8045, %v8046
        %v8048 = vrot.slane %v8047, 2
        %v8049 = vadd.f32 %v8047, %v8048
        %v8050 = vrot.slane %v8049, 1
        %v8051 = vadd.f32 %v8049, %v8050
        %v8052 = vadd.f32 %v7060, %v7092
        %v8053 = vadd.f32 %v8052, %v7124
        %v8054 = vadd.f32 %v8053, %v7156
        %v8055 = vadd.f32 %v8054, %v7188
        %v8056 = vadd.f32 %v8055, %v7220
        %v8057 = vadd.f32 %v8056, %v7252
        %v8058 = vadd.f32 %v8057, %v7284
        %v8059 = vadd.f32 %v8058, %v7316
        %v8060 = vadd.f32 %v8059, %v7348
        %v8061 = vadd.f32 %v8060, %v7380
        %v8062 = vadd.f32 %v8061, %v7412
        %v8063 = vadd.f32 %v8062, %v7444
        %v8064 = vadd.f32 %v8063, %v7476
        %v8065 = vadd.f32 %v8064, %v7508
        %v8066 = vadd.f32 %v8065, %v7540
        %v8067 = vrot.slane %v8066, 4
        %v8068 = vadd.f32 %v8066, %v8067
        %v8069 = vrot.slane %v8068, 2
        %v8070 = vadd.f32 %v8068, %v8069
        %v8071 = vrot.slane %v8070, 1
        %v8072 = vadd.f32 %v8070, %v8071
        %v8073 = vadd.f32 %v7061, %v7093
        %v8074 = vadd.f32 %v8073, %v7125
        %v8075 = vadd.f32 %v8074, %v7157
        %v8076 = vadd.f32 %v8075, %v7189
        %v8077 = vadd.f32 %v8076, %v7221
        %v8078 = vadd.f32 %v8077, %v7253
        %v8079 = vadd.f32 %v8078, %v7285
        %v8080 = vadd.f32 %v8079, %v7317
        %v8081 = vadd.f32 %v8080, %v7349
        %v8082 = vadd.f32 %v8081, %v7381
        %v8083 = vadd.f32 %v8082, %v7413
        %v8084 = vadd.f32 %v8083, %v7445
        %v8085 = vadd.f32 %v8084, %v7477
        %v8086 = vadd.f32 %v8085, %v7509
        %v8087 = vadd.f32 %v8086, %v7541
        %v8088 = vrot.slane %v8087, 4
        %v8089 = vadd.f32 %v8087, %v8088
        %v8090 = vrot.slane %v8089, 2
        %v8091 = vadd.f32 %v8089, %v8090
        %v8092 = vrot.slane %v8091, 1
        %v8093 = vadd.f32 %v8091, %v8092
        %v8094 = vadd.f32 %v7062, %v7094
        %v8095 = vadd.f32 %v8094, %v7126
        %v8096 = vadd.f32 %v8095, %v7158
        %v8097 = vadd.f32 %v8096, %v7190
        %v8098 = vadd.f32 %v8097, %v7222
        %v8099 = vadd.f32 %v8098, %v7254
        %v8100 = vadd.f32 %v8099, %v7286
        %v8101 = vadd.f32 %v8100, %v7318
        %v8102 = vadd.f32 %v8101, %v7350
        %v8103 = vadd.f32 %v8102, %v7382
        %v8104 = vadd.f32 %v8103, %v7414
        %v8105 = vadd.f32 %v8104, %v7446
        %v8106 = vadd.f32 %v8105, %v7478
        %v8107 = vadd.f32 %v8106, %v7510
        %v8108 = vadd.f32 %v8107, %v7542
        %v8109 = vrot.slane %v8108, 4
        %v8110 = vadd.f32 %v8108, %v8109
        %v8111 = vrot.slane %v8110, 2
        %v8112 = vadd.f32 %v8110, %v8111
        %v8113 = vrot.slane %v8112, 1
        %v8114 = vadd.f32 %v8112, %v8113
        %v8115 = vadd.f32 %v7063, %v7095
        %v8116 = vadd.f32 %v8115, %v7127
        %v8117 = vadd.f32 %v8116, %v7159
        %v8118 = vadd.f32 %v8117, %v7191
        %v8119 = vadd.f32 %v8118, %v7223
        %v8120 = vadd.f32 %v8119, %v7255
        %v8121 = vadd.f32 %v8120, %v7287
        %v8122 = vadd.f32 %v8121, %v7319
        %v8123 = vadd.f32 %v8122, %v7351
        %v8124 = vadd.f32 %v8123, %v7383
        %v8125 = vadd.f32 %v8124, %v7415
        %v8126 = vadd.f32 %v8125, %v7447
        %v8127 = vadd.f32 %v8126, %v7479
        %v8128 = vadd.f32 %v8127, %v7511
        %v8129 = vadd.f32 %v8128, %v7543
        %v8130 = vrot.slane %v8129, 4
        %v8131 = vadd.f32 %v8129, %v8130
        %v8132 = vrot.slane %v8131, 2
        %v8133 = vadd.f32 %v8131, %v8132
        %v8134 = vrot.slane %v8133, 1
        %v8135 = vadd.f32 %v8133, %v8134
        %v8136 = vadd.f32 %v7064, %v7096
        %v8137 = vadd.f32 %v8136, %v7128
        %v8138 = vadd.f32 %v8137, %v7160
        %v8139 = vadd.f32 %v8138, %v7192
        %v8140 = vadd.f32 %v8139, %v7224
        %v8141 = vadd.f32 %v8140, %v7256
        %v8142 = vadd.f32 %v8141, %v7288
        %v8143 = vadd.f32 %v8142, %v7320
        %v8144 = vadd.f32 %v8143, %v7352
        %v8145 = vadd.f32 %v8144, %v7384
        %v8146 = vadd.f32 %v8145, %v7416
        %v8147 = vadd.f32 %v8146, %v7448
        %v8148 = vadd.f32 %v8147, %v7480
        %v8149 = vadd.f32 %v8148, %v7512
        %v8150 = vadd.f32 %v8149, %v7544
        %v8151 = vrot.slane %v8150, 4
        %v8152 = vadd.f32 %v8150, %v8151
        %v8153 = vrot.slane %v8152, 2
        %v8154 = vadd.f32 %v8152, %v8153
        %v8155 = vrot.slane %v8154, 1
        %v8156 = vadd.f32 %v8154, %v8155
        %v8157 = vadd.f32 %v7065, %v7097
        %v8158 = vadd.f32 %v8157, %v7129
        %v8159 = vadd.f32 %v8158, %v7161
        %v8160 = vadd.f32 %v8159, %v7193
        %v8161 = vadd.f32 %v8160, %v7225
        %v8162 = vadd.f32 %v8161, %v7257
        %v8163 = vadd.f32 %v8162, %v7289
        %v8164 = vadd.f32 %v8163, %v7321
        %v8165 = vadd.f32 %v8164, %v7353
        %v8166 = vadd.f32 %v8165, %v7385
        %v8167 = vadd.f32 %v8166, %v7417
        %v8168 = vadd.f32 %v8167, %v7449
        %v8169 = vadd.f32 %v8168, %v7481
        %v8170 = vadd.f32 %v8169, %v7513
        %v8171 = vadd.f32 %v8170, %v7545
        %v8172 = vrot.slane %v8171, 4
        %v8173 = vadd.f32 %v8171, %v8172
        %v8174 = vrot.slane %v8173, 2
        %v8175 = vadd.f32 %v8173, %v8174
        %v8176 = vrot.slane %v8175, 1
        %v8177 = vadd.f32 %v8175, %v8176
        %v8178 = vadd.f32 %v7066, %v7098
        %v8179 = vadd.f32 %v8178, %v7130
        %v8180 = vadd.f32 %v8179, %v7162
        %v8181 = vadd.f32 %v8180, %v7194
        %v8182 = vadd.f32 %v8181, %v7226
        %v8183 = vadd.f32 %v8182, %v7258
        %v8184 = vadd.f32 %v8183, %v7290
        %v8185 = vadd.f32 %v8184, %v7322
        %v8186 = vadd.f32 %v8185, %v7354
        %v8187 = vadd.f32 %v8186, %v7386
        %v8188 = vadd.f32 %v8187, %v7418
        %v8189 = vadd.f32 %v8188, %v7450
        %v8190 = vadd.f32 %v8189, %v7482
        %v8191 = vadd.f32 %v8190, %v7514
        %v8192 = vadd.f32 %v8191, %v7546
        %v8193 = vrot.slane %v8192, 4
        %v8194 = vadd.f32 %v8192, %v8193
        %v8195 = vrot.slane %v8194, 2
        %v8196 = vadd.f32 %v8194, %v8195
        %v8197 = vrot.slane %v8196, 1
        %v8198 = vadd.f32 %v8196, %v8197
        %v8199 = vadd.f32 %v7067, %v7099
        %v8200 = vadd.f32 %v8199, %v7131
        %v8201 = vadd.f32 %v8200, %v7163
        %v8202 = vadd.f32 %v8201, %v7195
        %v8203 = vadd.f32 %v8202, %v7227
        %v8204 = vadd.f32 %v8203, %v7259
        %v8205 = vadd.f32 %v8204, %v7291
        %v8206 = vadd.f32 %v8205, %v7323
        %v8207 = vadd.f32 %v8206, %v7355
        %v8208 = vadd.f32 %v8207, %v7387
        %v8209 = vadd.f32 %v8208, %v7419
        %v8210 = vadd.f32 %v8209, %v7451
        %v8211 = vadd.f32 %v8210, %v7483
        %v8212 = vadd.f32 %v8211, %v7515
        %v8213 = vadd.f32 %v8212, %v7547
        %v8214 = vrot.slane %v8213, 4
        %v8215 = vadd.f32 %v8213, %v8214
        %v8216 = vrot.slane %v8215, 2
        %v8217 = vadd.f32 %v8215, %v8216
        %v8218 = vrot.slane %v8217, 1
        %v8219 = vadd.f32 %v8217, %v8218
        %v8252 = vrot.slane %v7589, 7
        %v8253 = vrot.slane %v7610, 6
        %v8254 = vrot.slane %v7631, 5
        %v8255 = vrot.slane %v7652, 4
        %v8256 = vrot.slane %v7673, 3
        %v8257 = vrot.slane %v7694, 2
        %v8258 = vrot.slane %v7715, 1
        %v8259 = vrot.slane %v7757, 7
        %v8260 = vrot.slane %v7778, 6
        %v8261 = vrot.slane %v7799, 5
        %v8262 = vrot.slane %v7820, 4
        %v8263 = vrot.slane %v7841, 3
        %v8264 = vrot.slane %v7862, 2
        %v8265 = vrot.slane %v7883, 1
        %v8266 = vrot.slane %v7925, 7
        %v8267 = vrot.slane %v7946, 6
        %v8268 = vrot.slane %v7967, 5
        %v8269 = vrot.slane %v7988, 4
        %v8270 = vrot.slane %v8009, 3
        %v8271 = vrot.slane %v8030, 2
        %v8272 = vrot.slane %v8051, 1
        %v8273 = vrot.slane %v8093, 7
        %v8274 = vrot.slane %v8114, 6
        %v8275 = vrot.slane %v8135, 5
        %v8276 = vrot.slane %v8156, 4
        %v8277 = vrot.slane %v8177, 3
        %v8278 = vrot.slane %v8198, 2
        %v8279 = vrot.slane %v8219, 1
        %vm8280 = vcmask 1040384
        %v8281 = vsel %vm8280, %v7568, %v8252
        %vm8282 = vcmask 1042434
        %v8283 = vsel %vm8282, %v8253, %v8254
        %vm8284 = vcmask 1041408
        %v8285 = vsel %vm8284, %v8281, %v8283
        %vm8286 = vcmask 1044484
        %v8287 = vsel %vm8286, %v8255, %v8256
        %vm8288 = vcmask 1046534
        %v8289 = vsel %vm8288, %v8257, %v8258
        %vm8290 = vcmask 1045508
        %v8291 = vsel %vm8290, %v8287, %v8289
        %vm8292 = vcmask 1043456
        %v8293 = vsel %vm8292, %v8285, %v8291
        %v8294 = vsel %vm8280, %v7736, %v8259
        %v8295 = vsel %vm8282, %v8260, %v8261
        %v8296 = vsel %vm8284, %v8294, %v8295
        %v8297 = vsel %vm8286, %v8262, %v8263
        %v8298 = vsel %vm8288, %v8264, %v8265
        %v8299 = vsel %vm8290, %v8297, %v8298
        %v8300 = vsel %vm8292, %v8296, %v8299
        %v8301 = vsel %vm8280, %v7904, %v8266
        %v8302 = vsel %vm8282, %v8267, %v8268
        %v8303 = vsel %vm8284, %v8301, %v8302
        %v8304 = vsel %vm8286, %v8269, %v8270
        %v8305 = vsel %vm8288, %v8271, %v8272
        %v8306 = vsel %vm8290, %v8304, %v8305
        %v8307 = vsel %vm8292, %v8303, %v8306
        %v8308 = vsel %vm8280, %v8072, %v8273
        %v8309 = vsel %vm8282, %v8274, %v8275
        %v8310 = vsel %vm8284, %v8308, %v8309
        %v8311 = vsel %vm8286, %v8276, %v8277
        %v8312 = vsel %vm8288, %v8278, %v8279
        %v8313 = vsel %vm8290, %v8311, %v8312
        %v8314 = vsel %vm8292, %v8310, %v8313
        %s8319 = sld [smem:[#allocation11 + $0x3]]
        %v8320 = vstv %s8319
        %v8321 = vmul.f32 %v517, %v8320
        %v8322 = vmul.f32 %v518, %v8320
        %v8323 = vmul.f32 %v519, %v8320
        %v8324 = vmul.f32 %v520, %v8320
        %s8325 = sld [smem:[#allocation11 + $0x83]]
        %v8326 = vstv %s8325
        %v8327 = vmul.f32 %v528, %v8326
        %v8328 = vmul.f32 %v529, %v8326
        %v8329 = vmul.f32 %v530, %v8326
        %v8330 = vmul.f32 %v531, %v8326
        %v8331 = vadd.f32 %v8321, %v8327
        %v8332 = vadd.f32 %v8322, %v8328
        %v8333 = vadd.f32 %v8323, %v8329
        %v8334 = vadd.f32 %v8324, %v8330
        %s8335 = sld [smem:[#allocation11 + $0x103]]
        %v8336 = vstv %s8335
        %v8337 = vmul.f32 %v543, %v8336
        %v8338 = vmul.f32 %v544, %v8336
        %v8339 = vmul.f32 %v545, %v8336
        %v8340 = vmul.f32 %v546, %v8336
        %v8341 = vadd.f32 %v8331, %v8337
        %v8342 = vadd.f32 %v8332, %v8338
        %v8343 = vadd.f32 %v8333, %v8339
        %v8344 = vadd.f32 %v8334, %v8340
        %s8345 = sld [smem:[#allocation11 + $0x183]]
        %v8346 = vstv %s8345
        %v8347 = vmul.f32 %v615, %v8346
        %v8348 = vmul.f32 %v616, %v8346
        %v8349 = vmul.f32 %v617, %v8346
        %v8350 = vmul.f32 %v618, %v8346
        %v8351 = vadd.f32 %v8341, %v8347
        %v8352 = vadd.f32 %v8342, %v8348
        %v8353 = vadd.f32 %v8343, %v8349
        %v8354 = vadd.f32 %v8344, %v8350
        %s8355 = sld [smem:[#allocation11 + $0x203]]
        %v8356 = vstv %s8355
        %v8357 = vmul.f32 %v677, %v8356
        %v8358 = vmul.f32 %v678, %v8356
        %v8359 = vmul.f32 %v679, %v8356
        %v8360 = vmul.f32 %v680, %v8356
        %v8361 = vadd.f32 %v8351, %v8357
        %v8362 = vadd.f32 %v8352, %v8358
        %v8363 = vadd.f32 %v8353, %v8359
        %v8364 = vadd.f32 %v8354, %v8360
        %s8365 = sld [smem:[#allocation11 + $0x283]]
        %v8366 = vstv %s8365
        %v8367 = vmul.f32 %v739, %v8366
        %v8368 = vmul.f32 %v740, %v8366
        %v8369 = vmul.f32 %v741, %v8366
        %v8370 = vmul.f32 %v742, %v8366
        %v8371 = vadd.f32 %v8361, %v8367
        %v8372 = vadd.f32 %v8362, %v8368
        %v8373 = vadd.f32 %v8363, %v8369
        %v8374 = vadd.f32 %v8364, %v8370
        %s8375 = sld [smem:[#allocation11 + $0x303]]
        %v8376 = vstv %s8375
        %v8377 = vmul.f32 %v8293, %v8376
        %v8378 = vmul.f32 %v8300, %v8376
        %v8379 = vmul.f32 %v8307, %v8376
        %v8380 = vmul.f32 %v8314, %v8376
        %v8381 = vadd.f32 %v8371, %v8377
        %v8382 = vadd.f32 %v8372, %v8378
        %v8383 = vadd.f32 %v8373, %v8379
        %v8384 = vadd.f32 %v8374, %v8380
        %s8385 = sld [smem:[#allocation12 + $0x3]]
        %v8386 = vstv %s8385
        %v8387 = vadd.f32 %v8381, %v8386
        %v8388 = vadd.f32 %v8382, %v8386
        %v8389 = vadd.f32 %v8383, %v8386
        %v8390 = vadd.f32 %v8384, %v8386
        %v8391 = vxor.u32 %v8387, 2147483648
        %v8392 = vxor.u32 %v8388, 2147483648
        %v8393 = vxor.u32 %v8389, 2147483648
        %v8394 = vxor.u32 %v8390, 2147483648
        %v8395 = vmul.f32 %v8391, 1.442695
        %v8396 = vpow.pop %v8395
        %v8397 = vmul.f32 %v8392, 1.442695
        %v8398 = vpow.pop %v8397
        %v8399 = vmul.f32 %v8393, 1.442695
        %v8400 = vpow.pop %v8399
        %v8401 = vmul.f32 %v8394, 1.442695
        %v8402 = vpow.pop %v8401
        %v8403 = vadd.f32 %v8396, 1.0
        %v8404 = vadd.f32 %v8398, 1.0
        %v8405 = vadd.f32 %v8400, 1.0
        %v8406 = vadd.f32 %v8402, 1.0
        %v8407 = vrcp.pop %v8403
        %v8408 = vmul.f32 %v8403, %v8407
        %v8409 = vsub.f32 1.0, %v8408
        %v8410 = vmul.f32 %v8407, %v8409
        %v8411 = vadd.f32 %v8407, %v8410
        %vm8412 = vweird.f32 %v8403
        %vm8413 = vweird.f32 %v8407
        %vm8414 = vmor %vm8412, %vm8413
        %v8415 = vsel %vm8414, %v8407, %v8411
        %v8416 = vand.u32 2147483647, %v8403
        %vm8417 = vcmp.eq.f32.partialorder %v8416, 8.507059e+37
        %v8418 = vand.u32 %v8403, 2147483648
        %v8419 = vor.u32 1.1754944e-38, %v8418
        %v8420 = vsel %vm8417, %v8419, %v8415
        %v8421 = vmul.f32 1.0, %v8420
        %v8422 = vrcp.pop %v8404
        %v8423 = vmul.f32 %v8404, %v8422
        %v8424 = vsub.f32 1.0, %v8423
        %v8425 = vmul.f32 %v8422, %v8424
        %v8426 = vadd.f32 %v8422, %v8425
        %vm8427 = vweird.f32 %v8404
        %vm8428 = vweird.f32 %v8422
        %vm8429 = vmor %vm8427, %vm8428
        %v8430 = vsel %vm8429, %v8422, %v8426
        %v8431 = vand.u32 2147483647, %v8404
        %vm8432 = vcmp.eq.f32.partialorder %v8431, 8.507059e+37
        %v8433 = vand.u32 %v8404, 2147483648
        %v8434 = vor.u32 1.1754944e-38, %v8433
        %v8435 = vsel %vm8432, %v8434, %v8430
        %v8436 = vmul.f32 1.0, %v8435
        %v8437 = vrcp.pop %v8405
        %v8438 = vmul.f32 %v8405, %v8437
        %v8439 = vsub.f32 1.0, %v8438
        %v8440 = vmul.f32 %v8437, %v8439
        %v8441 = vadd.f32 %v8437, %v8440
        %vm8442 = vweird.f32 %v8405
        %vm8443 = vweird.f32 %v8437
        %vm8444 = vmor %vm8442, %vm8443
        %v8445 = vsel %vm8444, %v8437, %v8441
        %v8446 = vand.u32 2147483647, %v8405
        %vm8447 = vcmp.eq.f32.partialorder %v8446, 8.507059e+37
        %v8448 = vand.u32 %v8405, 2147483648
        %v8449 = vor.u32 1.1754944e-38, %v8448
        %v8450 = vsel %vm8447, %v8449, %v8445
        %v8451 = vmul.f32 1.0, %v8450
        %v8452 = vrcp.pop %v8406
        %v8453 = vmul.f32 %v8406, %v8452
        %v8454 = vsub.f32 1.0, %v8453
        %v8455 = vmul.f32 %v8452, %v8454
        %v8456 = vadd.f32 %v8452, %v8455
        %vm8457 = vweird.f32 %v8406
        %vm8458 = vweird.f32 %v8452
        %vm8459 = vmor %vm8457, %vm8458
        %v8460 = vsel %vm8459, %v8452, %v8456
        %v8461 = vand.u32 2147483647, %v8406
        %vm8462 = vcmp.eq.f32.partialorder %v8461, 8.507059e+37
        %v8463 = vand.u32 %v8406, 2147483648
        %v8464 = vor.u32 1.1754944e-38, %v8463
        %v8465 = vsel %vm8462, %v8464, %v8460
        %v8466 = vmul.f32 1.0, %v8465
        %v8467 = vmul.f32 %v8421, %v8293
        %v8468 = vmul.f32 %v8436, %v8300
        %v8469 = vmul.f32 %v8451, %v8307
        %v8470 = vmul.f32 %v8466, %v8314
        %v8471 = vsub.f32 1.0, %v8467
        %v8472 = vsub.f32 1.0, %v8468
        %v8473 = vsub.f32 1.0, %v8469
        %v8474 = vsub.f32 1.0, %v8470
        %s8475 = sld [smem:[#allocation11]]
        %v8476 = vstv %s8475
        %v8477 = vmul.f32 %v517, %v8476
        %v8478 = vmul.f32 %v518, %v8476
        %v8479 = vmul.f32 %v519, %v8476
        %v8480 = vmul.f32 %v520, %v8476
        %s8481 = sld [smem:[#allocation11 + $0x80]]
        %v8482 = vstv %s8481
        %v8483 = vmul.f32 %v528, %v8482
        %v8484 = vmul.f32 %v529, %v8482
        %v8485 = vmul.f32 %v530, %v8482
        %v8486 = vmul.f32 %v531, %v8482
        %v8487 = vadd.f32 %v8477, %v8483
        %v8488 = vadd.f32 %v8478, %v8484
        %v8489 = vadd.f32 %v8479, %v8485
        %v8490 = vadd.f32 %v8480, %v8486
        %s8491 = sld [smem:[#allocation11 + $0x100]]
        %v8492 = vstv %s8491
        %v8493 = vmul.f32 %v543, %v8492
        %v8494 = vmul.f32 %v544, %v8492
        %v8495 = vmul.f32 %v545, %v8492
        %v8496 = vmul.f32 %v546, %v8492
        %v8497 = vadd.f32 %v8487, %v8493
        %v8498 = vadd.f32 %v8488, %v8494
        %v8499 = vadd.f32 %v8489, %v8495
        %v8500 = vadd.f32 %v8490, %v8496
        %s8501 = sld [smem:[#allocation11 + $0x180]]
        %v8502 = vstv %s8501
        %v8503 = vmul.f32 %v615, %v8502
        %v8504 = vmul.f32 %v616, %v8502
        %v8505 = vmul.f32 %v617, %v8502
        %v8506 = vmul.f32 %v618, %v8502
        %v8507 = vadd.f32 %v8497, %v8503
        %v8508 = vadd.f32 %v8498, %v8504
        %v8509 = vadd.f32 %v8499, %v8505
        %v8510 = vadd.f32 %v8500, %v8506
        %s8511 = sld [smem:[#allocation11 + $0x200]]
        %v8512 = vstv %s8511
        %v8513 = vmul.f32 %v677, %v8512
        %v8514 = vmul.f32 %v678, %v8512
        %v8515 = vmul.f32 %v679, %v8512
        %v8516 = vmul.f32 %v680, %v8512
        %v8517 = vadd.f32 %v8507, %v8513
        %v8518 = vadd.f32 %v8508, %v8514
        %v8519 = vadd.f32 %v8509, %v8515
        %v8520 = vadd.f32 %v8510, %v8516
        %s8521 = sld [smem:[#allocation11 + $0x280]]
        %v8522 = vstv %s8521
        %v8523 = vmul.f32 %v739, %v8522
        %v8524 = vmul.f32 %v740, %v8522
        %v8525 = vmul.f32 %v741, %v8522
        %v8526 = vmul.f32 %v742, %v8522
        %v8527 = vadd.f32 %v8517, %v8523
        %v8528 = vadd.f32 %v8518, %v8524
        %v8529 = vadd.f32 %v8519, %v8525
        %v8530 = vadd.f32 %v8520, %v8526
        %s8531 = sld [smem:[#allocation11 + $0x300]]
        %v8532 = vstv %s8531
        %v8533 = vmul.f32 %v8293, %v8532
        %v8534 = vmul.f32 %v8300, %v8532
        %v8535 = vmul.f32 %v8307, %v8532
        %v8536 = vmul.f32 %v8314, %v8532
        %v8537 = vadd.f32 %v8527, %v8533
        %v8538 = vadd.f32 %v8528, %v8534
        %v8539 = vadd.f32 %v8529, %v8535
        %v8540 = vadd.f32 %v8530, %v8536
        %s8541 = sld [smem:[#allocation12]]
        %v8542 = vstv %s8541
        %v8543 = vadd.f32 %v8537, %v8542
        %v8544 = vadd.f32 %v8538, %v8542
        %v8545 = vadd.f32 %v8539, %v8542
        %v8546 = vadd.f32 %v8540, %v8542
        %v8547 = vtanh.pop %v8543
        %v8548 = vtanh.pop %v8544
        %v8549 = vtanh.pop %v8545
        %v8550 = vtanh.pop %v8546
        %v8551 = vmul.f32 %v615, %v8467
        %v8552 = vmul.f32 %v616, %v8468
        %v8553 = vmul.f32 %v617, %v8469
        %v8554 = vmul.f32 %v618, %v8470
        %v8555 = vmul.f32 %v8547, %v8471
        %v8556 = vmul.f32 %v8548, %v8472
        %v8557 = vmul.f32 %v8549, %v8473
        %v8558 = vmul.f32 %v8550, %v8474
        %v8559 = vadd.f32 %v8551, %v8555
        %v8560 = vadd.f32 %v8552, %v8556
        %v8561 = vadd.f32 %v8553, %v8557
        %v8562 = vadd.f32 %v8554, %v8558
        %8563 = vst [vmem:[%s479] sm:$0xff] %v8559
        %8564 = vst [vmem:[%s479 + $0x8] sm:$0xff] %v8560
        %8565 = vst [vmem:[%s479 + $0x10] sm:$0xff] %v8561
        %8566 = vst [vmem:[%s479 + $0x18] sm:$0xff] %v8562
        %v8567 = vld [vmem:[%s407] sm:$0xff]
        %v8568 = vld [vmem:[%s407 + $0x8] sm:$0xff]
        %v8569 = vld [vmem:[%s407 + $0x10] sm:$0xff]
        %v8570 = vld [vmem:[%s407 + $0x18] sm:$0xff]
        %s8571 = sld [smem:[#allocation11 + $0x1]]
        %v8572 = vstv %s8571
        %v8573 = vmul.f32 %v8567, %v8572
        %v8574 = vmul.f32 %v8568, %v8572
        %v8575 = vmul.f32 %v8569, %v8572
        %v8576 = vmul.f32 %v8570, %v8572
        %v8577 = vld [vmem:[%s527] sm:$0xff]
        %v8578 = vld [vmem:[%s527 + $0x8] sm:$0xff]
        %v8579 = vld [vmem:[%s527 + $0x10] sm:$0xff]
        %v8580 = vld [vmem:[%s527 + $0x18] sm:$0xff]
        %s8581 = sld [smem:[#allocation11 + $0x81]]
        %v8582 = vstv %s8581
        %v8583 = vmul.f32 %v8577, %v8582
        %v8584 = vmul.f32 %v8578, %v8582
        %v8585 = vmul.f32 %v8579, %v8582
        %v8586 = vmul.f32 %v8580, %v8582
        %v8587 = vadd.f32 %v8573, %v8583
        %v8588 = vadd.f32 %v8574, %v8584
        %v8589 = vadd.f32 %v8575, %v8585
        %v8590 = vadd.f32 %v8576, %v8586
        %v8591 = vld [vmem:[%s542] sm:$0xff]
        %v8592 = vld [vmem:[%s542 + $0x8] sm:$0xff]
        %v8593 = vld [vmem:[%s542 + $0x10] sm:$0xff]
        %v8594 = vld [vmem:[%s542 + $0x18] sm:$0xff]
        %s8595 = sld [smem:[#allocation11 + $0x101]]
        %v8596 = vstv %s8595
        %v8597 = vmul.f32 %v8591, %v8596
        %v8598 = vmul.f32 %v8592, %v8596
        %v8599 = vmul.f32 %v8593, %v8596
        %v8600 = vmul.f32 %v8594, %v8596
        %v8601 = vadd.f32 %v8587, %v8597
        %v8602 = vadd.f32 %v8588, %v8598
        %v8603 = vadd.f32 %v8589, %v8599
        %v8604 = vadd.f32 %v8590, %v8600
        %s8605 = sld [smem:[#allocation11 + $0x181]]
        %v8606 = vstv %s8605
        %v8607 = vmul.f32 %v615, %v8606
        %v8608 = vmul.f32 %v616, %v8606
        %v8609 = vmul.f32 %v617, %v8606
        %v8610 = vmul.f32 %v618, %v8606
        %v8611 = vadd.f32 %v8601, %v8607
        %v8612 = vadd.f32 %v8602, %v8608
        %v8613 = vadd.f32 %v8603, %v8609
        %v8614 = vadd.f32 %v8604, %v8610
        %s8615 = sld [smem:[#allocation11 + $0x201]]
        %v8616 = vstv %s8615
        %v8617 = vmul.f32 %v677, %v8616
        %v8618 = vmul.f32 %v678, %v8616
        %v8619 = vmul.f32 %v679, %v8616
        %v8620 = vmul.f32 %v680, %v8616
        %v8621 = vadd.f32 %v8611, %v8617
        %v8622 = vadd.f32 %v8612, %v8618
        %v8623 = vadd.f32 %v8613, %v8619
        %v8624 = vadd.f32 %v8614, %v8620
        %s8625 = sld [smem:[#allocation11 + $0x281]]
        %v8626 = vstv %s8625
        %v8627 = vmul.f32 %v739, %v8626
        %v8628 = vmul.f32 %v740, %v8626
        %v8629 = vmul.f32 %v741, %v8626
        %v8630 = vmul.f32 %v742, %v8626
        %v8631 = vadd.f32 %v8621, %v8627
        %v8632 = vadd.f32 %v8622, %v8628
        %v8633 = vadd.f32 %v8623, %v8629
        %v8634 = vadd.f32 %v8624, %v8630
        %s8635 = sld [smem:[#allocation11 + $0x301]]
        %v8636 = vstv %s8635
        %v8637 = vmul.f32 %v8293, %v8636
        %v8638 = vmul.f32 %v8300, %v8636
        %v8639 = vmul.f32 %v8307, %v8636
        %v8640 = vmul.f32 %v8314, %v8636
        %v8641 = vadd.f32 %v8631, %v8637
        %v8642 = vadd.f32 %v8632, %v8638
        %v8643 = vadd.f32 %v8633, %v8639
        %v8644 = vadd.f32 %v8634, %v8640
        %s8645 = sld [smem:[#allocation12 + $0x1]]
        %v8646 = vstv %s8645
        %v8647 = vadd.f32 %v8641, %v8646
        %v8648 = vadd.f32 %v8642, %v8646
        %v8649 = vadd.f32 %v8643, %v8646
        %v8650 = vadd.f32 %v8644, %v8646
        %v8651 = vtanh.pop %v8647
        %v8652 = vtanh.pop %v8648
        %v8653 = vtanh.pop %v8649
        %v8654 = vtanh.pop %v8650
        %v8655 = vmul.f32 %v677, %v8467
        %v8656 = vmul.f32 %v678, %v8468
        %v8657 = vmul.f32 %v679, %v8469
        %v8658 = vmul.f32 %v680, %v8470
        %v8659 = vmul.f32 %v8651, %v8471
        %v8660 = vmul.f32 %v8652, %v8472
        %v8661 = vmul.f32 %v8653, %v8473
        %v8662 = vmul.f32 %v8654, %v8474
        %v8663 = vadd.f32 %v8655, %v8659
        %v8664 = vadd.f32 %v8656, %v8660
        %v8665 = vadd.f32 %v8657, %v8661
        %v8666 = vadd.f32 %v8658, %v8662
        %s8667 = scalar_lea.vmem %s479, 32 [#allocation14]
        %8668 = vst [vmem:[%s8667] sm:$0xff] %v8663
        %8669 = vst [vmem:[%s8667 + $0x8] sm:$0xff] %v8664
        %8670 = vst [vmem:[%s8667 + $0x10] sm:$0xff] %v8665
        %8671 = vst [vmem:[%s8667 + $0x18] sm:$0xff] %v8666
        %v8672 = vld [vmem:[%s407] sm:$0xff]
        %v8673 = vld [vmem:[%s407 + $0x8] sm:$0xff]
        %v8674 = vld [vmem:[%s407 + $0x10] sm:$0xff]
        %v8675 = vld [vmem:[%s407 + $0x18] sm:$0xff]
        %s8676 = sld [smem:[#allocation11 + $0x2]]
        %v8677 = vstv %s8676
        %v8678 = vmul.f32 %v8672, %v8677
        %v8679 = vmul.f32 %v8673, %v8677
        %v8680 = vmul.f32 %v8674, %v8677
        %v8681 = vmul.f32 %v8675, %v8677
        %v8682 = vld [vmem:[%s527] sm:$0xff]
        %v8683 = vld [vmem:[%s527 + $0x8] sm:$0xff]
        %v8684 = vld [vmem:[%s527 + $0x10] sm:$0xff]
        %v8685 = vld [vmem:[%s527 + $0x18] sm:$0xff]
        %s8686 = sld [smem:[#allocation11 + $0x82]]
        %v8687 = vstv %s8686
        %v8688 = vmul.f32 %v8682, %v8687
        %v8689 = vmul.f32 %v8683, %v8687
        %v8690 = vmul.f32 %v8684, %v8687
        %v8691 = vmul.f32 %v8685, %v8687
        %v8692 = vadd.f32 %v8678, %v8688
        %v8693 = vadd.f32 %v8679, %v8689
        %v8694 = vadd.f32 %v8680, %v8690
        %v8695 = vadd.f32 %v8681, %v8691
        %v8696 = vld [vmem:[%s542] sm:$0xff]
        %v8697 = vld [vmem:[%s542 + $0x8] sm:$0xff]
        %v8698 = vld [vmem:[%s542 + $0x10] sm:$0xff]
        %v8699 = vld [vmem:[%s542 + $0x18] sm:$0xff]
        %s8700 = sld [smem:[#allocation11 + $0x102]]
        %v8701 = vstv %s8700
        %v8702 = vmul.f32 %v8696, %v8701
        %v8703 = vmul.f32 %v8697, %v8701
        %v8704 = vmul.f32 %v8698, %v8701
        %v8705 = vmul.f32 %v8699, %v8701
        %v8706 = vadd.f32 %v8692, %v8702
        %v8707 = vadd.f32 %v8693, %v8703
        %v8708 = vadd.f32 %v8694, %v8704
        %v8709 = vadd.f32 %v8695, %v8705
        %s8710 = sld [smem:[#allocation11 + $0x182]]
        %v8711 = vstv %s8710
        %v8712 = vmul.f32 %v615, %v8711
        %v8713 = vmul.f32 %v616, %v8711
        %v8714 = vmul.f32 %v617, %v8711
        %v8715 = vmul.f32 %v618, %v8711
        %v8716 = vadd.f32 %v8706, %v8712
        %v8717 = vadd.f32 %v8707, %v8713
        %v8718 = vadd.f32 %v8708, %v8714
        %v8719 = vadd.f32 %v8709, %v8715
        %s8720 = sld [smem:[#allocation11 + $0x202]]
        %v8721 = vstv %s8720
        %v8722 = vmul.f32 %v677, %v8721
        %v8723 = vmul.f32 %v678, %v8721
        %v8724 = vmul.f32 %v679, %v8721
        %v8725 = vmul.f32 %v680, %v8721
        %v8726 = vadd.f32 %v8716, %v8722
        %v8727 = vadd.f32 %v8717, %v8723
        %v8728 = vadd.f32 %v8718, %v8724
        %v8729 = vadd.f32 %v8719, %v8725
        %s8730 = sld [smem:[#allocation11 + $0x282]]
        %v8731 = vstv %s8730
        %v8732 = vmul.f32 %v739, %v8731
        %v8733 = vmul.f32 %v740, %v8731
        %v8734 = vmul.f32 %v741, %v8731
        %v8735 = vmul.f32 %v742, %v8731
        %v8736 = vadd.f32 %v8726, %v8732
        %v8737 = vadd.f32 %v8727, %v8733
        %v8738 = vadd.f32 %v8728, %v8734
        %v8739 = vadd.f32 %v8729, %v8735
        %s8740 = sld [smem:[#allocation11 + $0x302]]
        %v8741 = vstv %s8740
        %v8742 = vmul.f32 %v8293, %v8741
        %v8743 = vmul.f32 %v8300, %v8741
        %v8744 = vmul.f32 %v8307, %v8741
        %v8745 = vmul.f32 %v8314, %v8741
        %v8746 = vadd.f32 %v8736, %v8742
        %v8747 = vadd.f32 %v8737, %v8743
        %v8748 = vadd.f32 %v8738, %v8744
        %v8749 = vadd.f32 %v8739, %v8745
        %s8750 = sld [smem:[#allocation12 + $0x2]]
        %v8751 = vstv %s8750
        %v8752 = vadd.f32 %v8746, %v8751
        %v8753 = vadd.f32 %v8747, %v8751
        %v8754 = vadd.f32 %v8748, %v8751
        %v8755 = vadd.f32 %v8749, %v8751
        %v8756 = vtanh.pop %v8752
        %v8757 = vtanh.pop %v8753
        %v8758 = vtanh.pop %v8754
        %v8759 = vtanh.pop %v8755
        %v8760 = vmul.f32 %v739, %v8467
        %v8761 = vmul.f32 %v740, %v8468
        %v8762 = vmul.f32 %v741, %v8469
        %v8763 = vmul.f32 %v742, %v8470
        %v8764 = vmul.f32 %v8756, %v8471
        %v8765 = vmul.f32 %v8757, %v8472
        %v8766 = vmul.f32 %v8758, %v8473
        %v8767 = vmul.f32 %v8759, %v8474
        %v8768 = vadd.f32 %v8760, %v8764
        %v8769 = vadd.f32 %v8761, %v8765
        %v8770 = vadd.f32 %v8762, %v8766
        %v8771 = vadd.f32 %v8763, %v8767
        %s8772 = scalar_lea.vmem %s479, 64 [#allocation14]
        %8773 = vst [vmem:[%s8772] sm:$0xff] %v8768
        %8774 = vst [vmem:[%s8772 + $0x8] sm:$0xff] %v8769
        %8775 = vst [vmem:[%s8772 + $0x10] sm:$0xff] %v8770
        %8776 = vst [vmem:[%s8772 + $0x18] sm:$0xff] %v8771
        %s8777 = sand.u32 %s218, 1
        %s8778 = scalar_lea.sflag [#allocation4], %s8777
        %s8779 = sand.u32 %s218, 1
        %s8780 = smul.addr %s8779, 96
        %s8781 = scalar_lea.vmem [#allocation14], %s8780
        // Predicated region
        $region73: #{_forward_impl.1} parent=47 // pred_check
          %p8782 = pneg %p228
        $region74: #{_forward_impl.1} parent=47 // pred_check_branch
          %8784 = sbr.rel (%p8782) target = $region76
        $region75: #{_forward_impl.1} parent=47 // pred_region
          #allocation20 [shape = 'u32[6]{0}', space=smem, size = 0x18, scoped, tag = 'DMA stride descriptor']
          %s8785 = smul.u32 4, %s35
          %8787 = vsyncadd %s8778, 0
          %s8788 = smul.addr %s34, 48
          %s8789 = sadd.s32 %s8785, %s8788
          %s8790 = smul.addr %s8789, 8
          %s8791 = scalar_lea.hbm %s7, %s8790
          %s8793 = sshll.u32 1, 14
          %s8794 = sxor.u32 4294967295, %s8793
          %s8797 = sshll.u32 7, 18
          %s8798 = sxor.u32 4294967295, %s8797
          %s8799 = sand.u32 0, %s8798
          %s8801 = sor.u32 %s8799, 0
          %s8802 = sshll.u32 %s8781, 4
          %s8803 = int_to_ptr.vmem [resolvable:$true] %s8802
          %s8804 = sshll.u32 %s8791, 4
          %s8805 = int_to_ptr.hbm [resolvable:$true] %s8804
          %8811 = sst [smem:[#allocation20]] 512
          %s8812 = scalar_lea.smem [#allocation20], 1
          %8813 = sst [smem:[%s8812]] 2048
          %s8814 = scalar_lea.smem [#allocation20], 2
          %8815 = sst [smem:[%s8814]] 4
          %s8816 = scalar_lea.smem [#allocation20], 3
          %8817 = sst [smem:[%s8816]] 128
          %s8818 = scalar_lea.smem [#allocation20], 4
          %8819 = sst [smem:[%s8818]] 128
          %s8820 = scalar_lea.smem [#allocation20], 5
          %8821 = sst [smem:[%s8820]] 8
          %8823 = dma.general %s8803, 1536, %s8805, %s8778, [#allocation19], [#allocation20], %s8801, 0
        $region76: #{_forward_impl.1} parent=47 // pred_fallthru
          _
      $region48: #{_forward_impl.1} parent=5 // pred_fallthru
        _
      %p8824 = scmp.le.s32.totalorder 2, %s25
      // Predicated region
      $region77: #{_forward_impl.1} parent=5 // pred_check
        %p8825 = pneg %p8824
      $region78: #{_forward_impl.1} parent=5 // pred_check_branch
        %8827 = sbr.rel (%p8825) target = $region80
      $region79: #{_forward_impl.1} parent=5 // pred_region
        %s8828 = ssub.s32 %s25, 2
        // Predicated region
        $region81: #{_forward_impl.1} parent=79 // pred_check
          %p8829 = pneg %p234
        $region82: #{_forward_impl.1} parent=79 // pred_check_branch
          %8831 = sbr.rel (%p8829) target = $region84
        $region83: #{_forward_impl.1} parent=79 // pred_region
          %s8832 = sand.u32 %s219, 1
          %s8833 = scalar_lea.sflag [#allocation4], %s8832
          %s8834 = sand.u32 %s219, 1
          %s8835 = smul.addr %s8834, 96
          %s8836 = scalar_lea.vmem [#allocation14], %s8835
          %8838 = dma.done %s8833, 1536
        $region84: #{_forward_impl.1} parent=79 // pred_fallthru
          _
      $region80: #{_forward_impl.1} parent=5 // pred_fallthru
        _
    $region6: #{_forward_impl.1} parent=1 // loop_footer
      %s29 = sadd.s32 1, %s25
    $region7: #{_forward_impl.1} parent=1 // loop_footer_branch
      %24 = sbr.rel target = $region3
    $region8: #{_forward_impl.1} parent=1 // loop_exit
      _
    %8839 = vsyncpa [#allocation3], 1
    %s8840 = scalar_lea.sflag [#allocation3], 1
    %8841 = vsyncpa %s8840, 1
    %8842 = vsyncpa [#allocation7], 1
    %s8843 = scalar_lea.sflag [#allocation7], 1
    %8844 = vsyncpa %s8843, 1
    %8845 = vsyncpa [#allocation4], 1
    %s8846 = scalar_lea.sflag [#allocation4], 1
    %8847 = vsyncpa %s8846, 1
    %8848 = vsyncpa [#allocation5], 1
    %s8849 = scalar_lea.sflag [#allocation5], 1
    %8850 = vsyncpa %s8849, 1
    %8851 = vsyncpa [#allocation10], 1
    %8852 = vsyncpa [#allocation13], 1

</llo_original>
